<compile_context>
chip_gen: v7x
topology: tpu7x:2x2x1
jax: 0.10.0
libtpu: 0.0.40
codegen_flags: <defaults>
</compile_context>

<pallas_src>
import jax
import jax.numpy as jnp
from jax import lax
from jax.experimental import pallas as pl
from jax.experimental.pallas import tpu as pltpu


# ------------------------------ fused kernel -------------------------------

def _even_odd_selectors(w_out, w_in):
    """(w_out, w_in) f32 matrices that gather even / odd columns (2x2 pool)."""
    r = lax.broadcasted_iota(jnp.int32, (w_out, w_in), 0)
    c = lax.broadcasted_iota(jnp.int32, (w_out, w_in), 1)
    return ((c == 2 * r).astype(jnp.float32),
            (c == 2 * r + 1).astype(jnp.float32))


def _make_fused_kernel(H, W):
    """Builds the whole-network kernel for an (H, W) input (multiples of 8)."""
    H1, W1 = H, W                  # conv1 output
    H2, W2 = H1 // 2, W1 // 2      # after pool1 (== conv2 output)
    H3, W3 = H2 // 2, W2 // 2      # after pool2 (== conv3 output)
    H4, W4 = H3 // 2, W3 // 2      # after pool3 (== conv4 output)

    def kernel(xc_ref,
               w1_ref, b1_ref, w2_ref, b2_ref,
               w3_ref, b3_ref, w4_ref, b4_ref,
               fw1_ref, fb1_ref, fw2_ref, fb2_ref,
               out_ref,
               xp2_ref, xp3_ref, xp4_ref):
        f32 = jnp.float32

        # Zero the padded scratch activations once per image: the untouched
        # 1-px border supplies the 'same' conv zero padding for stages 2-4.
        # (Re-zeroed every grid step so megacore partitioning stays correct.)
        xp2_ref[...] = jnp.zeros_like(xp2_ref)
        xp3_ref[...] = jnp.zeros_like(xp3_ref)
        xp4_ref[...] = jnp.zeros_like(xp4_ref)

        # Column-pair pooling selectors (hoisted out of the loops).
        s1e, s1o = _even_odd_selectors(W2, W1)
        s2e, s2o = _even_odd_selectors(W3, W2)
        s3e, s3o = _even_odd_selectors(W4, W3)

        def col_pool(m, se, so):
            return jnp.maximum(jnp.dot(se, m, preferred_element_type=f32),
                               jnp.dot(so, m, preferred_element_type=f32))

        def conv_pair(rows, w_ref, k, width, cout):
            """Two consecutive conv output rows sharing the k+1 input rows."""
            r0 = jnp.zeros((width, cout), f32)
            r1 = jnp.zeros((width, cout), f32)
            for dh in range(k):
                for dw in range(k):
                    wm = w_ref[dh * k + dw]                     # (cin, cout)
                    r0 = r0 + jnp.dot(rows[dh][dw:dw + width, :], wm,
                                      preferred_element_type=f32)
                    r1 = r1 + jnp.dot(rows[dh + 1][dw:dw + width, :], wm,
                                      preferred_element_type=f32)
            return r0, r1

        # ---- stage 1: conv 5x5 (3->16) via im2col + BN + ReLU + pool ------
        @pl.loop(0, H2)
        def _(ho):
            r0 = jnp.dot(xc_ref[2 * ho], w1_ref[...],
                         preferred_element_type=f32)             # (W1, 16)
            r1 = jnp.dot(xc_ref[2 * ho + 1], w1_ref[...],
                         preferred_element_type=f32)
            pooled = col_pool(jnp.maximum(r0, r1), s1e, s1o)     # (W2, 16)
            xp2_ref[1 + ho, pl.ds(1, W2), :] = jnp.maximum(
                pooled + b1_ref[...], 0.0)

        # ---- stage 2: conv 3x3 (16->32) + BN + ReLU + maxpool 2x2 ---------
        @pl.loop(0, H3)
        def _(ho):
            rows = [xp2_ref[2 * ho + j] for j in range(4)]       # (W2+2, 16)
            r0, r1 = conv_pair(rows, w2_ref, 3, W2, 32)
            pooled = col_pool(jnp.maximum(r0, r1), s2e, s2o)     # (W3, 32)
            xp3_ref[1 + ho, pl.ds(1, W3), :] = jnp.maximum(
                pooled + b2_ref[...], 0.0)

        # ---- stage 3: conv 3x3 (32->32) + BN + ReLU + maxpool 2x2 ---------
        @pl.loop(0, H4)
        def _(ho):
            rows = [xp3_ref[2 * ho + j] for j in range(4)]       # (W3+2, 32)
            r0, r1 = conv_pair(rows, w3_ref, 3, W3, 32)
            pooled = col_pool(jnp.maximum(r0, r1), s3e, s3o)     # (W4, 32)
            xp4_ref[1 + ho, pl.ds(1, W4), :] = jnp.maximum(
                pooled + b3_ref[...], 0.0)

        # ---- stage 4: conv 3x3 (32->64) + BN + ReLU + global max pool -----
        # bias-add and ReLU commute with max, so they are applied once after
        # the global spatial max.
        m4 = None
        for h in range(H4):
            rows = [xp4_ref[h + dh] for dh in range(3)]          # (W4+2, 32)
            acc = jnp.zeros((W4, 64), f32)
            for dh in range(3):
                for dw in range(3):
                    acc = acc + jnp.dot(rows[dh][dw:dw + W4, :],
                                        w4_ref[dh * 3 + dw],
                                        preferred_element_type=f32)
            m4 = acc if m4 is None else jnp.maximum(m4, acc)
        g = jnp.max(m4, axis=0, keepdims=True)                   # (1, 64)
        g = jnp.maximum(g + b4_ref[...], 0.0)

        # ---- head: Dropout(id) -> Linear(64->8) -> ReLU -> Dropout(id)
        #            -> Linear(8->2)
        h1 = jnp.maximum(
            jnp.dot(g, fw1_ref[...], preferred_element_type=f32) + fb1_ref[...],
            0.0)                                                 # (1, 8)
        out_ref[...] = (jnp.dot(h1, fw2_ref[...], preferred_element_type=f32)
                        + fb2_ref[...])                          # (1, 2)

    return kernel


# ------------------------------ glue / wrapper -----------------------------

def detection_network_pallas(x_nchw, params):
    N, C, H, W = x_nchw.shape
    assert C == 3 and H % 8 == 0 and W % 8 == 0, "expect (N, 3, 8k, 8m) input"

    # NCHW -> NHWC; zero-pad for the 5x5 'same' conv; wrapper-side im2col so
    # the in-kernel stem is one big MXU matmul per conv row.
    x = jnp.transpose(x_nchw, (0, 2, 3, 1)).astype(jnp.float32)
    xp = jnp.pad(x, ((0, 0), (2, 2), (2, 2), (0, 0)))
    patches = [xp[:, dh:dh + H, dw:dw + W, :]
               for dh in range(5) for dw in range(5)]
    x_cols = jnp.concatenate(patches, axis=-1)          # (N, H, W, 75)

    def fold(cname, bname, k, cin, cout, flat_k2=False):
        """Fold eval-mode BatchNorm (and the conv bias) into weight / bias."""
        w, b = params[cname]                   # (k, k, cin, cout), (cout,)
        gamma, beta, mean, var = params[bname]
        scale = gamma / jnp.sqrt(var + 1e-5)
        w_f = w * scale                        # scale into weight
        w_f = (w_f.reshape(k * k * cin, cout) if flat_k2
               else w_f.reshape(k * k, cin, cout))
        b_f = (beta + (b - mean) * scale).reshape(1, cout)
        return w_f, b_f

    w1, b1 = fold("conv1", "bn1", 5, 3, 16, flat_k2=True)   # (75, 16)
    w2, b2 = fold("conv2", "bn2", 3, 16, 32)                 # (9, 16, 32)
    w3, b3 = fold("conv3", "bn3", 3, 32, 32)
    w4, b4 = fold("conv4", "bn4", 3, 32, 64)
    fw1, fb1 = params["fc1"]
    fw2, fb2 = params["fc2"]
    fb1 = fb1.reshape(1, 8)
    fb2 = fb2.reshape(1, 2)

    H2, W2 = H // 2, W // 2
    H3, W3 = H // 4, W // 4
    H4, W4 = H // 8, W // 8

    consts = (w1, b1, w2, b2, w3, b3, w4, b4, fw1, fb1, fw2, fb2)

    def full_spec(a):
        nd = a.ndim
        return pl.BlockSpec(a.shape, lambda i, nd=nd: (0,) * nd)

    out = pl.pallas_call(
        _make_fused_kernel(H, W),
        out_shape=jax.ShapeDtypeStruct((N, 1, 2), jnp.float32),
        grid=(N,),
        in_specs=[pl.BlockSpec((None, H, W, 75), lambda i: (i, 0, 0, 0))]
                 + [full_spec(a) for a in consts],
        out_specs=pl.BlockSpec((None, 1, 2), lambda i: (i, 0, 0)),
        scratch_shapes=[
            pltpu.VMEM((H2 + 2, W2 + 2, 16), jnp.float32),   # padded stage-2 in
            pltpu.VMEM((H3 + 2, W3 + 2, 32), jnp.float32),   # padded stage-3 in
            pltpu.VMEM((H4 + 2, W4 + 2, 32), jnp.float32),   # padded stage-4 in
        ],
        compiler_params=pltpu.CompilerParams(
            dimension_semantics=("parallel",)),
    )(x_cols, *consts)
    return out.reshape(N, 2)


# --------------------------- params / reference ----------------------------

def init_params(key):
    keys = iter(jax.random.split(key, 40))

    def nrm(shape, s=0.1):
        return s * jax.random.normal(next(keys), shape, jnp.float32)

    def bn(c):
        gamma = 1.0 + nrm((c,), 0.1)
        beta = nrm((c,), 0.1)
        mean = nrm((c,), 0.1)
        var = 0.5 + jax.random.uniform(next(keys), (c,), jnp.float32)
        return gamma, beta, mean, var

    p = {}
    p["conv1"] = (nrm((5, 5, 3, 16)), nrm((16,)))
    p["bn1"] = bn(16)
    p["conv2"] = (nrm((3, 3, 16, 32)), nrm((32,)))
    p["bn2"] = bn(32)
    p["conv3"] = (nrm((3, 3, 32, 32)), nrm((32,)))
    p["bn3"] = bn(32)
    p["conv4"] = (nrm((3, 3, 32, 64)), nrm((64,)))
    p["bn4"] = bn(64)
    p["fc1"] = (nrm((64, 8)), nrm((8,)))
    p["fc2"] = (nrm((8, 2)), nrm((2,)))
    return p


def reference_forward(x_nchw, p):
    """Pure-JAX (XLA) reference for correctness checking."""
    x = jnp.transpose(x_nchw, (0, 2, 3, 1))

    def cbr(x, cname, bname, pad):
        w, b = p[cname]
        gamma, beta, mean, var = p[bname]
        y = lax.conv_general_dilated(
            x, w, (1, 1), [(pad, pad), (pad, pad)],
            dimension_numbers=("NHWC", "HWIO", "NHWC")) + b
        y = gamma * (y - mean) / jnp.sqrt(var + 1e-5) + beta
        return jnp.maximum(y, 0.0)

    def pool(x):
        return lax.reduce_window(x, -jnp.inf, lax.max,
                                 (1, 2, 2, 1), (1, 2, 2, 1), "VALID")

    x = pool(cbr(x, "conv1", "bn1", 2))
    x = pool(cbr(x, "conv2", "bn2", 1))
    x = pool(cbr(x, "conv3", "bn3", 1))
    x = cbr(x, "conv4", "bn4", 1)
    g = jnp.max(x, axis=(1, 2))               # AdaptiveMaxPool2d((1,1)) + flatten
    w1, b1 = p["fc1"]
    w2, b2 = p["fc2"]
    h = jnp.maximum(g @ w1 + b1, 0.0)
    return h @ w2 + b2


# ----------------------------------- main -----------------------------------

if __name__ == "__main__":
    key = jax.random.PRNGKey(0)
    kp, kx = jax.random.split(key)
    params = init_params(kp)

    # Same convention as the PyTorch module: NCHW input, 3 channels.
    x = jax.random.normal(kx, (2, 3, 32, 32), jnp.float32)

    out = jax.jit(detection_network_pallas)(x, params)
    out = jax.block_until_ready(out)
    assert out.shape == (2, 2) and out.dtype == jnp.float32

    ref = reference_forward(x, params)
    assert jnp.allclose(out, ref, atol=2e-2, rtol=2e-2), (out, ref)

    print("KERNEL_OK")
</pallas_src>

<mosaic_0001>
module attributes {stable_mosaic.version = 11 : i64} {
  func.func @kernel(%arg0: i32, %arg1: memref<1x32x32x75xf32, #tpu.memory_space<vmem>>, %arg2: memref<75x16xf32, #tpu.memory_space<vmem>>, %arg3: memref<1x16xf32, #tpu.memory_space<vmem>>, %arg4: memref<9x16x32xf32, #tpu.memory_space<vmem>>, %arg5: memref<1x32xf32, #tpu.memory_space<vmem>>, %arg6: memref<9x32x32xf32, #tpu.memory_space<vmem>>, %arg7: memref<1x32xf32, #tpu.memory_space<vmem>>, %arg8: memref<9x32x64xf32, #tpu.memory_space<vmem>>, %arg9: memref<1x64xf32, #tpu.memory_space<vmem>>, %arg10: memref<64x8xf32, #tpu.memory_space<vmem>>, %arg11: memref<1x8xf32, #tpu.memory_space<vmem>>, %arg12: memref<8x2xf32, #tpu.memory_space<vmem>>, %arg13: memref<1x2xf32, #tpu.memory_space<vmem>>, %arg14: memref<1x1x2xf32, #tpu.memory_space<vmem>>, %arg15: memref<18x18x16xf32, #tpu.memory_space<vmem>>, %arg16: memref<10x10x32xf32, #tpu.memory_space<vmem>>, %arg17: memref<6x6x32xf32, #tpu.memory_space<vmem>>) attributes {dimension_semantics = [#tpu.dimension_semantics<parallel>], iteration_bounds = array<i64: 2>, scalar_prefetch = 0 : i64, scratch_operands = 3 : i64, tpu.core_type = #tpu.core_type<tc>, window_params = [{transform_indices = @transform_0, window_bounds = array<i64: 1, 32, 32, 75>}, {pipeline_mode = #tpu.pipeline_mode<synchronous>, transform_indices = @transform_1, window_bounds = array<i64: 75, 16>}, {pipeline_mode = #tpu.pipeline_mode<synchronous>, transform_indices = @transform_2, window_bounds = array<i64: 1, 16>}, {pipeline_mode = #tpu.pipeline_mode<synchronous>, transform_indices = @transform_3, window_bounds = array<i64: 9, 16, 32>}, {pipeline_mode = #tpu.pipeline_mode<synchronous>, transform_indices = @transform_4, window_bounds = array<i64: 1, 32>}, {pipeline_mode = #tpu.pipeline_mode<synchronous>, transform_indices = @transform_5, window_bounds = array<i64: 9, 32, 32>}, {pipeline_mode = #tpu.pipeline_mode<synchronous>, transform_indices = @transform_6, window_bounds = array<i64: 1, 32>}, {pipeline_mode = #tpu.pipeline_mode<synchronous>, transform_indices = @transform_7, window_bounds = array<i64: 9, 32, 64>}, {pipeline_mode = #tpu.pipeline_mode<synchronous>, transform_indices = @transform_8, window_bounds = array<i64: 1, 64>}, {pipeline_mode = #tpu.pipeline_mode<synchronous>, transform_indices = @transform_9, window_bounds = array<i64: 64, 8>}, {pipeline_mode = #tpu.pipeline_mode<synchronous>, transform_indices = @transform_10, window_bounds = array<i64: 1, 8>}, {pipeline_mode = #tpu.pipeline_mode<synchronous>, transform_indices = @transform_11, window_bounds = array<i64: 8, 2>}, {pipeline_mode = #tpu.pipeline_mode<synchronous>, transform_indices = @transform_12, window_bounds = array<i64: 1, 2>}, {transform_indices = @transform_13, window_bounds = array<i64: 1, 1, 2>}]} {
    %cst = arith.constant 0.000000e+00 : f32
    %0 = vector.broadcast %cst : f32 to vector<18x18x16xf32>
    %c0 = arith.constant 0 : index
    %c0_0 = arith.constant 0 : index
    %c0_1 = arith.constant 0 : index
    %1 = vector.load %arg15[%c0, %c0_0, %c0_1] : memref<18x18x16xf32, #tpu.memory_space<vmem>>, vector<18x18x16xf32>
    tpu.vector_store %arg15[%c0, %c0_0, %c0_1], %0 {strides = array<i32>} : memref<18x18x16xf32, #tpu.memory_space<vmem>>, vector<18x18x16xf32>,
    %cst_2 = arith.constant 0.000000e+00 : f32
    %2 = vector.broadcast %cst_2 : f32 to vector<10x10x32xf32>
    %c0_3 = arith.constant 0 : index
    %c0_4 = arith.constant 0 : index
    %c0_5 = arith.constant 0 : index
    %3 = vector.load %arg16[%c0_3, %c0_4, %c0_5] : memref<10x10x32xf32, #tpu.memory_space<vmem>>, vector<10x10x32xf32>
    tpu.vector_store %arg16[%c0_3, %c0_4, %c0_5], %2 {strides = array<i32>} : memref<10x10x32xf32, #tpu.memory_space<vmem>>, vector<10x10x32xf32>,
    %cst_6 = arith.constant 0.000000e+00 : f32
    %4 = vector.broadcast %cst_6 : f32 to vector<6x6x32xf32>
    %c0_7 = arith.constant 0 : index
    %c0_8 = arith.constant 0 : index
    %c0_9 = arith.constant 0 : index
    %5 = vector.load %arg17[%c0_7, %c0_8, %c0_9] : memref<6x6x32xf32, #tpu.memory_space<vmem>>, vector<6x6x32xf32>
    tpu.vector_store %arg17[%c0_7, %c0_8, %c0_9], %4 {strides = array<i32>} : memref<6x6x32xf32, #tpu.memory_space<vmem>>, vector<6x6x32xf32>,
    %6 = tpu.iota {dimensions = array<i32: 0>} : vector<16x32xi32>
    %7 = tpu.iota {dimensions = array<i32: 1>} : vector<16x32xi32>
    %c2_i32 = arith.constant 2 : i32
    %8 = vector.broadcast %c2_i32 : i32 to vector<16x32xi32>
    %9 = arith.muli %8, %6 : vector<16x32xi32>
    %10 = arith.cmpi eq, %7, %9 : vector<16x32xi32>
    %11 = arith.extui %10 : vector<16x32xi1> to vector<16x32xi32>
    %12 = arith.sitofp %11 : vector<16x32xi32> to vector<16x32xf32>
    %c2_i32_10 = arith.constant 2 : i32
    %13 = vector.broadcast %c2_i32_10 : i32 to vector<16x32xi32>
    %14 = arith.muli %13, %6 : vector<16x32xi32>
    %c1_i32 = arith.constant 1 : i32
    %15 = vector.broadcast %c1_i32 : i32 to vector<16x32xi32>
    %16 = arith.addi %14, %15 : vector<16x32xi32>
    %17 = arith.cmpi eq, %7, %16 : vector<16x32xi32>
    %18 = arith.extui %17 : vector<16x32xi1> to vector<16x32xi32>
    %19 = arith.sitofp %18 : vector<16x32xi32> to vector<16x32xf32>
    %20 = tpu.iota {dimensions = array<i32: 0>} : vector<8x16xi32>
    %21 = tpu.iota {dimensions = array<i32: 1>} : vector<8x16xi32>
    %c2_i32_11 = arith.constant 2 : i32
    %22 = vector.broadcast %c2_i32_11 : i32 to vector<8x16xi32>
    %23 = arith.muli %22, %20 : vector<8x16xi32>
    %24 = arith.cmpi eq, %21, %23 : vector<8x16xi32>
    %25 = arith.extui %24 : vector<8x16xi1> to vector<8x16xi32>
    %26 = arith.sitofp %25 : vector<8x16xi32> to vector<8x16xf32>
    %c2_i32_12 = arith.constant 2 : i32
    %27 = vector.broadcast %c2_i32_12 : i32 to vector<8x16xi32>
    %28 = arith.muli %27, %20 : vector<8x16xi32>
    %c1_i32_13 = arith.constant 1 : i32
    %29 = vector.broadcast %c1_i32_13 : i32 to vector<8x16xi32>
    %30 = arith.addi %28, %29 : vector<8x16xi32>
    %31 = arith.cmpi eq, %21, %30 : vector<8x16xi32>
    %32 = arith.extui %31 : vector<8x16xi1> to vector<8x16xi32>
    %33 = arith.sitofp %32 : vector<8x16xi32> to vector<8x16xf32>
    %34 = tpu.iota {dimensions = array<i32: 0>} : vector<4x8xi32>
    %35 = tpu.iota {dimensions = array<i32: 1>} : vector<4x8xi32>
    %c2_i32_14 = arith.constant 2 : i32
    %36 = vector.broadcast %c2_i32_14 : i32 to vector<4x8xi32>
    %37 = arith.muli %36, %34 : vector<4x8xi32>
    %38 = arith.cmpi eq, %35, %37 : vector<4x8xi32>
    %39 = arith.extui %38 : vector<4x8xi1> to vector<4x8xi32>
    %40 = arith.sitofp %39 : vector<4x8xi32> to vector<4x8xf32>
    %c2_i32_15 = arith.constant 2 : i32
    %41 = vector.broadcast %c2_i32_15 : i32 to vector<4x8xi32>
    %42 = arith.muli %41, %34 : vector<4x8xi32>
    %c1_i32_16 = arith.constant 1 : i32
    %43 = vector.broadcast %c1_i32_16 : i32 to vector<4x8xi32>
    %44 = arith.addi %42, %43 : vector<4x8xi32>
    %45 = arith.cmpi eq, %35, %44 : vector<4x8xi32>
    %46 = arith.extui %45 : vector<4x8xi1> to vector<4x8xi32>
    %47 = arith.sitofp %46 : vector<4x8xi32> to vector<4x8xf32>
    %c0_i32 = arith.constant 0 : i32
    %c16_i32 = arith.constant 16 : i32
    %48 = arith.addi %c0_i32, %c16_i32 : i32
    %c1_i32_17 = arith.constant 1 : i32
    scf.for %arg18 = %c0_i32 to %48 step %c1_i32_17  : i32 {
      %c1_i32_219 = arith.constant 1 : i32
      %281 = arith.muli %arg18, %c1_i32_219 : i32
      %c0_i32_220 = arith.constant 0 : i32
      %282 = arith.addi %c0_i32_220, %281 : i32
      %c2_i32_221 = arith.constant 2 : i32
      %283 = arith.muli %c2_i32_221, %282 : i32
      %c0_222 = arith.constant 0 : index
      %284 = arith.index_cast %283 : i32 to index
      %c0_223 = arith.constant 0 : index
      %c0_224 = arith.constant 0 : index
      %285 = vector.load %arg1[%c0_222, %284, %c0_223, %c0_224] : memref<1x32x32x75xf32, #tpu.memory_space<vmem>>, vector<1x1x32x75xf32>
      %286 = vector.shape_cast %285 : vector<1x1x32x75xf32> to vector<32x75xf32>
      %c0_225 = arith.constant 0 : index
      %c0_226 = arith.constant 0 : index
      %287 = vector.load %arg2[%c0_225, %c0_226] : memref<75x16xf32, #tpu.memory_space<vmem>>, vector<75x16xf32>
      %cst_227 = arith.constant dense<0.000000e+00> : vector<32x16xf32>
      %288 = tpu.matmul %286, %287, %cst_227 {dimension_numbers = #tpu.dot_dimension_numbers<[1], [0], [0], [1], [0, 0, 1, 1], [], []>} : vector<32x75xf32>, vector<75x16xf32>, vector<32x16xf32> -> vector<32x16xf32>
      %c2_i32_228 = arith.constant 2 : i32
      %289 = arith.muli %c2_i32_228, %282 : i32
      %c1_i32_229 = arith.constant 1 : i32
      %290 = arith.addi %289, %c1_i32_229 : i32
      %c0_230 = arith.constant 0 : index
      %291 = arith.index_cast %290 : i32 to index
      %c0_231 = arith.constant 0 : index
      %c0_232 = arith.constant 0 : index
      %292 = vector.load %arg1[%c0_230, %291, %c0_231, %c0_232] : memref<1x32x32x75xf32, #tpu.memory_space<vmem>>, vector<1x1x32x75xf32>
      %293 = vector.shape_cast %292 : vector<1x1x32x75xf32> to vector<32x75xf32>
      %c0_233 = arith.constant 0 : index
      %c0_234 = arith.constant 0 : index
      %294 = vector.load %arg2[%c0_233, %c0_234] : memref<75x16xf32, #tpu.memory_space<vmem>>, vector<75x16xf32>
      %cst_235 = arith.constant dense<0.000000e+00> : vector<32x16xf32>
      %295 = tpu.matmul %293, %294, %cst_235 {dimension_numbers = #tpu.dot_dimension_numbers<[1], [0], [0], [1], [0, 0, 1, 1], [], []>} : vector<32x75xf32>, vector<75x16xf32>, vector<32x16xf32> -> vector<32x16xf32>
      %296 = arith.maximumf %288, %295 : vector<32x16xf32>
      %cst_236 = arith.constant dense<0.000000e+00> : vector<16x16xf32>
      %297 = tpu.matmul %12, %296, %cst_236 {dimension_numbers = #tpu.dot_dimension_numbers<[1], [0], [0], [1], [0, 0, 1, 1], [], []>} : vector<16x32xf32>, vector<32x16xf32>, vector<16x16xf32> -> vector<16x16xf32>
      %cst_237 = arith.constant dense<0.000000e+00> : vector<16x16xf32>
      %298 = tpu.matmul %19, %296, %cst_237 {dimension_numbers = #tpu.dot_dimension_numbers<[1], [0], [0], [1], [0, 0, 1, 1], [], []>} : vector<16x32xf32>, vector<32x16xf32>, vector<16x16xf32> -> vector<16x16xf32>
      %299 = arith.maximumf %297, %298 : vector<16x16xf32>
      %c0_238 = arith.constant 0 : index
      %c0_239 = arith.constant 0 : index
      %300 = vector.load %arg3[%c0_238, %c0_239] : memref<1x16xf32, #tpu.memory_space<vmem>>, vector<1x16xf32>
      %301 = vector.broadcast %300 : vector<1x16xf32> to vector<16x16xf32>
      %302 = arith.addf %299, %301 : vector<16x16xf32>
      %cst_240 = arith.constant 0.000000e+00 : f32
      %303 = vector.broadcast %cst_240 : f32 to vector<16x16xf32>
      %304 = arith.maximumf %302, %303 : vector<16x16xf32>
      %c1_i32_241 = arith.constant 1 : i32
      %305 = arith.addi %c1_i32_241, %282 : i32
      %306 = arith.index_cast %305 : i32 to index
      %c1_242 = arith.constant 1 : index
      %c0_243 = arith.constant 0 : index
      %307 = vector.load %arg15[%306, %c1_242, %c0_243] : memref<18x18x16xf32, #tpu.memory_space<vmem>>, vector<1x16x16xf32>
      %308 = vector.shape_cast %307 : vector<1x16x16xf32> to vector<16x16xf32>
      %309 = vector.shape_cast %304 : vector<16x16xf32> to vector<1x16x16xf32>
      tpu.vector_store %arg15[%306, %c1_242, %c0_243], %309 {strides = array<i32>} : memref<18x18x16xf32, #tpu.memory_space<vmem>>, vector<1x16x16xf32>,
    }
    %c16_i32_18 = arith.constant 16 : i32
    %c0_i32_19 = arith.constant 0 : i32
    %c8_i32 = arith.constant 8 : i32
    %49 = arith.addi %c0_i32_19, %c8_i32 : i32
    %c1_i32_20 = arith.constant 1 : i32
    scf.for %arg18 = %c0_i32_19 to %49 step %c1_i32_20  : i32 {
      %c1_i32_219 = arith.constant 1 : i32
      %281 = arith.muli %arg18, %c1_i32_219 : i32
      %c0_i32_220 = arith.constant 0 : i32
      %282 = arith.addi %c0_i32_220, %281 : i32
      %c2_i32_221 = arith.constant 2 : i32
      %283 = arith.muli %c2_i32_221, %282 : i32
      %c0_i32_222 = arith.constant 0 : i32
      %284 = arith.addi %283, %c0_i32_222 : i32
      %285 = arith.index_cast %284 : i32 to index
      %c0_223 = arith.constant 0 : index
      %c0_224 = arith.constant 0 : index
      %286 = vector.load %arg15[%285, %c0_223, %c0_224] : memref<18x18x16xf32, #tpu.memory_space<vmem>>, vector<1x18x16xf32>
      %287 = vector.shape_cast %286 : vector<1x18x16xf32> to vector<18x16xf32>
      %c2_i32_225 = arith.constant 2 : i32
      %288 = arith.muli %c2_i32_225, %282 : i32
      %c1_i32_226 = arith.constant 1 : i32
      %289 = arith.addi %288, %c1_i32_226 : i32
      %290 = arith.index_cast %289 : i32 to index
      %c0_227 = arith.constant 0 : index
      %c0_228 = arith.constant 0 : index
      %291 = vector.load %arg15[%290, %c0_227, %c0_228] : memref<18x18x16xf32, #tpu.memory_space<vmem>>, vector<1x18x16xf32>
      %292 = vector.shape_cast %291 : vector<1x18x16xf32> to vector<18x16xf32>
      %c2_i32_229 = arith.constant 2 : i32
      %293 = arith.muli %c2_i32_229, %282 : i32
      %c2_i32_230 = arith.constant 2 : i32
      %294 = arith.addi %293, %c2_i32_230 : i32
      %295 = arith.index_cast %294 : i32 to index
      %c0_231 = arith.constant 0 : index
      %c0_232 = arith.constant 0 : index
      %296 = vector.load %arg15[%295, %c0_231, %c0_232] : memref<18x18x16xf32, #tpu.memory_space<vmem>>, vector<1x18x16xf32>
      %297 = vector.shape_cast %296 : vector<1x18x16xf32> to vector<18x16xf32>
      %c2_i32_233 = arith.constant 2 : i32
      %298 = arith.muli %c2_i32_233, %282 : i32
      %c3_i32 = arith.constant 3 : i32
      %299 = arith.addi %298, %c3_i32 : i32
      %300 = arith.index_cast %299 : i32 to index
      %c0_234 = arith.constant 0 : index
      %c0_235 = arith.constant 0 : index
      %301 = vector.load %arg15[%300, %c0_234, %c0_235] : memref<18x18x16xf32, #tpu.memory_space<vmem>>, vector<1x18x16xf32>
      %302 = vector.shape_cast %301 : vector<1x18x16xf32> to vector<18x16xf32>
      %cst_236 = arith.constant 0.000000e+00 : f32
      %303 = vector.broadcast %cst_236 : f32 to vector<16x32xf32>
      %cst_237 = arith.constant 0.000000e+00 : f32
      %304 = vector.broadcast %cst_237 : f32 to vector<16x32xf32>
      %c0_238 = arith.constant 0 : index
      %c0_239 = arith.constant 0 : index
      %c0_240 = arith.constant 0 : index
      %305 = vector.load %arg4[%c0_238, %c0_239, %c0_240] : memref<9x16x32xf32, #tpu.memory_space<vmem>>, vector<1x16x32xf32>
      %306 = vector.shape_cast %305 : vector<1x16x32xf32> to vector<16x32xf32>
      %307 = vector.extract_strided_slice %287 {offsets = [0, 0], sizes = [16, 16], strides = [1, 1]} : vector<18x16xf32> to vector<16x16xf32>
      %cst_241 = arith.constant dense<0.000000e+00> : vector<16x32xf32>
      %308 = tpu.matmul %307, %306, %cst_241 {dimension_numbers = #tpu.dot_dimension_numbers<[1], [0], [0], [1], [0, 0, 1, 1], [], []>} : vector<16x16xf32>, vector<16x32xf32>, vector<16x32xf32> -> vector<16x32xf32>
      %309 = arith.addf %303, %308 : vector<16x32xf32>
      %310 = vector.extract_strided_slice %292 {offsets = [0, 0], sizes = [16, 16], strides = [1, 1]} : vector<18x16xf32> to vector<16x16xf32>
      %cst_242 = arith.constant dense<0.000000e+00> : vector<16x32xf32>
      %311 = tpu.matmul %310, %306, %cst_242 {dimension_numbers = #tpu.dot_dimension_numbers<[1], [0], [0], [1], [0, 0, 1, 1], [], []>} : vector<16x16xf32>, vector<16x32xf32>, vector<16x32xf32> -> vector<16x32xf32>
      %312 = arith.addf %304, %311 : vector<16x32xf32>
      %c1_243 = arith.constant 1 : index
      %c0_244 = arith.constant 0 : index
      %c0_245 = arith.constant 0 : index
      %313 = vector.load %arg4[%c1_243, %c0_244, %c0_245] : memref<9x16x32xf32, #tpu.memory_space<vmem>>, vector<1x16x32xf32>
      %314 = vector.shape_cast %313 : vector<1x16x32xf32> to vector<16x32xf32>
      %315 = vector.extract_strided_slice %287 {offsets = [1, 0], sizes = [16, 16], strides = [1, 1]} : vector<18x16xf32> to vector<16x16xf32>
      %cst_246 = arith.constant dense<0.000000e+00> : vector<16x32xf32>
      %316 = tpu.matmul %315, %314, %cst_246 {dimension_numbers = #tpu.dot_dimension_numbers<[1], [0], [0], [1], [0, 0, 1, 1], [], []>} : vector<16x16xf32>, vector<16x32xf32>, vector<16x32xf32> -> vector<16x32xf32>
      %317 = arith.addf %309, %316 : vector<16x32xf32>
      %318 = vector.extract_strided_slice %292 {offsets = [1, 0], sizes = [16, 16], strides = [1, 1]} : vector<18x16xf32> to vector<16x16xf32>
      %cst_247 = arith.constant dense<0.000000e+00> : vector<16x32xf32>
      %319 = tpu.matmul %318, %314, %cst_247 {dimension_numbers = #tpu.dot_dimension_numbers<[1], [0], [0], [1], [0, 0, 1, 1], [], []>} : vector<16x16xf32>, vector<16x32xf32>, vector<16x32xf32> -> vector<16x32xf32>
      %320 = arith.addf %312, %319 : vector<16x32xf32>
      %c2_248 = arith.constant 2 : index
      %c0_249 = arith.constant 0 : index
      %c0_250 = arith.constant 0 : index
      %321 = vector.load %arg4[%c2_248, %c0_249, %c0_250] : memref<9x16x32xf32, #tpu.memory_space<vmem>>, vector<1x16x32xf32>
      %322 = vector.shape_cast %321 : vector<1x16x32xf32> to vector<16x32xf32>
      %323 = vector.extract_strided_slice %287 {offsets = [2, 0], sizes = [16, 16], strides = [1, 1]} : vector<18x16xf32> to vector<16x16xf32>
      %cst_251 = arith.constant dense<0.000000e+00> : vector<16x32xf32>
      %324 = tpu.matmul %323, %322, %cst_251 {dimension_numbers = #tpu.dot_dimension_numbers<[1], [0], [0], [1], [0, 0, 1, 1], [], []>} : vector<16x16xf32>, vector<16x32xf32>, vector<16x32xf32> -> vector<16x32xf32>
      %325 = arith.addf %317, %324 : vector<16x32xf32>
      %326 = vector.extract_strided_slice %292 {offsets = [2, 0], sizes = [16, 16], strides = [1, 1]} : vector<18x16xf32> to vector<16x16xf32>
      %cst_252 = arith.constant dense<0.000000e+00> : vector<16x32xf32>
      %327 = tpu.matmul %326, %322, %cst_252 {dimension_numbers = #tpu.dot_dimension_numbers<[1], [0], [0], [1], [0, 0, 1, 1], [], []>} : vector<16x16xf32>, vector<16x32xf32>, vector<16x32xf32> -> vector<16x32xf32>
      %328 = arith.addf %320, %327 : vector<16x32xf32>
      %c3_253 = arith.constant 3 : index
      %c0_254 = arith.constant 0 : index
      %c0_255 = arith.constant 0 : index
      %329 = vector.load %arg4[%c3_253, %c0_254, %c0_255] : memref<9x16x32xf32, #tpu.memory_space<vmem>>, vector<1x16x32xf32>
      %330 = vector.shape_cast %329 : vector<1x16x32xf32> to vector<16x32xf32>
      %331 = vector.extract_strided_slice %292 {offsets = [0, 0], sizes = [16, 16], strides = [1, 1]} : vector<18x16xf32> to vector<16x16xf32>
      %cst_256 = arith.constant dense<0.000000e+00> : vector<16x32xf32>
      %332 = tpu.matmul %331, %330, %cst_256 {dimension_numbers = #tpu.dot_dimension_numbers<[1], [0], [0], [1], [0, 0, 1, 1], [], []>} : vector<16x16xf32>, vector<16x32xf32>, vector<16x32xf32> -> vector<16x32xf32>
      %333 = arith.addf %325, %332 : vector<16x32xf32>
      %334 = vector.extract_strided_slice %297 {offsets = [0, 0], sizes = [16, 16], strides = [1, 1]} : vector<18x16xf32> to vector<16x16xf32>
      %cst_257 = arith.constant dense<0.000000e+00> : vector<16x32xf32>
      %335 = tpu.matmul %334, %330, %cst_257 {dimension_numbers = #tpu.dot_dimension_numbers<[1], [0], [0], [1], [0, 0, 1, 1], [], []>} : vector<16x16xf32>, vector<16x32xf32>, vector<16x32xf32> -> vector<16x32xf32>
      %336 = arith.addf %328, %335 : vector<16x32xf32>
      %c4_258 = arith.constant 4 : index
      %c0_259 = arith.constant 0 : index
      %c0_260 = arith.constant 0 : index
      %337 = vector.load %arg4[%c4_258, %c0_259, %c0_260] : memref<9x16x32xf32, #tpu.memory_space<vmem>>, vector<1x16x32xf32>
      %338 = vector.shape_cast %337 : vector<1x16x32xf32> to vector<16x32xf32>
      %339 = vector.extract_strided_slice %292 {offsets = [1, 0], sizes = [16, 16], strides = [1, 1]} : vector<18x16xf32> to vector<16x16xf32>
      %cst_261 = arith.constant dense<0.000000e+00> : vector<16x32xf32>
      %340 = tpu.matmul %339, %338, %cst_261 {dimension_numbers = #tpu.dot_dimension_numbers<[1], [0], [0], [1], [0, 0, 1, 1], [], []>} : vector<16x16xf32>, vector<16x32xf32>, vector<16x32xf32> -> vector<16x32xf32>
      %341 = arith.addf %333, %340 : vector<16x32xf32>
      %342 = vector.extract_strided_slice %297 {offsets = [1, 0], sizes = [16, 16], strides = [1, 1]} : vector<18x16xf32> to vector<16x16xf32>
      %cst_262 = arith.constant dense<0.000000e+00> : vector<16x32xf32>
      %343 = tpu.matmul %342, %338, %cst_262 {dimension_numbers = #tpu.dot_dimension_numbers<[1], [0], [0], [1], [0, 0, 1, 1], [], []>} : vector<16x16xf32>, vector<16x32xf32>, vector<16x32xf32> -> vector<16x32xf32>
      %344 = arith.addf %336, %343 : vector<16x32xf32>
      %c5_263 = arith.constant 5 : index
      %c0_264 = arith.constant 0 : index
      %c0_265 = arith.constant 0 : index
      %345 = vector.load %arg4[%c5_263, %c0_264, %c0_265] : memref<9x16x32xf32, #tpu.memory_space<vmem>>, vector<1x16x32xf32>
      %346 = vector.shape_cast %345 : vector<1x16x32xf32> to vector<16x32xf32>
      %347 = vector.extract_strided_slice %292 {offsets = [2, 0], sizes = [16, 16], strides = [1, 1]} : vector<18x16xf32> to vector<16x16xf32>
      %cst_266 = arith.constant dense<0.000000e+00> : vector<16x32xf32>
      %348 = tpu.matmul %347, %346, %cst_266 {dimension_numbers = #tpu.dot_dimension_numbers<[1], [0], [0], [1], [0, 0, 1, 1], [], []>} : vector<16x16xf32>, vector<16x32xf32>, vector<16x32xf32> -> vector<16x32xf32>
      %349 = arith.addf %341, %348 : vector<16x32xf32>
      %350 = vector.extract_strided_slice %297 {offsets = [2, 0], sizes = [16, 16], strides = [1, 1]} : vector<18x16xf32> to vector<16x16xf32>
      %cst_267 = arith.constant dense<0.000000e+00> : vector<16x32xf32>
      %351 = tpu.matmul %350, %346, %cst_267 {dimension_numbers = #tpu.dot_dimension_numbers<[1], [0], [0], [1], [0, 0, 1, 1], [], []>} : vector<16x16xf32>, vector<16x32xf32>, vector<16x32xf32> -> vector<16x32xf32>
      %352 = arith.addf %344, %351 : vector<16x32xf32>
      %c6_268 = arith.constant 6 : index
      %c0_269 = arith.constant 0 : index
      %c0_270 = arith.constant 0 : index
      %353 = vector.load %arg4[%c6_268, %c0_269, %c0_270] : memref<9x16x32xf32, #tpu.memory_space<vmem>>, vector<1x16x32xf32>
      %354 = vector.shape_cast %353 : vector<1x16x32xf32> to vector<16x32xf32>
      %355 = vector.extract_strided_slice %297 {offsets = [0, 0], sizes = [16, 16], strides = [1, 1]} : vector<18x16xf32> to vector<16x16xf32>
      %cst_271 = arith.constant dense<0.000000e+00> : vector<16x32xf32>
      %356 = tpu.matmul %355, %354, %cst_271 {dimension_numbers = #tpu.dot_dimension_numbers<[1], [0], [0], [1], [0, 0, 1, 1], [], []>} : vector<16x16xf32>, vector<16x32xf32>, vector<16x32xf32> -> vector<16x32xf32>
      %357 = arith.addf %349, %356 : vector<16x32xf32>
      %358 = vector.extract_strided_slice %302 {offsets = [0, 0], sizes = [16, 16], strides = [1, 1]} : vector<18x16xf32> to vector<16x16xf32>
      %cst_272 = arith.constant dense<0.000000e+00> : vector<16x32xf32>
      %359 = tpu.matmul %358, %354, %cst_272 {dimension_numbers = #tpu.dot_dimension_numbers<[1], [0], [0], [1], [0, 0, 1, 1], [], []>} : vector<16x16xf32>, vector<16x32xf32>, vector<16x32xf32> -> vector<16x32xf32>
      %360 = arith.addf %352, %359 : vector<16x32xf32>
      %c7_273 = arith.constant 7 : index
      %c0_274 = arith.constant 0 : index
      %c0_275 = arith.constant 0 : index
      %361 = vector.load %arg4[%c7_273, %c0_274, %c0_275] : memref<9x16x32xf32, #tpu.memory_space<vmem>>, vector<1x16x32xf32>
      %362 = vector.shape_cast %361 : vector<1x16x32xf32> to vector<16x32xf32>
      %363 = vector.extract_strided_slice %297 {offsets = [1, 0], sizes = [16, 16], strides = [1, 1]} : vector<18x16xf32> to vector<16x16xf32>
      %cst_276 = arith.constant dense<0.000000e+00> : vector<16x32xf32>
      %364 = tpu.matmul %363, %362, %cst_276 {dimension_numbers = #tpu.dot_dimension_numbers<[1], [0], [0], [1], [0, 0, 1, 1], [], []>} : vector<16x16xf32>, vector<16x32xf32>, vector<16x32xf32> -> vector<16x32xf32>
      %365 = arith.addf %357, %364 : vector<16x32xf32>
      %366 = vector.extract_strided_slice %302 {offsets = [1, 0], sizes = [16, 16], strides = [1, 1]} : vector<18x16xf32> to vector<16x16xf32>
      %cst_277 = arith.constant dense<0.000000e+00> : vector<16x32xf32>
      %367 = tpu.matmul %366, %362, %cst_277 {dimension_numbers = #tpu.dot_dimension_numbers<[1], [0], [0], [1], [0, 0, 1, 1], [], []>} : vector<16x16xf32>, vector<16x32xf32>, vector<16x32xf32> -> vector<16x32xf32>
      %368 = arith.addf %360, %367 : vector<16x32xf32>
      %c8_278 = arith.constant 8 : index
      %c0_279 = arith.constant 0 : index
      %c0_280 = arith.constant 0 : index
      %369 = vector.load %arg4[%c8_278, %c0_279, %c0_280] : memref<9x16x32xf32, #tpu.memory_space<vmem>>, vector<1x16x32xf32>
      %370 = vector.shape_cast %369 : vector<1x16x32xf32> to vector<16x32xf32>
      %371 = vector.extract_strided_slice %297 {offsets = [2, 0], sizes = [16, 16], strides = [1, 1]} : vector<18x16xf32> to vector<16x16xf32>
      %cst_281 = arith.constant dense<0.000000e+00> : vector<16x32xf32>
      %372 = tpu.matmul %371, %370, %cst_281 {dimension_numbers = #tpu.dot_dimension_numbers<[1], [0], [0], [1], [0, 0, 1, 1], [], []>} : vector<16x16xf32>, vector<16x32xf32>, vector<16x32xf32> -> vector<16x32xf32>
      %373 = arith.addf %365, %372 : vector<16x32xf32>
      %374 = vector.extract_strided_slice %302 {offsets = [2, 0], sizes = [16, 16], strides = [1, 1]} : vector<18x16xf32> to vector<16x16xf32>
      %cst_282 = arith.constant dense<0.000000e+00> : vector<16x32xf32>
      %375 = tpu.matmul %374, %370, %cst_282 {dimension_numbers = #tpu.dot_dimension_numbers<[1], [0], [0], [1], [0, 0, 1, 1], [], []>} : vector<16x16xf32>, vector<16x32xf32>, vector<16x32xf32> -> vector<16x32xf32>
      %376 = arith.addf %368, %375 : vector<16x32xf32>
      %377 = arith.maximumf %373, %376 : vector<16x32xf32>
      %cst_283 = arith.constant dense<0.000000e+00> : vector<8x32xf32>
      %378 = tpu.matmul %26, %377, %cst_283 {dimension_numbers = #tpu.dot_dimension_numbers<[1], [0], [0], [1], [0, 0, 1, 1], [], []>} : vector<8x16xf32>, vector<16x32xf32>, vector<8x32xf32> -> vector<8x32xf32>
      %cst_284 = arith.constant dense<0.000000e+00> : vector<8x32xf32>
      %379 = tpu.matmul %33, %377, %cst_284 {dimension_numbers = #tpu.dot_dimension_numbers<[1], [0], [0], [1], [0, 0, 1, 1], [], []>} : vector<8x16xf32>, vector<16x32xf32>, vector<8x32xf32> -> vector<8x32xf32>
      %380 = arith.maximumf %378, %379 : vector<8x32xf32>
      %c0_285 = arith.constant 0 : index
      %c0_286 = arith.constant 0 : index
      %381 = vector.load %arg5[%c0_285, %c0_286] : memref<1x32xf32, #tpu.memory_space<vmem>>, vector<1x32xf32>
      %382 = vector.broadcast %381 : vector<1x32xf32> to vector<8x32xf32>
      %383 = arith.addf %380, %382 : vector<8x32xf32>
      %cst_287 = arith.constant 0.000000e+00 : f32
      %384 = vector.broadcast %cst_287 : f32 to vector<8x32xf32>
      %385 = arith.maximumf %383, %384 : vector<8x32xf32>
      %c1_i32_288 = arith.constant 1 : i32
      %386 = arith.addi %c1_i32_288, %282 : i32
      %387 = arith.index_cast %386 : i32 to index
      %c1_289 = arith.constant 1 : index
      %c0_290 = arith.constant 0 : index
      %388 = vector.load %arg16[%387, %c1_289, %c0_290] : memref<10x10x32xf32, #tpu.memory_space<vmem>>, vector<1x8x32xf32>
      %389 = vector.shape_cast %388 : vector<1x8x32xf32> to vector<8x32xf32>
      %390 = vector.shape_cast %385 : vector<8x32xf32> to vector<1x8x32xf32>
      tpu.vector_store %arg16[%387, %c1_289, %c0_290], %390 {strides = array<i32>} : memref<10x10x32xf32, #tpu.memory_space<vmem>>, vector<1x8x32xf32>,
    }
    %c8_i32_21 = arith.constant 8 : i32
    %c0_i32_22 = arith.constant 0 : i32
    %c4_i32 = arith.constant 4 : i32
    %50 = arith.addi %c0_i32_22, %c4_i32 : i32
    %c1_i32_23 = arith.constant 1 : i32
    scf.for %arg18 = %c0_i32_22 to %50 step %c1_i32_23  : i32 {
      %c1_i32_219 = arith.constant 1 : i32
      %281 = arith.muli %arg18, %c1_i32_219 : i32
      %c0_i32_220 = arith.constant 0 : i32
      %282 = arith.addi %c0_i32_220, %281 : i32
      %c2_i32_221 = arith.constant 2 : i32
      %283 = arith.muli %c2_i32_221, %282 : i32
      %c0_i32_222 = arith.constant 0 : i32
      %284 = arith.addi %283, %c0_i32_222 : i32
      %285 = arith.index_cast %284 : i32 to index
      %c0_223 = arith.constant 0 : index
      %c0_224 = arith.constant 0 : index
      %286 = vector.load %arg16[%285, %c0_223, %c0_224] : memref<10x10x32xf32, #tpu.memory_space<vmem>>, vector<1x10x32xf32>
      %287 = vector.shape_cast %286 : vector<1x10x32xf32> to vector<10x32xf32>
      %c2_i32_225 = arith.constant 2 : i32
      %288 = arith.muli %c2_i32_225, %282 : i32
      %c1_i32_226 = arith.constant 1 : i32
      %289 = arith.addi %288, %c1_i32_226 : i32
      %290 = arith.index_cast %289 : i32 to index
      %c0_227 = arith.constant 0 : index
      %c0_228 = arith.constant 0 : index
      %291 = vector.load %arg16[%290, %c0_227, %c0_228] : memref<10x10x32xf32, #tpu.memory_space<vmem>>, vector<1x10x32xf32>
      %292 = vector.shape_cast %291 : vector<1x10x32xf32> to vector<10x32xf32>
      %c2_i32_229 = arith.constant 2 : i32
      %293 = arith.muli %c2_i32_229, %282 : i32
      %c2_i32_230 = arith.constant 2 : i32
      %294 = arith.addi %293, %c2_i32_230 : i32
      %295 = arith.index_cast %294 : i32 to index
      %c0_231 = arith.constant 0 : index
      %c0_232 = arith.constant 0 : index
      %296 = vector.load %arg16[%295, %c0_231, %c0_232] : memref<10x10x32xf32, #tpu.memory_space<vmem>>, vector<1x10x32xf32>
      %297 = vector.shape_cast %296 : vector<1x10x32xf32> to vector<10x32xf32>
      %c2_i32_233 = arith.constant 2 : i32
      %298 = arith.muli %c2_i32_233, %282 : i32
      %c3_i32 = arith.constant 3 : i32
      %299 = arith.addi %298, %c3_i32 : i32
      %300 = arith.index_cast %299 : i32 to index
      %c0_234 = arith.constant 0 : index
      %c0_235 = arith.constant 0 : index
      %301 = vector.load %arg16[%300, %c0_234, %c0_235] : memref<10x10x32xf32, #tpu.memory_space<vmem>>, vector<1x10x32xf32>
      %302 = vector.shape_cast %301 : vector<1x10x32xf32> to vector<10x32xf32>
      %cst_236 = arith.constant 0.000000e+00 : f32
      %303 = vector.broadcast %cst_236 : f32 to vector<8x32xf32>
      %cst_237 = arith.constant 0.000000e+00 : f32
      %304 = vector.broadcast %cst_237 : f32 to vector<8x32xf32>
      %c0_238 = arith.constant 0 : index
      %c0_239 = arith.constant 0 : index
      %c0_240 = arith.constant 0 : index
      %305 = vector.load %arg6[%c0_238, %c0_239, %c0_240] : memref<9x32x32xf32, #tpu.memory_space<vmem>>, vector<1x32x32xf32>
      %306 = vector.shape_cast %305 : vector<1x32x32xf32> to vector<32x32xf32>
      %307 = vector.extract_strided_slice %287 {offsets = [0, 0], sizes = [8, 32], strides = [1, 1]} : vector<10x32xf32> to vector<8x32xf32>
      %cst_241 = arith.constant dense<0.000000e+00> : vector<8x32xf32>
      %308 = tpu.matmul %307, %306, %cst_241 {dimension_numbers = #tpu.dot_dimension_numbers<[1], [0], [0], [1], [0, 0, 1, 1], [], []>} : vector<8x32xf32>, vector<32x32xf32>, vector<8x32xf32> -> vector<8x32xf32>
      %309 = arith.addf %303, %308 : vector<8x32xf32>
      %310 = vector.extract_strided_slice %292 {offsets = [0, 0], sizes = [8, 32], strides = [1, 1]} : vector<10x32xf32> to vector<8x32xf32>
      %cst_242 = arith.constant dense<0.000000e+00> : vector<8x32xf32>
      %311 = tpu.matmul %310, %306, %cst_242 {dimension_numbers = #tpu.dot_dimension_numbers<[1], [0], [0], [1], [0, 0, 1, 1], [], []>} : vector<8x32xf32>, vector<32x32xf32>, vector<8x32xf32> -> vector<8x32xf32>
      %312 = arith.addf %304, %311 : vector<8x32xf32>
      %c1_243 = arith.constant 1 : index
      %c0_244 = arith.constant 0 : index
      %c0_245 = arith.constant 0 : index
      %313 = vector.load %arg6[%c1_243, %c0_244, %c0_245] : memref<9x32x32xf32, #tpu.memory_space<vmem>>, vector<1x32x32xf32>
      %314 = vector.shape_cast %313 : vector<1x32x32xf32> to vector<32x32xf32>
      %315 = vector.extract_strided_slice %287 {offsets = [1, 0], sizes = [8, 32], strides = [1, 1]} : vector<10x32xf32> to vector<8x32xf32>
      %cst_246 = arith.constant dense<0.000000e+00> : vector<8x32xf32>
      %316 = tpu.matmul %315, %314, %cst_246 {dimension_numbers = #tpu.dot_dimension_numbers<[1], [0], [0], [1], [0, 0, 1, 1], [], []>} : vector<8x32xf32>, vector<32x32xf32>, vector<8x32xf32> -> vector<8x32xf32>
      %317 = arith.addf %309, %316 : vector<8x32xf32>
      %318 = vector.extract_strided_slice %292 {offsets = [1, 0], sizes = [8, 32], strides = [1, 1]} : vector<10x32xf32> to vector<8x32xf32>
      %cst_247 = arith.constant dense<0.000000e+00> : vector<8x32xf32>
      %319 = tpu.matmul %318, %314, %cst_247 {dimension_numbers = #tpu.dot_dimension_numbers<[1], [0], [0], [1], [0, 0, 1, 1], [], []>} : vector<8x32xf32>, vector<32x32xf32>, vector<8x32xf32> -> vector<8x32xf32>
      %320 = arith.addf %312, %319 : vector<8x32xf32>
      %c2_248 = arith.constant 2 : index
      %c0_249 = arith.constant 0 : index
      %c0_250 = arith.constant 0 : index
      %321 = vector.load %arg6[%c2_248, %c0_249, %c0_250] : memref<9x32x32xf32, #tpu.memory_space<vmem>>, vector<1x32x32xf32>
      %322 = vector.shape_cast %321 : vector<1x32x32xf32> to vector<32x32xf32>
      %323 = vector.extract_strided_slice %287 {offsets = [2, 0], sizes = [8, 32], strides = [1, 1]} : vector<10x32xf32> to vector<8x32xf32>
      %cst_251 = arith.constant dense<0.000000e+00> : vector<8x32xf32>
      %324 = tpu.matmul %323, %322, %cst_251 {dimension_numbers = #tpu.dot_dimension_numbers<[1], [0], [0], [1], [0, 0, 1, 1], [], []>} : vector<8x32xf32>, vector<32x32xf32>, vector<8x32xf32> -> vector<8x32xf32>
      %325 = arith.addf %317, %324 : vector<8x32xf32>
      %326 = vector.extract_strided_slice %292 {offsets = [2, 0], sizes = [8, 32], strides = [1, 1]} : vector<10x32xf32> to vector<8x32xf32>
      %cst_252 = arith.constant dense<0.000000e+00> : vector<8x32xf32>
      %327 = tpu.matmul %326, %322, %cst_252 {dimension_numbers = #tpu.dot_dimension_numbers<[1], [0], [0], [1], [0, 0, 1, 1], [], []>} : vector<8x32xf32>, vector<32x32xf32>, vector<8x32xf32> -> vector<8x32xf32>
      %328 = arith.addf %320, %327 : vector<8x32xf32>
      %c3_253 = arith.constant 3 : index
      %c0_254 = arith.constant 0 : index
      %c0_255 = arith.constant 0 : index
      %329 = vector.load %arg6[%c3_253, %c0_254, %c0_255] : memref<9x32x32xf32, #tpu.memory_space<vmem>>, vector<1x32x32xf32>
      %330 = vector.shape_cast %329 : vector<1x32x32xf32> to vector<32x32xf32>
      %331 = vector.extract_strided_slice %292 {offsets = [0, 0], sizes = [8, 32], strides = [1, 1]} : vector<10x32xf32> to vector<8x32xf32>
      %cst_256 = arith.constant dense<0.000000e+00> : vector<8x32xf32>
      %332 = tpu.matmul %331, %330, %cst_256 {dimension_numbers = #tpu.dot_dimension_numbers<[1], [0], [0], [1], [0, 0, 1, 1], [], []>} : vector<8x32xf32>, vector<32x32xf32>, vector<8x32xf32> -> vector<8x32xf32>
      %333 = arith.addf %325, %332 : vector<8x32xf32>
      %334 = vector.extract_strided_slice %297 {offsets = [0, 0], sizes = [8, 32], strides = [1, 1]} : vector<10x32xf32> to vector<8x32xf32>
      %cst_257 = arith.constant dense<0.000000e+00> : vector<8x32xf32>
      %335 = tpu.matmul %334, %330, %cst_257 {dimension_numbers = #tpu.dot_dimension_numbers<[1], [0], [0], [1], [0, 0, 1, 1], [], []>} : vector<8x32xf32>, vector<32x32xf32>, vector<8x32xf32> -> vector<8x32xf32>
      %336 = arith.addf %328, %335 : vector<8x32xf32>
      %c4_258 = arith.constant 4 : index
      %c0_259 = arith.constant 0 : index
      %c0_260 = arith.constant 0 : index
      %337 = vector.load %arg6[%c4_258, %c0_259, %c0_260] : memref<9x32x32xf32, #tpu.memory_space<vmem>>, vector<1x32x32xf32>
      %338 = vector.shape_cast %337 : vector<1x32x32xf32> to vector<32x32xf32>
      %339 = vector.extract_strided_slice %292 {offsets = [1, 0], sizes = [8, 32], strides = [1, 1]} : vector<10x32xf32> to vector<8x32xf32>
      %cst_261 = arith.constant dense<0.000000e+00> : vector<8x32xf32>
      %340 = tpu.matmul %339, %338, %cst_261 {dimension_numbers = #tpu.dot_dimension_numbers<[1], [0], [0], [1], [0, 0, 1, 1], [], []>} : vector<8x32xf32>, vector<32x32xf32>, vector<8x32xf32> -> vector<8x32xf32>
      %341 = arith.addf %333, %340 : vector<8x32xf32>
      %342 = vector.extract_strided_slice %297 {offsets = [1, 0], sizes = [8, 32], strides = [1, 1]} : vector<10x32xf32> to vector<8x32xf32>
      %cst_262 = arith.constant dense<0.000000e+00> : vector<8x32xf32>
      %343 = tpu.matmul %342, %338, %cst_262 {dimension_numbers = #tpu.dot_dimension_numbers<[1], [0], [0], [1], [0, 0, 1, 1], [], []>} : vector<8x32xf32>, vector<32x32xf32>, vector<8x32xf32> -> vector<8x32xf32>
      %344 = arith.addf %336, %343 : vector<8x32xf32>
      %c5_263 = arith.constant 5 : index
      %c0_264 = arith.constant 0 : index
      %c0_265 = arith.constant 0 : index
      %345 = vector.load %arg6[%c5_263, %c0_264, %c0_265] : memref<9x32x32xf32, #tpu.memory_space<vmem>>, vector<1x32x32xf32>
      %346 = vector.shape_cast %345 : vector<1x32x32xf32> to vector<32x32xf32>
      %347 = vector.extract_strided_slice %292 {offsets = [2, 0], sizes = [8, 32], strides = [1, 1]} : vector<10x32xf32> to vector<8x32xf32>
      %cst_266 = arith.constant dense<0.000000e+00> : vector<8x32xf32>
      %348 = tpu.matmul %347, %346, %cst_266 {dimension_numbers = #tpu.dot_dimension_numbers<[1], [0], [0], [1], [0, 0, 1, 1], [], []>} : vector<8x32xf32>, vector<32x32xf32>, vector<8x32xf32> -> vector<8x32xf32>
      %349 = arith.addf %341, %348 : vector<8x32xf32>
      %350 = vector.extract_strided_slice %297 {offsets = [2, 0], sizes = [8, 32], strides = [1, 1]} : vector<10x32xf32> to vector<8x32xf32>
      %cst_267 = arith.constant dense<0.000000e+00> : vector<8x32xf32>
      %351 = tpu.matmul %350, %346, %cst_267 {dimension_numbers = #tpu.dot_dimension_numbers<[1], [0], [0], [1], [0, 0, 1, 1], [], []>} : vector<8x32xf32>, vector<32x32xf32>, vector<8x32xf32> -> vector<8x32xf32>
      %352 = arith.addf %344, %351 : vector<8x32xf32>
      %c6_268 = arith.constant 6 : index
      %c0_269 = arith.constant 0 : index
      %c0_270 = arith.constant 0 : index
      %353 = vector.load %arg6[%c6_268, %c0_269, %c0_270] : memref<9x32x32xf32, #tpu.memory_space<vmem>>, vector<1x32x32xf32>
      %354 = vector.shape_cast %353 : vector<1x32x32xf32> to vector<32x32xf32>
      %355 = vector.extract_strided_slice %297 {offsets = [0, 0], sizes = [8, 32], strides = [1, 1]} : vector<10x32xf32> to vector<8x32xf32>
      %cst_271 = arith.constant dense<0.000000e+00> : vector<8x32xf32>
      %356 = tpu.matmul %355, %354, %cst_271 {dimension_numbers = #tpu.dot_dimension_numbers<[1], [0], [0], [1], [0, 0, 1, 1], [], []>} : vector<8x32xf32>, vector<32x32xf32>, vector<8x32xf32> -> vector<8x32xf32>
      %357 = arith.addf %349, %356 : vector<8x32xf32>
      %358 = vector.extract_strided_slice %302 {offsets = [0, 0], sizes = [8, 32], strides = [1, 1]} : vector<10x32xf32> to vector<8x32xf32>
      %cst_272 = arith.constant dense<0.000000e+00> : vector<8x32xf32>
      %359 = tpu.matmul %358, %354, %cst_272 {dimension_numbers = #tpu.dot_dimension_numbers<[1], [0], [0], [1], [0, 0, 1, 1], [], []>} : vector<8x32xf32>, vector<32x32xf32>, vector<8x32xf32> -> vector<8x32xf32>
      %360 = arith.addf %352, %359 : vector<8x32xf32>
      %c7_273 = arith.constant 7 : index
      %c0_274 = arith.constant 0 : index
      %c0_275 = arith.constant 0 : index
      %361 = vector.load %arg6[%c7_273, %c0_274, %c0_275] : memref<9x32x32xf32, #tpu.memory_space<vmem>>, vector<1x32x32xf32>
      %362 = vector.shape_cast %361 : vector<1x32x32xf32> to vector<32x32xf32>
      %363 = vector.extract_strided_slice %297 {offsets = [1, 0], sizes = [8, 32], strides = [1, 1]} : vector<10x32xf32> to vector<8x32xf32>
      %cst_276 = arith.constant dense<0.000000e+00> : vector<8x32xf32>
      %364 = tpu.matmul %363, %362, %cst_276 {dimension_numbers = #tpu.dot_dimension_numbers<[1], [0], [0], [1], [0, 0, 1, 1], [], []>} : vector<8x32xf32>, vector<32x32xf32>, vector<8x32xf32> -> vector<8x32xf32>
      %365 = arith.addf %357, %364 : vector<8x32xf32>
      %366 = vector.extract_strided_slice %302 {offsets = [1, 0], sizes = [8, 32], strides = [1, 1]} : vector<10x32xf32> to vector<8x32xf32>
      %cst_277 = arith.constant dense<0.000000e+00> : vector<8x32xf32>
      %367 = tpu.matmul %366, %362, %cst_277 {dimension_numbers = #tpu.dot_dimension_numbers<[1], [0], [0], [1], [0, 0, 1, 1], [], []>} : vector<8x32xf32>, vector<32x32xf32>, vector<8x32xf32> -> vector<8x32xf32>
      %368 = arith.addf %360, %367 : vector<8x32xf32>
      %c8_278 = arith.constant 8 : index
      %c0_279 = arith.constant 0 : index
      %c0_280 = arith.constant 0 : index
      %369 = vector.load %arg6[%c8_278, %c0_279, %c0_280] : memref<9x32x32xf32, #tpu.memory_space<vmem>>, vector<1x32x32xf32>
      %370 = vector.shape_cast %369 : vector<1x32x32xf32> to vector<32x32xf32>
      %371 = vector.extract_strided_slice %297 {offsets = [2, 0], sizes = [8, 32], strides = [1, 1]} : vector<10x32xf32> to vector<8x32xf32>
      %cst_281 = arith.constant dense<0.000000e+00> : vector<8x32xf32>
      %372 = tpu.matmul %371, %370, %cst_281 {dimension_numbers = #tpu.dot_dimension_numbers<[1], [0], [0], [1], [0, 0, 1, 1], [], []>} : vector<8x32xf32>, vector<32x32xf32>, vector<8x32xf32> -> vector<8x32xf32>
      %373 = arith.addf %365, %372 : vector<8x32xf32>
      %374 = vector.extract_strided_slice %302 {offsets = [2, 0], sizes = [8, 32], strides = [1, 1]} : vector<10x32xf32> to vector<8x32xf32>
      %cst_282 = arith.constant dense<0.000000e+00> : vector<8x32xf32>
      %375 = tpu.matmul %374, %370, %cst_282 {dimension_numbers = #tpu.dot_dimension_numbers<[1], [0], [0], [1], [0, 0, 1, 1], [], []>} : vector<8x32xf32>, vector<32x32xf32>, vector<8x32xf32> -> vector<8x32xf32>
      %376 = arith.addf %368, %375 : vector<8x32xf32>
      %377 = arith.maximumf %373, %376 : vector<8x32xf32>
      %cst_283 = arith.constant dense<0.000000e+00> : vector<4x32xf32>
      %378 = tpu.matmul %40, %377, %cst_283 {dimension_numbers = #tpu.dot_dimension_numbers<[1], [0], [0], [1], [0, 0, 1, 1], [], []>} : vector<4x8xf32>, vector<8x32xf32>, vector<4x32xf32> -> vector<4x32xf32>
      %cst_284 = arith.constant dense<0.000000e+00> : vector<4x32xf32>
      %379 = tpu.matmul %47, %377, %cst_284 {dimension_numbers = #tpu.dot_dimension_numbers<[1], [0], [0], [1], [0, 0, 1, 1], [], []>} : vector<4x8xf32>, vector<8x32xf32>, vector<4x32xf32> -> vector<4x32xf32>
      %380 = arith.maximumf %378, %379 : vector<4x32xf32>
      %c0_285 = arith.constant 0 : index
      %c0_286 = arith.constant 0 : index
      %381 = vector.load %arg7[%c0_285, %c0_286] : memref<1x32xf32, #tpu.memory_space<vmem>>, vector<1x32xf32>
      %382 = vector.broadcast %381 : vector<1x32xf32> to vector<4x32xf32>
      %383 = arith.addf %380, %382 : vector<4x32xf32>
      %cst_287 = arith.constant 0.000000e+00 : f32
      %384 = vector.broadcast %cst_287 : f32 to vector<4x32xf32>
      %385 = arith.maximumf %383, %384 : vector<4x32xf32>
      %c1_i32_288 = arith.constant 1 : i32
      %386 = arith.addi %c1_i32_288, %282 : i32
      %387 = arith.index_cast %386 : i32 to index
      %c1_289 = arith.constant 1 : index
      %c0_290 = arith.constant 0 : index
      %388 = vector.load %arg17[%387, %c1_289, %c0_290] : memref<6x6x32xf32, #tpu.memory_space<vmem>>, vector<1x4x32xf32>
      %389 = vector.shape_cast %388 : vector<1x4x32xf32> to vector<4x32xf32>
      %390 = vector.shape_cast %385 : vector<4x32xf32> to vector<1x4x32xf32>
      tpu.vector_store %arg17[%387, %c1_289, %c0_290], %390 {strides = array<i32>} : memref<6x6x32xf32, #tpu.memory_space<vmem>>, vector<1x4x32xf32>,
    }
    %c4_i32_24 = arith.constant 4 : i32
    %c0_25 = arith.constant 0 : index
    %c0_26 = arith.constant 0 : index
    %c0_27 = arith.constant 0 : index
    %51 = vector.load %arg17[%c0_25, %c0_26, %c0_27] : memref<6x6x32xf32, #tpu.memory_space<vmem>>, vector<1x6x32xf32>
    %52 = vector.shape_cast %51 : vector<1x6x32xf32> to vector<6x32xf32>
    %c1 = arith.constant 1 : index
    %c0_28 = arith.constant 0 : index
    %c0_29 = arith.constant 0 : index
    %53 = vector.load %arg17[%c1, %c0_28, %c0_29] : memref<6x6x32xf32, #tpu.memory_space<vmem>>, vector<1x6x32xf32>
    %54 = vector.shape_cast %53 : vector<1x6x32xf32> to vector<6x32xf32>
    %c2 = arith.constant 2 : index
    %c0_30 = arith.constant 0 : index
    %c0_31 = arith.constant 0 : index
    %55 = vector.load %arg17[%c2, %c0_30, %c0_31] : memref<6x6x32xf32, #tpu.memory_space<vmem>>, vector<1x6x32xf32>
    %56 = vector.shape_cast %55 : vector<1x6x32xf32> to vector<6x32xf32>
    %cst_32 = arith.constant 0.000000e+00 : f32
    %57 = vector.broadcast %cst_32 : f32 to vector<4x64xf32>
    %58 = vector.extract_strided_slice %52 {offsets = [0, 0], sizes = [4, 32], strides = [1, 1]} : vector<6x32xf32> to vector<4x32xf32>
    %c0_33 = arith.constant 0 : index
    %c0_34 = arith.constant 0 : index
    %c0_35 = arith.constant 0 : index
    %59 = vector.load %arg8[%c0_33, %c0_34, %c0_35] : memref<9x32x64xf32, #tpu.memory_space<vmem>>, vector<1x32x64xf32>
    %60 = vector.shape_cast %59 : vector<1x32x64xf32> to vector<32x64xf32>
    %cst_36 = arith.constant dense<0.000000e+00> : vector<4x64xf32>
    %61 = tpu.matmul %58, %60, %cst_36 {dimension_numbers = #tpu.dot_dimension_numbers<[1], [0], [0], [1], [0, 0, 1, 1], [], []>} : vector<4x32xf32>, vector<32x64xf32>, vector<4x64xf32> -> vector<4x64xf32>
    %62 = arith.addf %57, %61 : vector<4x64xf32>
    %63 = vector.extract_strided_slice %52 {offsets = [1, 0], sizes = [4, 32], strides = [1, 1]} : vector<6x32xf32> to vector<4x32xf32>
    %c1_37 = arith.constant 1 : index
    %c0_38 = arith.constant 0 : index
    %c0_39 = arith.constant 0 : index
    %64 = vector.load %arg8[%c1_37, %c0_38, %c0_39] : memref<9x32x64xf32, #tpu.memory_space<vmem>>, vector<1x32x64xf32>
    %65 = vector.shape_cast %64 : vector<1x32x64xf32> to vector<32x64xf32>
    %cst_40 = arith.constant dense<0.000000e+00> : vector<4x64xf32>
    %66 = tpu.matmul %63, %65, %cst_40 {dimension_numbers = #tpu.dot_dimension_numbers<[1], [0], [0], [1], [0, 0, 1, 1], [], []>} : vector<4x32xf32>, vector<32x64xf32>, vector<4x64xf32> -> vector<4x64xf32>
    %67 = arith.addf %62, %66 : vector<4x64xf32>
    %68 = vector.extract_strided_slice %52 {offsets = [2, 0], sizes = [4, 32], strides = [1, 1]} : vector<6x32xf32> to vector<4x32xf32>
    %c2_41 = arith.constant 2 : index
    %c0_42 = arith.constant 0 : index
    %c0_43 = arith.constant 0 : index
    %69 = vector.load %arg8[%c2_41, %c0_42, %c0_43] : memref<9x32x64xf32, #tpu.memory_space<vmem>>, vector<1x32x64xf32>
    %70 = vector.shape_cast %69 : vector<1x32x64xf32> to vector<32x64xf32>
    %cst_44 = arith.constant dense<0.000000e+00> : vector<4x64xf32>
    %71 = tpu.matmul %68, %70, %cst_44 {dimension_numbers = #tpu.dot_dimension_numbers<[1], [0], [0], [1], [0, 0, 1, 1], [], []>} : vector<4x32xf32>, vector<32x64xf32>, vector<4x64xf32> -> vector<4x64xf32>
    %72 = arith.addf %67, %71 : vector<4x64xf32>
    %73 = vector.extract_strided_slice %54 {offsets = [0, 0], sizes = [4, 32], strides = [1, 1]} : vector<6x32xf32> to vector<4x32xf32>
    %c3 = arith.constant 3 : index
    %c0_45 = arith.constant 0 : index
    %c0_46 = arith.constant 0 : index
    %74 = vector.load %arg8[%c3, %c0_45, %c0_46] : memref<9x32x64xf32, #tpu.memory_space<vmem>>, vector<1x32x64xf32>
    %75 = vector.shape_cast %74 : vector<1x32x64xf32> to vector<32x64xf32>
    %cst_47 = arith.constant dense<0.000000e+00> : vector<4x64xf32>
    %76 = tpu.matmul %73, %75, %cst_47 {dimension_numbers = #tpu.dot_dimension_numbers<[1], [0], [0], [1], [0, 0, 1, 1], [], []>} : vector<4x32xf32>, vector<32x64xf32>, vector<4x64xf32> -> vector<4x64xf32>
    %77 = arith.addf %72, %76 : vector<4x64xf32>
    %78 = vector.extract_strided_slice %54 {offsets = [1, 0], sizes = [4, 32], strides = [1, 1]} : vector<6x32xf32> to vector<4x32xf32>
    %c4 = arith.constant 4 : index
    %c0_48 = arith.constant 0 : index
    %c0_49 = arith.constant 0 : index
    %79 = vector.load %arg8[%c4, %c0_48, %c0_49] : memref<9x32x64xf32, #tpu.memory_space<vmem>>, vector<1x32x64xf32>
    %80 = vector.shape_cast %79 : vector<1x32x64xf32> to vector<32x64xf32>
    %cst_50 = arith.constant dense<0.000000e+00> : vector<4x64xf32>
    %81 = tpu.matmul %78, %80, %cst_50 {dimension_numbers = #tpu.dot_dimension_numbers<[1], [0], [0], [1], [0, 0, 1, 1], [], []>} : vector<4x32xf32>, vector<32x64xf32>, vector<4x64xf32> -> vector<4x64xf32>
    %82 = arith.addf %77, %81 : vector<4x64xf32>
    %83 = vector.extract_strided_slice %54 {offsets = [2, 0], sizes = [4, 32], strides = [1, 1]} : vector<6x32xf32> to vector<4x32xf32>
    %c5 = arith.constant 5 : index
    %c0_51 = arith.constant 0 : index
    %c0_52 = arith.constant 0 : index
    %84 = vector.load %arg8[%c5, %c0_51, %c0_52] : memref<9x32x64xf32, #tpu.memory_space<vmem>>, vector<1x32x64xf32>
    %85 = vector.shape_cast %84 : vector<1x32x64xf32> to vector<32x64xf32>
    %cst_53 = arith.constant dense<0.000000e+00> : vector<4x64xf32>
    %86 = tpu.matmul %83, %85, %cst_53 {dimension_numbers = #tpu.dot_dimension_numbers<[1], [0], [0], [1], [0, 0, 1, 1], [], []>} : vector<4x32xf32>, vector<32x64xf32>, vector<4x64xf32> -> vector<4x64xf32>
    %87 = arith.addf %82, %86 : vector<4x64xf32>
    %88 = vector.extract_strided_slice %56 {offsets = [0, 0], sizes = [4, 32], strides = [1, 1]} : vector<6x32xf32> to vector<4x32xf32>
    %c6 = arith.constant 6 : index
    %c0_54 = arith.constant 0 : index
    %c0_55 = arith.constant 0 : index
    %89 = vector.load %arg8[%c6, %c0_54, %c0_55] : memref<9x32x64xf32, #tpu.memory_space<vmem>>, vector<1x32x64xf32>
    %90 = vector.shape_cast %89 : vector<1x32x64xf32> to vector<32x64xf32>
    %cst_56 = arith.constant dense<0.000000e+00> : vector<4x64xf32>
    %91 = tpu.matmul %88, %90, %cst_56 {dimension_numbers = #tpu.dot_dimension_numbers<[1], [0], [0], [1], [0, 0, 1, 1], [], []>} : vector<4x32xf32>, vector<32x64xf32>, vector<4x64xf32> -> vector<4x64xf32>
    %92 = arith.addf %87, %91 : vector<4x64xf32>
    %93 = vector.extract_strided_slice %56 {offsets = [1, 0], sizes = [4, 32], strides = [1, 1]} : vector<6x32xf32> to vector<4x32xf32>
    %c7 = arith.constant 7 : index
    %c0_57 = arith.constant 0 : index
    %c0_58 = arith.constant 0 : index
    %94 = vector.load %arg8[%c7, %c0_57, %c0_58] : memref<9x32x64xf32, #tpu.memory_space<vmem>>, vector<1x32x64xf32>
    %95 = vector.shape_cast %94 : vector<1x32x64xf32> to vector<32x64xf32>
    %cst_59 = arith.constant dense<0.000000e+00> : vector<4x64xf32>
    %96 = tpu.matmul %93, %95, %cst_59 {dimension_numbers = #tpu.dot_dimension_numbers<[1], [0], [0], [1], [0, 0, 1, 1], [], []>} : vector<4x32xf32>, vector<32x64xf32>, vector<4x64xf32> -> vector<4x64xf32>
    %97 = arith.addf %92, %96 : vector<4x64xf32>
    %98 = vector.extract_strided_slice %56 {offsets = [2, 0], sizes = [4, 32], strides = [1, 1]} : vector<6x32xf32> to vector<4x32xf32>
    %c8 = arith.constant 8 : index
    %c0_60 = arith.constant 0 : index
    %c0_61 = arith.constant 0 : index
    %99 = vector.load %arg8[%c8, %c0_60, %c0_61] : memref<9x32x64xf32, #tpu.memory_space<vmem>>, vector<1x32x64xf32>
    %100 = vector.shape_cast %99 : vector<1x32x64xf32> to vector<32x64xf32>
    %cst_62 = arith.constant dense<0.000000e+00> : vector<4x64xf32>
    %101 = tpu.matmul %98, %100, %cst_62 {dimension_numbers = #tpu.dot_dimension_numbers<[1], [0], [0], [1], [0, 0, 1, 1], [], []>} : vector<4x32xf32>, vector<32x64xf32>, vector<4x64xf32> -> vector<4x64xf32>
    %102 = arith.addf %97, %101 : vector<4x64xf32>
    %c1_63 = arith.constant 1 : index
    %c0_64 = arith.constant 0 : index
    %c0_65 = arith.constant 0 : index
    %103 = vector.load %arg17[%c1_63, %c0_64, %c0_65] : memref<6x6x32xf32, #tpu.memory_space<vmem>>, vector<1x6x32xf32>
    %104 = vector.shape_cast %103 : vector<1x6x32xf32> to vector<6x32xf32>
    %c2_66 = arith.constant 2 : index
    %c0_67 = arith.constant 0 : index
    %c0_68 = arith.constant 0 : index
    %105 = vector.load %arg17[%c2_66, %c0_67, %c0_68] : memref<6x6x32xf32, #tpu.memory_space<vmem>>, vector<1x6x32xf32>
    %106 = vector.shape_cast %105 : vector<1x6x32xf32> to vector<6x32xf32>
    %c3_69 = arith.constant 3 : index
    %c0_70 = arith.constant 0 : index
    %c0_71 = arith.constant 0 : index
    %107 = vector.load %arg17[%c3_69, %c0_70, %c0_71] : memref<6x6x32xf32, #tpu.memory_space<vmem>>, vector<1x6x32xf32>
    %108 = vector.shape_cast %107 : vector<1x6x32xf32> to vector<6x32xf32>
    %cst_72 = arith.constant 0.000000e+00 : f32
    %109 = vector.broadcast %cst_72 : f32 to vector<4x64xf32>
    %110 = vector.extract_strided_slice %104 {offsets = [0, 0], sizes = [4, 32], strides = [1, 1]} : vector<6x32xf32> to vector<4x32xf32>
    %c0_73 = arith.constant 0 : index
    %c0_74 = arith.constant 0 : index
    %c0_75 = arith.constant 0 : index
    %111 = vector.load %arg8[%c0_73, %c0_74, %c0_75] : memref<9x32x64xf32, #tpu.memory_space<vmem>>, vector<1x32x64xf32>
    %112 = vector.shape_cast %111 : vector<1x32x64xf32> to vector<32x64xf32>
    %cst_76 = arith.constant dense<0.000000e+00> : vector<4x64xf32>
    %113 = tpu.matmul %110, %112, %cst_76 {dimension_numbers = #tpu.dot_dimension_numbers<[1], [0], [0], [1], [0, 0, 1, 1], [], []>} : vector<4x32xf32>, vector<32x64xf32>, vector<4x64xf32> -> vector<4x64xf32>
    %114 = arith.addf %109, %113 : vector<4x64xf32>
    %115 = vector.extract_strided_slice %104 {offsets = [1, 0], sizes = [4, 32], strides = [1, 1]} : vector<6x32xf32> to vector<4x32xf32>
    %c1_77 = arith.constant 1 : index
    %c0_78 = arith.constant 0 : index
    %c0_79 = arith.constant 0 : index
    %116 = vector.load %arg8[%c1_77, %c0_78, %c0_79] : memref<9x32x64xf32, #tpu.memory_space<vmem>>, vector<1x32x64xf32>
    %117 = vector.shape_cast %116 : vector<1x32x64xf32> to vector<32x64xf32>
    %cst_80 = arith.constant dense<0.000000e+00> : vector<4x64xf32>
    %118 = tpu.matmul %115, %117, %cst_80 {dimension_numbers = #tpu.dot_dimension_numbers<[1], [0], [0], [1], [0, 0, 1, 1], [], []>} : vector<4x32xf32>, vector<32x64xf32>, vector<4x64xf32> -> vector<4x64xf32>
    %119 = arith.addf %114, %118 : vector<4x64xf32>
    %120 = vector.extract_strided_slice %104 {offsets = [2, 0], sizes = [4, 32], strides = [1, 1]} : vector<6x32xf32> to vector<4x32xf32>
    %c2_81 = arith.constant 2 : index
    %c0_82 = arith.constant 0 : index
    %c0_83 = arith.constant 0 : index
    %121 = vector.load %arg8[%c2_81, %c0_82, %c0_83] : memref<9x32x64xf32, #tpu.memory_space<vmem>>, vector<1x32x64xf32>
    %122 = vector.shape_cast %121 : vector<1x32x64xf32> to vector<32x64xf32>
    %cst_84 = arith.constant dense<0.000000e+00> : vector<4x64xf32>
    %123 = tpu.matmul %120, %122, %cst_84 {dimension_numbers = #tpu.dot_dimension_numbers<[1], [0], [0], [1], [0, 0, 1, 1], [], []>} : vector<4x32xf32>, vector<32x64xf32>, vector<4x64xf32> -> vector<4x64xf32>
    %124 = arith.addf %119, %123 : vector<4x64xf32>
    %125 = vector.extract_strided_slice %106 {offsets = [0, 0], sizes = [4, 32], strides = [1, 1]} : vector<6x32xf32> to vector<4x32xf32>
    %c3_85 = arith.constant 3 : index
    %c0_86 = arith.constant 0 : index
    %c0_87 = arith.constant 0 : index
    %126 = vector.load %arg8[%c3_85, %c0_86, %c0_87] : memref<9x32x64xf32, #tpu.memory_space<vmem>>, vector<1x32x64xf32>
    %127 = vector.shape_cast %126 : vector<1x32x64xf32> to vector<32x64xf32>
    %cst_88 = arith.constant dense<0.000000e+00> : vector<4x64xf32>
    %128 = tpu.matmul %125, %127, %cst_88 {dimension_numbers = #tpu.dot_dimension_numbers<[1], [0], [0], [1], [0, 0, 1, 1], [], []>} : vector<4x32xf32>, vector<32x64xf32>, vector<4x64xf32> -> vector<4x64xf32>
    %129 = arith.addf %124, %128 : vector<4x64xf32>
    %130 = vector.extract_strided_slice %106 {offsets = [1, 0], sizes = [4, 32], strides = [1, 1]} : vector<6x32xf32> to vector<4x32xf32>
    %c4_89 = arith.constant 4 : index
    %c0_90 = arith.constant 0 : index
    %c0_91 = arith.constant 0 : index
    %131 = vector.load %arg8[%c4_89, %c0_90, %c0_91] : memref<9x32x64xf32, #tpu.memory_space<vmem>>, vector<1x32x64xf32>
    %132 = vector.shape_cast %131 : vector<1x32x64xf32> to vector<32x64xf32>
    %cst_92 = arith.constant dense<0.000000e+00> : vector<4x64xf32>
    %133 = tpu.matmul %130, %132, %cst_92 {dimension_numbers = #tpu.dot_dimension_numbers<[1], [0], [0], [1], [0, 0, 1, 1], [], []>} : vector<4x32xf32>, vector<32x64xf32>, vector<4x64xf32> -> vector<4x64xf32>
    %134 = arith.addf %129, %133 : vector<4x64xf32>
    %135 = vector.extract_strided_slice %106 {offsets = [2, 0], sizes = [4, 32], strides = [1, 1]} : vector<6x32xf32> to vector<4x32xf32>
    %c5_93 = arith.constant 5 : index
    %c0_94 = arith.constant 0 : index
    %c0_95 = arith.constant 0 : index
    %136 = vector.load %arg8[%c5_93, %c0_94, %c0_95] : memref<9x32x64xf32, #tpu.memory_space<vmem>>, vector<1x32x64xf32>
    %137 = vector.shape_cast %136 : vector<1x32x64xf32> to vector<32x64xf32>
    %cst_96 = arith.constant dense<0.000000e+00> : vector<4x64xf32>
    %138 = tpu.matmul %135, %137, %cst_96 {dimension_numbers = #tpu.dot_dimension_numbers<[1], [0], [0], [1], [0, 0, 1, 1], [], []>} : vector<4x32xf32>, vector<32x64xf32>, vector<4x64xf32> -> vector<4x64xf32>
    %139 = arith.addf %134, %138 : vector<4x64xf32>
    %140 = vector.extract_strided_slice %108 {offsets = [0, 0], sizes = [4, 32], strides = [1, 1]} : vector<6x32xf32> to vector<4x32xf32>
    %c6_97 = arith.constant 6 : index
    %c0_98 = arith.constant 0 : index
    %c0_99 = arith.constant 0 : index
    %141 = vector.load %arg8[%c6_97, %c0_98, %c0_99] : memref<9x32x64xf32, #tpu.memory_space<vmem>>, vector<1x32x64xf32>
    %142 = vector.shape_cast %141 : vector<1x32x64xf32> to vector<32x64xf32>
    %cst_100 = arith.constant dense<0.000000e+00> : vector<4x64xf32>
    %143 = tpu.matmul %140, %142, %cst_100 {dimension_numbers = #tpu.dot_dimension_numbers<[1], [0], [0], [1], [0, 0, 1, 1], [], []>} : vector<4x32xf32>, vector<32x64xf32>, vector<4x64xf32> -> vector<4x64xf32>
    %144 = arith.addf %139, %143 : vector<4x64xf32>
    %145 = vector.extract_strided_slice %108 {offsets = [1, 0], sizes = [4, 32], strides = [1, 1]} : vector<6x32xf32> to vector<4x32xf32>
    %c7_101 = arith.constant 7 : index
    %c0_102 = arith.constant 0 : index
    %c0_103 = arith.constant 0 : index
    %146 = vector.load %arg8[%c7_101, %c0_102, %c0_103] : memref<9x32x64xf32, #tpu.memory_space<vmem>>, vector<1x32x64xf32>
    %147 = vector.shape_cast %146 : vector<1x32x64xf32> to vector<32x64xf32>
    %cst_104 = arith.constant dense<0.000000e+00> : vector<4x64xf32>
    %148 = tpu.matmul %145, %147, %cst_104 {dimension_numbers = #tpu.dot_dimension_numbers<[1], [0], [0], [1], [0, 0, 1, 1], [], []>} : vector<4x32xf32>, vector<32x64xf32>, vector<4x64xf32> -> vector<4x64xf32>
    %149 = arith.addf %144, %148 : vector<4x64xf32>
    %150 = vector.extract_strided_slice %108 {offsets = [2, 0], sizes = [4, 32], strides = [1, 1]} : vector<6x32xf32> to vector<4x32xf32>
    %c8_105 = arith.constant 8 : index
    %c0_106 = arith.constant 0 : index
    %c0_107 = arith.constant 0 : index
    %151 = vector.load %arg8[%c8_105, %c0_106, %c0_107] : memref<9x32x64xf32, #tpu.memory_space<vmem>>, vector<1x32x64xf32>
    %152 = vector.shape_cast %151 : vector<1x32x64xf32> to vector<32x64xf32>
    %cst_108 = arith.constant dense<0.000000e+00> : vector<4x64xf32>
    %153 = tpu.matmul %150, %152, %cst_108 {dimension_numbers = #tpu.dot_dimension_numbers<[1], [0], [0], [1], [0, 0, 1, 1], [], []>} : vector<4x32xf32>, vector<32x64xf32>, vector<4x64xf32> -> vector<4x64xf32>
    %154 = arith.addf %149, %153 : vector<4x64xf32>
    %155 = arith.maximumf %102, %154 : vector<4x64xf32>
    %c2_109 = arith.constant 2 : index
    %c0_110 = arith.constant 0 : index
    %c0_111 = arith.constant 0 : index
    %156 = vector.load %arg17[%c2_109, %c0_110, %c0_111] : memref<6x6x32xf32, #tpu.memory_space<vmem>>, vector<1x6x32xf32>
    %157 = vector.shape_cast %156 : vector<1x6x32xf32> to vector<6x32xf32>
    %c3_112 = arith.constant 3 : index
    %c0_113 = arith.constant 0 : index
    %c0_114 = arith.constant 0 : index
    %158 = vector.load %arg17[%c3_112, %c0_113, %c0_114] : memref<6x6x32xf32, #tpu.memory_space<vmem>>, vector<1x6x32xf32>
    %159 = vector.shape_cast %158 : vector<1x6x32xf32> to vector<6x32xf32>
    %c4_115 = arith.constant 4 : index
    %c0_116 = arith.constant 0 : index
    %c0_117 = arith.constant 0 : index
    %160 = vector.load %arg17[%c4_115, %c0_116, %c0_117] : memref<6x6x32xf32, #tpu.memory_space<vmem>>, vector<1x6x32xf32>
    %161 = vector.shape_cast %160 : vector<1x6x32xf32> to vector<6x32xf32>
    %cst_118 = arith.constant 0.000000e+00 : f32
    %162 = vector.broadcast %cst_118 : f32 to vector<4x64xf32>
    %163 = vector.extract_strided_slice %157 {offsets = [0, 0], sizes = [4, 32], strides = [1, 1]} : vector<6x32xf32> to vector<4x32xf32>
    %c0_119 = arith.constant 0 : index
    %c0_120 = arith.constant 0 : index
    %c0_121 = arith.constant 0 : index
    %164 = vector.load %arg8[%c0_119, %c0_120, %c0_121] : memref<9x32x64xf32, #tpu.memory_space<vmem>>, vector<1x32x64xf32>
    %165 = vector.shape_cast %164 : vector<1x32x64xf32> to vector<32x64xf32>
    %cst_122 = arith.constant dense<0.000000e+00> : vector<4x64xf32>
    %166 = tpu.matmul %163, %165, %cst_122 {dimension_numbers = #tpu.dot_dimension_numbers<[1], [0], [0], [1], [0, 0, 1, 1], [], []>} : vector<4x32xf32>, vector<32x64xf32>, vector<4x64xf32> -> vector<4x64xf32>
    %167 = arith.addf %162, %166 : vector<4x64xf32>
    %168 = vector.extract_strided_slice %157 {offsets = [1, 0], sizes = [4, 32], strides = [1, 1]} : vector<6x32xf32> to vector<4x32xf32>
    %c1_123 = arith.constant 1 : index
    %c0_124 = arith.constant 0 : index
    %c0_125 = arith.constant 0 : index
    %169 = vector.load %arg8[%c1_123, %c0_124, %c0_125] : memref<9x32x64xf32, #tpu.memory_space<vmem>>, vector<1x32x64xf32>
    %170 = vector.shape_cast %169 : vector<1x32x64xf32> to vector<32x64xf32>
    %cst_126 = arith.constant dense<0.000000e+00> : vector<4x64xf32>
    %171 = tpu.matmul %168, %170, %cst_126 {dimension_numbers = #tpu.dot_dimension_numbers<[1], [0], [0], [1], [0, 0, 1, 1], [], []>} : vector<4x32xf32>, vector<32x64xf32>, vector<4x64xf32> -> vector<4x64xf32>
    %172 = arith.addf %167, %171 : vector<4x64xf32>
    %173 = vector.extract_strided_slice %157 {offsets = [2, 0], sizes = [4, 32], strides = [1, 1]} : vector<6x32xf32> to vector<4x32xf32>
    %c2_127 = arith.constant 2 : index
    %c0_128 = arith.constant 0 : index
    %c0_129 = arith.constant 0 : index
    %174 = vector.load %arg8[%c2_127, %c0_128, %c0_129] : memref<9x32x64xf32, #tpu.memory_space<vmem>>, vector<1x32x64xf32>
    %175 = vector.shape_cast %174 : vector<1x32x64xf32> to vector<32x64xf32>
    %cst_130 = arith.constant dense<0.000000e+00> : vector<4x64xf32>
    %176 = tpu.matmul %173, %175, %cst_130 {dimension_numbers = #tpu.dot_dimension_numbers<[1], [0], [0], [1], [0, 0, 1, 1], [], []>} : vector<4x32xf32>, vector<32x64xf32>, vector<4x64xf32> -> vector<4x64xf32>
    %177 = arith.addf %172, %176 : vector<4x64xf32>
    %178 = vector.extract_strided_slice %159 {offsets = [0, 0], sizes = [4, 32], strides = [1, 1]} : vector<6x32xf32> to vector<4x32xf32>
    %c3_131 = arith.constant 3 : index
    %c0_132 = arith.constant 0 : index
    %c0_133 = arith.constant 0 : index
    %179 = vector.load %arg8[%c3_131, %c0_132, %c0_133] : memref<9x32x64xf32, #tpu.memory_space<vmem>>, vector<1x32x64xf32>
    %180 = vector.shape_cast %179 : vector<1x32x64xf32> to vector<32x64xf32>
    %cst_134 = arith.constant dense<0.000000e+00> : vector<4x64xf32>
    %181 = tpu.matmul %178, %180, %cst_134 {dimension_numbers = #tpu.dot_dimension_numbers<[1], [0], [0], [1], [0, 0, 1, 1], [], []>} : vector<4x32xf32>, vector<32x64xf32>, vector<4x64xf32> -> vector<4x64xf32>
    %182 = arith.addf %177, %181 : vector<4x64xf32>
    %183 = vector.extract_strided_slice %159 {offsets = [1, 0], sizes = [4, 32], strides = [1, 1]} : vector<6x32xf32> to vector<4x32xf32>
    %c4_135 = arith.constant 4 : index
    %c0_136 = arith.constant 0 : index
    %c0_137 = arith.constant 0 : index
    %184 = vector.load %arg8[%c4_135, %c0_136, %c0_137] : memref<9x32x64xf32, #tpu.memory_space<vmem>>, vector<1x32x64xf32>
    %185 = vector.shape_cast %184 : vector<1x32x64xf32> to vector<32x64xf32>
    %cst_138 = arith.constant dense<0.000000e+00> : vector<4x64xf32>
    %186 = tpu.matmul %183, %185, %cst_138 {dimension_numbers = #tpu.dot_dimension_numbers<[1], [0], [0], [1], [0, 0, 1, 1], [], []>} : vector<4x32xf32>, vector<32x64xf32>, vector<4x64xf32> -> vector<4x64xf32>
    %187 = arith.addf %182, %186 : vector<4x64xf32>
    %188 = vector.extract_strided_slice %159 {offsets = [2, 0], sizes = [4, 32], strides = [1, 1]} : vector<6x32xf32> to vector<4x32xf32>
    %c5_139 = arith.constant 5 : index
    %c0_140 = arith.constant 0 : index
    %c0_141 = arith.constant 0 : index
    %189 = vector.load %arg8[%c5_139, %c0_140, %c0_141] : memref<9x32x64xf32, #tpu.memory_space<vmem>>, vector<1x32x64xf32>
    %190 = vector.shape_cast %189 : vector<1x32x64xf32> to vector<32x64xf32>
    %cst_142 = arith.constant dense<0.000000e+00> : vector<4x64xf32>
    %191 = tpu.matmul %188, %190, %cst_142 {dimension_numbers = #tpu.dot_dimension_numbers<[1], [0], [0], [1], [0, 0, 1, 1], [], []>} : vector<4x32xf32>, vector<32x64xf32>, vector<4x64xf32> -> vector<4x64xf32>
    %192 = arith.addf %187, %191 : vector<4x64xf32>
    %193 = vector.extract_strided_slice %161 {offsets = [0, 0], sizes = [4, 32], strides = [1, 1]} : vector<6x32xf32> to vector<4x32xf32>
    %c6_143 = arith.constant 6 : index
    %c0_144 = arith.constant 0 : index
    %c0_145 = arith.constant 0 : index
    %194 = vector.load %arg8[%c6_143, %c0_144, %c0_145] : memref<9x32x64xf32, #tpu.memory_space<vmem>>, vector<1x32x64xf32>
    %195 = vector.shape_cast %194 : vector<1x32x64xf32> to vector<32x64xf32>
    %cst_146 = arith.constant dense<0.000000e+00> : vector<4x64xf32>
    %196 = tpu.matmul %193, %195, %cst_146 {dimension_numbers = #tpu.dot_dimension_numbers<[1], [0], [0], [1], [0, 0, 1, 1], [], []>} : vector<4x32xf32>, vector<32x64xf32>, vector<4x64xf32> -> vector<4x64xf32>
    %197 = arith.addf %192, %196 : vector<4x64xf32>
    %198 = vector.extract_strided_slice %161 {offsets = [1, 0], sizes = [4, 32], strides = [1, 1]} : vector<6x32xf32> to vector<4x32xf32>
    %c7_147 = arith.constant 7 : index
    %c0_148 = arith.constant 0 : index
    %c0_149 = arith.constant 0 : index
    %199 = vector.load %arg8[%c7_147, %c0_148, %c0_149] : memref<9x32x64xf32, #tpu.memory_space<vmem>>, vector<1x32x64xf32>
    %200 = vector.shape_cast %199 : vector<1x32x64xf32> to vector<32x64xf32>
    %cst_150 = arith.constant dense<0.000000e+00> : vector<4x64xf32>
    %201 = tpu.matmul %198, %200, %cst_150 {dimension_numbers = #tpu.dot_dimension_numbers<[1], [0], [0], [1], [0, 0, 1, 1], [], []>} : vector<4x32xf32>, vector<32x64xf32>, vector<4x64xf32> -> vector<4x64xf32>
    %202 = arith.addf %197, %201 : vector<4x64xf32>
    %203 = vector.extract_strided_slice %161 {offsets = [2, 0], sizes = [4, 32], strides = [1, 1]} : vector<6x32xf32> to vector<4x32xf32>
    %c8_151 = arith.constant 8 : index
    %c0_152 = arith.constant 0 : index
    %c0_153 = arith.constant 0 : index
    %204 = vector.load %arg8[%c8_151, %c0_152, %c0_153] : memref<9x32x64xf32, #tpu.memory_space<vmem>>, vector<1x32x64xf32>
    %205 = vector.shape_cast %204 : vector<1x32x64xf32> to vector<32x64xf32>
    %cst_154 = arith.constant dense<0.000000e+00> : vector<4x64xf32>
    %206 = tpu.matmul %203, %205, %cst_154 {dimension_numbers = #tpu.dot_dimension_numbers<[1], [0], [0], [1], [0, 0, 1, 1], [], []>} : vector<4x32xf32>, vector<32x64xf32>, vector<4x64xf32> -> vector<4x64xf32>
    %207 = arith.addf %202, %206 : vector<4x64xf32>
    %208 = arith.maximumf %155, %207 : vector<4x64xf32>
    %c3_155 = arith.constant 3 : index
    %c0_156 = arith.constant 0 : index
    %c0_157 = arith.constant 0 : index
    %209 = vector.load %arg17[%c3_155, %c0_156, %c0_157] : memref<6x6x32xf32, #tpu.memory_space<vmem>>, vector<1x6x32xf32>
    %210 = vector.shape_cast %209 : vector<1x6x32xf32> to vector<6x32xf32>
    %c4_158 = arith.constant 4 : index
    %c0_159 = arith.constant 0 : index
    %c0_160 = arith.constant 0 : index
    %211 = vector.load %arg17[%c4_158, %c0_159, %c0_160] : memref<6x6x32xf32, #tpu.memory_space<vmem>>, vector<1x6x32xf32>
    %212 = vector.shape_cast %211 : vector<1x6x32xf32> to vector<6x32xf32>
    %c5_161 = arith.constant 5 : index
    %c0_162 = arith.constant 0 : index
    %c0_163 = arith.constant 0 : index
    %213 = vector.load %arg17[%c5_161, %c0_162, %c0_163] : memref<6x6x32xf32, #tpu.memory_space<vmem>>, vector<1x6x32xf32>
    %214 = vector.shape_cast %213 : vector<1x6x32xf32> to vector<6x32xf32>
    %cst_164 = arith.constant 0.000000e+00 : f32
    %215 = vector.broadcast %cst_164 : f32 to vector<4x64xf32>
    %216 = vector.extract_strided_slice %210 {offsets = [0, 0], sizes = [4, 32], strides = [1, 1]} : vector<6x32xf32> to vector<4x32xf32>
    %c0_165 = arith.constant 0 : index
    %c0_166 = arith.constant 0 : index
    %c0_167 = arith.constant 0 : index
    %217 = vector.load %arg8[%c0_165, %c0_166, %c0_167] : memref<9x32x64xf32, #tpu.memory_space<vmem>>, vector<1x32x64xf32>
    %218 = vector.shape_cast %217 : vector<1x32x64xf32> to vector<32x64xf32>
    %cst_168 = arith.constant dense<0.000000e+00> : vector<4x64xf32>
    %219 = tpu.matmul %216, %218, %cst_168 {dimension_numbers = #tpu.dot_dimension_numbers<[1], [0], [0], [1], [0, 0, 1, 1], [], []>} : vector<4x32xf32>, vector<32x64xf32>, vector<4x64xf32> -> vector<4x64xf32>
    %220 = arith.addf %215, %219 : vector<4x64xf32>
    %221 = vector.extract_strided_slice %210 {offsets = [1, 0], sizes = [4, 32], strides = [1, 1]} : vector<6x32xf32> to vector<4x32xf32>
    %c1_169 = arith.constant 1 : index
    %c0_170 = arith.constant 0 : index
    %c0_171 = arith.constant 0 : index
    %222 = vector.load %arg8[%c1_169, %c0_170, %c0_171] : memref<9x32x64xf32, #tpu.memory_space<vmem>>, vector<1x32x64xf32>
    %223 = vector.shape_cast %222 : vector<1x32x64xf32> to vector<32x64xf32>
    %cst_172 = arith.constant dense<0.000000e+00> : vector<4x64xf32>
    %224 = tpu.matmul %221, %223, %cst_172 {dimension_numbers = #tpu.dot_dimension_numbers<[1], [0], [0], [1], [0, 0, 1, 1], [], []>} : vector<4x32xf32>, vector<32x64xf32>, vector<4x64xf32> -> vector<4x64xf32>
    %225 = arith.addf %220, %224 : vector<4x64xf32>
    %226 = vector.extract_strided_slice %210 {offsets = [2, 0], sizes = [4, 32], strides = [1, 1]} : vector<6x32xf32> to vector<4x32xf32>
    %c2_173 = arith.constant 2 : index
    %c0_174 = arith.constant 0 : index
    %c0_175 = arith.constant 0 : index
    %227 = vector.load %arg8[%c2_173, %c0_174, %c0_175] : memref<9x32x64xf32, #tpu.memory_space<vmem>>, vector<1x32x64xf32>
    %228 = vector.shape_cast %227 : vector<1x32x64xf32> to vector<32x64xf32>
    %cst_176 = arith.constant dense<0.000000e+00> : vector<4x64xf32>
    %229 = tpu.matmul %226, %228, %cst_176 {dimension_numbers = #tpu.dot_dimension_numbers<[1], [0], [0], [1], [0, 0, 1, 1], [], []>} : vector<4x32xf32>, vector<32x64xf32>, vector<4x64xf32> -> vector<4x64xf32>
    %230 = arith.addf %225, %229 : vector<4x64xf32>
    %231 = vector.extract_strided_slice %212 {offsets = [0, 0], sizes = [4, 32], strides = [1, 1]} : vector<6x32xf32> to vector<4x32xf32>
    %c3_177 = arith.constant 3 : index
    %c0_178 = arith.constant 0 : index
    %c0_179 = arith.constant 0 : index
    %232 = vector.load %arg8[%c3_177, %c0_178, %c0_179] : memref<9x32x64xf32, #tpu.memory_space<vmem>>, vector<1x32x64xf32>
    %233 = vector.shape_cast %232 : vector<1x32x64xf32> to vector<32x64xf32>
    %cst_180 = arith.constant dense<0.000000e+00> : vector<4x64xf32>
    %234 = tpu.matmul %231, %233, %cst_180 {dimension_numbers = #tpu.dot_dimension_numbers<[1], [0], [0], [1], [0, 0, 1, 1], [], []>} : vector<4x32xf32>, vector<32x64xf32>, vector<4x64xf32> -> vector<4x64xf32>
    %235 = arith.addf %230, %234 : vector<4x64xf32>
    %236 = vector.extract_strided_slice %212 {offsets = [1, 0], sizes = [4, 32], strides = [1, 1]} : vector<6x32xf32> to vector<4x32xf32>
    %c4_181 = arith.constant 4 : index
    %c0_182 = arith.constant 0 : index
    %c0_183 = arith.constant 0 : index
    %237 = vector.load %arg8[%c4_181, %c0_182, %c0_183] : memref<9x32x64xf32, #tpu.memory_space<vmem>>, vector<1x32x64xf32>
    %238 = vector.shape_cast %237 : vector<1x32x64xf32> to vector<32x64xf32>
    %cst_184 = arith.constant dense<0.000000e+00> : vector<4x64xf32>
    %239 = tpu.matmul %236, %238, %cst_184 {dimension_numbers = #tpu.dot_dimension_numbers<[1], [0], [0], [1], [0, 0, 1, 1], [], []>} : vector<4x32xf32>, vector<32x64xf32>, vector<4x64xf32> -> vector<4x64xf32>
    %240 = arith.addf %235, %239 : vector<4x64xf32>
    %241 = vector.extract_strided_slice %212 {offsets = [2, 0], sizes = [4, 32], strides = [1, 1]} : vector<6x32xf32> to vector<4x32xf32>
    %c5_185 = arith.constant 5 : index
    %c0_186 = arith.constant 0 : index
    %c0_187 = arith.constant 0 : index
    %242 = vector.load %arg8[%c5_185, %c0_186, %c0_187] : memref<9x32x64xf32, #tpu.memory_space<vmem>>, vector<1x32x64xf32>
    %243 = vector.shape_cast %242 : vector<1x32x64xf32> to vector<32x64xf32>
    %cst_188 = arith.constant dense<0.000000e+00> : vector<4x64xf32>
    %244 = tpu.matmul %241, %243, %cst_188 {dimension_numbers = #tpu.dot_dimension_numbers<[1], [0], [0], [1], [0, 0, 1, 1], [], []>} : vector<4x32xf32>, vector<32x64xf32>, vector<4x64xf32> -> vector<4x64xf32>
    %245 = arith.addf %240, %244 : vector<4x64xf32>
    %246 = vector.extract_strided_slice %214 {offsets = [0, 0], sizes = [4, 32], strides = [1, 1]} : vector<6x32xf32> to vector<4x32xf32>
    %c6_189 = arith.constant 6 : index
    %c0_190 = arith.constant 0 : index
    %c0_191 = arith.constant 0 : index
    %247 = vector.load %arg8[%c6_189, %c0_190, %c0_191] : memref<9x32x64xf32, #tpu.memory_space<vmem>>, vector<1x32x64xf32>
    %248 = vector.shape_cast %247 : vector<1x32x64xf32> to vector<32x64xf32>
    %cst_192 = arith.constant dense<0.000000e+00> : vector<4x64xf32>
    %249 = tpu.matmul %246, %248, %cst_192 {dimension_numbers = #tpu.dot_dimension_numbers<[1], [0], [0], [1], [0, 0, 1, 1], [], []>} : vector<4x32xf32>, vector<32x64xf32>, vector<4x64xf32> -> vector<4x64xf32>
    %250 = arith.addf %245, %249 : vector<4x64xf32>
    %251 = vector.extract_strided_slice %214 {offsets = [1, 0], sizes = [4, 32], strides = [1, 1]} : vector<6x32xf32> to vector<4x32xf32>
    %c7_193 = arith.constant 7 : index
    %c0_194 = arith.constant 0 : index
    %c0_195 = arith.constant 0 : index
    %252 = vector.load %arg8[%c7_193, %c0_194, %c0_195] : memref<9x32x64xf32, #tpu.memory_space<vmem>>, vector<1x32x64xf32>
    %253 = vector.shape_cast %252 : vector<1x32x64xf32> to vector<32x64xf32>
    %cst_196 = arith.constant dense<0.000000e+00> : vector<4x64xf32>
    %254 = tpu.matmul %251, %253, %cst_196 {dimension_numbers = #tpu.dot_dimension_numbers<[1], [0], [0], [1], [0, 0, 1, 1], [], []>} : vector<4x32xf32>, vector<32x64xf32>, vector<4x64xf32> -> vector<4x64xf32>
    %255 = arith.addf %250, %254 : vector<4x64xf32>
    %256 = vector.extract_strided_slice %214 {offsets = [2, 0], sizes = [4, 32], strides = [1, 1]} : vector<6x32xf32> to vector<4x32xf32>
    %c8_197 = arith.constant 8 : index
    %c0_198 = arith.constant 0 : index
    %c0_199 = arith.constant 0 : index
    %257 = vector.load %arg8[%c8_197, %c0_198, %c0_199] : memref<9x32x64xf32, #tpu.memory_space<vmem>>, vector<1x32x64xf32>
    %258 = vector.shape_cast %257 : vector<1x32x64xf32> to vector<32x64xf32>
    %cst_200 = arith.constant dense<0.000000e+00> : vector<4x64xf32>
    %259 = tpu.matmul %256, %258, %cst_200 {dimension_numbers = #tpu.dot_dimension_numbers<[1], [0], [0], [1], [0, 0, 1, 1], [], []>} : vector<4x32xf32>, vector<32x64xf32>, vector<4x64xf32> -> vector<4x64xf32>
    %260 = arith.addf %255, %259 : vector<4x64xf32>
    %261 = arith.maximumf %208, %260 : vector<4x64xf32>
    %cst_201 = arith.constant dense<0xFF800000> : vector<64xf32>
    %262 = vector.multi_reduction <maximumf>, %261, %cst_201 [0] : vector<4x64xf32> to vector<64xf32>
    %263 = vector.shape_cast %262 : vector<64xf32> to vector<1x64xf32>
    %c0_202 = arith.constant 0 : index
    %c0_203 = arith.constant 0 : index
    %264 = vector.load %arg9[%c0_202, %c0_203] : memref<1x64xf32, #tpu.memory_space<vmem>>, vector<1x64xf32>
    %265 = arith.addf %263, %264 : vector<1x64xf32>
    %cst_204 = arith.constant 0.000000e+00 : f32
    %266 = vector.broadcast %cst_204 : f32 to vector<1x64xf32>
    %267 = arith.maximumf %265, %266 : vector<1x64xf32>
    %c0_205 = arith.constant 0 : index
    %c0_206 = arith.constant 0 : index
    %268 = vector.load %arg10[%c0_205, %c0_206] : memref<64x8xf32, #tpu.memory_space<vmem>>, vector<64x8xf32>
    %cst_207 = arith.constant dense<0.000000e+00> : vector<1x8xf32>
    %269 = tpu.matmul %267, %268, %cst_207 {dimension_numbers = #tpu.dot_dimension_numbers<[1], [0], [0], [1], [0, 0, 1, 1], [], []>} : vector<1x64xf32>, vector<64x8xf32>, vector<1x8xf32> -> vector<1x8xf32>
    %c0_208 = arith.constant 0 : index
    %c0_209 = arith.constant 0 : index
    %270 = vector.load %arg11[%c0_208, %c0_209] : memref<1x8xf32, #tpu.memory_space<vmem>>, vector<1x8xf32>
    %271 = arith.addf %269, %270 : vector<1x8xf32>
    %cst_210 = arith.constant 0.000000e+00 : f32
    %272 = vector.broadcast %cst_210 : f32 to vector<1x8xf32>
    %273 = arith.maximumf %271, %272 : vector<1x8xf32>
    %c0_211 = arith.constant 0 : index
    %c0_212 = arith.constant 0 : index
    %274 = vector.load %arg12[%c0_211, %c0_212] : memref<8x2xf32, #tpu.memory_space<vmem>>, vector<8x2xf32>
    %cst_213 = arith.constant dense<0.000000e+00> : vector<1x2xf32>
    %275 = tpu.matmul %273, %274, %cst_213 {dimension_numbers = #tpu.dot_dimension_numbers<[1], [0], [0], [1], [0, 0, 1, 1], [], []>} : vector<1x8xf32>, vector<8x2xf32>, vector<1x2xf32> -> vector<1x2xf32>
    %c0_214 = arith.constant 0 : index
    %c0_215 = arith.constant 0 : index
    %276 = vector.load %arg13[%c0_214, %c0_215] : memref<1x2xf32, #tpu.memory_space<vmem>>, vector<1x2xf32>
    %277 = arith.addf %275, %276 : vector<1x2xf32>
    %c0_216 = arith.constant 0 : index
    %c0_217 = arith.constant 0 : index
    %c0_218 = arith.constant 0 : index
    %278 = vector.load %arg14[%c0_216, %c0_217, %c0_218] : memref<1x1x2xf32, #tpu.memory_space<vmem>>, vector<1x1x2xf32>
    %279 = vector.shape_cast %278 : vector<1x1x2xf32> to vector<1x2xf32>
    %280 = vector.shape_cast %277 : vector<1x2xf32> to vector<1x1x2xf32>
    tpu.vector_store %arg14[%c0_216, %c0_217, %c0_218], %280 {strides = array<i32>} : memref<1x1x2xf32, #tpu.memory_space<vmem>>, vector<1x1x2xf32>,
    return
  }
  func.func @transform_0(%arg0: i32) -> (i32, i32, i32, i32) {
    %c0_i32 = arith.constant 0 : i32
    %c0_i32_0 = arith.constant 0 : i32
    %c0_i32_1 = arith.constant 0 : i32
    %c0_i32_2 = arith.constant 0 : i32
    return %arg0, %c0_i32, %c0_i32_0, %c0_i32_1 : i32, i32, i32, i32
  }
  func.func @transform_1(%arg0: i32) -> (i32, i32) {
    %c0_i32 = arith.constant 0 : i32
    %c0_i32_0 = arith.constant 0 : i32
    %c0_i32_1 = arith.constant 0 : i32
    return %c0_i32, %c0_i32_0 : i32, i32
  }
  func.func @transform_2(%arg0: i32) -> (i32, i32) {
    %c0_i32 = arith.constant 0 : i32
    %c0_i32_0 = arith.constant 0 : i32
    %c0_i32_1 = arith.constant 0 : i32
    return %c0_i32, %c0_i32_0 : i32, i32
  }
  func.func @transform_3(%arg0: i32) -> (i32, i32, i32) {
    %c0_i32 = arith.constant 0 : i32
    %c0_i32_0 = arith.constant 0 : i32
    %c0_i32_1 = arith.constant 0 : i32
    %c0_i32_2 = arith.constant 0 : i32
    return %c0_i32, %c0_i32_0, %c0_i32_1 : i32, i32, i32
  }
  func.func @transform_4(%arg0: i32) -> (i32, i32) {
    %c0_i32 = arith.constant 0 : i32
    %c0_i32_0 = arith.constant 0 : i32
    %c0_i32_1 = arith.constant 0 : i32
    return %c0_i32, %c0_i32_0 : i32, i32
  }
  func.func @transform_5(%arg0: i32) -> (i32, i32, i32) {
    %c0_i32 = arith.constant 0 : i32
    %c0_i32_0 = arith.constant 0 : i32
    %c0_i32_1 = arith.constant 0 : i32
    %c0_i32_2 = arith.constant 0 : i32
    return %c0_i32, %c0_i32_0, %c0_i32_1 : i32, i32, i32
  }
  func.func @transform_6(%arg0: i32) -> (i32, i32) {
    %c0_i32 = arith.constant 0 : i32
    %c0_i32_0 = arith.constant 0 : i32
    %c0_i32_1 = arith.constant 0 : i32
    return %c0_i32, %c0_i32_0 : i32, i32
  }
  func.func @transform_7(%arg0: i32) -> (i32, i32, i32) {
    %c0_i32 = arith.constant 0 : i32
    %c0_i32_0 = arith.constant 0 : i32
    %c0_i32_1 = arith.constant 0 : i32
    %c0_i32_2 = arith.constant 0 : i32
    return %c0_i32, %c0_i32_0, %c0_i32_1 : i32, i32, i32
  }
  func.func @transform_8(%arg0: i32) -> (i32, i32) {
    %c0_i32 = arith.constant 0 : i32
    %c0_i32_0 = arith.constant 0 : i32
    %c0_i32_1 = arith.constant 0 : i32
    return %c0_i32, %c0_i32_0 : i32, i32
  }
  func.func @transform_9(%arg0: i32) -> (i32, i32) {
    %c0_i32 = arith.constant 0 : i32
    %c0_i32_0 = arith.constant 0 : i32
    %c0_i32_1 = arith.constant 0 : i32
    return %c0_i32, %c0_i32_0 : i32, i32
  }
  func.func @transform_10(%arg0: i32) -> (i32, i32) {
    %c0_i32 = arith.constant 0 : i32
    %c0_i32_0 = arith.constant 0 : i32
    %c0_i32_1 = arith.constant 0 : i32
    return %c0_i32, %c0_i32_0 : i32, i32
  }
  func.func @transform_11(%arg0: i32) -> (i32, i32) {
    %c0_i32 = arith.constant 0 : i32
    %c0_i32_0 = arith.constant 0 : i32
    %c0_i32_1 = arith.constant 0 : i32
    return %c0_i32, %c0_i32_0 : i32, i32
  }
  func.func @transform_12(%arg0: i32) -> (i32, i32) {
    %c0_i32 = arith.constant 0 : i32
    %c0_i32_0 = arith.constant 0 : i32
    %c0_i32_1 = arith.constant 0 : i32
    return %c0_i32, %c0_i32_0 : i32, i32
  }
  func.func @transform_13(%arg0: i32) -> (i32, i32, i32) {
    %c0_i32 = arith.constant 0 : i32
    %c0_i32_0 = arith.constant 0 : i32
    %c0_i32_1 = arith.constant 0 : i32
    return %arg0, %c0_i32, %c0_i32_0 : i32, i32, i32
  }
}

</mosaic_0001>

<llo_original>
// kernel: detection_network_pallas.1
$region0: #{detection_network_pallas.1}
  #allocation0 [shape = 'u32[]', space=smem, size = 0x4, offset = 0x4, fixed_abs, tag = 'smem constant byte address 0x4 - core index']
  #allocation1 [shape = 'u32[144,128]{1,0:T(1,128)}', space=vmem, size = 0x12000, scoped, tag = 'internal scratch']
  #allocation2 [shape = 'f32[18,18,16]{2,1,0:T(8,128)}', space=vmem, size = 0x36000, scoped, tag = 'scratch operand']
  #allocation3 [shape = 'f32[10,10,32]{2,1,0:T(8,128)}', space=vmem, size = 0x14000, scoped, tag = 'scratch operand']
  #allocation4 [shape = 'f32[6,6,32]{2,1,0:T(8,128)}', space=vmem, size = 0x6000, scoped, tag = 'scratch operand']
  %s0 = inlined_call_operand.vmem [shape: f32[2,32,32,75], index: 0, kind: input, shape index: {}]
  %s1 = inlined_call_operand.vmem [shape: f32[75,16], index: 1, kind: input, shape index: {}]
  %s2 = inlined_call_operand.vmem [shape: f32[1,16], index: 2, kind: input, shape index: {}]
  %s3 = inlined_call_operand.vmem [shape: f32[9,16,32], index: 3, kind: input, shape index: {}]
  %s4 = inlined_call_operand.vmem [shape: f32[1,32], index: 4, kind: input, shape index: {}]
  %s5 = inlined_call_operand.vmem [shape: f32[9,32,32], index: 5, kind: input, shape index: {}]
  %s6 = inlined_call_operand.vmem [shape: f32[1,32], index: 6, kind: input, shape index: {}]
  %s7 = inlined_call_operand.vmem [shape: f32[9,32,64], index: 7, kind: input, shape index: {}]
  %s8 = inlined_call_operand.vmem [shape: f32[1,64], index: 8, kind: input, shape index: {}]
  %s9 = inlined_call_operand.vmem [shape: f32[64,8], index: 9, kind: input, shape index: {}]
  %s10 = inlined_call_operand.vmem [shape: f32[1,8], index: 10, kind: input, shape index: {}]
  %s11 = inlined_call_operand.vmem [shape: f32[8,2], index: 11, kind: input, shape index: {}]
  %s12 = inlined_call_operand.vmem [shape: f32[1,2], index: 12, kind: input, shape index: {}]
  %s13 = inlined_call_operand.hbm [shape: f32[2,1,2], index: 13, kind: output, shape index: {}]
  %s14 = sld [smem:[#allocation0]]
  $region106: #{detection_network_pallas.1} parent=0
    _
  %s16 = ssub.s32 1, %s14
  %s17 = scalar_select 0, %s16, %s14
  $region1: #{detection_network_pallas.1} parent=0
    #allocation5 [shape = 'u8[1024]{0}', space=vmem, size = 0x400, scoped, tag = 'output window, operand 0']
    #allocation6 [shape = 's32[2]{0}', space=sflag, size = 0x8, scoped, tag = 'scoped memory for detection_network_pallas.1']
    %18 = vsyncpa [#allocation6], 0
    %s19 = scalar_lea.sflag [#allocation6], 1
    %20 = vsyncpa %s19, 0
    loop: start=0, step=1, limit=4
    $region2: #{detection_network_pallas.1} parent=1 // loop_pre_header
      _
    $region3: #{detection_network_pallas.1} parent=1 // loop_header
      %s22 = sphi 0, %s26
      %p23 = scmp.ge.s32.totalorder %s22, 4
      %s32 = sphi 0, %s34
      %s35 = sphi 0, %s32
      %s36 = sphi 0, %s35
      %s52 = sphi 0, %s36
      %s56 = sphi 0, %s56
      %s58 = sphi 0, %s56
      %s59 = sphi 0, %s58
      %s73 = sphi 0, %s59
      %s77 = sphi 0, %s77
      %s79 = sphi 0, %s77
      %s80 = sphi 0, %s79
      %s94 = sphi 0, %s80
      %s98 = sphi 0, %s98
      %s100 = sphi 0, %s98
      %s101 = sphi 0, %s100
      %s115 = sphi 0, %s101
      %s119 = sphi 0, %s119
      %s121 = sphi 0, %s119
      %s122 = sphi 0, %s121
      %s136 = sphi 0, %s122
      %s140 = sphi 0, %s140
      %s142 = sphi 0, %s140
      %s143 = sphi 0, %s142
      %s157 = sphi 0, %s143
      %s161 = sphi 0, %s161
      %s163 = sphi 0, %s161
      %s164 = sphi 0, %s163
      %s178 = sphi 0, %s164
      %s182 = sphi 0, %s182
      %s184 = sphi 0, %s182
      %s185 = sphi 0, %s184
      %s199 = sphi 0, %s185
      %s203 = sphi 0, %s203
      %s205 = sphi 0, %s203
      %s206 = sphi 0, %s205
      %s220 = sphi 0, %s206
      %s224 = sphi 0, %s224
      %s226 = sphi 0, %s224
      %s227 = sphi 0, %s226
      %s241 = sphi 0, %s227
      %s245 = sphi 0, %s245
      %s247 = sphi 0, %s245
      %s248 = sphi 0, %s247
      %s262 = sphi 0, %s248
      %s266 = sphi 0, %s266
      %s268 = sphi 0, %s266
      %s269 = sphi 0, %s268
      %s283 = sphi 0, %s269
      %s287 = sphi 0, %s287
      %s289 = sphi 0, %s287
      %s290 = sphi 0, %s289
      %s304 = sphi 0, %s290
      %s310 = sphi 0, %s312
      %s313 = sphi 0, %s310
      %s314 = sphi 0, %s313
      %s330 = sphi 0, %s314
    $region4: #{detection_network_pallas.1} parent=1 // loop_header_branch
      %25 = sbr.rel (%p23) target = $region8
    $region5: #{detection_network_pallas.1} parent=1 // loop_body
      %s27 = ssub.s32 %s22, 1
      %s28 = ssub.s32 %s22, 2
      %s29 = sadd.s32 %s22, 1
      %s30 = ssub.s32 %s22, %s29
      %p31 = scmp.eq.s32.totalorder %s30, 0
      %s33 = sadd.s32 %s32, 1
      %s34 = scalar_select %p31, %s32, %s33
      %p37 = pneg %p31
      %p38 = scmp.eq.s32.totalorder %s22, 1
      %p39 = por %p37, %p38
      %p40 = scmp.ne.s32.totalorder %s32, %s35
      %p41 = scmp.eq.s32.totalorder %s22, 0
      %p42 = por %p40, %p41
      %p43 = scmp.ne.s32.totalorder %s32, %s35
      %p44 = scmp.eq.s32.totalorder %s27, 1
      %p45 = por %p43, %p44
      %p46 = scmp.ne.s32.totalorder %s35, %s36
      %p47 = scmp.eq.s32.totalorder %s27, 0
      %p48 = por %p46, %p47
      %p49 = scmp.ne.s32.totalorder %s35, %s36
      %p50 = scmp.eq.s32.totalorder %s28, 1
      %p51 = por %p49, %p50
      %p53 = scmp.ne.s32.totalorder %s36, %s52
      %p54 = scmp.eq.s32.totalorder %s28, 0
      %p55 = por %p53, %p54
      %s57 = sadd.s32 %s56, 1
      %p60 = scmp.eq.s32.totalorder %s22, 1
      %p61 = scmp.ne.s32.totalorder %s56, %s58
      %p62 = scmp.eq.s32.totalorder %s22, 0
      %p63 = por %p61, %p62
      %p64 = scmp.ne.s32.totalorder %s56, %s58
      %p65 = scmp.eq.s32.totalorder %s27, 1
      %p66 = por %p64, %p65
      %p67 = scmp.ne.s32.totalorder %s58, %s59
      %p68 = scmp.eq.s32.totalorder %s27, 0
      %p69 = por %p67, %p68
      %p70 = scmp.ne.s32.totalorder %s58, %s59
      %p71 = scmp.eq.s32.totalorder %s28, 1
      %p72 = por %p70, %p71
      %p74 = scmp.ne.s32.totalorder %s59, %s73
      %p75 = scmp.eq.s32.totalorder %s28, 0
      %p76 = por %p74, %p75
      %s78 = sadd.s32 %s77, 1
      %p81 = scmp.eq.s32.totalorder %s22, 1
      %p82 = scmp.ne.s32.totalorder %s77, %s79
      %p83 = scmp.eq.s32.totalorder %s22, 0
      %p84 = por %p82, %p83
      %p85 = scmp.ne.s32.totalorder %s77, %s79
      %p86 = scmp.eq.s32.totalorder %s27, 1
      %p87 = por %p85, %p86
      %p88 = scmp.ne.s32.totalorder %s79, %s80
      %p89 = scmp.eq.s32.totalorder %s27, 0
      %p90 = por %p88, %p89
      %p91 = scmp.ne.s32.totalorder %s79, %s80
      %p92 = scmp.eq.s32.totalorder %s28, 1
      %p93 = por %p91, %p92
      %p95 = scmp.ne.s32.totalorder %s80, %s94
      %p96 = scmp.eq.s32.totalorder %s28, 0
      %p97 = por %p95, %p96
      %s99 = sadd.s32 %s98, 1
      %p102 = scmp.eq.s32.totalorder %s22, 1
      %p103 = scmp.ne.s32.totalorder %s98, %s100
      %p104 = scmp.eq.s32.totalorder %s22, 0
      %p105 = por %p103, %p104
      %p106 = scmp.ne.s32.totalorder %s98, %s100
      %p107 = scmp.eq.s32.totalorder %s27, 1
      %p108 = por %p106, %p107
      %p109 = scmp.ne.s32.totalorder %s100, %s101
      %p110 = scmp.eq.s32.totalorder %s27, 0
      %p111 = por %p109, %p110
      %p112 = scmp.ne.s32.totalorder %s100, %s101
      %p113 = scmp.eq.s32.totalorder %s28, 1
      %p114 = por %p112, %p113
      %p116 = scmp.ne.s32.totalorder %s101, %s115
      %p117 = scmp.eq.s32.totalorder %s28, 0
      %p118 = por %p116, %p117
      %s120 = sadd.s32 %s119, 1
      %p123 = scmp.eq.s32.totalorder %s22, 1
      %p124 = scmp.ne.s32.totalorder %s119, %s121
      %p125 = scmp.eq.s32.totalorder %s22, 0
      %p126 = por %p124, %p125
      %p127 = scmp.ne.s32.totalorder %s119, %s121
      %p128 = scmp.eq.s32.totalorder %s27, 1
      %p129 = por %p127, %p128
      %p130 = scmp.ne.s32.totalorder %s121, %s122
      %p131 = scmp.eq.s32.totalorder %s27, 0
      %p132 = por %p130, %p131
      %p133 = scmp.ne.s32.totalorder %s121, %s122
      %p134 = scmp.eq.s32.totalorder %s28, 1
      %p135 = por %p133, %p134
      %p137 = scmp.ne.s32.totalorder %s122, %s136
      %p138 = scmp.eq.s32.totalorder %s28, 0
      %p139 = por %p137, %p138
      %s141 = sadd.s32 %s140, 1
      %p144 = scmp.eq.s32.totalorder %s22, 1
      %p145 = scmp.ne.s32.totalorder %s140, %s142
      %p146 = scmp.eq.s32.totalorder %s22, 0
      %p147 = por %p145, %p146
      %p148 = scmp.ne.s32.totalorder %s140, %s142
      %p149 = scmp.eq.s32.totalorder %s27, 1
      %p150 = por %p148, %p149
      %p151 = scmp.ne.s32.totalorder %s142, %s143
      %p152 = scmp.eq.s32.totalorder %s27, 0
      %p153 = por %p151, %p152
      %p154 = scmp.ne.s32.totalorder %s142, %s143
      %p155 = scmp.eq.s32.totalorder %s28, 1
      %p156 = por %p154, %p155
      %p158 = scmp.ne.s32.totalorder %s143, %s157
      %p159 = scmp.eq.s32.totalorder %s28, 0
      %p160 = por %p158, %p159
      %s162 = sadd.s32 %s161, 1
      %p165 = scmp.eq.s32.totalorder %s22, 1
      %p166 = scmp.ne.s32.totalorder %s161, %s163
      %p167 = scmp.eq.s32.totalorder %s22, 0
      %p168 = por %p166, %p167
      %p169 = scmp.ne.s32.totalorder %s161, %s163
      %p170 = scmp.eq.s32.totalorder %s27, 1
      %p171 = por %p169, %p170
      %p172 = scmp.ne.s32.totalorder %s163, %s164
      %p173 = scmp.eq.s32.totalorder %s27, 0
      %p174 = por %p172, %p173
      %p175 = scmp.ne.s32.totalorder %s163, %s164
      %p176 = scmp.eq.s32.totalorder %s28, 1
      %p177 = por %p175, %p176
      %p179 = scmp.ne.s32.totalorder %s164, %s178
      %p180 = scmp.eq.s32.totalorder %s28, 0
      %p181 = por %p179, %p180
      %s183 = sadd.s32 %s182, 1
      %p186 = scmp.eq.s32.totalorder %s22, 1
      %p187 = scmp.ne.s32.totalorder %s182, %s184
      %p188 = scmp.eq.s32.totalorder %s22, 0
      %p189 = por %p187, %p188
      %p190 = scmp.ne.s32.totalorder %s182, %s184
      %p191 = scmp.eq.s32.totalorder %s27, 1
      %p192 = por %p190, %p191
      %p193 = scmp.ne.s32.totalorder %s184, %s185
      %p194 = scmp.eq.s32.totalorder %s27, 0
      %p195 = por %p193, %p194
      %p196 = scmp.ne.s32.totalorder %s184, %s185
      %p197 = scmp.eq.s32.totalorder %s28, 1
      %p198 = por %p196, %p197
      %p200 = scmp.ne.s32.totalorder %s185, %s199
      %p201 = scmp.eq.s32.totalorder %s28, 0
      %p202 = por %p200, %p201
      %s204 = sadd.s32 %s203, 1
      %p207 = scmp.eq.s32.totalorder %s22, 1
      %p208 = scmp.ne.s32.totalorder %s203, %s205
      %p209 = scmp.eq.s32.totalorder %s22, 0
      %p210 = por %p208, %p209
      %p211 = scmp.ne.s32.totalorder %s203, %s205
      %p212 = scmp.eq.s32.totalorder %s27, 1
      %p213 = por %p211, %p212
      %p214 = scmp.ne.s32.totalorder %s205, %s206
      %p215 = scmp.eq.s32.totalorder %s27, 0
      %p216 = por %p214, %p215
      %p217 = scmp.ne.s32.totalorder %s205, %s206
      %p218 = scmp.eq.s32.totalorder %s28, 1
      %p219 = por %p217, %p218
      %p221 = scmp.ne.s32.totalorder %s206, %s220
      %p222 = scmp.eq.s32.totalorder %s28, 0
      %p223 = por %p221, %p222
      %s225 = sadd.s32 %s224, 1
      %p228 = scmp.eq.s32.totalorder %s22, 1
      %p229 = scmp.ne.s32.totalorder %s224, %s226
      %p230 = scmp.eq.s32.totalorder %s22, 0
      %p231 = por %p229, %p230
      %p232 = scmp.ne.s32.totalorder %s224, %s226
      %p233 = scmp.eq.s32.totalorder %s27, 1
      %p234 = por %p232, %p233
      %p235 = scmp.ne.s32.totalorder %s226, %s227
      %p236 = scmp.eq.s32.totalorder %s27, 0
      %p237 = por %p235, %p236
      %p238 = scmp.ne.s32.totalorder %s226, %s227
      %p239 = scmp.eq.s32.totalorder %s28, 1
      %p240 = por %p238, %p239
      %p242 = scmp.ne.s32.totalorder %s227, %s241
      %p243 = scmp.eq.s32.totalorder %s28, 0
      %p244 = por %p242, %p243
      %s246 = sadd.s32 %s245, 1
      %p249 = scmp.eq.s32.totalorder %s22, 1
      %p250 = scmp.ne.s32.totalorder %s245, %s247
      %p251 = scmp.eq.s32.totalorder %s22, 0
      %p252 = por %p250, %p251
      %p253 = scmp.ne.s32.totalorder %s245, %s247
      %p254 = scmp.eq.s32.totalorder %s27, 1
      %p255 = por %p253, %p254
      %p256 = scmp.ne.s32.totalorder %s247, %s248
      %p257 = scmp.eq.s32.totalorder %s27, 0
      %p258 = por %p256, %p257
      %p259 = scmp.ne.s32.totalorder %s247, %s248
      %p260 = scmp.eq.s32.totalorder %s28, 1
      %p261 = por %p259, %p260
      %p263 = scmp.ne.s32.totalorder %s248, %s262
      %p264 = scmp.eq.s32.totalorder %s28, 0
      %p265 = por %p263, %p264
      %s267 = sadd.s32 %s266, 1
      %p270 = scmp.eq.s32.totalorder %s22, 1
      %p271 = scmp.ne.s32.totalorder %s266, %s268
      %p272 = scmp.eq.s32.totalorder %s22, 0
      %p273 = por %p271, %p272
      %p274 = scmp.ne.s32.totalorder %s266, %s268
      %p275 = scmp.eq.s32.totalorder %s27, 1
      %p276 = por %p274, %p275
      %p277 = scmp.ne.s32.totalorder %s268, %s269
      %p278 = scmp.eq.s32.totalorder %s27, 0
      %p279 = por %p277, %p278
      %p280 = scmp.ne.s32.totalorder %s268, %s269
      %p281 = scmp.eq.s32.totalorder %s28, 1
      %p282 = por %p280, %p281
      %p284 = scmp.ne.s32.totalorder %s269, %s283
      %p285 = scmp.eq.s32.totalorder %s28, 0
      %p286 = por %p284, %p285
      %s288 = sadd.s32 %s287, 1
      %p291 = scmp.eq.s32.totalorder %s22, 1
      %p292 = scmp.ne.s32.totalorder %s287, %s289
      %p293 = scmp.eq.s32.totalorder %s22, 0
      %p294 = por %p292, %p293
      %p295 = scmp.ne.s32.totalorder %s287, %s289
      %p296 = scmp.eq.s32.totalorder %s27, 1
      %p297 = por %p295, %p296
      %p298 = scmp.ne.s32.totalorder %s289, %s290
      %p299 = scmp.eq.s32.totalorder %s27, 0
      %p300 = por %p298, %p299
      %p301 = scmp.ne.s32.totalorder %s289, %s290
      %p302 = scmp.eq.s32.totalorder %s28, 1
      %p303 = por %p301, %p302
      %p305 = scmp.ne.s32.totalorder %s290, %s304
      %p306 = scmp.eq.s32.totalorder %s28, 0
      %p307 = por %p305, %p306
      %s308 = ssub.s32 %s22, %s29
      %p309 = scmp.eq.s32.totalorder %s308, 0
      %s311 = sadd.s32 %s310, 1
      %s312 = scalar_select %p309, %s310, %s311
      %p315 = pneg %p309
      %p316 = scmp.eq.s32.totalorder %s22, 1
      %p317 = por %p315, %p316
      %p318 = scmp.ne.s32.totalorder %s310, %s313
      %p319 = scmp.eq.s32.totalorder %s22, 0
      %p320 = por %p318, %p319
      %p321 = scmp.ne.s32.totalorder %s310, %s313
      %p322 = scmp.eq.s32.totalorder %s27, 1
      %p323 = por %p321, %p322
      %p324 = scmp.ne.s32.totalorder %s313, %s314
      %p325 = scmp.eq.s32.totalorder %s27, 0
      %p326 = por %p324, %p325
      %p327 = scmp.ne.s32.totalorder %s313, %s314
      %p328 = scmp.eq.s32.totalorder %s28, 1
      %p329 = por %p327, %p328
      %p331 = scmp.ne.s32.totalorder %s314, %s330
      %p332 = scmp.eq.s32.totalorder %s28, 0
      %p333 = por %p331, %p332
      %p334 = scmp.le.s32.totalorder 1, %s22
      %p335 = scmp.lt.s32.totalorder %s22, 3
      %p336 = pnand %p334, %p335
      %p337 = pneg %p336
      // Predicated region
      $region9: #{detection_network_pallas.1} parent=5 // pred_check
        _
      $region10: #{detection_network_pallas.1} parent=5 // pred_check_branch
        %339 = sbr.rel (%p336) target = $region12
      $region11: #{detection_network_pallas.1} parent=5 // pred_region
        %s340 = ssub.s32 %s22, 1
        // Predicated region
        $region13: #{detection_network_pallas.1} parent=11 // pred_check
          %p341 = pneg %p69
        $region14: #{detection_network_pallas.1} parent=11 // pred_check_branch
          %343 = sbr.rel (%p341) target = $region16
        $region15: #{detection_network_pallas.1} parent=11 // pred_region
          _
        $region16: #{detection_network_pallas.1} parent=11 // pred_fallthru
          _
        // Predicated region
        $region17: #{detection_network_pallas.1} parent=11 // pred_check
          %p344 = pneg %p90
        $region18: #{detection_network_pallas.1} parent=11 // pred_check_branch
          %346 = sbr.rel (%p344) target = $region20
        $region19: #{detection_network_pallas.1} parent=11 // pred_region
          _
        $region20: #{detection_network_pallas.1} parent=11 // pred_fallthru
          _
        // Predicated region
        $region21: #{detection_network_pallas.1} parent=11 // pred_check
          %p347 = pneg %p111
        $region22: #{detection_network_pallas.1} parent=11 // pred_check_branch
          %349 = sbr.rel (%p347) target = $region24
        $region23: #{detection_network_pallas.1} parent=11 // pred_region
          _
        $region24: #{detection_network_pallas.1} parent=11 // pred_fallthru
          _
        // Predicated region
        $region25: #{detection_network_pallas.1} parent=11 // pred_check
          %p350 = pneg %p132
        $region26: #{detection_network_pallas.1} parent=11 // pred_check_branch
          %352 = sbr.rel (%p350) target = $region28
        $region27: #{detection_network_pallas.1} parent=11 // pred_region
          _
        $region28: #{detection_network_pallas.1} parent=11 // pred_fallthru
          _
        // Predicated region
        $region29: #{detection_network_pallas.1} parent=11 // pred_check
          %p353 = pneg %p153
        $region30: #{detection_network_pallas.1} parent=11 // pred_check_branch
          %355 = sbr.rel (%p353) target = $region32
        $region31: #{detection_network_pallas.1} parent=11 // pred_region
          _
        $region32: #{detection_network_pallas.1} parent=11 // pred_fallthru
          _
        // Predicated region
        $region33: #{detection_network_pallas.1} parent=11 // pred_check
          %p356 = pneg %p174
        $region34: #{detection_network_pallas.1} parent=11 // pred_check_branch
          %358 = sbr.rel (%p356) target = $region36
        $region35: #{detection_network_pallas.1} parent=11 // pred_region
          _
        $region36: #{detection_network_pallas.1} parent=11 // pred_fallthru
          _
        // Predicated region
        $region37: #{detection_network_pallas.1} parent=11 // pred_check
          %p359 = pneg %p195
        $region38: #{detection_network_pallas.1} parent=11 // pred_check_branch
          %361 = sbr.rel (%p359) target = $region40
        $region39: #{detection_network_pallas.1} parent=11 // pred_region
          _
        $region40: #{detection_network_pallas.1} parent=11 // pred_fallthru
          _
        // Predicated region
        $region41: #{detection_network_pallas.1} parent=11 // pred_check
          %p362 = pneg %p216
        $region42: #{detection_network_pallas.1} parent=11 // pred_check_branch
          %364 = sbr.rel (%p362) target = $region44
        $region43: #{detection_network_pallas.1} parent=11 // pred_region
          _
        $region44: #{detection_network_pallas.1} parent=11 // pred_fallthru
          _
        // Predicated region
        $region45: #{detection_network_pallas.1} parent=11 // pred_check
          %p365 = pneg %p237
        $region46: #{detection_network_pallas.1} parent=11 // pred_check_branch
          %367 = sbr.rel (%p365) target = $region48
        $region47: #{detection_network_pallas.1} parent=11 // pred_region
          _
        $region48: #{detection_network_pallas.1} parent=11 // pred_fallthru
          _
        // Predicated region
        $region49: #{detection_network_pallas.1} parent=11 // pred_check
          %p368 = pneg %p258
        $region50: #{detection_network_pallas.1} parent=11 // pred_check_branch
          %370 = sbr.rel (%p368) target = $region52
        $region51: #{detection_network_pallas.1} parent=11 // pred_region
          _
        $region52: #{detection_network_pallas.1} parent=11 // pred_fallthru
          _
        // Predicated region
        $region53: #{detection_network_pallas.1} parent=11 // pred_check
          %p371 = pneg %p279
        $region54: #{detection_network_pallas.1} parent=11 // pred_check_branch
          %373 = sbr.rel (%p371) target = $region56
        $region55: #{detection_network_pallas.1} parent=11 // pred_region
          _
        $region56: #{detection_network_pallas.1} parent=11 // pred_fallthru
          _
        // Predicated region
        $region57: #{detection_network_pallas.1} parent=11 // pred_check
          %p374 = pneg %p300
        $region58: #{detection_network_pallas.1} parent=11 // pred_check_branch
          %376 = sbr.rel (%p374) target = $region60
        $region59: #{detection_network_pallas.1} parent=11 // pred_region
          _
        $region60: #{detection_network_pallas.1} parent=11 // pred_fallthru
          _
      $region12: #{detection_network_pallas.1} parent=5 // pred_fallthru
        _
      %p377 = scmp.lt.s32.totalorder %s22, 2
      // Predicated region
      $region61: #{detection_network_pallas.1} parent=5 // pred_check
        %p378 = pneg %p377
      $region62: #{detection_network_pallas.1} parent=5 // pred_check_branch
        %380 = sbr.rel (%p378) target = $region64
      $region63: #{detection_network_pallas.1} parent=5 // pred_region
        // Predicated region
        $region65: #{detection_network_pallas.1} parent=63 // pred_check
          %p381 = pneg %p42
        $region66: #{detection_network_pallas.1} parent=63 // pred_check_branch
          %383 = sbr.rel (%p381) target = $region68
        $region67: #{detection_network_pallas.1} parent=63 // pred_region
          %p384 = scmp.lt.s32.totalorder %s22, 1
          %s385 = scalar_select %p384, %s22, 1
          %s386 = smul.addr %s385, 128
          %s387 = smul.addr %s386, 8
          %s388 = scalar_lea.vmem %s0, %s387
        $region68: #{detection_network_pallas.1} parent=63 // pred_fallthru
          _
      $region64: #{detection_network_pallas.1} parent=5 // pred_fallthru
        _
      %p389 = scmp.le.s32.totalorder 1, %s22
      %p390 = scmp.lt.s32.totalorder %s22, 3
      %p391 = pnand %p389, %p390
      %p392 = pneg %p391
      // Predicated region
      $region69: #{detection_network_pallas.1} parent=5 // pred_check
        _
      $region70: #{detection_network_pallas.1} parent=5 // pred_check_branch
        %394 = sbr.rel (%p391) target = $region72
      $region71: #{detection_network_pallas.1} parent=5 // pred_region
        %s395 = ssub.s32 %s22, 1
        %p396 = scmp.lt.s32.totalorder %s27, 1
        %s397 = scalar_select %p396, %s27, 1
        %s398 = smul.addr %s397, 128
        %s399 = smul.addr %s398, 8
        %s400 = scalar_lea.vmem %s0, %s399
        %p401 = pneg %p48
        %p402 = pneg %p45
        %p403 = pneg %p69
        %p404 = pneg %p66
        %p405 = pneg %p90
        %p406 = pneg %p87
        %p407 = pneg %p111
        %p408 = pneg %p108
        %p409 = pneg %p132
        %p410 = pneg %p129
        %p411 = pneg %p153
        %p412 = pneg %p150
        %p413 = pneg %p174
        %p414 = pneg %p171
        %p415 = pneg %p195
        %p416 = pneg %p192
        %p417 = pneg %p216
        %p418 = pneg %p213
        %p419 = pneg %p237
        %p420 = pneg %p234
        %p421 = pneg %p258
        %p422 = pneg %p255
        %p423 = pneg %p279
        %p424 = pneg %p276
        %p425 = pneg %p300
        %p426 = pneg %p297
        %p427 = pneg %p326
        %p428 = pneg %p323
        %s429 = sand.u32 %s313, 1
        %s430 = scalar_lea.sflag [#allocation6], %s429
        %s431 = sand.u32 %s313, 1
        %s432 = scalar_lea.vmem [#allocation5], %s431
        %p433 = scmp.lt.s32.totalorder %s27, 1
        %s434 = scalar_select %p433, %s27, 1
        %s435 = smul.addr %s434, 128
        %s436 = smul.addr %s435, 8
        %s437 = scalar_lea.vmem %s0, %s436
        %vm438 = vcmask 130048
        %439 = vst.msk [vmem:[#allocation2] sm:$0xff] %vm438, 0.0
        %440 = vst.msk [vmem:[#allocation2 + $0x8] sm:$0xff] %vm438, 0.0
        %vm441 = vcmask 123904
        %442 = vst.msk [vmem:[#allocation2 + $0x10] sm:$0x3] %vm441, 0.0
        %443 = vst.msk [vmem:[#allocation2 + $0x18] sm:$0xff] %vm438, 0.0
        %444 = vst.msk [vmem:[#allocation2 + $0x20] sm:$0xff] %vm438, 0.0
        %445 = vst.msk [vmem:[#allocation2 + $0x28] sm:$0x3] %vm441, 0.0
        %446 = vst.msk [vmem:[#allocation2 + $0x30] sm:$0xff] %vm438, 0.0
        %447 = vst.msk [vmem:[#allocation2 + $0x38] sm:$0xff] %vm438, 0.0
        %448 = vst.msk [vmem:[#allocation2 + $0x40] sm:$0x3] %vm441, 0.0
        %449 = vst.msk [vmem:[#allocation2 + $0x48] sm:$0xff] %vm438, 0.0
        %450 = vst.msk [vmem:[#allocation2 + $0x50] sm:$0xff] %vm438, 0.0
        %451 = vst.msk [vmem:[#allocation2 + $0x58] sm:$0x3] %vm441, 0.0
        %452 = vst.msk [vmem:[#allocation2 + $0x60] sm:$0xff] %vm438, 0.0
        %453 = vst.msk [vmem:[#allocation2 + $0x68] sm:$0xff] %vm438, 0.0
        %454 = vst.msk [vmem:[#allocation2 + $0x70] sm:$0x3] %vm441, 0.0
        %455 = vst.msk [vmem:[#allocation2 + $0x78] sm:$0xff] %vm438, 0.0
        %456 = vst.msk [vmem:[#allocation2 + $0x80] sm:$0xff] %vm438, 0.0
        %457 = vst.msk [vmem:[#allocation2 + $0x88] sm:$0x3] %vm441, 0.0
        %458 = vst.msk [vmem:[#allocation2 + $0x90] sm:$0xff] %vm438, 0.0
        %459 = vst.msk [vmem:[#allocation2 + $0x98] sm:$0xff] %vm438, 0.0
        %460 = vst.msk [vmem:[#allocation2 + $0xa0] sm:$0x3] %vm441, 0.0
        %461 = vst.msk [vmem:[#allocation2 + $0xa8] sm:$0xff] %vm438, 0.0
        %462 = vst.msk [vmem:[#allocation2 + $0xb0] sm:$0xff] %vm438, 0.0
        %463 = vst.msk [vmem:[#allocation2 + $0xb8] sm:$0x3] %vm441, 0.0
        %464 = vst.msk [vmem:[#allocation2 + $0xc0] sm:$0xff] %vm438, 0.0
        %465 = vst.msk [vmem:[#allocation2 + $0xc8] sm:$0xff] %vm438, 0.0
        %466 = vst.msk [vmem:[#allocation2 + $0xd0] sm:$0x3] %vm441, 0.0
        %467 = vst.msk [vmem:[#allocation2 + $0xd8] sm:$0xff] %vm438, 0.0
        %468 = vst.msk [vmem:[#allocation2 + $0xe0] sm:$0xff] %vm438, 0.0
        %469 = vst.msk [vmem:[#allocation2 + $0xe8] sm:$0x3] %vm441, 0.0
        %470 = vst.msk [vmem:[#allocation2 + $0xf0] sm:$0xff] %vm438, 0.0
        %471 = vst.msk [vmem:[#allocation2 + $0xf8] sm:$0xff] %vm438, 0.0
        %472 = vst.msk [vmem:[#allocation2 + $0x100] sm:$0x3] %vm441, 0.0
        %473 = vst.msk [vmem:[#allocation2 + $0x108] sm:$0xff] %vm438, 0.0
        %474 = vst.msk [vmem:[#allocation2 + $0x110] sm:$0xff] %vm438, 0.0
        %475 = vst.msk [vmem:[#allocation2 + $0x118] sm:$0x3] %vm441, 0.0
        %476 = vst.msk [vmem:[#allocation2 + $0x120] sm:$0xff] %vm438, 0.0
        %477 = vst.msk [vmem:[#allocation2 + $0x128] sm:$0xff] %vm438, 0.0
        %478 = vst.msk [vmem:[#allocation2 + $0x130] sm:$0x3] %vm441, 0.0
        %479 = vst.msk [vmem:[#allocation2 + $0x138] sm:$0xff] %vm438, 0.0
        %480 = vst.msk [vmem:[#allocation2 + $0x140] sm:$0xff] %vm438, 0.0
        %481 = vst.msk [vmem:[#allocation2 + $0x148] sm:$0x3] %vm441, 0.0
        %482 = vst.msk [vmem:[#allocation2 + $0x150] sm:$0xff] %vm438, 0.0
        %483 = vst.msk [vmem:[#allocation2 + $0x158] sm:$0xff] %vm438, 0.0
        %484 = vst.msk [vmem:[#allocation2 + $0x160] sm:$0x3] %vm441, 0.0
        %485 = vst.msk [vmem:[#allocation2 + $0x168] sm:$0xff] %vm438, 0.0
        %486 = vst.msk [vmem:[#allocation2 + $0x170] sm:$0xff] %vm438, 0.0
        %487 = vst.msk [vmem:[#allocation2 + $0x178] sm:$0x3] %vm441, 0.0
        %488 = vst.msk [vmem:[#allocation2 + $0x180] sm:$0xff] %vm438, 0.0
        %489 = vst.msk [vmem:[#allocation2 + $0x188] sm:$0xff] %vm438, 0.0
        %490 = vst.msk [vmem:[#allocation2 + $0x190] sm:$0x3] %vm441, 0.0
        %491 = vst.msk [vmem:[#allocation2 + $0x198] sm:$0xff] %vm438, 0.0
        %492 = vst.msk [vmem:[#allocation2 + $0x1a0] sm:$0xff] %vm438, 0.0
        %493 = vst.msk [vmem:[#allocation2 + $0x1a8] sm:$0x3] %vm441, 0.0
        %vm494 = vcmask 261120
        %495 = vst.msk [vmem:[#allocation3] sm:$0xff] %vm494, 0.0
        %vm496 = vcmask 254976
        %497 = vst.msk [vmem:[#allocation3 + $0x8] sm:$0x3] %vm496, 0.0
        %498 = vst.msk [vmem:[#allocation3 + $0x10] sm:$0xff] %vm494, 0.0
        %499 = vst.msk [vmem:[#allocation3 + $0x18] sm:$0x3] %vm496, 0.0
        %500 = vst.msk [vmem:[#allocation3 + $0x20] sm:$0xff] %vm494, 0.0
        %501 = vst.msk [vmem:[#allocation3 + $0x28] sm:$0x3] %vm496, 0.0
        %502 = vst.msk [vmem:[#allocation3 + $0x30] sm:$0xff] %vm494, 0.0
        %503 = vst.msk [vmem:[#allocation3 + $0x38] sm:$0x3] %vm496, 0.0
        %504 = vst.msk [vmem:[#allocation3 + $0x40] sm:$0xff] %vm494, 0.0
        %505 = vst.msk [vmem:[#allocation3 + $0x48] sm:$0x3] %vm496, 0.0
        %506 = vst.msk [vmem:[#allocation3 + $0x50] sm:$0xff] %vm494, 0.0
        %507 = vst.msk [vmem:[#allocation3 + $0x58] sm:$0x3] %vm496, 0.0
        %508 = vst.msk [vmem:[#allocation3 + $0x60] sm:$0xff] %vm494, 0.0
        %509 = vst.msk [vmem:[#allocation3 + $0x68] sm:$0x3] %vm496, 0.0
        %510 = vst.msk [vmem:[#allocation3 + $0x70] sm:$0xff] %vm494, 0.0
        %511 = vst.msk [vmem:[#allocation3 + $0x78] sm:$0x3] %vm496, 0.0
        %512 = vst.msk [vmem:[#allocation3 + $0x80] sm:$0xff] %vm494, 0.0
        %513 = vst.msk [vmem:[#allocation3 + $0x88] sm:$0x3] %vm496, 0.0
        %514 = vst.msk [vmem:[#allocation3 + $0x90] sm:$0xff] %vm494, 0.0
        %515 = vst.msk [vmem:[#allocation3 + $0x98] sm:$0x3] %vm496, 0.0
        %vm516 = vcmask 259072
        %517 = vst.msk [vmem:[#allocation4] sm:$0x3f] %vm516, 0.0
        %518 = vst.msk [vmem:[#allocation4 + $0x8] sm:$0x3f] %vm516, 0.0
        %519 = vst.msk [vmem:[#allocation4 + $0x10] sm:$0x3f] %vm516, 0.0
        %520 = vst.msk [vmem:[#allocation4 + $0x18] sm:$0x3f] %vm516, 0.0
        %521 = vst.msk [vmem:[#allocation4 + $0x20] sm:$0x3f] %vm516, 0.0
        %522 = vst.msk [vmem:[#allocation4 + $0x28] sm:$0x3f] %vm516, 0.0
        %v523 = vlaneseq
        %v524 = vshrl.u32 %v523, 7
        %v525 = vadd.s32 %v524, 8
        %v526 = vlaneseq
        %v527 = vand.u32 %v526, 127
        %v528 = vmul.u32 %v524, 2
        %v529 = vmul.u32 %v525, 2
        %vm530 = vcmp.eq.s32.totalorder %v527, %v528
        %vm531 = vcmp.eq.s32.totalorder %v527, %v529
        %v532 = vsel %vm530, 1, 0
        %v533 = vsel %vm531, 1, 0
        %v534 = vcvt.s32.f32 %v532
        %v535 = vcvt.s32.f32 %v533
        %v536 = vadd.s32 %v528, 1
        %v537 = vadd.s32 %v529, 1
        %vm538 = vcmp.eq.s32.totalorder %v527, %v536
        %vm539 = vcmp.eq.s32.totalorder %v527, %v537
        %v540 = vsel %vm538, 1, 0
        %v541 = vsel %vm539, 1, 0
        %v542 = vcvt.s32.f32 %v540
        %v543 = vcvt.s32.f32 %v541
        loop: start=0, step=1, limit=16
        $region73: #{detection_network_pallas.1} parent=71 // loop_pre_header
          _
        $region74: #{detection_network_pallas.1} parent=71 // loop_header
          %s545 = sphi 0, %s549
          %p546 = scmp.ge.s32.totalorder %s545, 16
        $region75: #{detection_network_pallas.1} parent=71 // loop_header_branch
          %548 = sbr.rel (%p546) target = $region79
        $region76: #{detection_network_pallas.1} parent=71 // loop_body
          %s550 = smul.u32 %s545, 2
          %s551 = smul.u32 %s550, 32
          %s552 = scalar_lea.vmem %s437, %s551
          %v553 = vld [vmem:[%s552] sm:$0xff]
          %v554 = vld [vmem:[%s552 + $0x8] sm:$0xff]
          %v555 = vld [vmem:[%s552 + $0x10] sm:$0xff]
          %v556 = vld [vmem:[%s552 + $0x18] sm:$0xff]
          %v557 = vld [vmem:[%s1] sm:$0xff]
          %v558 = vld [vmem:[%s1 + $0x8] sm:$0xff]
          %v559 = vld [vmem:[%s1 + $0x10] sm:$0xff]
          %v560 = vld [vmem:[%s1 + $0x18] sm:$0xff]
          %v561 = vld [vmem:[%s1 + $0x20] sm:$0xff]
          %v562 = vld [vmem:[%s1 + $0x28] sm:$0xff]
          %v563 = vld [vmem:[%s1 + $0x30] sm:$0xff]
          %v564 = vld [vmem:[%s1 + $0x38] sm:$0xff]
          %v565 = vld [vmem:[%s1 + $0x40] sm:$0xff]
          %v566 = vld [vmem:[%s1 + $0x48] sm:$0x7]
          %vm567 = vcmask 613376
          %v569 = vsel %vm567, %v553, 0
          %v572 = vsel %vm567, %v554, 0
          %v575 = vsel %vm567, %v555, 0
          %v578 = vsel %vm567, %v556, 0
          %vm580 = vcmask 1042432
          %v582 = vsel %vm580, %v566, 0
          %584 = vmatprep.subr.mxu0 0.0
          %585 = vmatpush1.msra.mxu0 %v557
          %586 = vmatprep.subr.mxu0 0.0
          %587 = vmatpush1.msra.mxu0 %v558
          %588 = vmatprep.subr.mxu0 0.0
          %589 = vmatpush1.msra.mxu0 %v559
          %590 = vmatprep.subr.mxu0 0.0
          %591 = vmatpush1.msra.mxu0 %v560
          %592 = vmatprep.subr.mxu0 0.0
          %593 = vmatpush1.msra.mxu0 %v561
          %594 = vmatprep.subr.mxu0 0.0
          %595 = vmatpush1.msra.mxu0 %v562
          %596 = vmatprep.subr.mxu0 0.0
          %597 = vmatpush1.msra.mxu0 %v563
          %598 = vmatprep.subr.mxu0 0.0
          %599 = vmatpush1.msra.mxu0 %v564
          %600 = vmatprep.subr.mxu0 0.0
          %601 = vmatpush1.msra.mxu0 %v565
          %602 = vmatprep.subr.mxu0 0.0
          %603 = vmatpush1.msra.mxu0 %v582
          %604 = vmatprep.subr.mxu0 0.0
          %605 = vmatpush1.msra.mxu0 0.0
          %606 = vmatprep.subr.mxu0 0.0
          %607 = vmatpush1.msra.mxu0 0.0
          %608 = vmatprep.subr.mxu0 0.0
          %609 = vmatpush1.msra.mxu0 0.0
          %610 = vmatprep.subr.mxu0 0.0
          %611 = vmatpush1.msra.mxu0 0.0
          %612 = vmatprep.subr.mxu0 0.0
          %613 = vmatpush1.msra.mxu0 0.0
          %614 = vmatprep.subr.mxu0 0.0
          %615 = vmatpush1.msra.mxu0 0.0
          %616 = vmatprep.subr.mxu0 0.0
          %617 = vmatpush1.msra.mxu0 0.0
          %618 = vmatprep.subr.mxu0 0.0
          %619 = vmatpush1.msra.mxu0 0.0
          %620 = vmatprep.subr.mxu0 0.0
          %621 = vmatpush1.msra.mxu0 0.0
          %622 = vmatprep.subr.mxu0 0.0
          %623 = vmatpush1.msra.mxu0 0.0
          %624 = vmatprep.subr.mxu0 0.0
          %625 = vmatpush1.msra.mxu0 0.0
          %626 = vmatprep.subr.mxu0 0.0
          %627 = vmatpush1.msra.mxu0 0.0
          %628 = vmatprep.subr.mxu0 0.0
          %629 = vmatpush1.msra.mxu0 0.0
          %630 = vmatprep.subr.mxu0 0.0
          %631 = vmatpush1.msra.mxu0 0.0
          %632 = vmatprep.subr.mxu0 0.0
          %633 = vmatpush1.msra.mxu0 0.0
          %634 = vmatprep.subr.mxu0 0.0
          %635 = vmatpush1.msra.mxu0 0.0
          %636 = vmatprep.subr.mxu0 0.0
          %637 = vmatpush1.msra.mxu0 0.0
          %638 = vmatprep.subr.mxu0 0.0
          %639 = vmatpush1.msra.mxu0 0.0
          %640 = vmatprep.subr.mxu0 0.0
          %641 = vmatpush1.msra.mxu0 0.0
          %642 = vmatprep.subr.mxu0 0.0
          %643 = vmatpush1.msra.mxu0 0.0
          %644 = vmatprep.subr.mxu0 0.0
          %645 = vmatpush1.msra.mxu0 0.0
          %646 = vmatprep.subr.mxu0 0.0
          %647 = vmatpush1.msra.mxu0 0.0
          %648 = vmatprep.mubr.f32.mxu0 0.0
          %649 = vmatmul.mubr.f32.gmra.mrb[0].mxu0 %v569
          %v650 = vpop.f32.mrb[0].mxu0
          %v651 = vadd.f32 0.0, %v650
          %v652 = vpop.f32.mrb[0].mxu0
          %653 = vmatprep.mubr.f32.mxu0 0.0
          %654 = vmatmul.mubr.f32.gmra.mrb[0].mxu0 %v572
          %v655 = vpop.f32.mrb[0].mxu0
          %v656 = vadd.f32 0.0, %v655
          %v657 = vpop.f32.mrb[0].mxu0
          %658 = vmatprep.mubr.f32.mxu0 0.0
          %659 = vmatmul.mubr.f32.gmra.mrb[0].mxu0 %v575
          %v660 = vpop.f32.mrb[0].mxu0
          %v661 = vadd.f32 0.0, %v660
          %v662 = vpop.f32.mrb[0].mxu0
          %663 = vmatprep.mubr.f32.mxu0 0.0
          %664 = vmatmul.mubr.f32.gmra.mrb[0].mxu0 %v578
          %v665 = vpop.f32.mrb[0].mxu0
          %v666 = vadd.f32 0.0, %v665
          %v667 = vpop.f32.mrb[0].mxu0
          %668 = vdwg.mxu0
          %s669 = sadd.s32 %s550, 1
          %s670 = smul.u32 %s669, 32
          %s671 = scalar_lea.vmem %s437, %s670
          %v672 = vld [vmem:[%s671] sm:$0xff]
          %v673 = vld [vmem:[%s671 + $0x8] sm:$0xff]
          %v674 = vld [vmem:[%s671 + $0x10] sm:$0xff]
          %v675 = vld [vmem:[%s671 + $0x18] sm:$0xff]
          %v677 = vsel %vm567, %v672, 0
          %v680 = vsel %vm567, %v673, 0
          %v683 = vsel %vm567, %v674, 0
          %v686 = vsel %vm567, %v675, 0
          %688 = vmatprep.subr.mxu0 0.0
          %689 = vmatpush1.msra.mxu0 %v557
          %690 = vmatprep.subr.mxu0 0.0
          %691 = vmatpush1.msra.mxu0 %v558
          %692 = vmatprep.subr.mxu0 0.0
          %693 = vmatpush1.msra.mxu0 %v559
          %694 = vmatprep.subr.mxu0 0.0
          %695 = vmatpush1.msra.mxu0 %v560
          %696 = vmatprep.subr.mxu0 0.0
          %697 = vmatpush1.msra.mxu0 %v561
          %698 = vmatprep.subr.mxu0 0.0
          %699 = vmatpush1.msra.mxu0 %v562
          %700 = vmatprep.subr.mxu0 0.0
          %701 = vmatpush1.msra.mxu0 %v563
          %702 = vmatprep.subr.mxu0 0.0
          %703 = vmatpush1.msra.mxu0 %v564
          %704 = vmatprep.subr.mxu0 0.0
          %705 = vmatpush1.msra.mxu0 %v565
          %706 = vmatprep.subr.mxu0 0.0
          %707 = vmatpush1.msra.mxu0 %v582
          %708 = vmatprep.subr.mxu0 0.0
          %709 = vmatpush1.msra.mxu0 0.0
          %710 = vmatprep.subr.mxu0 0.0
          %711 = vmatpush1.msra.mxu0 0.0
          %712 = vmatprep.subr.mxu0 0.0
          %713 = vmatpush1.msra.mxu0 0.0
          %714 = vmatprep.subr.mxu0 0.0
          %715 = vmatpush1.msra.mxu0 0.0
          %716 = vmatprep.subr.mxu0 0.0
          %717 = vmatpush1.msra.mxu0 0.0
          %718 = vmatprep.subr.mxu0 0.0
          %719 = vmatpush1.msra.mxu0 0.0
          %720 = vmatprep.subr.mxu0 0.0
          %721 = vmatpush1.msra.mxu0 0.0
          %722 = vmatprep.subr.mxu0 0.0
          %723 = vmatpush1.msra.mxu0 0.0
          %724 = vmatprep.subr.mxu0 0.0
          %725 = vmatpush1.msra.mxu0 0.0
          %726 = vmatprep.subr.mxu0 0.0
          %727 = vmatpush1.msra.mxu0 0.0
          %728 = vmatprep.subr.mxu0 0.0
          %729 = vmatpush1.msra.mxu0 0.0
          %730 = vmatprep.subr.mxu0 0.0
          %731 = vmatpush1.msra.mxu0 0.0
          %732 = vmatprep.subr.mxu0 0.0
          %733 = vmatpush1.msra.mxu0 0.0
          %734 = vmatprep.subr.mxu0 0.0
          %735 = vmatpush1.msra.mxu0 0.0
          %736 = vmatprep.subr.mxu0 0.0
          %737 = vmatpush1.msra.mxu0 0.0
          %738 = vmatprep.subr.mxu0 0.0
          %739 = vmatpush1.msra.mxu0 0.0
          %740 = vmatprep.subr.mxu0 0.0
          %741 = vmatpush1.msra.mxu0 0.0
          %742 = vmatprep.subr.mxu0 0.0
          %743 = vmatpush1.msra.mxu0 0.0
          %744 = vmatprep.subr.mxu0 0.0
          %745 = vmatpush1.msra.mxu0 0.0
          %746 = vmatprep.subr.mxu0 0.0
          %747 = vmatpush1.msra.mxu0 0.0
          %748 = vmatprep.subr.mxu0 0.0
          %749 = vmatpush1.msra.mxu0 0.0
          %750 = vmatprep.subr.mxu0 0.0
          %751 = vmatpush1.msra.mxu0 0.0
          %752 = vmatprep.mubr.f32.mxu0 0.0
          %753 = vmatmul.mubr.f32.gmra.mrb[0].mxu0 %v677
          %v754 = vpop.f32.mrb[0].mxu0
          %v755 = vadd.f32 0.0, %v754
          %v756 = vpop.f32.mrb[0].mxu0
          %757 = vmatprep.mubr.f32.mxu0 0.0
          %758 = vmatmul.mubr.f32.gmra.mrb[0].mxu0 %v680
          %v759 = vpop.f32.mrb[0].mxu0
          %v760 = vadd.f32 0.0, %v759
          %v761 = vpop.f32.mrb[0].mxu0
          %762 = vmatprep.mubr.f32.mxu0 0.0
          %763 = vmatmul.mubr.f32.gmra.mrb[0].mxu0 %v683
          %v764 = vpop.f32.mrb[0].mxu0
          %v765 = vadd.f32 0.0, %v764
          %v766 = vpop.f32.mrb[0].mxu0
          %767 = vmatprep.mubr.f32.mxu0 0.0
          %768 = vmatmul.mubr.f32.gmra.mrb[0].mxu0 %v686
          %v769 = vpop.f32.mrb[0].mxu0
          %v770 = vadd.f32 0.0, %v769
          %v771 = vpop.f32.mrb[0].mxu0
          %772 = vdwg.mxu0
          %v773 = vmax.f32 %v651, %v755
          %v774 = vmax.f32 %v656, %v760
          %v775 = vmax.f32 %v661, %v765
          %v776 = vmax.f32 %v666, %v770
          %v778 = vsel %vm494, %v534, 0
          %v781 = vsel %vm494, %v535, 0
          %783 = vmatprep.subr.mxu0 0.0
          %784 = vmatpush1.msra.mxu0 %v773
          %785 = vmatprep.subr.mxu0 0.0
          %786 = vmatpush1.msra.mxu0 %v774
          %787 = vmatprep.subr.mxu0 0.0
          %788 = vmatpush1.msra.mxu0 %v775
          %789 = vmatprep.subr.mxu0 0.0
          %790 = vmatpush1.msra.mxu0 %v776
          %791 = vmatprep.subr.mxu0 0.0
          %792 = vmatpush1.msra.mxu0 0.0
          %793 = vmatprep.subr.mxu0 0.0
          %794 = vmatpush1.msra.mxu0 0.0
          %795 = vmatprep.subr.mxu0 0.0
          %796 = vmatpush1.msra.mxu0 0.0
          %797 = vmatprep.subr.mxu0 0.0
          %798 = vmatpush1.msra.mxu0 0.0
          %799 = vmatprep.subr.mxu0 0.0
          %800 = vmatpush1.msra.mxu0 0.0
          %801 = vmatprep.subr.mxu0 0.0
          %802 = vmatpush1.msra.mxu0 0.0
          %803 = vmatprep.subr.mxu0 0.0
          %804 = vmatpush1.msra.mxu0 0.0
          %805 = vmatprep.subr.mxu0 0.0
          %806 = vmatpush1.msra.mxu0 0.0
          %807 = vmatprep.subr.mxu0 0.0
          %808 = vmatpush1.msra.mxu0 0.0
          %809 = vmatprep.subr.mxu0 0.0
          %810 = vmatpush1.msra.mxu0 0.0
          %811 = vmatprep.subr.mxu0 0.0
          %812 = vmatpush1.msra.mxu0 0.0
          %813 = vmatprep.subr.mxu0 0.0
          %814 = vmatpush1.msra.mxu0 0.0
          %815 = vmatprep.subr.mxu0 0.0
          %816 = vmatpush1.msra.mxu0 0.0
          %817 = vmatprep.subr.mxu0 0.0
          %818 = vmatpush1.msra.mxu0 0.0
          %819 = vmatprep.subr.mxu0 0.0
          %820 = vmatpush1.msra.mxu0 0.0
          %821 = vmatprep.subr.mxu0 0.0
          %822 = vmatpush1.msra.mxu0 0.0
          %823 = vmatprep.subr.mxu0 0.0
          %824 = vmatpush1.msra.mxu0 0.0
          %825 = vmatprep.subr.mxu0 0.0
          %826 = vmatpush1.msra.mxu0 0.0
          %827 = vmatprep.subr.mxu0 0.0
          %828 = vmatpush1.msra.mxu0 0.0
          %829 = vmatprep.subr.mxu0 0.0
          %830 = vmatpush1.msra.mxu0 0.0
          %831 = vmatprep.subr.mxu0 0.0
          %832 = vmatpush1.msra.mxu0 0.0
          %833 = vmatprep.subr.mxu0 0.0
          %834 = vmatpush1.msra.mxu0 0.0
          %835 = vmatprep.subr.mxu0 0.0
          %836 = vmatpush1.msra.mxu0 0.0
          %837 = vmatprep.subr.mxu0 0.0
          %838 = vmatpush1.msra.mxu0 0.0
          %839 = vmatprep.subr.mxu0 0.0
          %840 = vmatpush1.msra.mxu0 0.0
          %841 = vmatprep.subr.mxu0 0.0
          %842 = vmatpush1.msra.mxu0 0.0
          %843 = vmatprep.subr.mxu0 0.0
          %844 = vmatpush1.msra.mxu0 0.0
          %845 = vmatprep.subr.mxu0 0.0
          %846 = vmatpush1.msra.mxu0 0.0
          %847 = vmatprep.mubr.f32.mxu0 0.0
          %848 = vmatmul.mubr.f32.gmra.mrb[0].mxu0 %v778
          %v849 = vpop.f32.mrb[0].mxu0
          %v850 = vadd.f32 0.0, %v849
          %v851 = vpop.f32.mrb[0].mxu0
          %852 = vmatprep.mubr.f32.mxu0 0.0
          %853 = vmatmul.mubr.f32.gmra.mrb[0].mxu0 %v781
          %v854 = vpop.f32.mrb[0].mxu0
          %v855 = vadd.f32 0.0, %v854
          %v856 = vpop.f32.mrb[0].mxu0
          %857 = vdwg.mxu0
          %v859 = vsel %vm494, %v542, 0
          %v862 = vsel %vm494, %v543, 0
          %864 = vmatprep.subr.mxu0 0.0
          %865 = vmatpush1.msra.mxu0 %v773
          %866 = vmatprep.subr.mxu0 0.0
          %867 = vmatpush1.msra.mxu0 %v774
          %868 = vmatprep.subr.mxu0 0.0
          %869 = vmatpush1.msra.mxu0 %v775
          %870 = vmatprep.subr.mxu0 0.0
          %871 = vmatpush1.msra.mxu0 %v776
          %872 = vmatprep.subr.mxu0 0.0
          %873 = vmatpush1.msra.mxu0 0.0
          %874 = vmatprep.subr.mxu0 0.0
          %875 = vmatpush1.msra.mxu0 0.0
          %876 = vmatprep.subr.mxu0 0.0
          %877 = vmatpush1.msra.mxu0 0.0
          %878 = vmatprep.subr.mxu0 0.0
          %879 = vmatpush1.msra.mxu0 0.0
          %880 = vmatprep.subr.mxu0 0.0
          %881 = vmatpush1.msra.mxu0 0.0
          %882 = vmatprep.subr.mxu0 0.0
          %883 = vmatpush1.msra.mxu0 0.0
          %884 = vmatprep.subr.mxu0 0.0
          %885 = vmatpush1.msra.mxu0 0.0
          %886 = vmatprep.subr.mxu0 0.0
          %887 = vmatpush1.msra.mxu0 0.0
          %888 = vmatprep.subr.mxu0 0.0
          %889 = vmatpush1.msra.mxu0 0.0
          %890 = vmatprep.subr.mxu0 0.0
          %891 = vmatpush1.msra.mxu0 0.0
          %892 = vmatprep.subr.mxu0 0.0
          %893 = vmatpush1.msra.mxu0 0.0
          %894 = vmatprep.subr.mxu0 0.0
          %895 = vmatpush1.msra.mxu0 0.0
          %896 = vmatprep.subr.mxu0 0.0
          %897 = vmatpush1.msra.mxu0 0.0
          %898 = vmatprep.subr.mxu0 0.0
          %899 = vmatpush1.msra.mxu0 0.0
          %900 = vmatprep.subr.mxu0 0.0
          %901 = vmatpush1.msra.mxu0 0.0
          %902 = vmatprep.subr.mxu0 0.0
          %903 = vmatpush1.msra.mxu0 0.0
          %904 = vmatprep.subr.mxu0 0.0
          %905 = vmatpush1.msra.mxu0 0.0
          %906 = vmatprep.subr.mxu0 0.0
          %907 = vmatpush1.msra.mxu0 0.0
          %908 = vmatprep.subr.mxu0 0.0
          %909 = vmatpush1.msra.mxu0 0.0
          %910 = vmatprep.subr.mxu0 0.0
          %911 = vmatpush1.msra.mxu0 0.0
          %912 = vmatprep.subr.mxu0 0.0
          %913 = vmatpush1.msra.mxu0 0.0
          %914 = vmatprep.subr.mxu0 0.0
          %915 = vmatpush1.msra.mxu0 0.0
          %916 = vmatprep.subr.mxu0 0.0
          %917 = vmatpush1.msra.mxu0 0.0
          %918 = vmatprep.subr.mxu0 0.0
          %919 = vmatpush1.msra.mxu0 0.0
          %920 = vmatprep.subr.mxu0 0.0
          %921 = vmatpush1.msra.mxu0 0.0
          %922 = vmatprep.subr.mxu0 0.0
          %923 = vmatpush1.msra.mxu0 0.0
          %924 = vmatprep.subr.mxu0 0.0
          %925 = vmatpush1.msra.mxu0 0.0
          %926 = vmatprep.subr.mxu0 0.0
          %927 = vmatpush1.msra.mxu0 0.0
          %928 = vmatprep.mubr.f32.mxu0 0.0
          %929 = vmatmul.mubr.f32.gmra.mrb[0].mxu0 %v859
          %v930 = vpop.f32.mrb[0].mxu0
          %v931 = vadd.f32 0.0, %v930
          %v932 = vpop.f32.mrb[0].mxu0
          %933 = vmatprep.mubr.f32.mxu0 0.0
          %934 = vmatmul.mubr.f32.gmra.mrb[0].mxu0 %v862
          %v935 = vpop.f32.mrb[0].mxu0
          %v936 = vadd.f32 0.0, %v935
          %v937 = vpop.f32.mrb[0].mxu0
          %938 = vdwg.mxu0
          %v939 = vmax.f32 %v850, %v931
          %v940 = vmax.f32 %v855, %v936
          %v941 = vld [vmem:[%s2] sm:$0x1]
          %v943 = vlaneseq
          %v944 = vshrl.u32 %v943, 7
          %v945 = vsub.s32 0, %v944
          %v946 = vrot.slane %v941, %v945
          %v948 = vadd.f32 %v939, %v946
          %v949 = vadd.f32 %v940, %v946
          %v950 = vmax.f32 %v948, 0.0
          %v951 = vmax.f32 %v949, 0.0
          %s952 = sadd.s32 %s545, 1
          %s953 = smul.u32 %s952, 24
          %s954 = scalar_lea.vmem [#allocation2], %s953
          %955 = vst.msk [vmem:[%s954 + $0x1] sm:$0xff] %vm438, %v950
          %956 = vst.msk [vmem:[%s954 + $0x9] sm:$0xff] %vm438, %v951
        $region77: #{detection_network_pallas.1} parent=71 // loop_footer
          %s549 = sadd.s32 1, %s545
        $region78: #{detection_network_pallas.1} parent=71 // loop_footer_branch
          %544 = sbr.rel target = $region74
        $region79: #{detection_network_pallas.1} parent=71 // loop_exit
          _
        loop: start=0, step=1, limit=8
        $region80: #{detection_network_pallas.1} parent=71 // loop_pre_header
          _
        $region81: #{detection_network_pallas.1} parent=71 // loop_header
          %s958 = sphi 0, %s962
          %p959 = scmp.ge.s32.totalorder %s958, 8
        $region82: #{detection_network_pallas.1} parent=71 // loop_header_branch
          %961 = sbr.rel (%p959) target = $region86
        $region83: #{detection_network_pallas.1} parent=71 // loop_body
          %s963 = smul.u32 %s958, 2
          %s964 = smul.u32 %s963, 24
          %s965 = scalar_lea.vmem [#allocation2], %s964
          %v966 = vld [vmem:[%s965] sm:$0xff]
          %v967 = vld [vmem:[%s965 + $0x8] sm:$0xff]
          %v968 = vld [vmem:[%s965 + $0x10] sm:$0x3]
          %s969 = sadd.s32 %s963, 1
          %s970 = smul.u32 %s969, 24
          %s971 = scalar_lea.vmem [#allocation2], %s970
          %v972 = vld [vmem:[%s971] sm:$0xff]
          %v973 = vld [vmem:[%s971 + $0x8] sm:$0xff]
          %v974 = vld [vmem:[%s971 + $0x10] sm:$0x3]
          %s975 = sadd.s32 %s963, 2
          %s976 = smul.u32 %s975, 24
          %s977 = scalar_lea.vmem [#allocation2], %s976
          %v978 = vld [vmem:[%s977] sm:$0xff]
          %v979 = vld [vmem:[%s977 + $0x8] sm:$0xff]
          %v980 = vld [vmem:[%s977 + $0x10] sm:$0x3]
          %s981 = sadd.s32 %s963, 3
          %s982 = smul.u32 %s981, 24
          %s983 = scalar_lea.vmem [#allocation2], %s982
          %v984 = vld [vmem:[%s983] sm:$0xff]
          %v985 = vld [vmem:[%s983 + $0x8] sm:$0xff]
          %v986 = vld [vmem:[%s983 + $0x10] sm:$0x3]
          %v987 = vld [vmem:[%s3] sm:$0xff]
          %v988 = vld [vmem:[%s3 + $0x8] sm:$0xff]
          %s989 = scalar_lea.vmem %s3, 16
          %v990 = vld [vmem:[%s989] sm:$0xff]
          %v991 = vld [vmem:[%s989 + $0x8] sm:$0xff]
          %vm995 = vcmask 1046528
          %v996 = vrot.slane %v966, 1
          %v997 = vrot.slane %v967, 1
          %v998 = vsel %vm995, %v996, %v997
          %v999 = vrot.slane %v968, 1
          %v1000 = vsel %vm995, %v997, %v999
          %v1001 = vsel %vm438, %v998, 0
          %v1003 = vsel %vm438, %v1000, 0
          %1005 = vmatprep.subr.mxu0 0.0
          %1006 = vmatpush1.msra.mxu0 %v990
          %1007 = vmatprep.subr.mxu0 0.0
          %1008 = vmatpush1.msra.mxu0 %v991
          %1009 = vmatprep.subr.mxu0 0.0
          %1010 = vmatpush1.msra.mxu0 0.0
          %1011 = vmatprep.subr.mxu0 0.0
          %1012 = vmatpush1.msra.mxu0 0.0
          %1013 = vmatprep.subr.mxu0 0.0
          %1014 = vmatpush1.msra.mxu0 0.0
          %1015 = vmatprep.subr.mxu0 0.0
          %1016 = vmatpush1.msra.mxu0 0.0
          %1017 = vmatprep.subr.mxu0 0.0
          %1018 = vmatpush1.msra.mxu0 0.0
          %1019 = vmatprep.subr.mxu0 0.0
          %1020 = vmatpush1.msra.mxu0 0.0
          %1021 = vmatprep.subr.mxu0 0.0
          %1022 = vmatpush1.msra.mxu0 0.0
          %1023 = vmatprep.subr.mxu0 0.0
          %1024 = vmatpush1.msra.mxu0 0.0
          %1025 = vmatprep.subr.mxu0 0.0
          %1026 = vmatpush1.msra.mxu0 0.0
          %1027 = vmatprep.subr.mxu0 0.0
          %1028 = vmatpush1.msra.mxu0 0.0
          %1029 = vmatprep.subr.mxu0 0.0
          %1030 = vmatpush1.msra.mxu0 0.0
          %1031 = vmatprep.subr.mxu0 0.0
          %1032 = vmatpush1.msra.mxu0 0.0
          %1033 = vmatprep.subr.mxu0 0.0
          %1034 = vmatpush1.msra.mxu0 0.0
          %1035 = vmatprep.subr.mxu0 0.0
          %1036 = vmatpush1.msra.mxu0 0.0
          %1037 = vmatprep.subr.mxu0 0.0
          %1038 = vmatpush1.msra.mxu0 0.0
          %1039 = vmatprep.subr.mxu0 0.0
          %1040 = vmatpush1.msra.mxu0 0.0
          %1041 = vmatprep.subr.mxu0 0.0
          %1042 = vmatpush1.msra.mxu0 0.0
          %1043 = vmatprep.subr.mxu0 0.0
          %1044 = vmatpush1.msra.mxu0 0.0
          %1045 = vmatprep.subr.mxu0 0.0
          %1046 = vmatpush1.msra.mxu0 0.0
          %1047 = vmatprep.subr.mxu0 0.0
          %1048 = vmatpush1.msra.mxu0 0.0
          %1049 = vmatprep.subr.mxu0 0.0
          %1050 = vmatpush1.msra.mxu0 0.0
          %1051 = vmatprep.subr.mxu0 0.0
          %1052 = vmatpush1.msra.mxu0 0.0
          %1053 = vmatprep.subr.mxu0 0.0
          %1054 = vmatpush1.msra.mxu0 0.0
          %1055 = vmatprep.subr.mxu0 0.0
          %1056 = vmatpush1.msra.mxu0 0.0
          %1057 = vmatprep.subr.mxu0 0.0
          %1058 = vmatpush1.msra.mxu0 0.0
          %1059 = vmatprep.subr.mxu0 0.0
          %1060 = vmatpush1.msra.mxu0 0.0
          %1061 = vmatprep.subr.mxu0 0.0
          %1062 = vmatpush1.msra.mxu0 0.0
          %1063 = vmatprep.subr.mxu0 0.0
          %1064 = vmatpush1.msra.mxu0 0.0
          %1065 = vmatprep.subr.mxu0 0.0
          %1066 = vmatpush1.msra.mxu0 0.0
          %1067 = vmatprep.subr.mxu0 0.0
          %1068 = vmatpush1.msra.mxu0 0.0
          %1069 = vmatprep.mubr.f32.mxu0 0.0
          %1070 = vmatmul.mubr.f32.gmra.mrb[0].mxu0 %v1001
          %v1071 = vpop.f32.mrb[0].mxu0
          %v1072 = vadd.f32 0.0, %v1071
          %v1073 = vpop.f32.mrb[0].mxu0
          %1074 = vmatprep.mubr.f32.mxu0 0.0
          %1075 = vmatmul.mubr.f32.gmra.mrb[0].mxu0 %v1003
          %v1076 = vpop.f32.mrb[0].mxu0
          %v1077 = vadd.f32 0.0, %v1076
          %v1078 = vpop.f32.mrb[0].mxu0
          %1079 = vdwg.mxu0
          %v1080 = vsel %vm438, %v966, 0
          %v1082 = vsel %vm438, %v967, 0
          %1084 = vmatprep.subr.mxu0 0.0
          %1085 = vmatpush1.msra.mxu0 %v987
          %1086 = vmatprep.subr.mxu0 0.0
          %1087 = vmatpush1.msra.mxu0 %v988
          %1088 = vmatprep.subr.mxu0 0.0
          %1089 = vmatpush1.msra.mxu0 0.0
          %1090 = vmatprep.subr.mxu0 0.0
          %1091 = vmatpush1.msra.mxu0 0.0
          %1092 = vmatprep.subr.mxu0 0.0
          %1093 = vmatpush1.msra.mxu0 0.0
          %1094 = vmatprep.subr.mxu0 0.0
          %1095 = vmatpush1.msra.mxu0 0.0
          %1096 = vmatprep.subr.mxu0 0.0
          %1097 = vmatpush1.msra.mxu0 0.0
          %1098 = vmatprep.subr.mxu0 0.0
          %1099 = vmatpush1.msra.mxu0 0.0
          %1100 = vmatprep.subr.mxu0 0.0
          %1101 = vmatpush1.msra.mxu0 0.0
          %1102 = vmatprep.subr.mxu0 0.0
          %1103 = vmatpush1.msra.mxu0 0.0
          %1104 = vmatprep.subr.mxu0 0.0
          %1105 = vmatpush1.msra.mxu0 0.0
          %1106 = vmatprep.subr.mxu0 0.0
          %1107 = vmatpush1.msra.mxu0 0.0
          %1108 = vmatprep.subr.mxu0 0.0
          %1109 = vmatpush1.msra.mxu0 0.0
          %1110 = vmatprep.subr.mxu0 0.0
          %1111 = vmatpush1.msra.mxu0 0.0
          %1112 = vmatprep.subr.mxu0 0.0
          %1113 = vmatpush1.msra.mxu0 0.0
          %1114 = vmatprep.subr.mxu0 0.0
          %1115 = vmatpush1.msra.mxu0 0.0
          %1116 = vmatprep.subr.mxu0 0.0
          %1117 = vmatpush1.msra.mxu0 0.0
          %1118 = vmatprep.subr.mxu0 0.0
          %1119 = vmatpush1.msra.mxu0 0.0
          %1120 = vmatprep.subr.mxu0 0.0
          %1121 = vmatpush1.msra.mxu0 0.0
          %1122 = vmatprep.subr.mxu0 0.0
          %1123 = vmatpush1.msra.mxu0 0.0
          %1124 = vmatprep.subr.mxu0 0.0
          %1125 = vmatpush1.msra.mxu0 0.0
          %1126 = vmatprep.subr.mxu0 0.0
          %1127 = vmatpush1.msra.mxu0 0.0
          %1128 = vmatprep.subr.mxu0 0.0
          %1129 = vmatpush1.msra.mxu0 0.0
          %1130 = vmatprep.subr.mxu0 0.0
          %1131 = vmatpush1.msra.mxu0 0.0
          %1132 = vmatprep.subr.mxu0 0.0
          %1133 = vmatpush1.msra.mxu0 0.0
          %1134 = vmatprep.subr.mxu0 0.0
          %1135 = vmatpush1.msra.mxu0 0.0
          %1136 = vmatprep.subr.mxu0 0.0
          %1137 = vmatpush1.msra.mxu0 0.0
          %1138 = vmatprep.subr.mxu0 0.0
          %1139 = vmatpush1.msra.mxu0 0.0
          %1140 = vmatprep.subr.mxu0 0.0
          %1141 = vmatpush1.msra.mxu0 0.0
          %1142 = vmatprep.subr.mxu0 0.0
          %1143 = vmatpush1.msra.mxu0 0.0
          %1144 = vmatprep.subr.mxu0 0.0
          %1145 = vmatpush1.msra.mxu0 0.0
          %1146 = vmatprep.subr.mxu0 0.0
          %1147 = vmatpush1.msra.mxu0 0.0
          %1148 = vmatprep.mubr.f32.mxu0 0.0
          %1149 = vmatmul.mubr.f32.gmra.mrb[0].mxu0 %v1080
          %v1150 = vpop.f32.mrb[0].mxu0
          %v1151 = vadd.f32 %v1072, %v1150
          %v1152 = vpop.f32.mrb[0].mxu0
          %1153 = vmatprep.mubr.f32.mxu0 0.0
          %1154 = vmatmul.mubr.f32.gmra.mrb[0].mxu0 %v1082
          %v1155 = vpop.f32.mrb[0].mxu0
          %v1156 = vadd.f32 %v1077, %v1155
          %v1157 = vpop.f32.mrb[0].mxu0
          %1158 = vdwg.mxu0
          %v1162 = vrot.slane %v972, 1
          %v1163 = vrot.slane %v973, 1
          %v1164 = vsel %vm995, %v1162, %v1163
          %v1165 = vrot.slane %v974, 1
          %v1166 = vsel %vm995, %v1163, %v1165
          %v1167 = vsel %vm438, %v1164, 0
          %v1169 = vsel %vm438, %v1166, 0
          %1171 = vmatprep.subr.mxu0 0.0
          %1172 = vmatpush1.msra.mxu0 %v990
          %1173 = vmatprep.subr.mxu0 0.0
          %1174 = vmatpush1.msra.mxu0 %v991
          %1175 = vmatprep.subr.mxu0 0.0
          %1176 = vmatpush1.msra.mxu0 0.0
          %1177 = vmatprep.subr.mxu0 0.0
          %1178 = vmatpush1.msra.mxu0 0.0
          %1179 = vmatprep.subr.mxu0 0.0
          %1180 = vmatpush1.msra.mxu0 0.0
          %1181 = vmatprep.subr.mxu0 0.0
          %1182 = vmatpush1.msra.mxu0 0.0
          %1183 = vmatprep.subr.mxu0 0.0
          %1184 = vmatpush1.msra.mxu0 0.0
          %1185 = vmatprep.subr.mxu0 0.0
          %1186 = vmatpush1.msra.mxu0 0.0
          %1187 = vmatprep.subr.mxu0 0.0
          %1188 = vmatpush1.msra.mxu0 0.0
          %1189 = vmatprep.subr.mxu0 0.0
          %1190 = vmatpush1.msra.mxu0 0.0
          %1191 = vmatprep.subr.mxu0 0.0
          %1192 = vmatpush1.msra.mxu0 0.0
          %1193 = vmatprep.subr.mxu0 0.0
          %1194 = vmatpush1.msra.mxu0 0.0
          %1195 = vmatprep.subr.mxu0 0.0
          %1196 = vmatpush1.msra.mxu0 0.0
          %1197 = vmatprep.subr.mxu0 0.0
          %1198 = vmatpush1.msra.mxu0 0.0
          %1199 = vmatprep.subr.mxu0 0.0
          %1200 = vmatpush1.msra.mxu0 0.0
          %1201 = vmatprep.subr.mxu0 0.0
          %1202 = vmatpush1.msra.mxu0 0.0
          %1203 = vmatprep.subr.mxu0 0.0
          %1204 = vmatpush1.msra.mxu0 0.0
          %1205 = vmatprep.subr.mxu0 0.0
          %1206 = vmatpush1.msra.mxu0 0.0
          %1207 = vmatprep.subr.mxu0 0.0
          %1208 = vmatpush1.msra.mxu0 0.0
          %1209 = vmatprep.subr.mxu0 0.0
          %1210 = vmatpush1.msra.mxu0 0.0
          %1211 = vmatprep.subr.mxu0 0.0
          %1212 = vmatpush1.msra.mxu0 0.0
          %1213 = vmatprep.subr.mxu0 0.0
          %1214 = vmatpush1.msra.mxu0 0.0
          %1215 = vmatprep.subr.mxu0 0.0
          %1216 = vmatpush1.msra.mxu0 0.0
          %1217 = vmatprep.subr.mxu0 0.0
          %1218 = vmatpush1.msra.mxu0 0.0
          %1219 = vmatprep.subr.mxu0 0.0
          %1220 = vmatpush1.msra.mxu0 0.0
          %1221 = vmatprep.subr.mxu0 0.0
          %1222 = vmatpush1.msra.mxu0 0.0
          %1223 = vmatprep.subr.mxu0 0.0
          %1224 = vmatpush1.msra.mxu0 0.0
          %1225 = vmatprep.subr.mxu0 0.0
          %1226 = vmatpush1.msra.mxu0 0.0
          %1227 = vmatprep.subr.mxu0 0.0
          %1228 = vmatpush1.msra.mxu0 0.0
          %1229 = vmatprep.subr.mxu0 0.0
          %1230 = vmatpush1.msra.mxu0 0.0
          %1231 = vmatprep.subr.mxu0 0.0
          %1232 = vmatpush1.msra.mxu0 0.0
          %1233 = vmatprep.subr.mxu0 0.0
          %1234 = vmatpush1.msra.mxu0 0.0
          %1235 = vmatprep.mubr.f32.mxu0 0.0
          %1236 = vmatmul.mubr.f32.gmra.mrb[0].mxu0 %v1167
          %v1237 = vpop.f32.mrb[0].mxu0
          %v1238 = vadd.f32 0.0, %v1237
          %v1239 = vpop.f32.mrb[0].mxu0
          %1240 = vmatprep.mubr.f32.mxu0 0.0
          %1241 = vmatmul.mubr.f32.gmra.mrb[0].mxu0 %v1169
          %v1242 = vpop.f32.mrb[0].mxu0
          %v1243 = vadd.f32 0.0, %v1242
          %v1244 = vpop.f32.mrb[0].mxu0
          %1245 = vdwg.mxu0
          %v1246 = vsel %vm438, %v972, 0
          %v1248 = vsel %vm438, %v973, 0
          %1250 = vmatprep.subr.mxu0 0.0
          %1251 = vmatpush1.msra.mxu0 %v987
          %1252 = vmatprep.subr.mxu0 0.0
          %1253 = vmatpush1.msra.mxu0 %v988
          %1254 = vmatprep.subr.mxu0 0.0
          %1255 = vmatpush1.msra.mxu0 0.0
          %1256 = vmatprep.subr.mxu0 0.0
          %1257 = vmatpush1.msra.mxu0 0.0
          %1258 = vmatprep.subr.mxu0 0.0
          %1259 = vmatpush1.msra.mxu0 0.0
          %1260 = vmatprep.subr.mxu0 0.0
          %1261 = vmatpush1.msra.mxu0 0.0
          %1262 = vmatprep.subr.mxu0 0.0
          %1263 = vmatpush1.msra.mxu0 0.0
          %1264 = vmatprep.subr.mxu0 0.0
          %1265 = vmatpush1.msra.mxu0 0.0
          %1266 = vmatprep.subr.mxu0 0.0
          %1267 = vmatpush1.msra.mxu0 0.0
          %1268 = vmatprep.subr.mxu0 0.0
          %1269 = vmatpush1.msra.mxu0 0.0
          %1270 = vmatprep.subr.mxu0 0.0
          %1271 = vmatpush1.msra.mxu0 0.0
          %1272 = vmatprep.subr.mxu0 0.0
          %1273 = vmatpush1.msra.mxu0 0.0
          %1274 = vmatprep.subr.mxu0 0.0
          %1275 = vmatpush1.msra.mxu0 0.0
          %1276 = vmatprep.subr.mxu0 0.0
          %1277 = vmatpush1.msra.mxu0 0.0
          %1278 = vmatprep.subr.mxu0 0.0
          %1279 = vmatpush1.msra.mxu0 0.0
          %1280 = vmatprep.subr.mxu0 0.0
          %1281 = vmatpush1.msra.mxu0 0.0
          %1282 = vmatprep.subr.mxu0 0.0
          %1283 = vmatpush1.msra.mxu0 0.0
          %1284 = vmatprep.subr.mxu0 0.0
          %1285 = vmatpush1.msra.mxu0 0.0
          %1286 = vmatprep.subr.mxu0 0.0
          %1287 = vmatpush1.msra.mxu0 0.0
          %1288 = vmatprep.subr.mxu0 0.0
          %1289 = vmatpush1.msra.mxu0 0.0
          %1290 = vmatprep.subr.mxu0 0.0
          %1291 = vmatpush1.msra.mxu0 0.0
          %1292 = vmatprep.subr.mxu0 0.0
          %1293 = vmatpush1.msra.mxu0 0.0
          %1294 = vmatprep.subr.mxu0 0.0
          %1295 = vmatpush1.msra.mxu0 0.0
          %1296 = vmatprep.subr.mxu0 0.0
          %1297 = vmatpush1.msra.mxu0 0.0
          %1298 = vmatprep.subr.mxu0 0.0
          %1299 = vmatpush1.msra.mxu0 0.0
          %1300 = vmatprep.subr.mxu0 0.0
          %1301 = vmatpush1.msra.mxu0 0.0
          %1302 = vmatprep.subr.mxu0 0.0
          %1303 = vmatpush1.msra.mxu0 0.0
          %1304 = vmatprep.subr.mxu0 0.0
          %1305 = vmatpush1.msra.mxu0 0.0
          %1306 = vmatprep.subr.mxu0 0.0
          %1307 = vmatpush1.msra.mxu0 0.0
          %1308 = vmatprep.subr.mxu0 0.0
          %1309 = vmatpush1.msra.mxu0 0.0
          %1310 = vmatprep.subr.mxu0 0.0
          %1311 = vmatpush1.msra.mxu0 0.0
          %1312 = vmatprep.subr.mxu0 0.0
          %1313 = vmatpush1.msra.mxu0 0.0
          %1314 = vmatprep.mubr.f32.mxu0 0.0
          %1315 = vmatmul.mubr.f32.gmra.mrb[0].mxu0 %v1246
          %v1316 = vpop.f32.mrb[0].mxu0
          %v1317 = vadd.f32 %v1238, %v1316
          %v1318 = vpop.f32.mrb[0].mxu0
          %1319 = vmatprep.mubr.f32.mxu0 0.0
          %1320 = vmatmul.mubr.f32.gmra.mrb[0].mxu0 %v1248
          %v1321 = vpop.f32.mrb[0].mxu0
          %v1322 = vadd.f32 %v1243, %v1321
          %v1323 = vpop.f32.mrb[0].mxu0
          %1324 = vdwg.mxu0
          %s1325 = scalar_lea.vmem %s3, 32
          %v1326 = vld [vmem:[%s1325] sm:$0xff]
          %v1327 = vld [vmem:[%s1325 + $0x8] sm:$0xff]
          %vm1328 = vcmask 1045504
          %v1329 = vrot.slane %v966, 2
          %v1330 = vrot.slane %v967, 2
          %v1331 = vsel %vm1328, %v1329, %v1330
          %v1332 = vrot.slane %v968, 2
          %v1333 = vsel %vm1328, %v1330, %v1332
          %v1334 = vsel %vm438, %v1331, 0
          %v1336 = vsel %vm438, %v1333, 0
          %1338 = vmatprep.subr.mxu0 0.0
          %1339 = vmatpush1.msra.mxu0 %v1326
          %1340 = vmatprep.subr.mxu0 0.0
          %1341 = vmatpush1.msra.mxu0 %v1327
          %1342 = vmatprep.subr.mxu0 0.0
          %1343 = vmatpush1.msra.mxu0 0.0
          %1344 = vmatprep.subr.mxu0 0.0
          %1345 = vmatpush1.msra.mxu0 0.0
          %1346 = vmatprep.subr.mxu0 0.0
          %1347 = vmatpush1.msra.mxu0 0.0
          %1348 = vmatprep.subr.mxu0 0.0
          %1349 = vmatpush1.msra.mxu0 0.0
          %1350 = vmatprep.subr.mxu0 0.0
          %1351 = vmatpush1.msra.mxu0 0.0
          %1352 = vmatprep.subr.mxu0 0.0
          %1353 = vmatpush1.msra.mxu0 0.0
          %1354 = vmatprep.subr.mxu0 0.0
          %1355 = vmatpush1.msra.mxu0 0.0
          %1356 = vmatprep.subr.mxu0 0.0
          %1357 = vmatpush1.msra.mxu0 0.0
          %1358 = vmatprep.subr.mxu0 0.0
          %1359 = vmatpush1.msra.mxu0 0.0
          %1360 = vmatprep.subr.mxu0 0.0
          %1361 = vmatpush1.msra.mxu0 0.0
          %1362 = vmatprep.subr.mxu0 0.0
          %1363 = vmatpush1.msra.mxu0 0.0
          %1364 = vmatprep.subr.mxu0 0.0
          %1365 = vmatpush1.msra.mxu0 0.0
          %1366 = vmatprep.subr.mxu0 0.0
          %1367 = vmatpush1.msra.mxu0 0.0
          %1368 = vmatprep.subr.mxu0 0.0
          %1369 = vmatpush1.msra.mxu0 0.0
          %1370 = vmatprep.subr.mxu0 0.0
          %1371 = vmatpush1.msra.mxu0 0.0
          %1372 = vmatprep.subr.mxu0 0.0
          %1373 = vmatpush1.msra.mxu0 0.0
          %1374 = vmatprep.subr.mxu0 0.0
          %1375 = vmatpush1.msra.mxu0 0.0
          %1376 = vmatprep.subr.mxu0 0.0
          %1377 = vmatpush1.msra.mxu0 0.0
          %1378 = vmatprep.subr.mxu0 0.0
          %1379 = vmatpush1.msra.mxu0 0.0
          %1380 = vmatprep.subr.mxu0 0.0
          %1381 = vmatpush1.msra.mxu0 0.0
          %1382 = vmatprep.subr.mxu0 0.0
          %1383 = vmatpush1.msra.mxu0 0.0
          %1384 = vmatprep.subr.mxu0 0.0
          %1385 = vmatpush1.msra.mxu0 0.0
          %1386 = vmatprep.subr.mxu0 0.0
          %1387 = vmatpush1.msra.mxu0 0.0
          %1388 = vmatprep.subr.mxu0 0.0
          %1389 = vmatpush1.msra.mxu0 0.0
          %1390 = vmatprep.subr.mxu0 0.0
          %1391 = vmatpush1.msra.mxu0 0.0
          %1392 = vmatprep.subr.mxu0 0.0
          %1393 = vmatpush1.msra.mxu0 0.0
          %1394 = vmatprep.subr.mxu0 0.0
          %1395 = vmatpush1.msra.mxu0 0.0
          %1396 = vmatprep.subr.mxu0 0.0
          %1397 = vmatpush1.msra.mxu0 0.0
          %1398 = vmatprep.subr.mxu0 0.0
          %1399 = vmatpush1.msra.mxu0 0.0
          %1400 = vmatprep.subr.mxu0 0.0
          %1401 = vmatpush1.msra.mxu0 0.0
          %1402 = vmatprep.mubr.f32.mxu0 0.0
          %1403 = vmatmul.mubr.f32.gmra.mrb[0].mxu0 %v1334
          %v1404 = vpop.f32.mrb[0].mxu0
          %v1405 = vadd.f32 0.0, %v1404
          %v1406 = vpop.f32.mrb[0].mxu0
          %1407 = vmatprep.mubr.f32.mxu0 0.0
          %1408 = vmatmul.mubr.f32.gmra.mrb[0].mxu0 %v1336
          %v1409 = vpop.f32.mrb[0].mxu0
          %v1410 = vadd.f32 0.0, %v1409
          %v1411 = vpop.f32.mrb[0].mxu0
          %1412 = vdwg.mxu0
          %v1413 = vadd.f32 %v1151, %v1405
          %v1414 = vadd.f32 %v1156, %v1410
          %v1415 = vrot.slane %v972, 2
          %v1416 = vrot.slane %v973, 2
          %v1417 = vsel %vm1328, %v1415, %v1416
          %v1418 = vrot.slane %v974, 2
          %v1419 = vsel %vm1328, %v1416, %v1418
          %v1420 = vsel %vm438, %v1417, 0
          %v1422 = vsel %vm438, %v1419, 0
          %1424 = vmatprep.subr.mxu0 0.0
          %1425 = vmatpush1.msra.mxu0 %v1326
          %1426 = vmatprep.subr.mxu0 0.0
          %1427 = vmatpush1.msra.mxu0 %v1327
          %1428 = vmatprep.subr.mxu0 0.0
          %1429 = vmatpush1.msra.mxu0 0.0
          %1430 = vmatprep.subr.mxu0 0.0
          %1431 = vmatpush1.msra.mxu0 0.0
          %1432 = vmatprep.subr.mxu0 0.0
          %1433 = vmatpush1.msra.mxu0 0.0
          %1434 = vmatprep.subr.mxu0 0.0
          %1435 = vmatpush1.msra.mxu0 0.0
          %1436 = vmatprep.subr.mxu0 0.0
          %1437 = vmatpush1.msra.mxu0 0.0
          %1438 = vmatprep.subr.mxu0 0.0
          %1439 = vmatpush1.msra.mxu0 0.0
          %1440 = vmatprep.subr.mxu0 0.0
          %1441 = vmatpush1.msra.mxu0 0.0
          %1442 = vmatprep.subr.mxu0 0.0
          %1443 = vmatpush1.msra.mxu0 0.0
          %1444 = vmatprep.subr.mxu0 0.0
          %1445 = vmatpush1.msra.mxu0 0.0
          %1446 = vmatprep.subr.mxu0 0.0
          %1447 = vmatpush1.msra.mxu0 0.0
          %1448 = vmatprep.subr.mxu0 0.0
          %1449 = vmatpush1.msra.mxu0 0.0
          %1450 = vmatprep.subr.mxu0 0.0
          %1451 = vmatpush1.msra.mxu0 0.0
          %1452 = vmatprep.subr.mxu0 0.0
          %1453 = vmatpush1.msra.mxu0 0.0
          %1454 = vmatprep.subr.mxu0 0.0
          %1455 = vmatpush1.msra.mxu0 0.0
          %1456 = vmatprep.subr.mxu0 0.0
          %1457 = vmatpush1.msra.mxu0 0.0
          %1458 = vmatprep.subr.mxu0 0.0
          %1459 = vmatpush1.msra.mxu0 0.0
          %1460 = vmatprep.subr.mxu0 0.0
          %1461 = vmatpush1.msra.mxu0 0.0
          %1462 = vmatprep.subr.mxu0 0.0
          %1463 = vmatpush1.msra.mxu0 0.0
          %1464 = vmatprep.subr.mxu0 0.0
          %1465 = vmatpush1.msra.mxu0 0.0
          %1466 = vmatprep.subr.mxu0 0.0
          %1467 = vmatpush1.msra.mxu0 0.0
          %1468 = vmatprep.subr.mxu0 0.0
          %1469 = vmatpush1.msra.mxu0 0.0
          %1470 = vmatprep.subr.mxu0 0.0
          %1471 = vmatpush1.msra.mxu0 0.0
          %1472 = vmatprep.subr.mxu0 0.0
          %1473 = vmatpush1.msra.mxu0 0.0
          %1474 = vmatprep.subr.mxu0 0.0
          %1475 = vmatpush1.msra.mxu0 0.0
          %1476 = vmatprep.subr.mxu0 0.0
          %1477 = vmatpush1.msra.mxu0 0.0
          %1478 = vmatprep.subr.mxu0 0.0
          %1479 = vmatpush1.msra.mxu0 0.0
          %1480 = vmatprep.subr.mxu0 0.0
          %1481 = vmatpush1.msra.mxu0 0.0
          %1482 = vmatprep.subr.mxu0 0.0
          %1483 = vmatpush1.msra.mxu0 0.0
          %1484 = vmatprep.subr.mxu0 0.0
          %1485 = vmatpush1.msra.mxu0 0.0
          %1486 = vmatprep.subr.mxu0 0.0
          %1487 = vmatpush1.msra.mxu0 0.0
          %1488 = vmatprep.mubr.f32.mxu0 0.0
          %1489 = vmatmul.mubr.f32.gmra.mrb[0].mxu0 %v1420
          %v1490 = vpop.f32.mrb[0].mxu0
          %v1491 = vadd.f32 0.0, %v1490
          %v1492 = vpop.f32.mrb[0].mxu0
          %1493 = vmatprep.mubr.f32.mxu0 0.0
          %1494 = vmatmul.mubr.f32.gmra.mrb[0].mxu0 %v1422
          %v1495 = vpop.f32.mrb[0].mxu0
          %v1496 = vadd.f32 0.0, %v1495
          %v1497 = vpop.f32.mrb[0].mxu0
          %1498 = vdwg.mxu0
          %v1499 = vadd.f32 %v1317, %v1491
          %v1500 = vadd.f32 %v1322, %v1496
          %s1501 = scalar_lea.vmem %s3, 48
          %v1502 = vld [vmem:[%s1501] sm:$0xff]
          %v1503 = vld [vmem:[%s1501 + $0x8] sm:$0xff]
          %1504 = vmatprep.subr.mxu0 0.0
          %1505 = vmatpush1.msra.mxu0 %v1502
          %1506 = vmatprep.subr.mxu0 0.0
          %1507 = vmatpush1.msra.mxu0 %v1503
          %1508 = vmatprep.subr.mxu0 0.0
          %1509 = vmatpush1.msra.mxu0 0.0
          %1510 = vmatprep.subr.mxu0 0.0
          %1511 = vmatpush1.msra.mxu0 0.0
          %1512 = vmatprep.subr.mxu0 0.0
          %1513 = vmatpush1.msra.mxu0 0.0
          %1514 = vmatprep.subr.mxu0 0.0
          %1515 = vmatpush1.msra.mxu0 0.0
          %1516 = vmatprep.subr.mxu0 0.0
          %1517 = vmatpush1.msra.mxu0 0.0
          %1518 = vmatprep.subr.mxu0 0.0
          %1519 = vmatpush1.msra.mxu0 0.0
          %1520 = vmatprep.subr.mxu0 0.0
          %1521 = vmatpush1.msra.mxu0 0.0
          %1522 = vmatprep.subr.mxu0 0.0
          %1523 = vmatpush1.msra.mxu0 0.0
          %1524 = vmatprep.subr.mxu0 0.0
          %1525 = vmatpush1.msra.mxu0 0.0
          %1526 = vmatprep.subr.mxu0 0.0
          %1527 = vmatpush1.msra.mxu0 0.0
          %1528 = vmatprep.subr.mxu0 0.0
          %1529 = vmatpush1.msra.mxu0 0.0
          %1530 = vmatprep.subr.mxu0 0.0
          %1531 = vmatpush1.msra.mxu0 0.0
          %1532 = vmatprep.subr.mxu0 0.0
          %1533 = vmatpush1.msra.mxu0 0.0
          %1534 = vmatprep.subr.mxu0 0.0
          %1535 = vmatpush1.msra.mxu0 0.0
          %1536 = vmatprep.subr.mxu0 0.0
          %1537 = vmatpush1.msra.mxu0 0.0
          %1538 = vmatprep.subr.mxu0 0.0
          %1539 = vmatpush1.msra.mxu0 0.0
          %1540 = vmatprep.subr.mxu0 0.0
          %1541 = vmatpush1.msra.mxu0 0.0
          %1542 = vmatprep.subr.mxu0 0.0
          %1543 = vmatpush1.msra.mxu0 0.0
          %1544 = vmatprep.subr.mxu0 0.0
          %1545 = vmatpush1.msra.mxu0 0.0
          %1546 = vmatprep.subr.mxu0 0.0
          %1547 = vmatpush1.msra.mxu0 0.0
          %1548 = vmatprep.subr.mxu0 0.0
          %1549 = vmatpush1.msra.mxu0 0.0
          %1550 = vmatprep.subr.mxu0 0.0
          %1551 = vmatpush1.msra.mxu0 0.0
          %1552 = vmatprep.subr.mxu0 0.0
          %1553 = vmatpush1.msra.mxu0 0.0
          %1554 = vmatprep.subr.mxu0 0.0
          %1555 = vmatpush1.msra.mxu0 0.0
          %1556 = vmatprep.subr.mxu0 0.0
          %1557 = vmatpush1.msra.mxu0 0.0
          %1558 = vmatprep.subr.mxu0 0.0
          %1559 = vmatpush1.msra.mxu0 0.0
          %1560 = vmatprep.subr.mxu0 0.0
          %1561 = vmatpush1.msra.mxu0 0.0
          %1562 = vmatprep.subr.mxu0 0.0
          %1563 = vmatpush1.msra.mxu0 0.0
          %1564 = vmatprep.subr.mxu0 0.0
          %1565 = vmatpush1.msra.mxu0 0.0
          %1566 = vmatprep.subr.mxu0 0.0
          %1567 = vmatpush1.msra.mxu0 0.0
          %1568 = vmatprep.mubr.f32.mxu0 0.0
          %1569 = vmatmul.mubr.f32.gmra.mrb[0].mxu0 %v1246
          %v1570 = vpop.f32.mrb[0].mxu0
          %v1571 = vadd.f32 0.0, %v1570
          %v1572 = vpop.f32.mrb[0].mxu0
          %1573 = vmatprep.mubr.f32.mxu0 0.0
          %1574 = vmatmul.mubr.f32.gmra.mrb[0].mxu0 %v1248
          %v1575 = vpop.f32.mrb[0].mxu0
          %v1576 = vadd.f32 0.0, %v1575
          %v1577 = vpop.f32.mrb[0].mxu0
          %1578 = vdwg.mxu0
          %v1579 = vadd.f32 %v1413, %v1571
          %v1580 = vadd.f32 %v1414, %v1576
          %v1582 = vsel %vm438, %v978, 0
          %v1585 = vsel %vm438, %v979, 0
          %1587 = vmatprep.subr.mxu0 0.0
          %1588 = vmatpush1.msra.mxu0 %v1502
          %1589 = vmatprep.subr.mxu0 0.0
          %1590 = vmatpush1.msra.mxu0 %v1503
          %1591 = vmatprep.subr.mxu0 0.0
          %1592 = vmatpush1.msra.mxu0 0.0
          %1593 = vmatprep.subr.mxu0 0.0
          %1594 = vmatpush1.msra.mxu0 0.0
          %1595 = vmatprep.subr.mxu0 0.0
          %1596 = vmatpush1.msra.mxu0 0.0
          %1597 = vmatprep.subr.mxu0 0.0
          %1598 = vmatpush1.msra.mxu0 0.0
          %1599 = vmatprep.subr.mxu0 0.0
          %1600 = vmatpush1.msra.mxu0 0.0
          %1601 = vmatprep.subr.mxu0 0.0
          %1602 = vmatpush1.msra.mxu0 0.0
          %1603 = vmatprep.subr.mxu0 0.0
          %1604 = vmatpush1.msra.mxu0 0.0
          %1605 = vmatprep.subr.mxu0 0.0
          %1606 = vmatpush1.msra.mxu0 0.0
          %1607 = vmatprep.subr.mxu0 0.0
          %1608 = vmatpush1.msra.mxu0 0.0
          %1609 = vmatprep.subr.mxu0 0.0
          %1610 = vmatpush1.msra.mxu0 0.0
          %1611 = vmatprep.subr.mxu0 0.0
          %1612 = vmatpush1.msra.mxu0 0.0
          %1613 = vmatprep.subr.mxu0 0.0
          %1614 = vmatpush1.msra.mxu0 0.0
          %1615 = vmatprep.subr.mxu0 0.0
          %1616 = vmatpush1.msra.mxu0 0.0
          %1617 = vmatprep.subr.mxu0 0.0
          %1618 = vmatpush1.msra.mxu0 0.0
          %1619 = vmatprep.subr.mxu0 0.0
          %1620 = vmatpush1.msra.mxu0 0.0
          %1621 = vmatprep.subr.mxu0 0.0
          %1622 = vmatpush1.msra.mxu0 0.0
          %1623 = vmatprep.subr.mxu0 0.0
          %1624 = vmatpush1.msra.mxu0 0.0
          %1625 = vmatprep.subr.mxu0 0.0
          %1626 = vmatpush1.msra.mxu0 0.0
          %1627 = vmatprep.subr.mxu0 0.0
          %1628 = vmatpush1.msra.mxu0 0.0
          %1629 = vmatprep.subr.mxu0 0.0
          %1630 = vmatpush1.msra.mxu0 0.0
          %1631 = vmatprep.subr.mxu0 0.0
          %1632 = vmatpush1.msra.mxu0 0.0
          %1633 = vmatprep.subr.mxu0 0.0
          %1634 = vmatpush1.msra.mxu0 0.0
          %1635 = vmatprep.subr.mxu0 0.0
          %1636 = vmatpush1.msra.mxu0 0.0
          %1637 = vmatprep.subr.mxu0 0.0
          %1638 = vmatpush1.msra.mxu0 0.0
          %1639 = vmatprep.subr.mxu0 0.0
          %1640 = vmatpush1.msra.mxu0 0.0
          %1641 = vmatprep.subr.mxu0 0.0
          %1642 = vmatpush1.msra.mxu0 0.0
          %1643 = vmatprep.subr.mxu0 0.0
          %1644 = vmatpush1.msra.mxu0 0.0
          %1645 = vmatprep.subr.mxu0 0.0
          %1646 = vmatpush1.msra.mxu0 0.0
          %1647 = vmatprep.subr.mxu0 0.0
          %1648 = vmatpush1.msra.mxu0 0.0
          %1649 = vmatprep.subr.mxu0 0.0
          %1650 = vmatpush1.msra.mxu0 0.0
          %1651 = vmatprep.mubr.f32.mxu0 0.0
          %1652 = vmatmul.mubr.f32.gmra.mrb[0].mxu0 %v1582
          %v1653 = vpop.f32.mrb[0].mxu0
          %v1654 = vadd.f32 0.0, %v1653
          %v1655 = vpop.f32.mrb[0].mxu0
          %1656 = vmatprep.mubr.f32.mxu0 0.0
          %1657 = vmatmul.mubr.f32.gmra.mrb[0].mxu0 %v1585
          %v1658 = vpop.f32.mrb[0].mxu0
          %v1659 = vadd.f32 0.0, %v1658
          %v1660 = vpop.f32.mrb[0].mxu0
          %1661 = vdwg.mxu0
          %v1662 = vadd.f32 %v1499, %v1654
          %v1663 = vadd.f32 %v1500, %v1659
          %s1664 = scalar_lea.vmem %s3, 64
          %v1665 = vld [vmem:[%s1664] sm:$0xff]
          %v1666 = vld [vmem:[%s1664 + $0x8] sm:$0xff]
          %1667 = vmatprep.subr.mxu0 0.0
          %1668 = vmatpush1.msra.mxu0 %v1665
          %1669 = vmatprep.subr.mxu0 0.0
          %1670 = vmatpush1.msra.mxu0 %v1666
          %1671 = vmatprep.subr.mxu0 0.0
          %1672 = vmatpush1.msra.mxu0 0.0
          %1673 = vmatprep.subr.mxu0 0.0
          %1674 = vmatpush1.msra.mxu0 0.0
          %1675 = vmatprep.subr.mxu0 0.0
          %1676 = vmatpush1.msra.mxu0 0.0
          %1677 = vmatprep.subr.mxu0 0.0
          %1678 = vmatpush1.msra.mxu0 0.0
          %1679 = vmatprep.subr.mxu0 0.0
          %1680 = vmatpush1.msra.mxu0 0.0
          %1681 = vmatprep.subr.mxu0 0.0
          %1682 = vmatpush1.msra.mxu0 0.0
          %1683 = vmatprep.subr.mxu0 0.0
          %1684 = vmatpush1.msra.mxu0 0.0
          %1685 = vmatprep.subr.mxu0 0.0
          %1686 = vmatpush1.msra.mxu0 0.0
          %1687 = vmatprep.subr.mxu0 0.0
          %1688 = vmatpush1.msra.mxu0 0.0
          %1689 = vmatprep.subr.mxu0 0.0
          %1690 = vmatpush1.msra.mxu0 0.0
          %1691 = vmatprep.subr.mxu0 0.0
          %1692 = vmatpush1.msra.mxu0 0.0
          %1693 = vmatprep.subr.mxu0 0.0
          %1694 = vmatpush1.msra.mxu0 0.0
          %1695 = vmatprep.subr.mxu0 0.0
          %1696 = vmatpush1.msra.mxu0 0.0
          %1697 = vmatprep.subr.mxu0 0.0
          %1698 = vmatpush1.msra.mxu0 0.0
          %1699 = vmatprep.subr.mxu0 0.0
          %1700 = vmatpush1.msra.mxu0 0.0
          %1701 = vmatprep.subr.mxu0 0.0
          %1702 = vmatpush1.msra.mxu0 0.0
          %1703 = vmatprep.subr.mxu0 0.0
          %1704 = vmatpush1.msra.mxu0 0.0
          %1705 = vmatprep.subr.mxu0 0.0
          %1706 = vmatpush1.msra.mxu0 0.0
          %1707 = vmatprep.subr.mxu0 0.0
          %1708 = vmatpush1.msra.mxu0 0.0
          %1709 = vmatprep.subr.mxu0 0.0
          %1710 = vmatpush1.msra.mxu0 0.0
          %1711 = vmatprep.subr.mxu0 0.0
          %1712 = vmatpush1.msra.mxu0 0.0
          %1713 = vmatprep.subr.mxu0 0.0
          %1714 = vmatpush1.msra.mxu0 0.0
          %1715 = vmatprep.subr.mxu0 0.0
          %1716 = vmatpush1.msra.mxu0 0.0
          %1717 = vmatprep.subr.mxu0 0.0
          %1718 = vmatpush1.msra.mxu0 0.0
          %1719 = vmatprep.subr.mxu0 0.0
          %1720 = vmatpush1.msra.mxu0 0.0
          %1721 = vmatprep.subr.mxu0 0.0
          %1722 = vmatpush1.msra.mxu0 0.0
          %1723 = vmatprep.subr.mxu0 0.0
          %1724 = vmatpush1.msra.mxu0 0.0
          %1725 = vmatprep.subr.mxu0 0.0
          %1726 = vmatpush1.msra.mxu0 0.0
          %1727 = vmatprep.subr.mxu0 0.0
          %1728 = vmatpush1.msra.mxu0 0.0
          %1729 = vmatprep.subr.mxu0 0.0
          %1730 = vmatpush1.msra.mxu0 0.0
          %1731 = vmatprep.mubr.f32.mxu0 0.0
          %1732 = vmatmul.mubr.f32.gmra.mrb[0].mxu0 %v1167
          %v1733 = vpop.f32.mrb[0].mxu0
          %v1734 = vadd.f32 0.0, %v1733
          %v1735 = vpop.f32.mrb[0].mxu0
          %1736 = vmatprep.mubr.f32.mxu0 0.0
          %1737 = vmatmul.mubr.f32.gmra.mrb[0].mxu0 %v1169
          %v1738 = vpop.f32.mrb[0].mxu0
          %v1739 = vadd.f32 0.0, %v1738
          %v1740 = vpop.f32.mrb[0].mxu0
          %1741 = vdwg.mxu0
          %v1742 = vadd.f32 %v1579, %v1734
          %v1743 = vadd.f32 %v1580, %v1739
          %v1745 = vrot.slane %v978, 1
          %v1746 = vrot.slane %v979, 1
          %v1747 = vsel %vm995, %v1745, %v1746
          %v1748 = vrot.slane %v980, 1
          %v1749 = vsel %vm995, %v1746, %v1748
          %v1750 = vsel %vm438, %v1747, 0
          %v1752 = vsel %vm438, %v1749, 0
          %1754 = vmatprep.subr.mxu0 0.0
          %1755 = vmatpush1.msra.mxu0 %v1665
          %1756 = vmatprep.subr.mxu0 0.0
          %1757 = vmatpush1.msra.mxu0 %v1666
          %1758 = vmatprep.subr.mxu0 0.0
          %1759 = vmatpush1.msra.mxu0 0.0
          %1760 = vmatprep.subr.mxu0 0.0
          %1761 = vmatpush1.msra.mxu0 0.0
          %1762 = vmatprep.subr.mxu0 0.0
          %1763 = vmatpush1.msra.mxu0 0.0
          %1764 = vmatprep.subr.mxu0 0.0
          %1765 = vmatpush1.msra.mxu0 0.0
          %1766 = vmatprep.subr.mxu0 0.0
          %1767 = vmatpush1.msra.mxu0 0.0
          %1768 = vmatprep.subr.mxu0 0.0
          %1769 = vmatpush1.msra.mxu0 0.0
          %1770 = vmatprep.subr.mxu0 0.0
          %1771 = vmatpush1.msra.mxu0 0.0
          %1772 = vmatprep.subr.mxu0 0.0
          %1773 = vmatpush1.msra.mxu0 0.0
          %1774 = vmatprep.subr.mxu0 0.0
          %1775 = vmatpush1.msra.mxu0 0.0
          %1776 = vmatprep.subr.mxu0 0.0
          %1777 = vmatpush1.msra.mxu0 0.0
          %1778 = vmatprep.subr.mxu0 0.0
          %1779 = vmatpush1.msra.mxu0 0.0
          %1780 = vmatprep.subr.mxu0 0.0
          %1781 = vmatpush1.msra.mxu0 0.0
          %1782 = vmatprep.subr.mxu0 0.0
          %1783 = vmatpush1.msra.mxu0 0.0
          %1784 = vmatprep.subr.mxu0 0.0
          %1785 = vmatpush1.msra.mxu0 0.0
          %1786 = vmatprep.subr.mxu0 0.0
          %1787 = vmatpush1.msra.mxu0 0.0
          %1788 = vmatprep.subr.mxu0 0.0
          %1789 = vmatpush1.msra.mxu0 0.0
          %1790 = vmatprep.subr.mxu0 0.0
          %1791 = vmatpush1.msra.mxu0 0.0
          %1792 = vmatprep.subr.mxu0 0.0
          %1793 = vmatpush1.msra.mxu0 0.0
          %1794 = vmatprep.subr.mxu0 0.0
          %1795 = vmatpush1.msra.mxu0 0.0
          %1796 = vmatprep.subr.mxu0 0.0
          %1797 = vmatpush1.msra.mxu0 0.0
          %1798 = vmatprep.subr.mxu0 0.0
          %1799 = vmatpush1.msra.mxu0 0.0
          %1800 = vmatprep.subr.mxu0 0.0
          %1801 = vmatpush1.msra.mxu0 0.0
          %1802 = vmatprep.subr.mxu0 0.0
          %1803 = vmatpush1.msra.mxu0 0.0
          %1804 = vmatprep.subr.mxu0 0.0
          %1805 = vmatpush1.msra.mxu0 0.0
          %1806 = vmatprep.subr.mxu0 0.0
          %1807 = vmatpush1.msra.mxu0 0.0
          %1808 = vmatprep.subr.mxu0 0.0
          %1809 = vmatpush1.msra.mxu0 0.0
          %1810 = vmatprep.subr.mxu0 0.0
          %1811 = vmatpush1.msra.mxu0 0.0
          %1812 = vmatprep.subr.mxu0 0.0
          %1813 = vmatpush1.msra.mxu0 0.0
          %1814 = vmatprep.subr.mxu0 0.0
          %1815 = vmatpush1.msra.mxu0 0.0
          %1816 = vmatprep.subr.mxu0 0.0
          %1817 = vmatpush1.msra.mxu0 0.0
          %1818 = vmatprep.mubr.f32.mxu0 0.0
          %1819 = vmatmul.mubr.f32.gmra.mrb[0].mxu0 %v1750
          %v1820 = vpop.f32.mrb[0].mxu0
          %v1821 = vadd.f32 0.0, %v1820
          %v1822 = vpop.f32.mrb[0].mxu0
          %1823 = vmatprep.mubr.f32.mxu0 0.0
          %1824 = vmatmul.mubr.f32.gmra.mrb[0].mxu0 %v1752
          %v1825 = vpop.f32.mrb[0].mxu0
          %v1826 = vadd.f32 0.0, %v1825
          %v1827 = vpop.f32.mrb[0].mxu0
          %1828 = vdwg.mxu0
          %v1829 = vadd.f32 %v1662, %v1821
          %v1830 = vadd.f32 %v1663, %v1826
          %s1831 = scalar_lea.vmem %s3, 80
          %v1832 = vld [vmem:[%s1831] sm:$0xff]
          %v1833 = vld [vmem:[%s1831 + $0x8] sm:$0xff]
          %1834 = vmatprep.subr.mxu0 0.0
          %1835 = vmatpush1.msra.mxu0 %v1832
          %1836 = vmatprep.subr.mxu0 0.0
          %1837 = vmatpush1.msra.mxu0 %v1833
          %1838 = vmatprep.subr.mxu0 0.0
          %1839 = vmatpush1.msra.mxu0 0.0
          %1840 = vmatprep.subr.mxu0 0.0
          %1841 = vmatpush1.msra.mxu0 0.0
          %1842 = vmatprep.subr.mxu0 0.0
          %1843 = vmatpush1.msra.mxu0 0.0
          %1844 = vmatprep.subr.mxu0 0.0
          %1845 = vmatpush1.msra.mxu0 0.0
          %1846 = vmatprep.subr.mxu0 0.0
          %1847 = vmatpush1.msra.mxu0 0.0
          %1848 = vmatprep.subr.mxu0 0.0
          %1849 = vmatpush1.msra.mxu0 0.0
          %1850 = vmatprep.subr.mxu0 0.0
          %1851 = vmatpush1.msra.mxu0 0.0
          %1852 = vmatprep.subr.mxu0 0.0
          %1853 = vmatpush1.msra.mxu0 0.0
          %1854 = vmatprep.subr.mxu0 0.0
          %1855 = vmatpush1.msra.mxu0 0.0
          %1856 = vmatprep.subr.mxu0 0.0
          %1857 = vmatpush1.msra.mxu0 0.0
          %1858 = vmatprep.subr.mxu0 0.0
          %1859 = vmatpush1.msra.mxu0 0.0
          %1860 = vmatprep.subr.mxu0 0.0
          %1861 = vmatpush1.msra.mxu0 0.0
          %1862 = vmatprep.subr.mxu0 0.0
          %1863 = vmatpush1.msra.mxu0 0.0
          %1864 = vmatprep.subr.mxu0 0.0
          %1865 = vmatpush1.msra.mxu0 0.0
          %1866 = vmatprep.subr.mxu0 0.0
          %1867 = vmatpush1.msra.mxu0 0.0
          %1868 = vmatprep.subr.mxu0 0.0
          %1869 = vmatpush1.msra.mxu0 0.0
          %1870 = vmatprep.subr.mxu0 0.0
          %1871 = vmatpush1.msra.mxu0 0.0
          %1872 = vmatprep.subr.mxu0 0.0
          %1873 = vmatpush1.msra.mxu0 0.0
          %1874 = vmatprep.subr.mxu0 0.0
          %1875 = vmatpush1.msra.mxu0 0.0
          %1876 = vmatprep.subr.mxu0 0.0
          %1877 = vmatpush1.msra.mxu0 0.0
          %1878 = vmatprep.subr.mxu0 0.0
          %1879 = vmatpush1.msra.mxu0 0.0
          %1880 = vmatprep.subr.mxu0 0.0
          %1881 = vmatpush1.msra.mxu0 0.0
          %1882 = vmatprep.subr.mxu0 0.0
          %1883 = vmatpush1.msra.mxu0 0.0
          %1884 = vmatprep.subr.mxu0 0.0
          %1885 = vmatpush1.msra.mxu0 0.0
          %1886 = vmatprep.subr.mxu0 0.0
          %1887 = vmatpush1.msra.mxu0 0.0
          %1888 = vmatprep.subr.mxu0 0.0
          %1889 = vmatpush1.msra.mxu0 0.0
          %1890 = vmatprep.subr.mxu0 0.0
          %1891 = vmatpush1.msra.mxu0 0.0
          %1892 = vmatprep.subr.mxu0 0.0
          %1893 = vmatpush1.msra.mxu0 0.0
          %1894 = vmatprep.subr.mxu0 0.0
          %1895 = vmatpush1.msra.mxu0 0.0
          %1896 = vmatprep.subr.mxu0 0.0
          %1897 = vmatpush1.msra.mxu0 0.0
          %1898 = vmatprep.mubr.f32.mxu0 0.0
          %1899 = vmatmul.mubr.f32.gmra.mrb[0].mxu0 %v1420
          %v1900 = vpop.f32.mrb[0].mxu0
          %v1901 = vadd.f32 0.0, %v1900
          %v1902 = vpop.f32.mrb[0].mxu0
          %1903 = vmatprep.mubr.f32.mxu0 0.0
          %1904 = vmatmul.mubr.f32.gmra.mrb[0].mxu0 %v1422
          %v1905 = vpop.f32.mrb[0].mxu0
          %v1906 = vadd.f32 0.0, %v1905
          %v1907 = vpop.f32.mrb[0].mxu0
          %1908 = vdwg.mxu0
          %v1909 = vadd.f32 %v1742, %v1901
          %v1910 = vadd.f32 %v1743, %v1906
          %v1911 = vrot.slane %v978, 2
          %v1912 = vrot.slane %v979, 2
          %v1913 = vsel %vm1328, %v1911, %v1912
          %v1914 = vrot.slane %v980, 2
          %v1915 = vsel %vm1328, %v1912, %v1914
          %v1916 = vsel %vm438, %v1913, 0
          %v1918 = vsel %vm438, %v1915, 0
          %1920 = vmatprep.subr.mxu0 0.0
          %1921 = vmatpush1.msra.mxu0 %v1832
          %1922 = vmatprep.subr.mxu0 0.0
          %1923 = vmatpush1.msra.mxu0 %v1833
          %1924 = vmatprep.subr.mxu0 0.0
          %1925 = vmatpush1.msra.mxu0 0.0
          %1926 = vmatprep.subr.mxu0 0.0
          %1927 = vmatpush1.msra.mxu0 0.0
          %1928 = vmatprep.subr.mxu0 0.0
          %1929 = vmatpush1.msra.mxu0 0.0
          %1930 = vmatprep.subr.mxu0 0.0
          %1931 = vmatpush1.msra.mxu0 0.0
          %1932 = vmatprep.subr.mxu0 0.0
          %1933 = vmatpush1.msra.mxu0 0.0
          %1934 = vmatprep.subr.mxu0 0.0
          %1935 = vmatpush1.msra.mxu0 0.0
          %1936 = vmatprep.subr.mxu0 0.0
          %1937 = vmatpush1.msra.mxu0 0.0
          %1938 = vmatprep.subr.mxu0 0.0
          %1939 = vmatpush1.msra.mxu0 0.0
          %1940 = vmatprep.subr.mxu0 0.0
          %1941 = vmatpush1.msra.mxu0 0.0
          %1942 = vmatprep.subr.mxu0 0.0
          %1943 = vmatpush1.msra.mxu0 0.0
          %1944 = vmatprep.subr.mxu0 0.0
          %1945 = vmatpush1.msra.mxu0 0.0
          %1946 = vmatprep.subr.mxu0 0.0
          %1947 = vmatpush1.msra.mxu0 0.0
          %1948 = vmatprep.subr.mxu0 0.0
          %1949 = vmatpush1.msra.mxu0 0.0
          %1950 = vmatprep.subr.mxu0 0.0
          %1951 = vmatpush1.msra.mxu0 0.0
          %1952 = vmatprep.subr.mxu0 0.0
          %1953 = vmatpush1.msra.mxu0 0.0
          %1954 = vmatprep.subr.mxu0 0.0
          %1955 = vmatpush1.msra.mxu0 0.0
          %1956 = vmatprep.subr.mxu0 0.0
          %1957 = vmatpush1.msra.mxu0 0.0
          %1958 = vmatprep.subr.mxu0 0.0
          %1959 = vmatpush1.msra.mxu0 0.0
          %1960 = vmatprep.subr.mxu0 0.0
          %1961 = vmatpush1.msra.mxu0 0.0
          %1962 = vmatprep.subr.mxu0 0.0
          %1963 = vmatpush1.msra.mxu0 0.0
          %1964 = vmatprep.subr.mxu0 0.0
          %1965 = vmatpush1.msra.mxu0 0.0
          %1966 = vmatprep.subr.mxu0 0.0
          %1967 = vmatpush1.msra.mxu0 0.0
          %1968 = vmatprep.subr.mxu0 0.0
          %1969 = vmatpush1.msra.mxu0 0.0
          %1970 = vmatprep.subr.mxu0 0.0
          %1971 = vmatpush1.msra.mxu0 0.0
          %1972 = vmatprep.subr.mxu0 0.0
          %1973 = vmatpush1.msra.mxu0 0.0
          %1974 = vmatprep.subr.mxu0 0.0
          %1975 = vmatpush1.msra.mxu0 0.0
          %1976 = vmatprep.subr.mxu0 0.0
          %1977 = vmatpush1.msra.mxu0 0.0
          %1978 = vmatprep.subr.mxu0 0.0
          %1979 = vmatpush1.msra.mxu0 0.0
          %1980 = vmatprep.subr.mxu0 0.0
          %1981 = vmatpush1.msra.mxu0 0.0
          %1982 = vmatprep.subr.mxu0 0.0
          %1983 = vmatpush1.msra.mxu0 0.0
          %1984 = vmatprep.mubr.f32.mxu0 0.0
          %1985 = vmatmul.mubr.f32.gmra.mrb[0].mxu0 %v1916
          %v1986 = vpop.f32.mrb[0].mxu0
          %v1987 = vadd.f32 0.0, %v1986
          %v1988 = vpop.f32.mrb[0].mxu0
          %1989 = vmatprep.mubr.f32.mxu0 0.0
          %1990 = vmatmul.mubr.f32.gmra.mrb[0].mxu0 %v1918
          %v1991 = vpop.f32.mrb[0].mxu0
          %v1992 = vadd.f32 0.0, %v1991
          %v1993 = vpop.f32.mrb[0].mxu0
          %1994 = vdwg.mxu0
          %v1995 = vadd.f32 %v1829, %v1987
          %v1996 = vadd.f32 %v1830, %v1992
          %s1997 = scalar_lea.vmem %s3, 96
          %v1998 = vld [vmem:[%s1997] sm:$0xff]
          %v1999 = vld [vmem:[%s1997 + $0x8] sm:$0xff]
          %2000 = vmatprep.subr.mxu0 0.0
          %2001 = vmatpush1.msra.mxu0 %v1998
          %2002 = vmatprep.subr.mxu0 0.0
          %2003 = vmatpush1.msra.mxu0 %v1999
          %2004 = vmatprep.subr.mxu0 0.0
          %2005 = vmatpush1.msra.mxu0 0.0
          %2006 = vmatprep.subr.mxu0 0.0
          %2007 = vmatpush1.msra.mxu0 0.0
          %2008 = vmatprep.subr.mxu0 0.0
          %2009 = vmatpush1.msra.mxu0 0.0
          %2010 = vmatprep.subr.mxu0 0.0
          %2011 = vmatpush1.msra.mxu0 0.0
          %2012 = vmatprep.subr.mxu0 0.0
          %2013 = vmatpush1.msra.mxu0 0.0
          %2014 = vmatprep.subr.mxu0 0.0
          %2015 = vmatpush1.msra.mxu0 0.0
          %2016 = vmatprep.subr.mxu0 0.0
          %2017 = vmatpush1.msra.mxu0 0.0
          %2018 = vmatprep.subr.mxu0 0.0
          %2019 = vmatpush1.msra.mxu0 0.0
          %2020 = vmatprep.subr.mxu0 0.0
          %2021 = vmatpush1.msra.mxu0 0.0
          %2022 = vmatprep.subr.mxu0 0.0
          %2023 = vmatpush1.msra.mxu0 0.0
          %2024 = vmatprep.subr.mxu0 0.0
          %2025 = vmatpush1.msra.mxu0 0.0
          %2026 = vmatprep.subr.mxu0 0.0
          %2027 = vmatpush1.msra.mxu0 0.0
          %2028 = vmatprep.subr.mxu0 0.0
          %2029 = vmatpush1.msra.mxu0 0.0
          %2030 = vmatprep.subr.mxu0 0.0
          %2031 = vmatpush1.msra.mxu0 0.0
          %2032 = vmatprep.subr.mxu0 0.0
          %2033 = vmatpush1.msra.mxu0 0.0
          %2034 = vmatprep.subr.mxu0 0.0
          %2035 = vmatpush1.msra.mxu0 0.0
          %2036 = vmatprep.subr.mxu0 0.0
          %2037 = vmatpush1.msra.mxu0 0.0
          %2038 = vmatprep.subr.mxu0 0.0
          %2039 = vmatpush1.msra.mxu0 0.0
          %2040 = vmatprep.subr.mxu0 0.0
          %2041 = vmatpush1.msra.mxu0 0.0
          %2042 = vmatprep.subr.mxu0 0.0
          %2043 = vmatpush1.msra.mxu0 0.0
          %2044 = vmatprep.subr.mxu0 0.0
          %2045 = vmatpush1.msra.mxu0 0.0
          %2046 = vmatprep.subr.mxu0 0.0
          %2047 = vmatpush1.msra.mxu0 0.0
          %2048 = vmatprep.subr.mxu0 0.0
          %2049 = vmatpush1.msra.mxu0 0.0
          %2050 = vmatprep.subr.mxu0 0.0
          %2051 = vmatpush1.msra.mxu0 0.0
          %2052 = vmatprep.subr.mxu0 0.0
          %2053 = vmatpush1.msra.mxu0 0.0
          %2054 = vmatprep.subr.mxu0 0.0
          %2055 = vmatpush1.msra.mxu0 0.0
          %2056 = vmatprep.subr.mxu0 0.0
          %2057 = vmatpush1.msra.mxu0 0.0
          %2058 = vmatprep.subr.mxu0 0.0
          %2059 = vmatpush1.msra.mxu0 0.0
          %2060 = vmatprep.subr.mxu0 0.0
          %2061 = vmatpush1.msra.mxu0 0.0
          %2062 = vmatprep.subr.mxu0 0.0
          %2063 = vmatpush1.msra.mxu0 0.0
          %2064 = vmatprep.mubr.f32.mxu0 0.0
          %2065 = vmatmul.mubr.f32.gmra.mrb[0].mxu0 %v1582
          %v2066 = vpop.f32.mrb[0].mxu0
          %v2067 = vadd.f32 0.0, %v2066
          %v2068 = vpop.f32.mrb[0].mxu0
          %2069 = vmatprep.mubr.f32.mxu0 0.0
          %2070 = vmatmul.mubr.f32.gmra.mrb[0].mxu0 %v1585
          %v2071 = vpop.f32.mrb[0].mxu0
          %v2072 = vadd.f32 0.0, %v2071
          %v2073 = vpop.f32.mrb[0].mxu0
          %2074 = vdwg.mxu0
          %v2075 = vadd.f32 %v1909, %v2067
          %v2076 = vadd.f32 %v1910, %v2072
          %v2078 = vsel %vm438, %v984, 0
          %v2081 = vsel %vm438, %v985, 0
          %2083 = vmatprep.subr.mxu0 0.0
          %2084 = vmatpush1.msra.mxu0 %v1998
          %2085 = vmatprep.subr.mxu0 0.0
          %2086 = vmatpush1.msra.mxu0 %v1999
          %2087 = vmatprep.subr.mxu0 0.0
          %2088 = vmatpush1.msra.mxu0 0.0
          %2089 = vmatprep.subr.mxu0 0.0
          %2090 = vmatpush1.msra.mxu0 0.0
          %2091 = vmatprep.subr.mxu0 0.0
          %2092 = vmatpush1.msra.mxu0 0.0
          %2093 = vmatprep.subr.mxu0 0.0
          %2094 = vmatpush1.msra.mxu0 0.0
          %2095 = vmatprep.subr.mxu0 0.0
          %2096 = vmatpush1.msra.mxu0 0.0
          %2097 = vmatprep.subr.mxu0 0.0
          %2098 = vmatpush1.msra.mxu0 0.0
          %2099 = vmatprep.subr.mxu0 0.0
          %2100 = vmatpush1.msra.mxu0 0.0
          %2101 = vmatprep.subr.mxu0 0.0
          %2102 = vmatpush1.msra.mxu0 0.0
          %2103 = vmatprep.subr.mxu0 0.0
          %2104 = vmatpush1.msra.mxu0 0.0
          %2105 = vmatprep.subr.mxu0 0.0
          %2106 = vmatpush1.msra.mxu0 0.0
          %2107 = vmatprep.subr.mxu0 0.0
          %2108 = vmatpush1.msra.mxu0 0.0
          %2109 = vmatprep.subr.mxu0 0.0
          %2110 = vmatpush1.msra.mxu0 0.0
          %2111 = vmatprep.subr.mxu0 0.0
          %2112 = vmatpush1.msra.mxu0 0.0
          %2113 = vmatprep.subr.mxu0 0.0
          %2114 = vmatpush1.msra.mxu0 0.0
          %2115 = vmatprep.subr.mxu0 0.0
          %2116 = vmatpush1.msra.mxu0 0.0
          %2117 = vmatprep.subr.mxu0 0.0
          %2118 = vmatpush1.msra.mxu0 0.0
          %2119 = vmatprep.subr.mxu0 0.0
          %2120 = vmatpush1.msra.mxu0 0.0
          %2121 = vmatprep.subr.mxu0 0.0
          %2122 = vmatpush1.msra.mxu0 0.0
          %2123 = vmatprep.subr.mxu0 0.0
          %2124 = vmatpush1.msra.mxu0 0.0
          %2125 = vmatprep.subr.mxu0 0.0
          %2126 = vmatpush1.msra.mxu0 0.0
          %2127 = vmatprep.subr.mxu0 0.0
          %2128 = vmatpush1.msra.mxu0 0.0
          %2129 = vmatprep.subr.mxu0 0.0
          %2130 = vmatpush1.msra.mxu0 0.0
          %2131 = vmatprep.subr.mxu0 0.0
          %2132 = vmatpush1.msra.mxu0 0.0
          %2133 = vmatprep.subr.mxu0 0.0
          %2134 = vmatpush1.msra.mxu0 0.0
          %2135 = vmatprep.subr.mxu0 0.0
          %2136 = vmatpush1.msra.mxu0 0.0
          %2137 = vmatprep.subr.mxu0 0.0
          %2138 = vmatpush1.msra.mxu0 0.0
          %2139 = vmatprep.subr.mxu0 0.0
          %2140 = vmatpush1.msra.mxu0 0.0
          %2141 = vmatprep.subr.mxu0 0.0
          %2142 = vmatpush1.msra.mxu0 0.0
          %2143 = vmatprep.subr.mxu0 0.0
          %2144 = vmatpush1.msra.mxu0 0.0
          %2145 = vmatprep.subr.mxu0 0.0
          %2146 = vmatpush1.msra.mxu0 0.0
          %2147 = vmatprep.mubr.f32.mxu0 0.0
          %2148 = vmatmul.mubr.f32.gmra.mrb[0].mxu0 %v2078
          %v2149 = vpop.f32.mrb[0].mxu0
          %v2150 = vadd.f32 0.0, %v2149
          %v2151 = vpop.f32.mrb[0].mxu0
          %2152 = vmatprep.mubr.f32.mxu0 0.0
          %2153 = vmatmul.mubr.f32.gmra.mrb[0].mxu0 %v2081
          %v2154 = vpop.f32.mrb[0].mxu0
          %v2155 = vadd.f32 0.0, %v2154
          %v2156 = vpop.f32.mrb[0].mxu0
          %2157 = vdwg.mxu0
          %v2158 = vadd.f32 %v1995, %v2150
          %v2159 = vadd.f32 %v1996, %v2155
          %s2160 = scalar_lea.vmem %s3, 112
          %v2161 = vld [vmem:[%s2160] sm:$0xff]
          %v2162 = vld [vmem:[%s2160 + $0x8] sm:$0xff]
          %2163 = vmatprep.subr.mxu0 0.0
          %2164 = vmatpush1.msra.mxu0 %v2161
          %2165 = vmatprep.subr.mxu0 0.0
          %2166 = vmatpush1.msra.mxu0 %v2162
          %2167 = vmatprep.subr.mxu0 0.0
          %2168 = vmatpush1.msra.mxu0 0.0
          %2169 = vmatprep.subr.mxu0 0.0
          %2170 = vmatpush1.msra.mxu0 0.0
          %2171 = vmatprep.subr.mxu0 0.0
          %2172 = vmatpush1.msra.mxu0 0.0
          %2173 = vmatprep.subr.mxu0 0.0
          %2174 = vmatpush1.msra.mxu0 0.0
          %2175 = vmatprep.subr.mxu0 0.0
          %2176 = vmatpush1.msra.mxu0 0.0
          %2177 = vmatprep.subr.mxu0 0.0
          %2178 = vmatpush1.msra.mxu0 0.0
          %2179 = vmatprep.subr.mxu0 0.0
          %2180 = vmatpush1.msra.mxu0 0.0
          %2181 = vmatprep.subr.mxu0 0.0
          %2182 = vmatpush1.msra.mxu0 0.0
          %2183 = vmatprep.subr.mxu0 0.0
          %2184 = vmatpush1.msra.mxu0 0.0
          %2185 = vmatprep.subr.mxu0 0.0
          %2186 = vmatpush1.msra.mxu0 0.0
          %2187 = vmatprep.subr.mxu0 0.0
          %2188 = vmatpush1.msra.mxu0 0.0
          %2189 = vmatprep.subr.mxu0 0.0
          %2190 = vmatpush1.msra.mxu0 0.0
          %2191 = vmatprep.subr.mxu0 0.0
          %2192 = vmatpush1.msra.mxu0 0.0
          %2193 = vmatprep.subr.mxu0 0.0
          %2194 = vmatpush1.msra.mxu0 0.0
          %2195 = vmatprep.subr.mxu0 0.0
          %2196 = vmatpush1.msra.mxu0 0.0
          %2197 = vmatprep.subr.mxu0 0.0
          %2198 = vmatpush1.msra.mxu0 0.0
          %2199 = vmatprep.subr.mxu0 0.0
          %2200 = vmatpush1.msra.mxu0 0.0
          %2201 = vmatprep.subr.mxu0 0.0
          %2202 = vmatpush1.msra.mxu0 0.0
          %2203 = vmatprep.subr.mxu0 0.0
          %2204 = vmatpush1.msra.mxu0 0.0
          %2205 = vmatprep.subr.mxu0 0.0
          %2206 = vmatpush1.msra.mxu0 0.0
          %2207 = vmatprep.subr.mxu0 0.0
          %2208 = vmatpush1.msra.mxu0 0.0
          %2209 = vmatprep.subr.mxu0 0.0
          %2210 = vmatpush1.msra.mxu0 0.0
          %2211 = vmatprep.subr.mxu0 0.0
          %2212 = vmatpush1.msra.mxu0 0.0
          %2213 = vmatprep.subr.mxu0 0.0
          %2214 = vmatpush1.msra.mxu0 0.0
          %2215 = vmatprep.subr.mxu0 0.0
          %2216 = vmatpush1.msra.mxu0 0.0
          %2217 = vmatprep.subr.mxu0 0.0
          %2218 = vmatpush1.msra.mxu0 0.0
          %2219 = vmatprep.subr.mxu0 0.0
          %2220 = vmatpush1.msra.mxu0 0.0
          %2221 = vmatprep.subr.mxu0 0.0
          %2222 = vmatpush1.msra.mxu0 0.0
          %2223 = vmatprep.subr.mxu0 0.0
          %2224 = vmatpush1.msra.mxu0 0.0
          %2225 = vmatprep.subr.mxu0 0.0
          %2226 = vmatpush1.msra.mxu0 0.0
          %2227 = vmatprep.mubr.f32.mxu0 0.0
          %2228 = vmatmul.mubr.f32.gmra.mrb[0].mxu0 %v1750
          %v2229 = vpop.f32.mrb[0].mxu0
          %v2230 = vadd.f32 0.0, %v2229
          %v2231 = vpop.f32.mrb[0].mxu0
          %2232 = vmatprep.mubr.f32.mxu0 0.0
          %2233 = vmatmul.mubr.f32.gmra.mrb[0].mxu0 %v1752
          %v2234 = vpop.f32.mrb[0].mxu0
          %v2235 = vadd.f32 0.0, %v2234
          %v2236 = vpop.f32.mrb[0].mxu0
          %2237 = vdwg.mxu0
          %v2238 = vadd.f32 %v2075, %v2230
          %v2239 = vadd.f32 %v2076, %v2235
          %v2241 = vrot.slane %v984, 1
          %v2242 = vrot.slane %v985, 1
          %v2243 = vsel %vm995, %v2241, %v2242
          %v2244 = vrot.slane %v986, 1
          %v2245 = vsel %vm995, %v2242, %v2244
          %v2246 = vsel %vm438, %v2243, 0
          %v2248 = vsel %vm438, %v2245, 0
          %2250 = vmatprep.subr.mxu0 0.0
          %2251 = vmatpush1.msra.mxu0 %v2161
          %2252 = vmatprep.subr.mxu0 0.0
          %2253 = vmatpush1.msra.mxu0 %v2162
          %2254 = vmatprep.subr.mxu0 0.0
          %2255 = vmatpush1.msra.mxu0 0.0
          %2256 = vmatprep.subr.mxu0 0.0
          %2257 = vmatpush1.msra.mxu0 0.0
          %2258 = vmatprep.subr.mxu0 0.0
          %2259 = vmatpush1.msra.mxu0 0.0
          %2260 = vmatprep.subr.mxu0 0.0
          %2261 = vmatpush1.msra.mxu0 0.0
          %2262 = vmatprep.subr.mxu0 0.0
          %2263 = vmatpush1.msra.mxu0 0.0
          %2264 = vmatprep.subr.mxu0 0.0
          %2265 = vmatpush1.msra.mxu0 0.0
          %2266 = vmatprep.subr.mxu0 0.0
          %2267 = vmatpush1.msra.mxu0 0.0
          %2268 = vmatprep.subr.mxu0 0.0
          %2269 = vmatpush1.msra.mxu0 0.0
          %2270 = vmatprep.subr.mxu0 0.0
          %2271 = vmatpush1.msra.mxu0 0.0
          %2272 = vmatprep.subr.mxu0 0.0
          %2273 = vmatpush1.msra.mxu0 0.0
          %2274 = vmatprep.subr.mxu0 0.0
          %2275 = vmatpush1.msra.mxu0 0.0
          %2276 = vmatprep.subr.mxu0 0.0
          %2277 = vmatpush1.msra.mxu0 0.0
          %2278 = vmatprep.subr.mxu0 0.0
          %2279 = vmatpush1.msra.mxu0 0.0
          %2280 = vmatprep.subr.mxu0 0.0
          %2281 = vmatpush1.msra.mxu0 0.0
          %2282 = vmatprep.subr.mxu0 0.0
          %2283 = vmatpush1.msra.mxu0 0.0
          %2284 = vmatprep.subr.mxu0 0.0
          %2285 = vmatpush1.msra.mxu0 0.0
          %2286 = vmatprep.subr.mxu0 0.0
          %2287 = vmatpush1.msra.mxu0 0.0
          %2288 = vmatprep.subr.mxu0 0.0
          %2289 = vmatpush1.msra.mxu0 0.0
          %2290 = vmatprep.subr.mxu0 0.0
          %2291 = vmatpush1.msra.mxu0 0.0
          %2292 = vmatprep.subr.mxu0 0.0
          %2293 = vmatpush1.msra.mxu0 0.0
          %2294 = vmatprep.subr.mxu0 0.0
          %2295 = vmatpush1.msra.mxu0 0.0
          %2296 = vmatprep.subr.mxu0 0.0
          %2297 = vmatpush1.msra.mxu0 0.0
          %2298 = vmatprep.subr.mxu0 0.0
          %2299 = vmatpush1.msra.mxu0 0.0
          %2300 = vmatprep.subr.mxu0 0.0
          %2301 = vmatpush1.msra.mxu0 0.0
          %2302 = vmatprep.subr.mxu0 0.0
          %2303 = vmatpush1.msra.mxu0 0.0
          %2304 = vmatprep.subr.mxu0 0.0
          %2305 = vmatpush1.msra.mxu0 0.0
          %2306 = vmatprep.subr.mxu0 0.0
          %2307 = vmatpush1.msra.mxu0 0.0
          %2308 = vmatprep.subr.mxu0 0.0
          %2309 = vmatpush1.msra.mxu0 0.0
          %2310 = vmatprep.subr.mxu0 0.0
          %2311 = vmatpush1.msra.mxu0 0.0
          %2312 = vmatprep.subr.mxu0 0.0
          %2313 = vmatpush1.msra.mxu0 0.0
          %2314 = vmatprep.mubr.f32.mxu0 0.0
          %2315 = vmatmul.mubr.f32.gmra.mrb[0].mxu0 %v2246
          %v2316 = vpop.f32.mrb[0].mxu0
          %v2317 = vadd.f32 0.0, %v2316
          %v2318 = vpop.f32.mrb[0].mxu0
          %2319 = vmatprep.mubr.f32.mxu0 0.0
          %2320 = vmatmul.mubr.f32.gmra.mrb[0].mxu0 %v2248
          %v2321 = vpop.f32.mrb[0].mxu0
          %v2322 = vadd.f32 0.0, %v2321
          %v2323 = vpop.f32.mrb[0].mxu0
          %2324 = vdwg.mxu0
          %v2325 = vadd.f32 %v2158, %v2317
          %v2326 = vadd.f32 %v2159, %v2322
          %s2327 = scalar_lea.vmem %s3, 128
          %v2328 = vld [vmem:[%s2327] sm:$0xff]
          %v2329 = vld [vmem:[%s2327 + $0x8] sm:$0xff]
          %2330 = vmatprep.subr.mxu0 0.0
          %2331 = vmatpush1.msra.mxu0 %v2328
          %2332 = vmatprep.subr.mxu0 0.0
          %2333 = vmatpush1.msra.mxu0 %v2329
          %2334 = vmatprep.subr.mxu0 0.0
          %2335 = vmatpush1.msra.mxu0 0.0
          %2336 = vmatprep.subr.mxu0 0.0
          %2337 = vmatpush1.msra.mxu0 0.0
          %2338 = vmatprep.subr.mxu0 0.0
          %2339 = vmatpush1.msra.mxu0 0.0
          %2340 = vmatprep.subr.mxu0 0.0
          %2341 = vmatpush1.msra.mxu0 0.0
          %2342 = vmatprep.subr.mxu0 0.0
          %2343 = vmatpush1.msra.mxu0 0.0
          %2344 = vmatprep.subr.mxu0 0.0
          %2345 = vmatpush1.msra.mxu0 0.0
          %2346 = vmatprep.subr.mxu0 0.0
          %2347 = vmatpush1.msra.mxu0 0.0
          %2348 = vmatprep.subr.mxu0 0.0
          %2349 = vmatpush1.msra.mxu0 0.0
          %2350 = vmatprep.subr.mxu0 0.0
          %2351 = vmatpush1.msra.mxu0 0.0
          %2352 = vmatprep.subr.mxu0 0.0
          %2353 = vmatpush1.msra.mxu0 0.0
          %2354 = vmatprep.subr.mxu0 0.0
          %2355 = vmatpush1.msra.mxu0 0.0
          %2356 = vmatprep.subr.mxu0 0.0
          %2357 = vmatpush1.msra.mxu0 0.0
          %2358 = vmatprep.subr.mxu0 0.0
          %2359 = vmatpush1.msra.mxu0 0.0
          %2360 = vmatprep.subr.mxu0 0.0
          %2361 = vmatpush1.msra.mxu0 0.0
          %2362 = vmatprep.subr.mxu0 0.0
          %2363 = vmatpush1.msra.mxu0 0.0
          %2364 = vmatprep.subr.mxu0 0.0
          %2365 = vmatpush1.msra.mxu0 0.0
          %2366 = vmatprep.subr.mxu0 0.0
          %2367 = vmatpush1.msra.mxu0 0.0
          %2368 = vmatprep.subr.mxu0 0.0
          %2369 = vmatpush1.msra.mxu0 0.0
          %2370 = vmatprep.subr.mxu0 0.0
          %2371 = vmatpush1.msra.mxu0 0.0
          %2372 = vmatprep.subr.mxu0 0.0
          %2373 = vmatpush1.msra.mxu0 0.0
          %2374 = vmatprep.subr.mxu0 0.0
          %2375 = vmatpush1.msra.mxu0 0.0
          %2376 = vmatprep.subr.mxu0 0.0
          %2377 = vmatpush1.msra.mxu0 0.0
          %2378 = vmatprep.subr.mxu0 0.0
          %2379 = vmatpush1.msra.mxu0 0.0
          %2380 = vmatprep.subr.mxu0 0.0
          %2381 = vmatpush1.msra.mxu0 0.0
          %2382 = vmatprep.subr.mxu0 0.0
          %2383 = vmatpush1.msra.mxu0 0.0
          %2384 = vmatprep.subr.mxu0 0.0
          %2385 = vmatpush1.msra.mxu0 0.0
          %2386 = vmatprep.subr.mxu0 0.0
          %2387 = vmatpush1.msra.mxu0 0.0
          %2388 = vmatprep.subr.mxu0 0.0
          %2389 = vmatpush1.msra.mxu0 0.0
          %2390 = vmatprep.subr.mxu0 0.0
          %2391 = vmatpush1.msra.mxu0 0.0
          %2392 = vmatprep.subr.mxu0 0.0
          %2393 = vmatpush1.msra.mxu0 0.0
          %2394 = vmatprep.mubr.f32.mxu0 0.0
          %2395 = vmatmul.mubr.f32.gmra.mrb[0].mxu0 %v1916
          %v2396 = vpop.f32.mrb[0].mxu0
          %v2397 = vadd.f32 0.0, %v2396
          %v2398 = vpop.f32.mrb[0].mxu0
          %2399 = vmatprep.mubr.f32.mxu0 0.0
          %2400 = vmatmul.mubr.f32.gmra.mrb[0].mxu0 %v1918
          %v2401 = vpop.f32.mrb[0].mxu0
          %v2402 = vadd.f32 0.0, %v2401
          %v2403 = vpop.f32.mrb[0].mxu0
          %2404 = vdwg.mxu0
          %v2405 = vadd.f32 %v2238, %v2397
          %v2406 = vadd.f32 %v2239, %v2402
          %v2407 = vrot.slane %v984, 2
          %v2408 = vrot.slane %v985, 2
          %v2409 = vsel %vm1328, %v2407, %v2408
          %v2410 = vrot.slane %v986, 2
          %v2411 = vsel %vm1328, %v2408, %v2410
          %v2412 = vsel %vm438, %v2409, 0
          %v2414 = vsel %vm438, %v2411, 0
          %2416 = vmatprep.subr.mxu0 0.0
          %2417 = vmatpush1.msra.mxu0 %v2328
          %2418 = vmatprep.subr.mxu0 0.0
          %2419 = vmatpush1.msra.mxu0 %v2329
          %2420 = vmatprep.subr.mxu0 0.0
          %2421 = vmatpush1.msra.mxu0 0.0
          %2422 = vmatprep.subr.mxu0 0.0
          %2423 = vmatpush1.msra.mxu0 0.0
          %2424 = vmatprep.subr.mxu0 0.0
          %2425 = vmatpush1.msra.mxu0 0.0
          %2426 = vmatprep.subr.mxu0 0.0
          %2427 = vmatpush1.msra.mxu0 0.0
          %2428 = vmatprep.subr.mxu0 0.0
          %2429 = vmatpush1.msra.mxu0 0.0
          %2430 = vmatprep.subr.mxu0 0.0
          %2431 = vmatpush1.msra.mxu0 0.0
          %2432 = vmatprep.subr.mxu0 0.0
          %2433 = vmatpush1.msra.mxu0 0.0
          %2434 = vmatprep.subr.mxu0 0.0
          %2435 = vmatpush1.msra.mxu0 0.0
          %2436 = vmatprep.subr.mxu0 0.0
          %2437 = vmatpush1.msra.mxu0 0.0
          %2438 = vmatprep.subr.mxu0 0.0
          %2439 = vmatpush1.msra.mxu0 0.0
          %2440 = vmatprep.subr.mxu0 0.0
          %2441 = vmatpush1.msra.mxu0 0.0
          %2442 = vmatprep.subr.mxu0 0.0
          %2443 = vmatpush1.msra.mxu0 0.0
          %2444 = vmatprep.subr.mxu0 0.0
          %2445 = vmatpush1.msra.mxu0 0.0
          %2446 = vmatprep.subr.mxu0 0.0
          %2447 = vmatpush1.msra.mxu0 0.0
          %2448 = vmatprep.subr.mxu0 0.0
          %2449 = vmatpush1.msra.mxu0 0.0
          %2450 = vmatprep.subr.mxu0 0.0
          %2451 = vmatpush1.msra.mxu0 0.0
          %2452 = vmatprep.subr.mxu0 0.0
          %2453 = vmatpush1.msra.mxu0 0.0
          %2454 = vmatprep.subr.mxu0 0.0
          %2455 = vmatpush1.msra.mxu0 0.0
          %2456 = vmatprep.subr.mxu0 0.0
          %2457 = vmatpush1.msra.mxu0 0.0
          %2458 = vmatprep.subr.mxu0 0.0
          %2459 = vmatpush1.msra.mxu0 0.0
          %2460 = vmatprep.subr.mxu0 0.0
          %2461 = vmatpush1.msra.mxu0 0.0
          %2462 = vmatprep.subr.mxu0 0.0
          %2463 = vmatpush1.msra.mxu0 0.0
          %2464 = vmatprep.subr.mxu0 0.0
          %2465 = vmatpush1.msra.mxu0 0.0
          %2466 = vmatprep.subr.mxu0 0.0
          %2467 = vmatpush1.msra.mxu0 0.0
          %2468 = vmatprep.subr.mxu0 0.0
          %2469 = vmatpush1.msra.mxu0 0.0
          %2470 = vmatprep.subr.mxu0 0.0
          %2471 = vmatpush1.msra.mxu0 0.0
          %2472 = vmatprep.subr.mxu0 0.0
          %2473 = vmatpush1.msra.mxu0 0.0
          %2474 = vmatprep.subr.mxu0 0.0
          %2475 = vmatpush1.msra.mxu0 0.0
          %2476 = vmatprep.subr.mxu0 0.0
          %2477 = vmatpush1.msra.mxu0 0.0
          %2478 = vmatprep.subr.mxu0 0.0
          %2479 = vmatpush1.msra.mxu0 0.0
          %2480 = vmatprep.mubr.f32.mxu0 0.0
          %2481 = vmatmul.mubr.f32.gmra.mrb[0].mxu0 %v2412
          %v2482 = vpop.f32.mrb[0].mxu0
          %v2483 = vadd.f32 0.0, %v2482
          %v2484 = vpop.f32.mrb[0].mxu0
          %2485 = vmatprep.mubr.f32.mxu0 0.0
          %2486 = vmatmul.mubr.f32.gmra.mrb[0].mxu0 %v2414
          %v2487 = vpop.f32.mrb[0].mxu0
          %v2488 = vadd.f32 0.0, %v2487
          %v2489 = vpop.f32.mrb[0].mxu0
          %2490 = vdwg.mxu0
          %v2491 = vadd.f32 %v2325, %v2483
          %v2492 = vadd.f32 %v2326, %v2488
          %v2493 = vmax.f32 %v2405, %v2491
          %v2494 = vmax.f32 %v2406, %v2492
          %v2496 = vsel %vm438, %v534, 0
          %2498 = vmatprep.subr.mxu0 0.0
          %2499 = vmatpush1.msra.mxu0 %v2493
          %2500 = vmatprep.subr.mxu0 0.0
          %2501 = vmatpush1.msra.mxu0 %v2494
          %2502 = vmatprep.subr.mxu0 0.0
          %2503 = vmatpush1.msra.mxu0 0.0
          %2504 = vmatprep.subr.mxu0 0.0
          %2505 = vmatpush1.msra.mxu0 0.0
          %2506 = vmatprep.subr.mxu0 0.0
          %2507 = vmatpush1.msra.mxu0 0.0
          %2508 = vmatprep.subr.mxu0 0.0
          %2509 = vmatpush1.msra.mxu0 0.0
          %2510 = vmatprep.subr.mxu0 0.0
          %2511 = vmatpush1.msra.mxu0 0.0
          %2512 = vmatprep.subr.mxu0 0.0
          %2513 = vmatpush1.msra.mxu0 0.0
          %2514 = vmatprep.subr.mxu0 0.0
          %2515 = vmatpush1.msra.mxu0 0.0
          %2516 = vmatprep.subr.mxu0 0.0
          %2517 = vmatpush1.msra.mxu0 0.0
          %2518 = vmatprep.subr.mxu0 0.0
          %2519 = vmatpush1.msra.mxu0 0.0
          %2520 = vmatprep.subr.mxu0 0.0
          %2521 = vmatpush1.msra.mxu0 0.0
          %2522 = vmatprep.subr.mxu0 0.0
          %2523 = vmatpush1.msra.mxu0 0.0
          %2524 = vmatprep.subr.mxu0 0.0
          %2525 = vmatpush1.msra.mxu0 0.0
          %2526 = vmatprep.subr.mxu0 0.0
          %2527 = vmatpush1.msra.mxu0 0.0
          %2528 = vmatprep.subr.mxu0 0.0
          %2529 = vmatpush1.msra.mxu0 0.0
          %2530 = vmatprep.subr.mxu0 0.0
          %2531 = vmatpush1.msra.mxu0 0.0
          %2532 = vmatprep.subr.mxu0 0.0
          %2533 = vmatpush1.msra.mxu0 0.0
          %2534 = vmatprep.subr.mxu0 0.0
          %2535 = vmatpush1.msra.mxu0 0.0
          %2536 = vmatprep.subr.mxu0 0.0
          %2537 = vmatpush1.msra.mxu0 0.0
          %2538 = vmatprep.subr.mxu0 0.0
          %2539 = vmatpush1.msra.mxu0 0.0
          %2540 = vmatprep.subr.mxu0 0.0
          %2541 = vmatpush1.msra.mxu0 0.0
          %2542 = vmatprep.subr.mxu0 0.0
          %2543 = vmatpush1.msra.mxu0 0.0
          %2544 = vmatprep.subr.mxu0 0.0
          %2545 = vmatpush1.msra.mxu0 0.0
          %2546 = vmatprep.subr.mxu0 0.0
          %2547 = vmatpush1.msra.mxu0 0.0
          %2548 = vmatprep.subr.mxu0 0.0
          %2549 = vmatpush1.msra.mxu0 0.0
          %2550 = vmatprep.subr.mxu0 0.0
          %2551 = vmatpush1.msra.mxu0 0.0
          %2552 = vmatprep.subr.mxu0 0.0
          %2553 = vmatpush1.msra.mxu0 0.0
          %2554 = vmatprep.subr.mxu0 0.0
          %2555 = vmatpush1.msra.mxu0 0.0
          %2556 = vmatprep.subr.mxu0 0.0
          %2557 = vmatpush1.msra.mxu0 0.0
          %2558 = vmatprep.subr.mxu0 0.0
          %2559 = vmatpush1.msra.mxu0 0.0
          %2560 = vmatprep.subr.mxu0 0.0
          %2561 = vmatpush1.msra.mxu0 0.0
          %2562 = vmatprep.mubr.f32.mxu0 0.0
          %2563 = vmatmul.mubr.f32.gmra.mrb[0].mxu0 %v2496
          %v2564 = vpop.f32.mrb[0].mxu0
          %v2565 = vadd.f32 0.0, %v2564
          %v2566 = vpop.f32.mrb[0].mxu0
          %2567 = vdwg.mxu0
          %v2569 = vsel %vm438, %v542, 0
          %2571 = vmatprep.subr.mxu0 0.0
          %2572 = vmatpush1.msra.mxu0 %v2493
          %2573 = vmatprep.subr.mxu0 0.0
          %2574 = vmatpush1.msra.mxu0 %v2494
          %2575 = vmatprep.subr.mxu0 0.0
          %2576 = vmatpush1.msra.mxu0 0.0
          %2577 = vmatprep.subr.mxu0 0.0
          %2578 = vmatpush1.msra.mxu0 0.0
          %2579 = vmatprep.subr.mxu0 0.0
          %2580 = vmatpush1.msra.mxu0 0.0
          %2581 = vmatprep.subr.mxu0 0.0
          %2582 = vmatpush1.msra.mxu0 0.0
          %2583 = vmatprep.subr.mxu0 0.0
          %2584 = vmatpush1.msra.mxu0 0.0
          %2585 = vmatprep.subr.mxu0 0.0
          %2586 = vmatpush1.msra.mxu0 0.0
          %2587 = vmatprep.subr.mxu0 0.0
          %2588 = vmatpush1.msra.mxu0 0.0
          %2589 = vmatprep.subr.mxu0 0.0
          %2590 = vmatpush1.msra.mxu0 0.0
          %2591 = vmatprep.subr.mxu0 0.0
          %2592 = vmatpush1.msra.mxu0 0.0
          %2593 = vmatprep.subr.mxu0 0.0
          %2594 = vmatpush1.msra.mxu0 0.0
          %2595 = vmatprep.subr.mxu0 0.0
          %2596 = vmatpush1.msra.mxu0 0.0
          %2597 = vmatprep.subr.mxu0 0.0
          %2598 = vmatpush1.msra.mxu0 0.0
          %2599 = vmatprep.subr.mxu0 0.0
          %2600 = vmatpush1.msra.mxu0 0.0
          %2601 = vmatprep.subr.mxu0 0.0
          %2602 = vmatpush1.msra.mxu0 0.0
          %2603 = vmatprep.subr.mxu0 0.0
          %2604 = vmatpush1.msra.mxu0 0.0
          %2605 = vmatprep.subr.mxu0 0.0
          %2606 = vmatpush1.msra.mxu0 0.0
          %2607 = vmatprep.subr.mxu0 0.0
          %2608 = vmatpush1.msra.mxu0 0.0
          %2609 = vmatprep.subr.mxu0 0.0
          %2610 = vmatpush1.msra.mxu0 0.0
          %2611 = vmatprep.subr.mxu0 0.0
          %2612 = vmatpush1.msra.mxu0 0.0
          %2613 = vmatprep.subr.mxu0 0.0
          %2614 = vmatpush1.msra.mxu0 0.0
          %2615 = vmatprep.subr.mxu0 0.0
          %2616 = vmatpush1.msra.mxu0 0.0
          %2617 = vmatprep.subr.mxu0 0.0
          %2618 = vmatpush1.msra.mxu0 0.0
          %2619 = vmatprep.subr.mxu0 0.0
          %2620 = vmatpush1.msra.mxu0 0.0
          %2621 = vmatprep.subr.mxu0 0.0
          %2622 = vmatpush1.msra.mxu0 0.0
          %2623 = vmatprep.subr.mxu0 0.0
          %2624 = vmatpush1.msra.mxu0 0.0
          %2625 = vmatprep.subr.mxu0 0.0
          %2626 = vmatpush1.msra.mxu0 0.0
          %2627 = vmatprep.subr.mxu0 0.0
          %2628 = vmatpush1.msra.mxu0 0.0
          %2629 = vmatprep.subr.mxu0 0.0
          %2630 = vmatpush1.msra.mxu0 0.0
          %2631 = vmatprep.subr.mxu0 0.0
          %2632 = vmatpush1.msra.mxu0 0.0
          %2633 = vmatprep.subr.mxu0 0.0
          %2634 = vmatpush1.msra.mxu0 0.0
          %2635 = vmatprep.mubr.f32.mxu0 0.0
          %2636 = vmatmul.mubr.f32.gmra.mrb[0].mxu0 %v2569
          %v2637 = vpop.f32.mrb[0].mxu0
          %v2638 = vadd.f32 0.0, %v2637
          %v2639 = vpop.f32.mrb[0].mxu0
          %2640 = vdwg.mxu0
          %v2641 = vmax.f32 %v2565, %v2638
          %v2642 = vld [vmem:[%s4] sm:$0x1]
          %v2644 = vlaneseq
          %v2645 = vshrl.u32 %v2644, 7
          %v2646 = vsub.s32 0, %v2645
          %v2647 = vrot.slane %v2642, %v2646
          %v2649 = vadd.f32 %v2641, %v2647
          %v2650 = vmax.f32 %v2649, 0.0
          %s2651 = sadd.s32 %s958, 1
          %s2652 = smul.u32 %s2651, 16
          %s2653 = scalar_lea.vmem [#allocation3], %s2652
          %2654 = vst.msk [vmem:[%s2653 + $0x1] sm:$0xff] %vm494, %v2650
        $region84: #{detection_network_pallas.1} parent=71 // loop_footer
          %s962 = sadd.s32 1, %s958
        $region85: #{detection_network_pallas.1} parent=71 // loop_footer_branch
          %957 = sbr.rel target = $region81
        $region86: #{detection_network_pallas.1} parent=71 // loop_exit
          _
        loop: start=0, step=1, limit=4
        $region87: #{detection_network_pallas.1} parent=71 // loop_pre_header
          _
        $region88: #{detection_network_pallas.1} parent=71 // loop_header
          %s2656 = sphi 0, %s2660
          %p2657 = scmp.ge.s32.totalorder %s2656, 4
        $region89: #{detection_network_pallas.1} parent=71 // loop_header_branch
          %2659 = sbr.rel (%p2657) target = $region93
        $region90: #{detection_network_pallas.1} parent=71 // loop_body
          %s2661 = smul.u32 %s2656, 2
          %s2662 = smul.u32 %s2661, 16
          %s2663 = scalar_lea.vmem [#allocation3], %s2662
          %v2664 = vld [vmem:[%s2663] sm:$0xff]
          %v2665 = vld [vmem:[%s2663 + $0x8] sm:$0x3]
          %s2666 = sadd.s32 %s2661, 1
          %s2667 = smul.u32 %s2666, 16
          %s2668 = scalar_lea.vmem [#allocation3], %s2667
          %v2669 = vld [vmem:[%s2668] sm:$0xff]
          %v2670 = vld [vmem:[%s2668 + $0x8] sm:$0x3]
          %s2671 = sadd.s32 %s2661, 2
          %s2672 = smul.u32 %s2671, 16
          %s2673 = scalar_lea.vmem [#allocation3], %s2672
          %v2674 = vld [vmem:[%s2673] sm:$0xff]
          %v2675 = vld [vmem:[%s2673 + $0x8] sm:$0x3]
          %s2676 = sadd.s32 %s2661, 3
          %s2677 = smul.u32 %s2676, 16
          %s2678 = scalar_lea.vmem [#allocation3], %s2677
          %v2679 = vld [vmem:[%s2678] sm:$0xff]
          %v2680 = vld [vmem:[%s2678 + $0x8] sm:$0x3]
          %v2681 = vld [vmem:[%s5] sm:$0xff]
          %v2682 = vld [vmem:[%s5 + $0x8] sm:$0xff]
          %v2683 = vld [vmem:[%s5 + $0x10] sm:$0xff]
          %v2684 = vld [vmem:[%s5 + $0x18] sm:$0xff]
          %s2685 = scalar_lea.vmem %s5, 32
          %v2686 = vld [vmem:[%s2685] sm:$0xff]
          %v2687 = vld [vmem:[%s2685 + $0x8] sm:$0xff]
          %v2688 = vld [vmem:[%s2685 + $0x10] sm:$0xff]
          %v2689 = vld [vmem:[%s2685 + $0x18] sm:$0xff]
          %vm2692 = vcmask 1046528
          %v2693 = vrot.slane %v2664, 1
          %v2694 = vrot.slane %v2665, 1
          %v2695 = vsel %vm2692, %v2693, %v2694
          %v2696 = vsel %vm494, %v2695, 0
          %2698 = vmatprep.subr.mxu0 0.0
          %2699 = vmatpush1.msra.mxu0 %v2686
          %2700 = vmatprep.subr.mxu0 0.0
          %2701 = vmatpush1.msra.mxu0 %v2687
          %2702 = vmatprep.subr.mxu0 0.0
          %2703 = vmatpush1.msra.mxu0 %v2688
          %2704 = vmatprep.subr.mxu0 0.0
          %2705 = vmatpush1.msra.mxu0 %v2689
          %2706 = vmatprep.subr.mxu0 0.0
          %2707 = vmatpush1.msra.mxu0 0.0
          %2708 = vmatprep.subr.mxu0 0.0
          %2709 = vmatpush1.msra.mxu0 0.0
          %2710 = vmatprep.subr.mxu0 0.0
          %2711 = vmatpush1.msra.mxu0 0.0
          %2712 = vmatprep.subr.mxu0 0.0
          %2713 = vmatpush1.msra.mxu0 0.0
          %2714 = vmatprep.subr.mxu0 0.0
          %2715 = vmatpush1.msra.mxu0 0.0
          %2716 = vmatprep.subr.mxu0 0.0
          %2717 = vmatpush1.msra.mxu0 0.0
          %2718 = vmatprep.subr.mxu0 0.0
          %2719 = vmatpush1.msra.mxu0 0.0
          %2720 = vmatprep.subr.mxu0 0.0
          %2721 = vmatpush1.msra.mxu0 0.0
          %2722 = vmatprep.subr.mxu0 0.0
          %2723 = vmatpush1.msra.mxu0 0.0
          %2724 = vmatprep.subr.mxu0 0.0
          %2725 = vmatpush1.msra.mxu0 0.0
          %2726 = vmatprep.subr.mxu0 0.0
          %2727 = vmatpush1.msra.mxu0 0.0
          %2728 = vmatprep.subr.mxu0 0.0
          %2729 = vmatpush1.msra.mxu0 0.0
          %2730 = vmatprep.subr.mxu0 0.0
          %2731 = vmatpush1.msra.mxu0 0.0
          %2732 = vmatprep.subr.mxu0 0.0
          %2733 = vmatpush1.msra.mxu0 0.0
          %2734 = vmatprep.subr.mxu0 0.0
          %2735 = vmatpush1.msra.mxu0 0.0
          %2736 = vmatprep.subr.mxu0 0.0
          %2737 = vmatpush1.msra.mxu0 0.0
          %2738 = vmatprep.subr.mxu0 0.0
          %2739 = vmatpush1.msra.mxu0 0.0
          %2740 = vmatprep.subr.mxu0 0.0
          %2741 = vmatpush1.msra.mxu0 0.0
          %2742 = vmatprep.subr.mxu0 0.0
          %2743 = vmatpush1.msra.mxu0 0.0
          %2744 = vmatprep.subr.mxu0 0.0
          %2745 = vmatpush1.msra.mxu0 0.0
          %2746 = vmatprep.subr.mxu0 0.0
          %2747 = vmatpush1.msra.mxu0 0.0
          %2748 = vmatprep.subr.mxu0 0.0
          %2749 = vmatpush1.msra.mxu0 0.0
          %2750 = vmatprep.subr.mxu0 0.0
          %2751 = vmatpush1.msra.mxu0 0.0
          %2752 = vmatprep.subr.mxu0 0.0
          %2753 = vmatpush1.msra.mxu0 0.0
          %2754 = vmatprep.subr.mxu0 0.0
          %2755 = vmatpush1.msra.mxu0 0.0
          %2756 = vmatprep.subr.mxu0 0.0
          %2757 = vmatpush1.msra.mxu0 0.0
          %2758 = vmatprep.subr.mxu0 0.0
          %2759 = vmatpush1.msra.mxu0 0.0
          %2760 = vmatprep.subr.mxu0 0.0
          %2761 = vmatpush1.msra.mxu0 0.0
          %2762 = vmatprep.mubr.f32.mxu0 0.0
          %2763 = vmatmul.mubr.f32.gmra.mrb[0].mxu0 %v2696
          %v2764 = vpop.f32.mrb[0].mxu0
          %v2765 = vadd.f32 0.0, %v2764
          %v2766 = vpop.f32.mrb[0].mxu0
          %2767 = vdwg.mxu0
          %v2768 = vsel %vm494, %v2664, 0
          %2770 = vmatprep.subr.mxu0 0.0
          %2771 = vmatpush1.msra.mxu0 %v2681
          %2772 = vmatprep.subr.mxu0 0.0
          %2773 = vmatpush1.msra.mxu0 %v2682
          %2774 = vmatprep.subr.mxu0 0.0
          %2775 = vmatpush1.msra.mxu0 %v2683
          %2776 = vmatprep.subr.mxu0 0.0
          %2777 = vmatpush1.msra.mxu0 %v2684
          %2778 = vmatprep.subr.mxu0 0.0
          %2779 = vmatpush1.msra.mxu0 0.0
          %2780 = vmatprep.subr.mxu0 0.0
          %2781 = vmatpush1.msra.mxu0 0.0
          %2782 = vmatprep.subr.mxu0 0.0
          %2783 = vmatpush1.msra.mxu0 0.0
          %2784 = vmatprep.subr.mxu0 0.0
          %2785 = vmatpush1.msra.mxu0 0.0
          %2786 = vmatprep.subr.mxu0 0.0
          %2787 = vmatpush1.msra.mxu0 0.0
          %2788 = vmatprep.subr.mxu0 0.0
          %2789 = vmatpush1.msra.mxu0 0.0
          %2790 = vmatprep.subr.mxu0 0.0
          %2791 = vmatpush1.msra.mxu0 0.0
          %2792 = vmatprep.subr.mxu0 0.0
          %2793 = vmatpush1.msra.mxu0 0.0
          %2794 = vmatprep.subr.mxu0 0.0
          %2795 = vmatpush1.msra.mxu0 0.0
          %2796 = vmatprep.subr.mxu0 0.0
          %2797 = vmatpush1.msra.mxu0 0.0
          %2798 = vmatprep.subr.mxu0 0.0
          %2799 = vmatpush1.msra.mxu0 0.0
          %2800 = vmatprep.subr.mxu0 0.0
          %2801 = vmatpush1.msra.mxu0 0.0
          %2802 = vmatprep.subr.mxu0 0.0
          %2803 = vmatpush1.msra.mxu0 0.0
          %2804 = vmatprep.subr.mxu0 0.0
          %2805 = vmatpush1.msra.mxu0 0.0
          %2806 = vmatprep.subr.mxu0 0.0
          %2807 = vmatpush1.msra.mxu0 0.0
          %2808 = vmatprep.subr.mxu0 0.0
          %2809 = vmatpush1.msra.mxu0 0.0
          %2810 = vmatprep.subr.mxu0 0.0
          %2811 = vmatpush1.msra.mxu0 0.0
          %2812 = vmatprep.subr.mxu0 0.0
          %2813 = vmatpush1.msra.mxu0 0.0
          %2814 = vmatprep.subr.mxu0 0.0
          %2815 = vmatpush1.msra.mxu0 0.0
          %2816 = vmatprep.subr.mxu0 0.0
          %2817 = vmatpush1.msra.mxu0 0.0
          %2818 = vmatprep.subr.mxu0 0.0
          %2819 = vmatpush1.msra.mxu0 0.0
          %2820 = vmatprep.subr.mxu0 0.0
          %2821 = vmatpush1.msra.mxu0 0.0
          %2822 = vmatprep.subr.mxu0 0.0
          %2823 = vmatpush1.msra.mxu0 0.0
          %2824 = vmatprep.subr.mxu0 0.0
          %2825 = vmatpush1.msra.mxu0 0.0
          %2826 = vmatprep.subr.mxu0 0.0
          %2827 = vmatpush1.msra.mxu0 0.0
          %2828 = vmatprep.subr.mxu0 0.0
          %2829 = vmatpush1.msra.mxu0 0.0
          %2830 = vmatprep.subr.mxu0 0.0
          %2831 = vmatpush1.msra.mxu0 0.0
          %2832 = vmatprep.subr.mxu0 0.0
          %2833 = vmatpush1.msra.mxu0 0.0
          %2834 = vmatprep.mubr.f32.mxu0 0.0
          %2835 = vmatmul.mubr.f32.gmra.mrb[0].mxu0 %v2768
          %v2836 = vpop.f32.mrb[0].mxu0
          %v2837 = vadd.f32 %v2765, %v2836
          %v2838 = vpop.f32.mrb[0].mxu0
          %2839 = vdwg.mxu0
          %v2842 = vrot.slane %v2669, 1
          %v2843 = vrot.slane %v2670, 1
          %v2844 = vsel %vm2692, %v2842, %v2843
          %v2845 = vsel %vm494, %v2844, 0
          %2847 = vmatprep.subr.mxu0 0.0
          %2848 = vmatpush1.msra.mxu0 %v2686
          %2849 = vmatprep.subr.mxu0 0.0
          %2850 = vmatpush1.msra.mxu0 %v2687
          %2851 = vmatprep.subr.mxu0 0.0
          %2852 = vmatpush1.msra.mxu0 %v2688
          %2853 = vmatprep.subr.mxu0 0.0
          %2854 = vmatpush1.msra.mxu0 %v2689
          %2855 = vmatprep.subr.mxu0 0.0
          %2856 = vmatpush1.msra.mxu0 0.0
          %2857 = vmatprep.subr.mxu0 0.0
          %2858 = vmatpush1.msra.mxu0 0.0
          %2859 = vmatprep.subr.mxu0 0.0
          %2860 = vmatpush1.msra.mxu0 0.0
          %2861 = vmatprep.subr.mxu0 0.0
          %2862 = vmatpush1.msra.mxu0 0.0
          %2863 = vmatprep.subr.mxu0 0.0
          %2864 = vmatpush1.msra.mxu0 0.0
          %2865 = vmatprep.subr.mxu0 0.0
          %2866 = vmatpush1.msra.mxu0 0.0
          %2867 = vmatprep.subr.mxu0 0.0
          %2868 = vmatpush1.msra.mxu0 0.0
          %2869 = vmatprep.subr.mxu0 0.0
          %2870 = vmatpush1.msra.mxu0 0.0
          %2871 = vmatprep.subr.mxu0 0.0
          %2872 = vmatpush1.msra.mxu0 0.0
          %2873 = vmatprep.subr.mxu0 0.0
          %2874 = vmatpush1.msra.mxu0 0.0
          %2875 = vmatprep.subr.mxu0 0.0
          %2876 = vmatpush1.msra.mxu0 0.0
          %2877 = vmatprep.subr.mxu0 0.0
          %2878 = vmatpush1.msra.mxu0 0.0
          %2879 = vmatprep.subr.mxu0 0.0
          %2880 = vmatpush1.msra.mxu0 0.0
          %2881 = vmatprep.subr.mxu0 0.0
          %2882 = vmatpush1.msra.mxu0 0.0
          %2883 = vmatprep.subr.mxu0 0.0
          %2884 = vmatpush1.msra.mxu0 0.0
          %2885 = vmatprep.subr.mxu0 0.0
          %2886 = vmatpush1.msra.mxu0 0.0
          %2887 = vmatprep.subr.mxu0 0.0
          %2888 = vmatpush1.msra.mxu0 0.0
          %2889 = vmatprep.subr.mxu0 0.0
          %2890 = vmatpush1.msra.mxu0 0.0
          %2891 = vmatprep.subr.mxu0 0.0
          %2892 = vmatpush1.msra.mxu0 0.0
          %2893 = vmatprep.subr.mxu0 0.0
          %2894 = vmatpush1.msra.mxu0 0.0
          %2895 = vmatprep.subr.mxu0 0.0
          %2896 = vmatpush1.msra.mxu0 0.0
          %2897 = vmatprep.subr.mxu0 0.0
          %2898 = vmatpush1.msra.mxu0 0.0
          %2899 = vmatprep.subr.mxu0 0.0
          %2900 = vmatpush1.msra.mxu0 0.0
          %2901 = vmatprep.subr.mxu0 0.0
          %2902 = vmatpush1.msra.mxu0 0.0
          %2903 = vmatprep.subr.mxu0 0.0
          %2904 = vmatpush1.msra.mxu0 0.0
          %2905 = vmatprep.subr.mxu0 0.0
          %2906 = vmatpush1.msra.mxu0 0.0
          %2907 = vmatprep.subr.mxu0 0.0
          %2908 = vmatpush1.msra.mxu0 0.0
          %2909 = vmatprep.subr.mxu0 0.0
          %2910 = vmatpush1.msra.mxu0 0.0
          %2911 = vmatprep.mubr.f32.mxu0 0.0
          %2912 = vmatmul.mubr.f32.gmra.mrb[0].mxu0 %v2845
          %v2913 = vpop.f32.mrb[0].mxu0
          %v2914 = vadd.f32 0.0, %v2913
          %v2915 = vpop.f32.mrb[0].mxu0
          %2916 = vdwg.mxu0
          %v2917 = vsel %vm494, %v2669, 0
          %2919 = vmatprep.subr.mxu0 0.0
          %2920 = vmatpush1.msra.mxu0 %v2681
          %2921 = vmatprep.subr.mxu0 0.0
          %2922 = vmatpush1.msra.mxu0 %v2682
          %2923 = vmatprep.subr.mxu0 0.0
          %2924 = vmatpush1.msra.mxu0 %v2683
          %2925 = vmatprep.subr.mxu0 0.0
          %2926 = vmatpush1.msra.mxu0 %v2684
          %2927 = vmatprep.subr.mxu0 0.0
          %2928 = vmatpush1.msra.mxu0 0.0
          %2929 = vmatprep.subr.mxu0 0.0
          %2930 = vmatpush1.msra.mxu0 0.0
          %2931 = vmatprep.subr.mxu0 0.0
          %2932 = vmatpush1.msra.mxu0 0.0
          %2933 = vmatprep.subr.mxu0 0.0
          %2934 = vmatpush1.msra.mxu0 0.0
          %2935 = vmatprep.subr.mxu0 0.0
          %2936 = vmatpush1.msra.mxu0 0.0
          %2937 = vmatprep.subr.mxu0 0.0
          %2938 = vmatpush1.msra.mxu0 0.0
          %2939 = vmatprep.subr.mxu0 0.0
          %2940 = vmatpush1.msra.mxu0 0.0
          %2941 = vmatprep.subr.mxu0 0.0
          %2942 = vmatpush1.msra.mxu0 0.0
          %2943 = vmatprep.subr.mxu0 0.0
          %2944 = vmatpush1.msra.mxu0 0.0
          %2945 = vmatprep.subr.mxu0 0.0
          %2946 = vmatpush1.msra.mxu0 0.0
          %2947 = vmatprep.subr.mxu0 0.0
          %2948 = vmatpush1.msra.mxu0 0.0
          %2949 = vmatprep.subr.mxu0 0.0
          %2950 = vmatpush1.msra.mxu0 0.0
          %2951 = vmatprep.subr.mxu0 0.0
          %2952 = vmatpush1.msra.mxu0 0.0
          %2953 = vmatprep.subr.mxu0 0.0
          %2954 = vmatpush1.msra.mxu0 0.0
          %2955 = vmatprep.subr.mxu0 0.0
          %2956 = vmatpush1.msra.mxu0 0.0
          %2957 = vmatprep.subr.mxu0 0.0
          %2958 = vmatpush1.msra.mxu0 0.0
          %2959 = vmatprep.subr.mxu0 0.0
          %2960 = vmatpush1.msra.mxu0 0.0
          %2961 = vmatprep.subr.mxu0 0.0
          %2962 = vmatpush1.msra.mxu0 0.0
          %2963 = vmatprep.subr.mxu0 0.0
          %2964 = vmatpush1.msra.mxu0 0.0
          %2965 = vmatprep.subr.mxu0 0.0
          %2966 = vmatpush1.msra.mxu0 0.0
          %2967 = vmatprep.subr.mxu0 0.0
          %2968 = vmatpush1.msra.mxu0 0.0
          %2969 = vmatprep.subr.mxu0 0.0
          %2970 = vmatpush1.msra.mxu0 0.0
          %2971 = vmatprep.subr.mxu0 0.0
          %2972 = vmatpush1.msra.mxu0 0.0
          %2973 = vmatprep.subr.mxu0 0.0
          %2974 = vmatpush1.msra.mxu0 0.0
          %2975 = vmatprep.subr.mxu0 0.0
          %2976 = vmatpush1.msra.mxu0 0.0
          %2977 = vmatprep.subr.mxu0 0.0
          %2978 = vmatpush1.msra.mxu0 0.0
          %2979 = vmatprep.subr.mxu0 0.0
          %2980 = vmatpush1.msra.mxu0 0.0
          %2981 = vmatprep.subr.mxu0 0.0
          %2982 = vmatpush1.msra.mxu0 0.0
          %2983 = vmatprep.mubr.f32.mxu0 0.0
          %2984 = vmatmul.mubr.f32.gmra.mrb[0].mxu0 %v2917
          %v2985 = vpop.f32.mrb[0].mxu0
          %v2986 = vadd.f32 %v2914, %v2985
          %v2987 = vpop.f32.mrb[0].mxu0
          %2988 = vdwg.mxu0
          %s2989 = scalar_lea.vmem %s5, 64
          %v2990 = vld [vmem:[%s2989] sm:$0xff]
          %v2991 = vld [vmem:[%s2989 + $0x8] sm:$0xff]
          %v2992 = vld [vmem:[%s2989 + $0x10] sm:$0xff]
          %v2993 = vld [vmem:[%s2989 + $0x18] sm:$0xff]
          %vm2994 = vcmask 1045504
          %v2995 = vrot.slane %v2664, 2
          %v2996 = vrot.slane %v2665, 2
          %v2997 = vsel %vm2994, %v2995, %v2996
          %v2998 = vsel %vm494, %v2997, 0
          %3000 = vmatprep.subr.mxu0 0.0
          %3001 = vmatpush1.msra.mxu0 %v2990
          %3002 = vmatprep.subr.mxu0 0.0
          %3003 = vmatpush1.msra.mxu0 %v2991
          %3004 = vmatprep.subr.mxu0 0.0
          %3005 = vmatpush1.msra.mxu0 %v2992
          %3006 = vmatprep.subr.mxu0 0.0
          %3007 = vmatpush1.msra.mxu0 %v2993
          %3008 = vmatprep.subr.mxu0 0.0
          %3009 = vmatpush1.msra.mxu0 0.0
          %3010 = vmatprep.subr.mxu0 0.0
          %3011 = vmatpush1.msra.mxu0 0.0
          %3012 = vmatprep.subr.mxu0 0.0
          %3013 = vmatpush1.msra.mxu0 0.0
          %3014 = vmatprep.subr.mxu0 0.0
          %3015 = vmatpush1.msra.mxu0 0.0
          %3016 = vmatprep.subr.mxu0 0.0
          %3017 = vmatpush1.msra.mxu0 0.0
          %3018 = vmatprep.subr.mxu0 0.0
          %3019 = vmatpush1.msra.mxu0 0.0
          %3020 = vmatprep.subr.mxu0 0.0
          %3021 = vmatpush1.msra.mxu0 0.0
          %3022 = vmatprep.subr.mxu0 0.0
          %3023 = vmatpush1.msra.mxu0 0.0
          %3024 = vmatprep.subr.mxu0 0.0
          %3025 = vmatpush1.msra.mxu0 0.0
          %3026 = vmatprep.subr.mxu0 0.0
          %3027 = vmatpush1.msra.mxu0 0.0
          %3028 = vmatprep.subr.mxu0 0.0
          %3029 = vmatpush1.msra.mxu0 0.0
          %3030 = vmatprep.subr.mxu0 0.0
          %3031 = vmatpush1.msra.mxu0 0.0
          %3032 = vmatprep.subr.mxu0 0.0
          %3033 = vmatpush1.msra.mxu0 0.0
          %3034 = vmatprep.subr.mxu0 0.0
          %3035 = vmatpush1.msra.mxu0 0.0
          %3036 = vmatprep.subr.mxu0 0.0
          %3037 = vmatpush1.msra.mxu0 0.0
          %3038 = vmatprep.subr.mxu0 0.0
          %3039 = vmatpush1.msra.mxu0 0.0
          %3040 = vmatprep.subr.mxu0 0.0
          %3041 = vmatpush1.msra.mxu0 0.0
          %3042 = vmatprep.subr.mxu0 0.0
          %3043 = vmatpush1.msra.mxu0 0.0
          %3044 = vmatprep.subr.mxu0 0.0
          %3045 = vmatpush1.msra.mxu0 0.0
          %3046 = vmatprep.subr.mxu0 0.0
          %3047 = vmatpush1.msra.mxu0 0.0
          %3048 = vmatprep.subr.mxu0 0.0
          %3049 = vmatpush1.msra.mxu0 0.0
          %3050 = vmatprep.subr.mxu0 0.0
          %3051 = vmatpush1.msra.mxu0 0.0
          %3052 = vmatprep.subr.mxu0 0.0
          %3053 = vmatpush1.msra.mxu0 0.0
          %3054 = vmatprep.subr.mxu0 0.0
          %3055 = vmatpush1.msra.mxu0 0.0
          %3056 = vmatprep.subr.mxu0 0.0
          %3057 = vmatpush1.msra.mxu0 0.0
          %3058 = vmatprep.subr.mxu0 0.0
          %3059 = vmatpush1.msra.mxu0 0.0
          %3060 = vmatprep.subr.mxu0 0.0
          %3061 = vmatpush1.msra.mxu0 0.0
          %3062 = vmatprep.subr.mxu0 0.0
          %3063 = vmatpush1.msra.mxu0 0.0
          %3064 = vmatprep.mubr.f32.mxu0 0.0
          %3065 = vmatmul.mubr.f32.gmra.mrb[0].mxu0 %v2998
          %v3066 = vpop.f32.mrb[0].mxu0
          %v3067 = vadd.f32 0.0, %v3066
          %v3068 = vpop.f32.mrb[0].mxu0
          %3069 = vdwg.mxu0
          %v3070 = vadd.f32 %v2837, %v3067
          %v3071 = vrot.slane %v2669, 2
          %v3072 = vrot.slane %v2670, 2
          %v3073 = vsel %vm2994, %v3071, %v3072
          %v3074 = vsel %vm494, %v3073, 0
          %3076 = vmatprep.subr.mxu0 0.0
          %3077 = vmatpush1.msra.mxu0 %v2990
          %3078 = vmatprep.subr.mxu0 0.0
          %3079 = vmatpush1.msra.mxu0 %v2991
          %3080 = vmatprep.subr.mxu0 0.0
          %3081 = vmatpush1.msra.mxu0 %v2992
          %3082 = vmatprep.subr.mxu0 0.0
          %3083 = vmatpush1.msra.mxu0 %v2993
          %3084 = vmatprep.subr.mxu0 0.0
          %3085 = vmatpush1.msra.mxu0 0.0
          %3086 = vmatprep.subr.mxu0 0.0
          %3087 = vmatpush1.msra.mxu0 0.0
          %3088 = vmatprep.subr.mxu0 0.0
          %3089 = vmatpush1.msra.mxu0 0.0
          %3090 = vmatprep.subr.mxu0 0.0
          %3091 = vmatpush1.msra.mxu0 0.0
          %3092 = vmatprep.subr.mxu0 0.0
          %3093 = vmatpush1.msra.mxu0 0.0
          %3094 = vmatprep.subr.mxu0 0.0
          %3095 = vmatpush1.msra.mxu0 0.0
          %3096 = vmatprep.subr.mxu0 0.0
          %3097 = vmatpush1.msra.mxu0 0.0
          %3098 = vmatprep.subr.mxu0 0.0
          %3099 = vmatpush1.msra.mxu0 0.0
          %3100 = vmatprep.subr.mxu0 0.0
          %3101 = vmatpush1.msra.mxu0 0.0
          %3102 = vmatprep.subr.mxu0 0.0
          %3103 = vmatpush1.msra.mxu0 0.0
          %3104 = vmatprep.subr.mxu0 0.0
          %3105 = vmatpush1.msra.mxu0 0.0
          %3106 = vmatprep.subr.mxu0 0.0
          %3107 = vmatpush1.msra.mxu0 0.0
          %3108 = vmatprep.subr.mxu0 0.0
          %3109 = vmatpush1.msra.mxu0 0.0
          %3110 = vmatprep.subr.mxu0 0.0
          %3111 = vmatpush1.msra.mxu0 0.0
          %3112 = vmatprep.subr.mxu0 0.0
          %3113 = vmatpush1.msra.mxu0 0.0
          %3114 = vmatprep.subr.mxu0 0.0
          %3115 = vmatpush1.msra.mxu0 0.0
          %3116 = vmatprep.subr.mxu0 0.0
          %3117 = vmatpush1.msra.mxu0 0.0
          %3118 = vmatprep.subr.mxu0 0.0
          %3119 = vmatpush1.msra.mxu0 0.0
          %3120 = vmatprep.subr.mxu0 0.0
          %3121 = vmatpush1.msra.mxu0 0.0
          %3122 = vmatprep.subr.mxu0 0.0
          %3123 = vmatpush1.msra.mxu0 0.0
          %3124 = vmatprep.subr.mxu0 0.0
          %3125 = vmatpush1.msra.mxu0 0.0
          %3126 = vmatprep.subr.mxu0 0.0
          %3127 = vmatpush1.msra.mxu0 0.0
          %3128 = vmatprep.subr.mxu0 0.0
          %3129 = vmatpush1.msra.mxu0 0.0
          %3130 = vmatprep.subr.mxu0 0.0
          %3131 = vmatpush1.msra.mxu0 0.0
          %3132 = vmatprep.subr.mxu0 0.0
          %3133 = vmatpush1.msra.mxu0 0.0
          %3134 = vmatprep.subr.mxu0 0.0
          %3135 = vmatpush1.msra.mxu0 0.0
          %3136 = vmatprep.subr.mxu0 0.0
          %3137 = vmatpush1.msra.mxu0 0.0
          %3138 = vmatprep.subr.mxu0 0.0
          %3139 = vmatpush1.msra.mxu0 0.0
          %3140 = vmatprep.mubr.f32.mxu0 0.0
          %3141 = vmatmul.mubr.f32.gmra.mrb[0].mxu0 %v3074
          %v3142 = vpop.f32.mrb[0].mxu0
          %v3143 = vadd.f32 0.0, %v3142
          %v3144 = vpop.f32.mrb[0].mxu0
          %3145 = vdwg.mxu0
          %v3146 = vadd.f32 %v2986, %v3143
          %s3147 = scalar_lea.vmem %s5, 96
          %v3148 = vld [vmem:[%s3147] sm:$0xff]
          %v3149 = vld [vmem:[%s3147 + $0x8] sm:$0xff]
          %v3150 = vld [vmem:[%s3147 + $0x10] sm:$0xff]
          %v3151 = vld [vmem:[%s3147 + $0x18] sm:$0xff]
          %3152 = vmatprep.subr.mxu0 0.0
          %3153 = vmatpush1.msra.mxu0 %v3148
          %3154 = vmatprep.subr.mxu0 0.0
          %3155 = vmatpush1.msra.mxu0 %v3149
          %3156 = vmatprep.subr.mxu0 0.0
          %3157 = vmatpush1.msra.mxu0 %v3150
          %3158 = vmatprep.subr.mxu0 0.0
          %3159 = vmatpush1.msra.mxu0 %v3151
          %3160 = vmatprep.subr.mxu0 0.0
          %3161 = vmatpush1.msra.mxu0 0.0
          %3162 = vmatprep.subr.mxu0 0.0
          %3163 = vmatpush1.msra.mxu0 0.0
          %3164 = vmatprep.subr.mxu0 0.0
          %3165 = vmatpush1.msra.mxu0 0.0
          %3166 = vmatprep.subr.mxu0 0.0
          %3167 = vmatpush1.msra.mxu0 0.0
          %3168 = vmatprep.subr.mxu0 0.0
          %3169 = vmatpush1.msra.mxu0 0.0
          %3170 = vmatprep.subr.mxu0 0.0
          %3171 = vmatpush1.msra.mxu0 0.0
          %3172 = vmatprep.subr.mxu0 0.0
          %3173 = vmatpush1.msra.mxu0 0.0
          %3174 = vmatprep.subr.mxu0 0.0
          %3175 = vmatpush1.msra.mxu0 0.0
          %3176 = vmatprep.subr.mxu0 0.0
          %3177 = vmatpush1.msra.mxu0 0.0
          %3178 = vmatprep.subr.mxu0 0.0
          %3179 = vmatpush1.msra.mxu0 0.0
          %3180 = vmatprep.subr.mxu0 0.0
          %3181 = vmatpush1.msra.mxu0 0.0
          %3182 = vmatprep.subr.mxu0 0.0
          %3183 = vmatpush1.msra.mxu0 0.0
          %3184 = vmatprep.subr.mxu0 0.0
          %3185 = vmatpush1.msra.mxu0 0.0
          %3186 = vmatprep.subr.mxu0 0.0
          %3187 = vmatpush1.msra.mxu0 0.0
          %3188 = vmatprep.subr.mxu0 0.0
          %3189 = vmatpush1.msra.mxu0 0.0
          %3190 = vmatprep.subr.mxu0 0.0
          %3191 = vmatpush1.msra.mxu0 0.0
          %3192 = vmatprep.subr.mxu0 0.0
          %3193 = vmatpush1.msra.mxu0 0.0
          %3194 = vmatprep.subr.mxu0 0.0
          %3195 = vmatpush1.msra.mxu0 0.0
          %3196 = vmatprep.subr.mxu0 0.0
          %3197 = vmatpush1.msra.mxu0 0.0
          %3198 = vmatprep.subr.mxu0 0.0
          %3199 = vmatpush1.msra.mxu0 0.0
          %3200 = vmatprep.subr.mxu0 0.0
          %3201 = vmatpush1.msra.mxu0 0.0
          %3202 = vmatprep.subr.mxu0 0.0
          %3203 = vmatpush1.msra.mxu0 0.0
          %3204 = vmatprep.subr.mxu0 0.0
          %3205 = vmatpush1.msra.mxu0 0.0
          %3206 = vmatprep.subr.mxu0 0.0
          %3207 = vmatpush1.msra.mxu0 0.0
          %3208 = vmatprep.subr.mxu0 0.0
          %3209 = vmatpush1.msra.mxu0 0.0
          %3210 = vmatprep.subr.mxu0 0.0
          %3211 = vmatpush1.msra.mxu0 0.0
          %3212 = vmatprep.subr.mxu0 0.0
          %3213 = vmatpush1.msra.mxu0 0.0
          %3214 = vmatprep.subr.mxu0 0.0
          %3215 = vmatpush1.msra.mxu0 0.0
          %3216 = vmatprep.mubr.f32.mxu0 0.0
          %3217 = vmatmul.mubr.f32.gmra.mrb[0].mxu0 %v2917
          %v3218 = vpop.f32.mrb[0].mxu0
          %v3219 = vadd.f32 0.0, %v3218
          %v3220 = vpop.f32.mrb[0].mxu0
          %3221 = vdwg.mxu0
          %v3222 = vadd.f32 %v3070, %v3219
          %v3224 = vsel %vm494, %v2674, 0
          %3226 = vmatprep.subr.mxu0 0.0
          %3227 = vmatpush1.msra.mxu0 %v3148
          %3228 = vmatprep.subr.mxu0 0.0
          %3229 = vmatpush1.msra.mxu0 %v3149
          %3230 = vmatprep.subr.mxu0 0.0
          %3231 = vmatpush1.msra.mxu0 %v3150
          %3232 = vmatprep.subr.mxu0 0.0
          %3233 = vmatpush1.msra.mxu0 %v3151
          %3234 = vmatprep.subr.mxu0 0.0
          %3235 = vmatpush1.msra.mxu0 0.0
          %3236 = vmatprep.subr.mxu0 0.0
          %3237 = vmatpush1.msra.mxu0 0.0
          %3238 = vmatprep.subr.mxu0 0.0
          %3239 = vmatpush1.msra.mxu0 0.0
          %3240 = vmatprep.subr.mxu0 0.0
          %3241 = vmatpush1.msra.mxu0 0.0
          %3242 = vmatprep.subr.mxu0 0.0
          %3243 = vmatpush1.msra.mxu0 0.0
          %3244 = vmatprep.subr.mxu0 0.0
          %3245 = vmatpush1.msra.mxu0 0.0
          %3246 = vmatprep.subr.mxu0 0.0
          %3247 = vmatpush1.msra.mxu0 0.0
          %3248 = vmatprep.subr.mxu0 0.0
          %3249 = vmatpush1.msra.mxu0 0.0
          %3250 = vmatprep.subr.mxu0 0.0
          %3251 = vmatpush1.msra.mxu0 0.0
          %3252 = vmatprep.subr.mxu0 0.0
          %3253 = vmatpush1.msra.mxu0 0.0
          %3254 = vmatprep.subr.mxu0 0.0
          %3255 = vmatpush1.msra.mxu0 0.0
          %3256 = vmatprep.subr.mxu0 0.0
          %3257 = vmatpush1.msra.mxu0 0.0
          %3258 = vmatprep.subr.mxu0 0.0
          %3259 = vmatpush1.msra.mxu0 0.0
          %3260 = vmatprep.subr.mxu0 0.0
          %3261 = vmatpush1.msra.mxu0 0.0
          %3262 = vmatprep.subr.mxu0 0.0
          %3263 = vmatpush1.msra.mxu0 0.0
          %3264 = vmatprep.subr.mxu0 0.0
          %3265 = vmatpush1.msra.mxu0 0.0
          %3266 = vmatprep.subr.mxu0 0.0
          %3267 = vmatpush1.msra.mxu0 0.0
          %3268 = vmatprep.subr.mxu0 0.0
          %3269 = vmatpush1.msra.mxu0 0.0
          %3270 = vmatprep.subr.mxu0 0.0
          %3271 = vmatpush1.msra.mxu0 0.0
          %3272 = vmatprep.subr.mxu0 0.0
          %3273 = vmatpush1.msra.mxu0 0.0
          %3274 = vmatprep.subr.mxu0 0.0
          %3275 = vmatpush1.msra.mxu0 0.0
          %3276 = vmatprep.subr.mxu0 0.0
          %3277 = vmatpush1.msra.mxu0 0.0
          %3278 = vmatprep.subr.mxu0 0.0
          %3279 = vmatpush1.msra.mxu0 0.0
          %3280 = vmatprep.subr.mxu0 0.0
          %3281 = vmatpush1.msra.mxu0 0.0
          %3282 = vmatprep.subr.mxu0 0.0
          %3283 = vmatpush1.msra.mxu0 0.0
          %3284 = vmatprep.subr.mxu0 0.0
          %3285 = vmatpush1.msra.mxu0 0.0
          %3286 = vmatprep.subr.mxu0 0.0
          %3287 = vmatpush1.msra.mxu0 0.0
          %3288 = vmatprep.subr.mxu0 0.0
          %3289 = vmatpush1.msra.mxu0 0.0
          %3290 = vmatprep.mubr.f32.mxu0 0.0
          %3291 = vmatmul.mubr.f32.gmra.mrb[0].mxu0 %v3224
          %v3292 = vpop.f32.mrb[0].mxu0
          %v3293 = vadd.f32 0.0, %v3292
          %v3294 = vpop.f32.mrb[0].mxu0
          %3295 = vdwg.mxu0
          %v3296 = vadd.f32 %v3146, %v3293
          %s3297 = scalar_lea.vmem %s5, 128
          %v3298 = vld [vmem:[%s3297] sm:$0xff]
          %v3299 = vld [vmem:[%s3297 + $0x8] sm:$0xff]
          %v3300 = vld [vmem:[%s3297 + $0x10] sm:$0xff]
          %v3301 = vld [vmem:[%s3297 + $0x18] sm:$0xff]
          %3302 = vmatprep.subr.mxu0 0.0
          %3303 = vmatpush1.msra.mxu0 %v3298
          %3304 = vmatprep.subr.mxu0 0.0
          %3305 = vmatpush1.msra.mxu0 %v3299
          %3306 = vmatprep.subr.mxu0 0.0
          %3307 = vmatpush1.msra.mxu0 %v3300
          %3308 = vmatprep.subr.mxu0 0.0
          %3309 = vmatpush1.msra.mxu0 %v3301
          %3310 = vmatprep.subr.mxu0 0.0
          %3311 = vmatpush1.msra.mxu0 0.0
          %3312 = vmatprep.subr.mxu0 0.0
          %3313 = vmatpush1.msra.mxu0 0.0
          %3314 = vmatprep.subr.mxu0 0.0
          %3315 = vmatpush1.msra.mxu0 0.0
          %3316 = vmatprep.subr.mxu0 0.0
          %3317 = vmatpush1.msra.mxu0 0.0
          %3318 = vmatprep.subr.mxu0 0.0
          %3319 = vmatpush1.msra.mxu0 0.0
          %3320 = vmatprep.subr.mxu0 0.0
          %3321 = vmatpush1.msra.mxu0 0.0
          %3322 = vmatprep.subr.mxu0 0.0
          %3323 = vmatpush1.msra.mxu0 0.0
          %3324 = vmatprep.subr.mxu0 0.0
          %3325 = vmatpush1.msra.mxu0 0.0
          %3326 = vmatprep.subr.mxu0 0.0
          %3327 = vmatpush1.msra.mxu0 0.0
          %3328 = vmatprep.subr.mxu0 0.0
          %3329 = vmatpush1.msra.mxu0 0.0
          %3330 = vmatprep.subr.mxu0 0.0
          %3331 = vmatpush1.msra.mxu0 0.0
          %3332 = vmatprep.subr.mxu0 0.0
          %3333 = vmatpush1.msra.mxu0 0.0
          %3334 = vmatprep.subr.mxu0 0.0
          %3335 = vmatpush1.msra.mxu0 0.0
          %3336 = vmatprep.subr.mxu0 0.0
          %3337 = vmatpush1.msra.mxu0 0.0
          %3338 = vmatprep.subr.mxu0 0.0
          %3339 = vmatpush1.msra.mxu0 0.0
          %3340 = vmatprep.subr.mxu0 0.0
          %3341 = vmatpush1.msra.mxu0 0.0
          %3342 = vmatprep.subr.mxu0 0.0
          %3343 = vmatpush1.msra.mxu0 0.0
          %3344 = vmatprep.subr.mxu0 0.0
          %3345 = vmatpush1.msra.mxu0 0.0
          %3346 = vmatprep.subr.mxu0 0.0
          %3347 = vmatpush1.msra.mxu0 0.0
          %3348 = vmatprep.subr.mxu0 0.0
          %3349 = vmatpush1.msra.mxu0 0.0
          %3350 = vmatprep.subr.mxu0 0.0
          %3351 = vmatpush1.msra.mxu0 0.0
          %3352 = vmatprep.subr.mxu0 0.0
          %3353 = vmatpush1.msra.mxu0 0.0
          %3354 = vmatprep.subr.mxu0 0.0
          %3355 = vmatpush1.msra.mxu0 0.0
          %3356 = vmatprep.subr.mxu0 0.0
          %3357 = vmatpush1.msra.mxu0 0.0
          %3358 = vmatprep.subr.mxu0 0.0
          %3359 = vmatpush1.msra.mxu0 0.0
          %3360 = vmatprep.subr.mxu0 0.0
          %3361 = vmatpush1.msra.mxu0 0.0
          %3362 = vmatprep.subr.mxu0 0.0
          %3363 = vmatpush1.msra.mxu0 0.0
          %3364 = vmatprep.subr.mxu0 0.0
          %3365 = vmatpush1.msra.mxu0 0.0
          %3366 = vmatprep.mubr.f32.mxu0 0.0
          %3367 = vmatmul.mubr.f32.gmra.mrb[0].mxu0 %v2845
          %v3368 = vpop.f32.mrb[0].mxu0
          %v3369 = vadd.f32 0.0, %v3368
          %v3370 = vpop.f32.mrb[0].mxu0
          %3371 = vdwg.mxu0
          %v3372 = vadd.f32 %v3222, %v3369
          %v3374 = vrot.slane %v2674, 1
          %v3375 = vrot.slane %v2675, 1
          %v3376 = vsel %vm2692, %v3374, %v3375
          %v3377 = vsel %vm494, %v3376, 0
          %3379 = vmatprep.subr.mxu0 0.0
          %3380 = vmatpush1.msra.mxu0 %v3298
          %3381 = vmatprep.subr.mxu0 0.0
          %3382 = vmatpush1.msra.mxu0 %v3299
          %3383 = vmatprep.subr.mxu0 0.0
          %3384 = vmatpush1.msra.mxu0 %v3300
          %3385 = vmatprep.subr.mxu0 0.0
          %3386 = vmatpush1.msra.mxu0 %v3301
          %3387 = vmatprep.subr.mxu0 0.0
          %3388 = vmatpush1.msra.mxu0 0.0
          %3389 = vmatprep.subr.mxu0 0.0
          %3390 = vmatpush1.msra.mxu0 0.0
          %3391 = vmatprep.subr.mxu0 0.0
          %3392 = vmatpush1.msra.mxu0 0.0
          %3393 = vmatprep.subr.mxu0 0.0
          %3394 = vmatpush1.msra.mxu0 0.0
          %3395 = vmatprep.subr.mxu0 0.0
          %3396 = vmatpush1.msra.mxu0 0.0
          %3397 = vmatprep.subr.mxu0 0.0
          %3398 = vmatpush1.msra.mxu0 0.0
          %3399 = vmatprep.subr.mxu0 0.0
          %3400 = vmatpush1.msra.mxu0 0.0
          %3401 = vmatprep.subr.mxu0 0.0
          %3402 = vmatpush1.msra.mxu0 0.0
          %3403 = vmatprep.subr.mxu0 0.0
          %3404 = vmatpush1.msra.mxu0 0.0
          %3405 = vmatprep.subr.mxu0 0.0
          %3406 = vmatpush1.msra.mxu0 0.0
          %3407 = vmatprep.subr.mxu0 0.0
          %3408 = vmatpush1.msra.mxu0 0.0
          %3409 = vmatprep.subr.mxu0 0.0
          %3410 = vmatpush1.msra.mxu0 0.0
          %3411 = vmatprep.subr.mxu0 0.0
          %3412 = vmatpush1.msra.mxu0 0.0
          %3413 = vmatprep.subr.mxu0 0.0
          %3414 = vmatpush1.msra.mxu0 0.0
          %3415 = vmatprep.subr.mxu0 0.0
          %3416 = vmatpush1.msra.mxu0 0.0
          %3417 = vmatprep.subr.mxu0 0.0
          %3418 = vmatpush1.msra.mxu0 0.0
          %3419 = vmatprep.subr.mxu0 0.0
          %3420 = vmatpush1.msra.mxu0 0.0
          %3421 = vmatprep.subr.mxu0 0.0
          %3422 = vmatpush1.msra.mxu0 0.0
          %3423 = vmatprep.subr.mxu0 0.0
          %3424 = vmatpush1.msra.mxu0 0.0
          %3425 = vmatprep.subr.mxu0 0.0
          %3426 = vmatpush1.msra.mxu0 0.0
          %3427 = vmatprep.subr.mxu0 0.0
          %3428 = vmatpush1.msra.mxu0 0.0
          %3429 = vmatprep.subr.mxu0 0.0
          %3430 = vmatpush1.msra.mxu0 0.0
          %3431 = vmatprep.subr.mxu0 0.0
          %3432 = vmatpush1.msra.mxu0 0.0
          %3433 = vmatprep.subr.mxu0 0.0
          %3434 = vmatpush1.msra.mxu0 0.0
          %3435 = vmatprep.subr.mxu0 0.0
          %3436 = vmatpush1.msra.mxu0 0.0
          %3437 = vmatprep.subr.mxu0 0.0
          %3438 = vmatpush1.msra.mxu0 0.0
          %3439 = vmatprep.subr.mxu0 0.0
          %3440 = vmatpush1.msra.mxu0 0.0
          %3441 = vmatprep.subr.mxu0 0.0
          %3442 = vmatpush1.msra.mxu0 0.0
          %3443 = vmatprep.mubr.f32.mxu0 0.0
          %3444 = vmatmul.mubr.f32.gmra.mrb[0].mxu0 %v3377
          %v3445 = vpop.f32.mrb[0].mxu0
          %v3446 = vadd.f32 0.0, %v3445
          %v3447 = vpop.f32.mrb[0].mxu0
          %3448 = vdwg.mxu0
          %v3449 = vadd.f32 %v3296, %v3446
          %s3450 = scalar_lea.vmem %s5, 160
          %v3451 = vld [vmem:[%s3450] sm:$0xff]
          %v3452 = vld [vmem:[%s3450 + $0x8] sm:$0xff]
          %v3453 = vld [vmem:[%s3450 + $0x10] sm:$0xff]
          %v3454 = vld [vmem:[%s3450 + $0x18] sm:$0xff]
          %3455 = vmatprep.subr.mxu0 0.0
          %3456 = vmatpush1.msra.mxu0 %v3451
          %3457 = vmatprep.subr.mxu0 0.0
          %3458 = vmatpush1.msra.mxu0 %v3452
          %3459 = vmatprep.subr.mxu0 0.0
          %3460 = vmatpush1.msra.mxu0 %v3453
          %3461 = vmatprep.subr.mxu0 0.0
          %3462 = vmatpush1.msra.mxu0 %v3454
          %3463 = vmatprep.subr.mxu0 0.0
          %3464 = vmatpush1.msra.mxu0 0.0
          %3465 = vmatprep.subr.mxu0 0.0
          %3466 = vmatpush1.msra.mxu0 0.0
          %3467 = vmatprep.subr.mxu0 0.0
          %3468 = vmatpush1.msra.mxu0 0.0
          %3469 = vmatprep.subr.mxu0 0.0
          %3470 = vmatpush1.msra.mxu0 0.0
          %3471 = vmatprep.subr.mxu0 0.0
          %3472 = vmatpush1.msra.mxu0 0.0
          %3473 = vmatprep.subr.mxu0 0.0
          %3474 = vmatpush1.msra.mxu0 0.0
          %3475 = vmatprep.subr.mxu0 0.0
          %3476 = vmatpush1.msra.mxu0 0.0
          %3477 = vmatprep.subr.mxu0 0.0
          %3478 = vmatpush1.msra.mxu0 0.0
          %3479 = vmatprep.subr.mxu0 0.0
          %3480 = vmatpush1.msra.mxu0 0.0
          %3481 = vmatprep.subr.mxu0 0.0
          %3482 = vmatpush1.msra.mxu0 0.0
          %3483 = vmatprep.subr.mxu0 0.0
          %3484 = vmatpush1.msra.mxu0 0.0
          %3485 = vmatprep.subr.mxu0 0.0
          %3486 = vmatpush1.msra.mxu0 0.0
          %3487 = vmatprep.subr.mxu0 0.0
          %3488 = vmatpush1.msra.mxu0 0.0
          %3489 = vmatprep.subr.mxu0 0.0
          %3490 = vmatpush1.msra.mxu0 0.0
          %3491 = vmatprep.subr.mxu0 0.0
          %3492 = vmatpush1.msra.mxu0 0.0
          %3493 = vmatprep.subr.mxu0 0.0
          %3494 = vmatpush1.msra.mxu0 0.0
          %3495 = vmatprep.subr.mxu0 0.0
          %3496 = vmatpush1.msra.mxu0 0.0
          %3497 = vmatprep.subr.mxu0 0.0
          %3498 = vmatpush1.msra.mxu0 0.0
          %3499 = vmatprep.subr.mxu0 0.0
          %3500 = vmatpush1.msra.mxu0 0.0
          %3501 = vmatprep.subr.mxu0 0.0
          %3502 = vmatpush1.msra.mxu0 0.0
          %3503 = vmatprep.subr.mxu0 0.0
          %3504 = vmatpush1.msra.mxu0 0.0
          %3505 = vmatprep.subr.mxu0 0.0
          %3506 = vmatpush1.msra.mxu0 0.0
          %3507 = vmatprep.subr.mxu0 0.0
          %3508 = vmatpush1.msra.mxu0 0.0
          %3509 = vmatprep.subr.mxu0 0.0
          %3510 = vmatpush1.msra.mxu0 0.0
          %3511 = vmatprep.subr.mxu0 0.0
          %3512 = vmatpush1.msra.mxu0 0.0
          %3513 = vmatprep.subr.mxu0 0.0
          %3514 = vmatpush1.msra.mxu0 0.0
          %3515 = vmatprep.subr.mxu0 0.0
          %3516 = vmatpush1.msra.mxu0 0.0
          %3517 = vmatprep.subr.mxu0 0.0
          %3518 = vmatpush1.msra.mxu0 0.0
          %3519 = vmatprep.mubr.f32.mxu0 0.0
          %3520 = vmatmul.mubr.f32.gmra.mrb[0].mxu0 %v3074
          %v3521 = vpop.f32.mrb[0].mxu0
          %v3522 = vadd.f32 0.0, %v3521
          %v3523 = vpop.f32.mrb[0].mxu0
          %3524 = vdwg.mxu0
          %v3525 = vadd.f32 %v3372, %v3522
          %v3526 = vrot.slane %v2674, 2
          %v3527 = vrot.slane %v2675, 2
          %v3528 = vsel %vm2994, %v3526, %v3527
          %v3529 = vsel %vm494, %v3528, 0
          %3531 = vmatprep.subr.mxu0 0.0
          %3532 = vmatpush1.msra.mxu0 %v3451
          %3533 = vmatprep.subr.mxu0 0.0
          %3534 = vmatpush1.msra.mxu0 %v3452
          %3535 = vmatprep.subr.mxu0 0.0
          %3536 = vmatpush1.msra.mxu0 %v3453
          %3537 = vmatprep.subr.mxu0 0.0
          %3538 = vmatpush1.msra.mxu0 %v3454
          %3539 = vmatprep.subr.mxu0 0.0
          %3540 = vmatpush1.msra.mxu0 0.0
          %3541 = vmatprep.subr.mxu0 0.0
          %3542 = vmatpush1.msra.mxu0 0.0
          %3543 = vmatprep.subr.mxu0 0.0
          %3544 = vmatpush1.msra.mxu0 0.0
          %3545 = vmatprep.subr.mxu0 0.0
          %3546 = vmatpush1.msra.mxu0 0.0
          %3547 = vmatprep.subr.mxu0 0.0
          %3548 = vmatpush1.msra.mxu0 0.0
          %3549 = vmatprep.subr.mxu0 0.0
          %3550 = vmatpush1.msra.mxu0 0.0
          %3551 = vmatprep.subr.mxu0 0.0
          %3552 = vmatpush1.msra.mxu0 0.0
          %3553 = vmatprep.subr.mxu0 0.0
          %3554 = vmatpush1.msra.mxu0 0.0
          %3555 = vmatprep.subr.mxu0 0.0
          %3556 = vmatpush1.msra.mxu0 0.0
          %3557 = vmatprep.subr.mxu0 0.0
          %3558 = vmatpush1.msra.mxu0 0.0
          %3559 = vmatprep.subr.mxu0 0.0
          %3560 = vmatpush1.msra.mxu0 0.0
          %3561 = vmatprep.subr.mxu0 0.0
          %3562 = vmatpush1.msra.mxu0 0.0
          %3563 = vmatprep.subr.mxu0 0.0
          %3564 = vmatpush1.msra.mxu0 0.0
          %3565 = vmatprep.subr.mxu0 0.0
          %3566 = vmatpush1.msra.mxu0 0.0
          %3567 = vmatprep.subr.mxu0 0.0
          %3568 = vmatpush1.msra.mxu0 0.0
          %3569 = vmatprep.subr.mxu0 0.0
          %3570 = vmatpush1.msra.mxu0 0.0
          %3571 = vmatprep.subr.mxu0 0.0
          %3572 = vmatpush1.msra.mxu0 0.0
          %3573 = vmatprep.subr.mxu0 0.0
          %3574 = vmatpush1.msra.mxu0 0.0
          %3575 = vmatprep.subr.mxu0 0.0
          %3576 = vmatpush1.msra.mxu0 0.0
          %3577 = vmatprep.subr.mxu0 0.0
          %3578 = vmatpush1.msra.mxu0 0.0
          %3579 = vmatprep.subr.mxu0 0.0
          %3580 = vmatpush1.msra.mxu0 0.0
          %3581 = vmatprep.subr.mxu0 0.0
          %3582 = vmatpush1.msra.mxu0 0.0
          %3583 = vmatprep.subr.mxu0 0.0
          %3584 = vmatpush1.msra.mxu0 0.0
          %3585 = vmatprep.subr.mxu0 0.0
          %3586 = vmatpush1.msra.mxu0 0.0
          %3587 = vmatprep.subr.mxu0 0.0
          %3588 = vmatpush1.msra.mxu0 0.0
          %3589 = vmatprep.subr.mxu0 0.0
          %3590 = vmatpush1.msra.mxu0 0.0
          %3591 = vmatprep.subr.mxu0 0.0
          %3592 = vmatpush1.msra.mxu0 0.0
          %3593 = vmatprep.subr.mxu0 0.0
          %3594 = vmatpush1.msra.mxu0 0.0
          %3595 = vmatprep.mubr.f32.mxu0 0.0
          %3596 = vmatmul.mubr.f32.gmra.mrb[0].mxu0 %v3529
          %v3597 = vpop.f32.mrb[0].mxu0
          %v3598 = vadd.f32 0.0, %v3597
          %v3599 = vpop.f32.mrb[0].mxu0
          %3600 = vdwg.mxu0
          %v3601 = vadd.f32 %v3449, %v3598
          %s3602 = scalar_lea.vmem %s5, 192
          %v3603 = vld [vmem:[%s3602] sm:$0xff]
          %v3604 = vld [vmem:[%s3602 + $0x8] sm:$0xff]
          %v3605 = vld [vmem:[%s3602 + $0x10] sm:$0xff]
          %v3606 = vld [vmem:[%s3602 + $0x18] sm:$0xff]
          %3607 = vmatprep.subr.mxu0 0.0
          %3608 = vmatpush1.msra.mxu0 %v3603
          %3609 = vmatprep.subr.mxu0 0.0
          %3610 = vmatpush1.msra.mxu0 %v3604
          %3611 = vmatprep.subr.mxu0 0.0
          %3612 = vmatpush1.msra.mxu0 %v3605
          %3613 = vmatprep.subr.mxu0 0.0
          %3614 = vmatpush1.msra.mxu0 %v3606
          %3615 = vmatprep.subr.mxu0 0.0
          %3616 = vmatpush1.msra.mxu0 0.0
          %3617 = vmatprep.subr.mxu0 0.0
          %3618 = vmatpush1.msra.mxu0 0.0
          %3619 = vmatprep.subr.mxu0 0.0
          %3620 = vmatpush1.msra.mxu0 0.0
          %3621 = vmatprep.subr.mxu0 0.0
          %3622 = vmatpush1.msra.mxu0 0.0
          %3623 = vmatprep.subr.mxu0 0.0
          %3624 = vmatpush1.msra.mxu0 0.0
          %3625 = vmatprep.subr.mxu0 0.0
          %3626 = vmatpush1.msra.mxu0 0.0
          %3627 = vmatprep.subr.mxu0 0.0
          %3628 = vmatpush1.msra.mxu0 0.0
          %3629 = vmatprep.subr.mxu0 0.0
          %3630 = vmatpush1.msra.mxu0 0.0
          %3631 = vmatprep.subr.mxu0 0.0
          %3632 = vmatpush1.msra.mxu0 0.0
          %3633 = vmatprep.subr.mxu0 0.0
          %3634 = vmatpush1.msra.mxu0 0.0
          %3635 = vmatprep.subr.mxu0 0.0
          %3636 = vmatpush1.msra.mxu0 0.0
          %3637 = vmatprep.subr.mxu0 0.0
          %3638 = vmatpush1.msra.mxu0 0.0
          %3639 = vmatprep.subr.mxu0 0.0
          %3640 = vmatpush1.msra.mxu0 0.0
          %3641 = vmatprep.subr.mxu0 0.0
          %3642 = vmatpush1.msra.mxu0 0.0
          %3643 = vmatprep.subr.mxu0 0.0
          %3644 = vmatpush1.msra.mxu0 0.0
          %3645 = vmatprep.subr.mxu0 0.0
          %3646 = vmatpush1.msra.mxu0 0.0
          %3647 = vmatprep.subr.mxu0 0.0
          %3648 = vmatpush1.msra.mxu0 0.0
          %3649 = vmatprep.subr.mxu0 0.0
          %3650 = vmatpush1.msra.mxu0 0.0
          %3651 = vmatprep.subr.mxu0 0.0
          %3652 = vmatpush1.msra.mxu0 0.0
          %3653 = vmatprep.subr.mxu0 0.0
          %3654 = vmatpush1.msra.mxu0 0.0
          %3655 = vmatprep.subr.mxu0 0.0
          %3656 = vmatpush1.msra.mxu0 0.0
          %3657 = vmatprep.subr.mxu0 0.0
          %3658 = vmatpush1.msra.mxu0 0.0
          %3659 = vmatprep.subr.mxu0 0.0
          %3660 = vmatpush1.msra.mxu0 0.0
          %3661 = vmatprep.subr.mxu0 0.0
          %3662 = vmatpush1.msra.mxu0 0.0
          %3663 = vmatprep.subr.mxu0 0.0
          %3664 = vmatpush1.msra.mxu0 0.0
          %3665 = vmatprep.subr.mxu0 0.0
          %3666 = vmatpush1.msra.mxu0 0.0
          %3667 = vmatprep.subr.mxu0 0.0
          %3668 = vmatpush1.msra.mxu0 0.0
          %3669 = vmatprep.subr.mxu0 0.0
          %3670 = vmatpush1.msra.mxu0 0.0
          %3671 = vmatprep.mubr.f32.mxu0 0.0
          %3672 = vmatmul.mubr.f32.gmra.mrb[0].mxu0 %v3224
          %v3673 = vpop.f32.mrb[0].mxu0
          %v3674 = vadd.f32 0.0, %v3673
          %v3675 = vpop.f32.mrb[0].mxu0
          %3676 = vdwg.mxu0
          %v3677 = vadd.f32 %v3525, %v3674
          %v3679 = vsel %vm494, %v2679, 0
          %3681 = vmatprep.subr.mxu0 0.0
          %3682 = vmatpush1.msra.mxu0 %v3603
          %3683 = vmatprep.subr.mxu0 0.0
          %3684 = vmatpush1.msra.mxu0 %v3604
          %3685 = vmatprep.subr.mxu0 0.0
          %3686 = vmatpush1.msra.mxu0 %v3605
          %3687 = vmatprep.subr.mxu0 0.0
          %3688 = vmatpush1.msra.mxu0 %v3606
          %3689 = vmatprep.subr.mxu0 0.0
          %3690 = vmatpush1.msra.mxu0 0.0
          %3691 = vmatprep.subr.mxu0 0.0
          %3692 = vmatpush1.msra.mxu0 0.0
          %3693 = vmatprep.subr.mxu0 0.0
          %3694 = vmatpush1.msra.mxu0 0.0
          %3695 = vmatprep.subr.mxu0 0.0
          %3696 = vmatpush1.msra.mxu0 0.0
          %3697 = vmatprep.subr.mxu0 0.0
          %3698 = vmatpush1.msra.mxu0 0.0
          %3699 = vmatprep.subr.mxu0 0.0
          %3700 = vmatpush1.msra.mxu0 0.0
          %3701 = vmatprep.subr.mxu0 0.0
          %3702 = vmatpush1.msra.mxu0 0.0
          %3703 = vmatprep.subr.mxu0 0.0
          %3704 = vmatpush1.msra.mxu0 0.0
          %3705 = vmatprep.subr.mxu0 0.0
          %3706 = vmatpush1.msra.mxu0 0.0
          %3707 = vmatprep.subr.mxu0 0.0
          %3708 = vmatpush1.msra.mxu0 0.0
          %3709 = vmatprep.subr.mxu0 0.0
          %3710 = vmatpush1.msra.mxu0 0.0
          %3711 = vmatprep.subr.mxu0 0.0
          %3712 = vmatpush1.msra.mxu0 0.0
          %3713 = vmatprep.subr.mxu0 0.0
          %3714 = vmatpush1.msra.mxu0 0.0
          %3715 = vmatprep.subr.mxu0 0.0
          %3716 = vmatpush1.msra.mxu0 0.0
          %3717 = vmatprep.subr.mxu0 0.0
          %3718 = vmatpush1.msra.mxu0 0.0
          %3719 = vmatprep.subr.mxu0 0.0
          %3720 = vmatpush1.msra.mxu0 0.0
          %3721 = vmatprep.subr.mxu0 0.0
          %3722 = vmatpush1.msra.mxu0 0.0
          %3723 = vmatprep.subr.mxu0 0.0
          %3724 = vmatpush1.msra.mxu0 0.0
          %3725 = vmatprep.subr.mxu0 0.0
          %3726 = vmatpush1.msra.mxu0 0.0
          %3727 = vmatprep.subr.mxu0 0.0
          %3728 = vmatpush1.msra.mxu0 0.0
          %3729 = vmatprep.subr.mxu0 0.0
          %3730 = vmatpush1.msra.mxu0 0.0
          %3731 = vmatprep.subr.mxu0 0.0
          %3732 = vmatpush1.msra.mxu0 0.0
          %3733 = vmatprep.subr.mxu0 0.0
          %3734 = vmatpush1.msra.mxu0 0.0
          %3735 = vmatprep.subr.mxu0 0.0
          %3736 = vmatpush1.msra.mxu0 0.0
          %3737 = vmatprep.subr.mxu0 0.0
          %3738 = vmatpush1.msra.mxu0 0.0
          %3739 = vmatprep.subr.mxu0 0.0
          %3740 = vmatpush1.msra.mxu0 0.0
          %3741 = vmatprep.subr.mxu0 0.0
          %3742 = vmatpush1.msra.mxu0 0.0
          %3743 = vmatprep.subr.mxu0 0.0
          %3744 = vmatpush1.msra.mxu0 0.0
          %3745 = vmatprep.mubr.f32.mxu0 0.0
          %3746 = vmatmul.mubr.f32.gmra.mrb[0].mxu0 %v3679
          %v3747 = vpop.f32.mrb[0].mxu0
          %v3748 = vadd.f32 0.0, %v3747
          %v3749 = vpop.f32.mrb[0].mxu0
          %3750 = vdwg.mxu0
          %v3751 = vadd.f32 %v3601, %v3748
          %s3752 = scalar_lea.vmem %s5, 224
          %v3753 = vld [vmem:[%s3752] sm:$0xff]
          %v3754 = vld [vmem:[%s3752 + $0x8] sm:$0xff]
          %v3755 = vld [vmem:[%s3752 + $0x10] sm:$0xff]
          %v3756 = vld [vmem:[%s3752 + $0x18] sm:$0xff]
          %3757 = vmatprep.subr.mxu0 0.0
          %3758 = vmatpush1.msra.mxu0 %v3753
          %3759 = vmatprep.subr.mxu0 0.0
          %3760 = vmatpush1.msra.mxu0 %v3754
          %3761 = vmatprep.subr.mxu0 0.0
          %3762 = vmatpush1.msra.mxu0 %v3755
          %3763 = vmatprep.subr.mxu0 0.0
          %3764 = vmatpush1.msra.mxu0 %v3756
          %3765 = vmatprep.subr.mxu0 0.0
          %3766 = vmatpush1.msra.mxu0 0.0
          %3767 = vmatprep.subr.mxu0 0.0
          %3768 = vmatpush1.msra.mxu0 0.0
          %3769 = vmatprep.subr.mxu0 0.0
          %3770 = vmatpush1.msra.mxu0 0.0
          %3771 = vmatprep.subr.mxu0 0.0
          %3772 = vmatpush1.msra.mxu0 0.0
          %3773 = vmatprep.subr.mxu0 0.0
          %3774 = vmatpush1.msra.mxu0 0.0
          %3775 = vmatprep.subr.mxu0 0.0
          %3776 = vmatpush1.msra.mxu0 0.0
          %3777 = vmatprep.subr.mxu0 0.0
          %3778 = vmatpush1.msra.mxu0 0.0
          %3779 = vmatprep.subr.mxu0 0.0
          %3780 = vmatpush1.msra.mxu0 0.0
          %3781 = vmatprep.subr.mxu0 0.0
          %3782 = vmatpush1.msra.mxu0 0.0
          %3783 = vmatprep.subr.mxu0 0.0
          %3784 = vmatpush1.msra.mxu0 0.0
          %3785 = vmatprep.subr.mxu0 0.0
          %3786 = vmatpush1.msra.mxu0 0.0
          %3787 = vmatprep.subr.mxu0 0.0
          %3788 = vmatpush1.msra.mxu0 0.0
          %3789 = vmatprep.subr.mxu0 0.0
          %3790 = vmatpush1.msra.mxu0 0.0
          %3791 = vmatprep.subr.mxu0 0.0
          %3792 = vmatpush1.msra.mxu0 0.0
          %3793 = vmatprep.subr.mxu0 0.0
          %3794 = vmatpush1.msra.mxu0 0.0
          %3795 = vmatprep.subr.mxu0 0.0
          %3796 = vmatpush1.msra.mxu0 0.0
          %3797 = vmatprep.subr.mxu0 0.0
          %3798 = vmatpush1.msra.mxu0 0.0
          %3799 = vmatprep.subr.mxu0 0.0
          %3800 = vmatpush1.msra.mxu0 0.0
          %3801 = vmatprep.subr.mxu0 0.0
          %3802 = vmatpush1.msra.mxu0 0.0
          %3803 = vmatprep.subr.mxu0 0.0
          %3804 = vmatpush1.msra.mxu0 0.0
          %3805 = vmatprep.subr.mxu0 0.0
          %3806 = vmatpush1.msra.mxu0 0.0
          %3807 = vmatprep.subr.mxu0 0.0
          %3808 = vmatpush1.msra.mxu0 0.0
          %3809 = vmatprep.subr.mxu0 0.0
          %3810 = vmatpush1.msra.mxu0 0.0
          %3811 = vmatprep.subr.mxu0 0.0
          %3812 = vmatpush1.msra.mxu0 0.0
          %3813 = vmatprep.subr.mxu0 0.0
          %3814 = vmatpush1.msra.mxu0 0.0
          %3815 = vmatprep.subr.mxu0 0.0
          %3816 = vmatpush1.msra.mxu0 0.0
          %3817 = vmatprep.subr.mxu0 0.0
          %3818 = vmatpush1.msra.mxu0 0.0
          %3819 = vmatprep.subr.mxu0 0.0
          %3820 = vmatpush1.msra.mxu0 0.0
          %3821 = vmatprep.mubr.f32.mxu0 0.0
          %3822 = vmatmul.mubr.f32.gmra.mrb[0].mxu0 %v3377
          %v3823 = vpop.f32.mrb[0].mxu0
          %v3824 = vadd.f32 0.0, %v3823
          %v3825 = vpop.f32.mrb[0].mxu0
          %3826 = vdwg.mxu0
          %v3827 = vadd.f32 %v3677, %v3824
          %v3829 = vrot.slane %v2679, 1
          %v3830 = vrot.slane %v2680, 1
          %v3831 = vsel %vm2692, %v3829, %v3830
          %v3832 = vsel %vm494, %v3831, 0
          %3834 = vmatprep.subr.mxu0 0.0
          %3835 = vmatpush1.msra.mxu0 %v3753
          %3836 = vmatprep.subr.mxu0 0.0
          %3837 = vmatpush1.msra.mxu0 %v3754
          %3838 = vmatprep.subr.mxu0 0.0
          %3839 = vmatpush1.msra.mxu0 %v3755
          %3840 = vmatprep.subr.mxu0 0.0
          %3841 = vmatpush1.msra.mxu0 %v3756
          %3842 = vmatprep.subr.mxu0 0.0
          %3843 = vmatpush1.msra.mxu0 0.0
          %3844 = vmatprep.subr.mxu0 0.0
          %3845 = vmatpush1.msra.mxu0 0.0
          %3846 = vmatprep.subr.mxu0 0.0
          %3847 = vmatpush1.msra.mxu0 0.0
          %3848 = vmatprep.subr.mxu0 0.0
          %3849 = vmatpush1.msra.mxu0 0.0
          %3850 = vmatprep.subr.mxu0 0.0
          %3851 = vmatpush1.msra.mxu0 0.0
          %3852 = vmatprep.subr.mxu0 0.0
          %3853 = vmatpush1.msra.mxu0 0.0
          %3854 = vmatprep.subr.mxu0 0.0
          %3855 = vmatpush1.msra.mxu0 0.0
          %3856 = vmatprep.subr.mxu0 0.0
          %3857 = vmatpush1.msra.mxu0 0.0
          %3858 = vmatprep.subr.mxu0 0.0
          %3859 = vmatpush1.msra.mxu0 0.0
          %3860 = vmatprep.subr.mxu0 0.0
          %3861 = vmatpush1.msra.mxu0 0.0
          %3862 = vmatprep.subr.mxu0 0.0
          %3863 = vmatpush1.msra.mxu0 0.0
          %3864 = vmatprep.subr.mxu0 0.0
          %3865 = vmatpush1.msra.mxu0 0.0
          %3866 = vmatprep.subr.mxu0 0.0
          %3867 = vmatpush1.msra.mxu0 0.0
          %3868 = vmatprep.subr.mxu0 0.0
          %3869 = vmatpush1.msra.mxu0 0.0
          %3870 = vmatprep.subr.mxu0 0.0
          %3871 = vmatpush1.msra.mxu0 0.0
          %3872 = vmatprep.subr.mxu0 0.0
          %3873 = vmatpush1.msra.mxu0 0.0
          %3874 = vmatprep.subr.mxu0 0.0
          %3875 = vmatpush1.msra.mxu0 0.0
          %3876 = vmatprep.subr.mxu0 0.0
          %3877 = vmatpush1.msra.mxu0 0.0
          %3878 = vmatprep.subr.mxu0 0.0
          %3879 = vmatpush1.msra.mxu0 0.0
          %3880 = vmatprep.subr.mxu0 0.0
          %3881 = vmatpush1.msra.mxu0 0.0
          %3882 = vmatprep.subr.mxu0 0.0
          %3883 = vmatpush1.msra.mxu0 0.0
          %3884 = vmatprep.subr.mxu0 0.0
          %3885 = vmatpush1.msra.mxu0 0.0
          %3886 = vmatprep.subr.mxu0 0.0
          %3887 = vmatpush1.msra.mxu0 0.0
          %3888 = vmatprep.subr.mxu0 0.0
          %3889 = vmatpush1.msra.mxu0 0.0
          %3890 = vmatprep.subr.mxu0 0.0
          %3891 = vmatpush1.msra.mxu0 0.0
          %3892 = vmatprep.subr.mxu0 0.0
          %3893 = vmatpush1.msra.mxu0 0.0
          %3894 = vmatprep.subr.mxu0 0.0
          %3895 = vmatpush1.msra.mxu0 0.0
          %3896 = vmatprep.subr.mxu0 0.0
          %3897 = vmatpush1.msra.mxu0 0.0
          %3898 = vmatprep.mubr.f32.mxu0 0.0
          %3899 = vmatmul.mubr.f32.gmra.mrb[0].mxu0 %v3832
          %v3900 = vpop.f32.mrb[0].mxu0
          %v3901 = vadd.f32 0.0, %v3900
          %v3902 = vpop.f32.mrb[0].mxu0
          %3903 = vdwg.mxu0
          %v3904 = vadd.f32 %v3751, %v3901
          %s3905 = scalar_lea.vmem %s5, 256
          %v3906 = vld [vmem:[%s3905] sm:$0xff]
          %v3907 = vld [vmem:[%s3905 + $0x8] sm:$0xff]
          %v3908 = vld [vmem:[%s3905 + $0x10] sm:$0xff]
          %v3909 = vld [vmem:[%s3905 + $0x18] sm:$0xff]
          %3910 = vmatprep.subr.mxu0 0.0
          %3911 = vmatpush1.msra.mxu0 %v3906
          %3912 = vmatprep.subr.mxu0 0.0
          %3913 = vmatpush1.msra.mxu0 %v3907
          %3914 = vmatprep.subr.mxu0 0.0
          %3915 = vmatpush1.msra.mxu0 %v3908
          %3916 = vmatprep.subr.mxu0 0.0
          %3917 = vmatpush1.msra.mxu0 %v3909
          %3918 = vmatprep.subr.mxu0 0.0
          %3919 = vmatpush1.msra.mxu0 0.0
          %3920 = vmatprep.subr.mxu0 0.0
          %3921 = vmatpush1.msra.mxu0 0.0
          %3922 = vmatprep.subr.mxu0 0.0
          %3923 = vmatpush1.msra.mxu0 0.0
          %3924 = vmatprep.subr.mxu0 0.0
          %3925 = vmatpush1.msra.mxu0 0.0
          %3926 = vmatprep.subr.mxu0 0.0
          %3927 = vmatpush1.msra.mxu0 0.0
          %3928 = vmatprep.subr.mxu0 0.0
          %3929 = vmatpush1.msra.mxu0 0.0
          %3930 = vmatprep.subr.mxu0 0.0
          %3931 = vmatpush1.msra.mxu0 0.0
          %3932 = vmatprep.subr.mxu0 0.0
          %3933 = vmatpush1.msra.mxu0 0.0
          %3934 = vmatprep.subr.mxu0 0.0
          %3935 = vmatpush1.msra.mxu0 0.0
          %3936 = vmatprep.subr.mxu0 0.0
          %3937 = vmatpush1.msra.mxu0 0.0
          %3938 = vmatprep.subr.mxu0 0.0
          %3939 = vmatpush1.msra.mxu0 0.0
          %3940 = vmatprep.subr.mxu0 0.0
          %3941 = vmatpush1.msra.mxu0 0.0
          %3942 = vmatprep.subr.mxu0 0.0
          %3943 = vmatpush1.msra.mxu0 0.0
          %3944 = vmatprep.subr.mxu0 0.0
          %3945 = vmatpush1.msra.mxu0 0.0
          %3946 = vmatprep.subr.mxu0 0.0
          %3947 = vmatpush1.msra.mxu0 0.0
          %3948 = vmatprep.subr.mxu0 0.0
          %3949 = vmatpush1.msra.mxu0 0.0
          %3950 = vmatprep.subr.mxu0 0.0
          %3951 = vmatpush1.msra.mxu0 0.0
          %3952 = vmatprep.subr.mxu0 0.0
          %3953 = vmatpush1.msra.mxu0 0.0
          %3954 = vmatprep.subr.mxu0 0.0
          %3955 = vmatpush1.msra.mxu0 0.0
          %3956 = vmatprep.subr.mxu0 0.0
          %3957 = vmatpush1.msra.mxu0 0.0
          %3958 = vmatprep.subr.mxu0 0.0
          %3959 = vmatpush1.msra.mxu0 0.0
          %3960 = vmatprep.subr.mxu0 0.0
          %3961 = vmatpush1.msra.mxu0 0.0
          %3962 = vmatprep.subr.mxu0 0.0
          %3963 = vmatpush1.msra.mxu0 0.0
          %3964 = vmatprep.subr.mxu0 0.0
          %3965 = vmatpush1.msra.mxu0 0.0
          %3966 = vmatprep.subr.mxu0 0.0
          %3967 = vmatpush1.msra.mxu0 0.0
          %3968 = vmatprep.subr.mxu0 0.0
          %3969 = vmatpush1.msra.mxu0 0.0
          %3970 = vmatprep.subr.mxu0 0.0
          %3971 = vmatpush1.msra.mxu0 0.0
          %3972 = vmatprep.subr.mxu0 0.0
          %3973 = vmatpush1.msra.mxu0 0.0
          %3974 = vmatprep.mubr.f32.mxu0 0.0
          %3975 = vmatmul.mubr.f32.gmra.mrb[0].mxu0 %v3529
          %v3976 = vpop.f32.mrb[0].mxu0
          %v3977 = vadd.f32 0.0, %v3976
          %v3978 = vpop.f32.mrb[0].mxu0
          %3979 = vdwg.mxu0
          %v3980 = vadd.f32 %v3827, %v3977
          %v3981 = vrot.slane %v2679, 2
          %v3982 = vrot.slane %v2680, 2
          %v3983 = vsel %vm2994, %v3981, %v3982
          %v3984 = vsel %vm494, %v3983, 0
          %3986 = vmatprep.subr.mxu0 0.0
          %3987 = vmatpush1.msra.mxu0 %v3906
          %3988 = vmatprep.subr.mxu0 0.0
          %3989 = vmatpush1.msra.mxu0 %v3907
          %3990 = vmatprep.subr.mxu0 0.0
          %3991 = vmatpush1.msra.mxu0 %v3908
          %3992 = vmatprep.subr.mxu0 0.0
          %3993 = vmatpush1.msra.mxu0 %v3909
          %3994 = vmatprep.subr.mxu0 0.0
          %3995 = vmatpush1.msra.mxu0 0.0
          %3996 = vmatprep.subr.mxu0 0.0
          %3997 = vmatpush1.msra.mxu0 0.0
          %3998 = vmatprep.subr.mxu0 0.0
          %3999 = vmatpush1.msra.mxu0 0.0
          %4000 = vmatprep.subr.mxu0 0.0
          %4001 = vmatpush1.msra.mxu0 0.0
          %4002 = vmatprep.subr.mxu0 0.0
          %4003 = vmatpush1.msra.mxu0 0.0
          %4004 = vmatprep.subr.mxu0 0.0
          %4005 = vmatpush1.msra.mxu0 0.0
          %4006 = vmatprep.subr.mxu0 0.0
          %4007 = vmatpush1.msra.mxu0 0.0
          %4008 = vmatprep.subr.mxu0 0.0
          %4009 = vmatpush1.msra.mxu0 0.0
          %4010 = vmatprep.subr.mxu0 0.0
          %4011 = vmatpush1.msra.mxu0 0.0
          %4012 = vmatprep.subr.mxu0 0.0
          %4013 = vmatpush1.msra.mxu0 0.0
          %4014 = vmatprep.subr.mxu0 0.0
          %4015 = vmatpush1.msra.mxu0 0.0
          %4016 = vmatprep.subr.mxu0 0.0
          %4017 = vmatpush1.msra.mxu0 0.0
          %4018 = vmatprep.subr.mxu0 0.0
          %4019 = vmatpush1.msra.mxu0 0.0
          %4020 = vmatprep.subr.mxu0 0.0
          %4021 = vmatpush1.msra.mxu0 0.0
          %4022 = vmatprep.subr.mxu0 0.0
          %4023 = vmatpush1.msra.mxu0 0.0
          %4024 = vmatprep.subr.mxu0 0.0
          %4025 = vmatpush1.msra.mxu0 0.0
          %4026 = vmatprep.subr.mxu0 0.0
          %4027 = vmatpush1.msra.mxu0 0.0
          %4028 = vmatprep.subr.mxu0 0.0
          %4029 = vmatpush1.msra.mxu0 0.0
          %4030 = vmatprep.subr.mxu0 0.0
          %4031 = vmatpush1.msra.mxu0 0.0
          %4032 = vmatprep.subr.mxu0 0.0
          %4033 = vmatpush1.msra.mxu0 0.0
          %4034 = vmatprep.subr.mxu0 0.0
          %4035 = vmatpush1.msra.mxu0 0.0
          %4036 = vmatprep.subr.mxu0 0.0
          %4037 = vmatpush1.msra.mxu0 0.0
          %4038 = vmatprep.subr.mxu0 0.0
          %4039 = vmatpush1.msra.mxu0 0.0
          %4040 = vmatprep.subr.mxu0 0.0
          %4041 = vmatpush1.msra.mxu0 0.0
          %4042 = vmatprep.subr.mxu0 0.0
          %4043 = vmatpush1.msra.mxu0 0.0
          %4044 = vmatprep.subr.mxu0 0.0
          %4045 = vmatpush1.msra.mxu0 0.0
          %4046 = vmatprep.subr.mxu0 0.0
          %4047 = vmatpush1.msra.mxu0 0.0
          %4048 = vmatprep.subr.mxu0 0.0
          %4049 = vmatpush1.msra.mxu0 0.0
          %4050 = vmatprep.mubr.f32.mxu0 0.0
          %4051 = vmatmul.mubr.f32.gmra.mrb[0].mxu0 %v3984
          %v4052 = vpop.f32.mrb[0].mxu0
          %v4053 = vadd.f32 0.0, %v4052
          %v4054 = vpop.f32.mrb[0].mxu0
          %4055 = vdwg.mxu0
          %v4056 = vadd.f32 %v3904, %v4053
          %v4057 = vmax.f32 %v3980, %v4056
          %vm4058 = vcmask 64512
          %v4060 = vsel %vm4058, %v534, 0
          %4062 = vmatprep.subr.mxu0 0.0
          %4063 = vmatpush1.msra.mxu0 %v4057
          %4064 = vmatprep.subr.mxu0 0.0
          %4065 = vmatpush1.msra.mxu0 0.0
          %4066 = vmatprep.subr.mxu0 0.0
          %4067 = vmatpush1.msra.mxu0 0.0
          %4068 = vmatprep.subr.mxu0 0.0
          %4069 = vmatpush1.msra.mxu0 0.0
          %4070 = vmatprep.subr.mxu0 0.0
          %4071 = vmatpush1.msra.mxu0 0.0
          %4072 = vmatprep.subr.mxu0 0.0
          %4073 = vmatpush1.msra.mxu0 0.0
          %4074 = vmatprep.subr.mxu0 0.0
          %4075 = vmatpush1.msra.mxu0 0.0
          %4076 = vmatprep.subr.mxu0 0.0
          %4077 = vmatpush1.msra.mxu0 0.0
          %4078 = vmatprep.subr.mxu0 0.0
          %4079 = vmatpush1.msra.mxu0 0.0
          %4080 = vmatprep.subr.mxu0 0.0
          %4081 = vmatpush1.msra.mxu0 0.0
          %4082 = vmatprep.subr.mxu0 0.0
          %4083 = vmatpush1.msra.mxu0 0.0
          %4084 = vmatprep.subr.mxu0 0.0
          %4085 = vmatpush1.msra.mxu0 0.0
          %4086 = vmatprep.subr.mxu0 0.0
          %4087 = vmatpush1.msra.mxu0 0.0
          %4088 = vmatprep.subr.mxu0 0.0
          %4089 = vmatpush1.msra.mxu0 0.0
          %4090 = vmatprep.subr.mxu0 0.0
          %4091 = vmatpush1.msra.mxu0 0.0
          %4092 = vmatprep.subr.mxu0 0.0
          %4093 = vmatpush1.msra.mxu0 0.0
          %4094 = vmatprep.subr.mxu0 0.0
          %4095 = vmatpush1.msra.mxu0 0.0
          %4096 = vmatprep.subr.mxu0 0.0
          %4097 = vmatpush1.msra.mxu0 0.0
          %4098 = vmatprep.subr.mxu0 0.0
          %4099 = vmatpush1.msra.mxu0 0.0
          %4100 = vmatprep.subr.mxu0 0.0
          %4101 = vmatpush1.msra.mxu0 0.0
          %4102 = vmatprep.subr.mxu0 0.0
          %4103 = vmatpush1.msra.mxu0 0.0
          %4104 = vmatprep.subr.mxu0 0.0
          %4105 = vmatpush1.msra.mxu0 0.0
          %4106 = vmatprep.subr.mxu0 0.0
          %4107 = vmatpush1.msra.mxu0 0.0
          %4108 = vmatprep.subr.mxu0 0.0
          %4109 = vmatpush1.msra.mxu0 0.0
          %4110 = vmatprep.subr.mxu0 0.0
          %4111 = vmatpush1.msra.mxu0 0.0
          %4112 = vmatprep.subr.mxu0 0.0
          %4113 = vmatpush1.msra.mxu0 0.0
          %4114 = vmatprep.subr.mxu0 0.0
          %4115 = vmatpush1.msra.mxu0 0.0
          %4116 = vmatprep.subr.mxu0 0.0
          %4117 = vmatpush1.msra.mxu0 0.0
          %4118 = vmatprep.subr.mxu0 0.0
          %4119 = vmatpush1.msra.mxu0 0.0
          %4120 = vmatprep.subr.mxu0 0.0
          %4121 = vmatpush1.msra.mxu0 0.0
          %4122 = vmatprep.subr.mxu0 0.0
          %4123 = vmatpush1.msra.mxu0 0.0
          %4124 = vmatprep.subr.mxu0 0.0
          %4125 = vmatpush1.msra.mxu0 0.0
          %4126 = vmatprep.mubr.f32.mxu0 0.0
          %4127 = vmatmul.mubr.f32.gmra.mrb[0].mxu0 %v4060
          %v4128 = vpop.f32.mrb[0].mxu0
          %v4129 = vadd.f32 0.0, %v4128
          %v4130 = vpop.f32.mrb[0].mxu0
          %4131 = vdwg.mxu0
          %v4133 = vsel %vm4058, %v542, 0
          %4135 = vmatprep.subr.mxu0 0.0
          %4136 = vmatpush1.msra.mxu0 %v4057
          %4137 = vmatprep.subr.mxu0 0.0
          %4138 = vmatpush1.msra.mxu0 0.0
          %4139 = vmatprep.subr.mxu0 0.0
          %4140 = vmatpush1.msra.mxu0 0.0
          %4141 = vmatprep.subr.mxu0 0.0
          %4142 = vmatpush1.msra.mxu0 0.0
          %4143 = vmatprep.subr.mxu0 0.0
          %4144 = vmatpush1.msra.mxu0 0.0
          %4145 = vmatprep.subr.mxu0 0.0
          %4146 = vmatpush1.msra.mxu0 0.0
          %4147 = vmatprep.subr.mxu0 0.0
          %4148 = vmatpush1.msra.mxu0 0.0
          %4149 = vmatprep.subr.mxu0 0.0
          %4150 = vmatpush1.msra.mxu0 0.0
          %4151 = vmatprep.subr.mxu0 0.0
          %4152 = vmatpush1.msra.mxu0 0.0
          %4153 = vmatprep.subr.mxu0 0.0
          %4154 = vmatpush1.msra.mxu0 0.0
          %4155 = vmatprep.subr.mxu0 0.0
          %4156 = vmatpush1.msra.mxu0 0.0
          %4157 = vmatprep.subr.mxu0 0.0
          %4158 = vmatpush1.msra.mxu0 0.0
          %4159 = vmatprep.subr.mxu0 0.0
          %4160 = vmatpush1.msra.mxu0 0.0
          %4161 = vmatprep.subr.mxu0 0.0
          %4162 = vmatpush1.msra.mxu0 0.0
          %4163 = vmatprep.subr.mxu0 0.0
          %4164 = vmatpush1.msra.mxu0 0.0
          %4165 = vmatprep.subr.mxu0 0.0
          %4166 = vmatpush1.msra.mxu0 0.0
          %4167 = vmatprep.subr.mxu0 0.0
          %4168 = vmatpush1.msra.mxu0 0.0
          %4169 = vmatprep.subr.mxu0 0.0
          %4170 = vmatpush1.msra.mxu0 0.0
          %4171 = vmatprep.subr.mxu0 0.0
          %4172 = vmatpush1.msra.mxu0 0.0
          %4173 = vmatprep.subr.mxu0 0.0
          %4174 = vmatpush1.msra.mxu0 0.0
          %4175 = vmatprep.subr.mxu0 0.0
          %4176 = vmatpush1.msra.mxu0 0.0
          %4177 = vmatprep.subr.mxu0 0.0
          %4178 = vmatpush1.msra.mxu0 0.0
          %4179 = vmatprep.subr.mxu0 0.0
          %4180 = vmatpush1.msra.mxu0 0.0
          %4181 = vmatprep.subr.mxu0 0.0
          %4182 = vmatpush1.msra.mxu0 0.0
          %4183 = vmatprep.subr.mxu0 0.0
          %4184 = vmatpush1.msra.mxu0 0.0
          %4185 = vmatprep.subr.mxu0 0.0
          %4186 = vmatpush1.msra.mxu0 0.0
          %4187 = vmatprep.subr.mxu0 0.0
          %4188 = vmatpush1.msra.mxu0 0.0
          %4189 = vmatprep.subr.mxu0 0.0
          %4190 = vmatpush1.msra.mxu0 0.0
          %4191 = vmatprep.subr.mxu0 0.0
          %4192 = vmatpush1.msra.mxu0 0.0
          %4193 = vmatprep.subr.mxu0 0.0
          %4194 = vmatpush1.msra.mxu0 0.0
          %4195 = vmatprep.subr.mxu0 0.0
          %4196 = vmatpush1.msra.mxu0 0.0
          %4197 = vmatprep.subr.mxu0 0.0
          %4198 = vmatpush1.msra.mxu0 0.0
          %4199 = vmatprep.mubr.f32.mxu0 0.0
          %4200 = vmatmul.mubr.f32.gmra.mrb[0].mxu0 %v4133
          %v4201 = vpop.f32.mrb[0].mxu0
          %v4202 = vadd.f32 0.0, %v4201
          %v4203 = vpop.f32.mrb[0].mxu0
          %4204 = vdwg.mxu0
          %v4205 = vmax.f32 %v4129, %v4202
          %v4206 = vld [vmem:[%s6] sm:$0x1]
          %v4208 = vlaneseq
          %v4209 = vshrl.u32 %v4208, 7
          %v4210 = vsub.s32 0, %v4209
          %v4211 = vrot.slane %v4206, %v4210
          %v4213 = vadd.f32 %v4205, %v4211
          %v4214 = vmax.f32 %v4213, 0.0
          %s4215 = sadd.s32 %s2656, 1
          %s4216 = smul.u32 %s4215, 8
          %s4217 = scalar_lea.vmem [#allocation4], %s4216
          %vm4218 = vcmask 257024
          %4219 = vst.msk [vmem:[%s4217 + $0x1] sm:$0xf] %vm4218, %v4214
        $region91: #{detection_network_pallas.1} parent=71 // loop_footer
          %s2660 = sadd.s32 1, %s2656
        $region92: #{detection_network_pallas.1} parent=71 // loop_footer_branch
          %2655 = sbr.rel target = $region88
        $region93: #{detection_network_pallas.1} parent=71 // loop_exit
          _
        %v4220 = vld [vmem:[#allocation4] sm:$0x3f]
        %s4221 = scalar_lea.vmem [#allocation4], 8
        %v4222 = vld [vmem:[%s4221] sm:$0x3f]
        %s4223 = scalar_lea.vmem [#allocation4], 16
        %v4224 = vld [vmem:[%s4223] sm:$0x3f]
        %v4225 = vld [vmem:[%s7] sm:$0xff]
        %v4226 = vld [vmem:[%s7 + $0x8] sm:$0xff]
        %v4227 = vld [vmem:[%s7 + $0x10] sm:$0xff]
        %v4228 = vld [vmem:[%s7 + $0x18] sm:$0xff]
        %s4229 = scalar_lea.vmem %s7, 32
        %v4230 = vld [vmem:[%s4229] sm:$0xff]
        %v4231 = vld [vmem:[%s4229 + $0x8] sm:$0xff]
        %v4232 = vld [vmem:[%s4229 + $0x10] sm:$0xff]
        %v4233 = vld [vmem:[%s4229 + $0x18] sm:$0xff]
        %v4235 = vrot.slane %v4220, 1
        %v4236 = vsel %vm494, %v4235, 0
        %4238 = vmatprep.subr.mxu0 0.0
        %4239 = vmatpush1.msra.mxu0 %v4230
        %4240 = vmatprep.subr.mxu0 0.0
        %4241 = vmatpush1.msra.mxu0 %v4231
        %4242 = vmatprep.subr.mxu0 0.0
        %4243 = vmatpush1.msra.mxu0 %v4232
        %4244 = vmatprep.subr.mxu0 0.0
        %4245 = vmatpush1.msra.mxu0 %v4233
        %4246 = vmatprep.subr.mxu0 0.0
        %4247 = vmatpush1.msra.mxu0 0.0
        %4248 = vmatprep.subr.mxu0 0.0
        %4249 = vmatpush1.msra.mxu0 0.0
        %4250 = vmatprep.subr.mxu0 0.0
        %4251 = vmatpush1.msra.mxu0 0.0
        %4252 = vmatprep.subr.mxu0 0.0
        %4253 = vmatpush1.msra.mxu0 0.0
        %4254 = vmatprep.subr.mxu0 0.0
        %4255 = vmatpush1.msra.mxu0 0.0
        %4256 = vmatprep.subr.mxu0 0.0
        %4257 = vmatpush1.msra.mxu0 0.0
        %4258 = vmatprep.subr.mxu0 0.0
        %4259 = vmatpush1.msra.mxu0 0.0
        %4260 = vmatprep.subr.mxu0 0.0
        %4261 = vmatpush1.msra.mxu0 0.0
        %4262 = vmatprep.subr.mxu0 0.0
        %4263 = vmatpush1.msra.mxu0 0.0
        %4264 = vmatprep.subr.mxu0 0.0
        %4265 = vmatpush1.msra.mxu0 0.0
        %4266 = vmatprep.subr.mxu0 0.0
        %4267 = vmatpush1.msra.mxu0 0.0
        %4268 = vmatprep.subr.mxu0 0.0
        %4269 = vmatpush1.msra.mxu0 0.0
        %4270 = vmatprep.subr.mxu0 0.0
        %4271 = vmatpush1.msra.mxu0 0.0
        %4272 = vmatprep.subr.mxu0 0.0
        %4273 = vmatpush1.msra.mxu0 0.0
        %4274 = vmatprep.subr.mxu0 0.0
        %4275 = vmatpush1.msra.mxu0 0.0
        %4276 = vmatprep.subr.mxu0 0.0
        %4277 = vmatpush1.msra.mxu0 0.0
        %4278 = vmatprep.subr.mxu0 0.0
        %4279 = vmatpush1.msra.mxu0 0.0
        %4280 = vmatprep.subr.mxu0 0.0
        %4281 = vmatpush1.msra.mxu0 0.0
        %4282 = vmatprep.subr.mxu0 0.0
        %4283 = vmatpush1.msra.mxu0 0.0
        %4284 = vmatprep.subr.mxu0 0.0
        %4285 = vmatpush1.msra.mxu0 0.0
        %4286 = vmatprep.subr.mxu0 0.0
        %4287 = vmatpush1.msra.mxu0 0.0
        %4288 = vmatprep.subr.mxu0 0.0
        %4289 = vmatpush1.msra.mxu0 0.0
        %4290 = vmatprep.subr.mxu0 0.0
        %4291 = vmatpush1.msra.mxu0 0.0
        %4292 = vmatprep.subr.mxu0 0.0
        %4293 = vmatpush1.msra.mxu0 0.0
        %4294 = vmatprep.subr.mxu0 0.0
        %4295 = vmatpush1.msra.mxu0 0.0
        %4296 = vmatprep.subr.mxu0 0.0
        %4297 = vmatpush1.msra.mxu0 0.0
        %4298 = vmatprep.subr.mxu0 0.0
        %4299 = vmatpush1.msra.mxu0 0.0
        %4300 = vmatprep.subr.mxu0 0.0
        %4301 = vmatpush1.msra.mxu0 0.0
        %4302 = vmatprep.mubr.f32.mxu0 0.0
        %4303 = vmatmul.mubr.f32.gmra.mrb[0].mxu0 %v4236
        %v4304 = vpop.f32.mrb[0].mxu0
        %v4305 = vadd.f32 0.0, %v4304
        %v4306 = vpop.f32.mrb[0].mxu0
        %4307 = vdwg.mxu0
        %v4308 = vsel %vm494, %v4220, 0
        %4310 = vmatprep.subr.mxu0 0.0
        %4311 = vmatpush1.msra.mxu0 %v4225
        %4312 = vmatprep.subr.mxu0 0.0
        %4313 = vmatpush1.msra.mxu0 %v4226
        %4314 = vmatprep.subr.mxu0 0.0
        %4315 = vmatpush1.msra.mxu0 %v4227
        %4316 = vmatprep.subr.mxu0 0.0
        %4317 = vmatpush1.msra.mxu0 %v4228
        %4318 = vmatprep.subr.mxu0 0.0
        %4319 = vmatpush1.msra.mxu0 0.0
        %4320 = vmatprep.subr.mxu0 0.0
        %4321 = vmatpush1.msra.mxu0 0.0
        %4322 = vmatprep.subr.mxu0 0.0
        %4323 = vmatpush1.msra.mxu0 0.0
        %4324 = vmatprep.subr.mxu0 0.0
        %4325 = vmatpush1.msra.mxu0 0.0
        %4326 = vmatprep.subr.mxu0 0.0
        %4327 = vmatpush1.msra.mxu0 0.0
        %4328 = vmatprep.subr.mxu0 0.0
        %4329 = vmatpush1.msra.mxu0 0.0
        %4330 = vmatprep.subr.mxu0 0.0
        %4331 = vmatpush1.msra.mxu0 0.0
        %4332 = vmatprep.subr.mxu0 0.0
        %4333 = vmatpush1.msra.mxu0 0.0
        %4334 = vmatprep.subr.mxu0 0.0
        %4335 = vmatpush1.msra.mxu0 0.0
        %4336 = vmatprep.subr.mxu0 0.0
        %4337 = vmatpush1.msra.mxu0 0.0
        %4338 = vmatprep.subr.mxu0 0.0
        %4339 = vmatpush1.msra.mxu0 0.0
        %4340 = vmatprep.subr.mxu0 0.0
        %4341 = vmatpush1.msra.mxu0 0.0
        %4342 = vmatprep.subr.mxu0 0.0
        %4343 = vmatpush1.msra.mxu0 0.0
        %4344 = vmatprep.subr.mxu0 0.0
        %4345 = vmatpush1.msra.mxu0 0.0
        %4346 = vmatprep.subr.mxu0 0.0
        %4347 = vmatpush1.msra.mxu0 0.0
        %4348 = vmatprep.subr.mxu0 0.0
        %4349 = vmatpush1.msra.mxu0 0.0
        %4350 = vmatprep.subr.mxu0 0.0
        %4351 = vmatpush1.msra.mxu0 0.0
        %4352 = vmatprep.subr.mxu0 0.0
        %4353 = vmatpush1.msra.mxu0 0.0
        %4354 = vmatprep.subr.mxu0 0.0
        %4355 = vmatpush1.msra.mxu0 0.0
        %4356 = vmatprep.subr.mxu0 0.0
        %4357 = vmatpush1.msra.mxu0 0.0
        %4358 = vmatprep.subr.mxu0 0.0
        %4359 = vmatpush1.msra.mxu0 0.0
        %4360 = vmatprep.subr.mxu0 0.0
        %4361 = vmatpush1.msra.mxu0 0.0
        %4362 = vmatprep.subr.mxu0 0.0
        %4363 = vmatpush1.msra.mxu0 0.0
        %4364 = vmatprep.subr.mxu0 0.0
        %4365 = vmatpush1.msra.mxu0 0.0
        %4366 = vmatprep.subr.mxu0 0.0
        %4367 = vmatpush1.msra.mxu0 0.0
        %4368 = vmatprep.subr.mxu0 0.0
        %4369 = vmatpush1.msra.mxu0 0.0
        %4370 = vmatprep.subr.mxu0 0.0
        %4371 = vmatpush1.msra.mxu0 0.0
        %4372 = vmatprep.subr.mxu0 0.0
        %4373 = vmatpush1.msra.mxu0 0.0
        %4374 = vmatprep.mubr.f32.mxu0 0.0
        %4375 = vmatmul.mubr.f32.gmra.mrb[0].mxu0 %v4308
        %v4376 = vpop.f32.mrb[0].mxu0
        %v4377 = vadd.f32 %v4305, %v4376
        %v4378 = vpop.f32.mrb[0].mxu0
        %4379 = vdwg.mxu0
        %s4380 = scalar_lea.vmem %s7, 64
        %v4381 = vld [vmem:[%s4380] sm:$0xff]
        %v4382 = vld [vmem:[%s4380 + $0x8] sm:$0xff]
        %v4383 = vld [vmem:[%s4380 + $0x10] sm:$0xff]
        %v4384 = vld [vmem:[%s4380 + $0x18] sm:$0xff]
        %v4385 = vrot.slane %v4220, 2
        %v4386 = vsel %vm494, %v4385, 0
        %4388 = vmatprep.subr.mxu0 0.0
        %4389 = vmatpush1.msra.mxu0 %v4381
        %4390 = vmatprep.subr.mxu0 0.0
        %4391 = vmatpush1.msra.mxu0 %v4382
        %4392 = vmatprep.subr.mxu0 0.0
        %4393 = vmatpush1.msra.mxu0 %v4383
        %4394 = vmatprep.subr.mxu0 0.0
        %4395 = vmatpush1.msra.mxu0 %v4384
        %4396 = vmatprep.subr.mxu0 0.0
        %4397 = vmatpush1.msra.mxu0 0.0
        %4398 = vmatprep.subr.mxu0 0.0
        %4399 = vmatpush1.msra.mxu0 0.0
        %4400 = vmatprep.subr.mxu0 0.0
        %4401 = vmatpush1.msra.mxu0 0.0
        %4402 = vmatprep.subr.mxu0 0.0
        %4403 = vmatpush1.msra.mxu0 0.0
        %4404 = vmatprep.subr.mxu0 0.0
        %4405 = vmatpush1.msra.mxu0 0.0
        %4406 = vmatprep.subr.mxu0 0.0
        %4407 = vmatpush1.msra.mxu0 0.0
        %4408 = vmatprep.subr.mxu0 0.0
        %4409 = vmatpush1.msra.mxu0 0.0
        %4410 = vmatprep.subr.mxu0 0.0
        %4411 = vmatpush1.msra.mxu0 0.0
        %4412 = vmatprep.subr.mxu0 0.0
        %4413 = vmatpush1.msra.mxu0 0.0
        %4414 = vmatprep.subr.mxu0 0.0
        %4415 = vmatpush1.msra.mxu0 0.0
        %4416 = vmatprep.subr.mxu0 0.0
        %4417 = vmatpush1.msra.mxu0 0.0
        %4418 = vmatprep.subr.mxu0 0.0
        %4419 = vmatpush1.msra.mxu0 0.0
        %4420 = vmatprep.subr.mxu0 0.0
        %4421 = vmatpush1.msra.mxu0 0.0
        %4422 = vmatprep.subr.mxu0 0.0
        %4423 = vmatpush1.msra.mxu0 0.0
        %4424 = vmatprep.subr.mxu0 0.0
        %4425 = vmatpush1.msra.mxu0 0.0
        %4426 = vmatprep.subr.mxu0 0.0
        %4427 = vmatpush1.msra.mxu0 0.0
        %4428 = vmatprep.subr.mxu0 0.0
        %4429 = vmatpush1.msra.mxu0 0.0
        %4430 = vmatprep.subr.mxu0 0.0
        %4431 = vmatpush1.msra.mxu0 0.0
        %4432 = vmatprep.subr.mxu0 0.0
        %4433 = vmatpush1.msra.mxu0 0.0
        %4434 = vmatprep.subr.mxu0 0.0
        %4435 = vmatpush1.msra.mxu0 0.0
        %4436 = vmatprep.subr.mxu0 0.0
        %4437 = vmatpush1.msra.mxu0 0.0
        %4438 = vmatprep.subr.mxu0 0.0
        %4439 = vmatpush1.msra.mxu0 0.0
        %4440 = vmatprep.subr.mxu0 0.0
        %4441 = vmatpush1.msra.mxu0 0.0
        %4442 = vmatprep.subr.mxu0 0.0
        %4443 = vmatpush1.msra.mxu0 0.0
        %4444 = vmatprep.subr.mxu0 0.0
        %4445 = vmatpush1.msra.mxu0 0.0
        %4446 = vmatprep.subr.mxu0 0.0
        %4447 = vmatpush1.msra.mxu0 0.0
        %4448 = vmatprep.subr.mxu0 0.0
        %4449 = vmatpush1.msra.mxu0 0.0
        %4450 = vmatprep.subr.mxu0 0.0
        %4451 = vmatpush1.msra.mxu0 0.0
        %4452 = vmatprep.mubr.f32.mxu0 0.0
        %4453 = vmatmul.mubr.f32.gmra.mrb[0].mxu0 %v4386
        %v4454 = vpop.f32.mrb[0].mxu0
        %v4455 = vadd.f32 0.0, %v4454
        %v4456 = vpop.f32.mrb[0].mxu0
        %4457 = vdwg.mxu0
        %v4458 = vadd.f32 %v4377, %v4455
        %s4459 = scalar_lea.vmem %s7, 96
        %v4460 = vld [vmem:[%s4459] sm:$0xff]
        %v4461 = vld [vmem:[%s4459 + $0x8] sm:$0xff]
        %v4462 = vld [vmem:[%s4459 + $0x10] sm:$0xff]
        %v4463 = vld [vmem:[%s4459 + $0x18] sm:$0xff]
        %v4465 = vsel %vm494, %v4222, 0
        %4467 = vmatprep.subr.mxu0 0.0
        %4468 = vmatpush1.msra.mxu0 %v4460
        %4469 = vmatprep.subr.mxu0 0.0
        %4470 = vmatpush1.msra.mxu0 %v4461
        %4471 = vmatprep.subr.mxu0 0.0
        %4472 = vmatpush1.msra.mxu0 %v4462
        %4473 = vmatprep.subr.mxu0 0.0
        %4474 = vmatpush1.msra.mxu0 %v4463
        %4475 = vmatprep.subr.mxu0 0.0
        %4476 = vmatpush1.msra.mxu0 0.0
        %4477 = vmatprep.subr.mxu0 0.0
        %4478 = vmatpush1.msra.mxu0 0.0
        %4479 = vmatprep.subr.mxu0 0.0
        %4480 = vmatpush1.msra.mxu0 0.0
        %4481 = vmatprep.subr.mxu0 0.0
        %4482 = vmatpush1.msra.mxu0 0.0
        %4483 = vmatprep.subr.mxu0 0.0
        %4484 = vmatpush1.msra.mxu0 0.0
        %4485 = vmatprep.subr.mxu0 0.0
        %4486 = vmatpush1.msra.mxu0 0.0
        %4487 = vmatprep.subr.mxu0 0.0
        %4488 = vmatpush1.msra.mxu0 0.0
        %4489 = vmatprep.subr.mxu0 0.0
        %4490 = vmatpush1.msra.mxu0 0.0
        %4491 = vmatprep.subr.mxu0 0.0
        %4492 = vmatpush1.msra.mxu0 0.0
        %4493 = vmatprep.subr.mxu0 0.0
        %4494 = vmatpush1.msra.mxu0 0.0
        %4495 = vmatprep.subr.mxu0 0.0
        %4496 = vmatpush1.msra.mxu0 0.0
        %4497 = vmatprep.subr.mxu0 0.0
        %4498 = vmatpush1.msra.mxu0 0.0
        %4499 = vmatprep.subr.mxu0 0.0
        %4500 = vmatpush1.msra.mxu0 0.0
        %4501 = vmatprep.subr.mxu0 0.0
        %4502 = vmatpush1.msra.mxu0 0.0
        %4503 = vmatprep.subr.mxu0 0.0
        %4504 = vmatpush1.msra.mxu0 0.0
        %4505 = vmatprep.subr.mxu0 0.0
        %4506 = vmatpush1.msra.mxu0 0.0
        %4507 = vmatprep.subr.mxu0 0.0
        %4508 = vmatpush1.msra.mxu0 0.0
        %4509 = vmatprep.subr.mxu0 0.0
        %4510 = vmatpush1.msra.mxu0 0.0
        %4511 = vmatprep.subr.mxu0 0.0
        %4512 = vmatpush1.msra.mxu0 0.0
        %4513 = vmatprep.subr.mxu0 0.0
        %4514 = vmatpush1.msra.mxu0 0.0
        %4515 = vmatprep.subr.mxu0 0.0
        %4516 = vmatpush1.msra.mxu0 0.0
        %4517 = vmatprep.subr.mxu0 0.0
        %4518 = vmatpush1.msra.mxu0 0.0
        %4519 = vmatprep.subr.mxu0 0.0
        %4520 = vmatpush1.msra.mxu0 0.0
        %4521 = vmatprep.subr.mxu0 0.0
        %4522 = vmatpush1.msra.mxu0 0.0
        %4523 = vmatprep.subr.mxu0 0.0
        %4524 = vmatpush1.msra.mxu0 0.0
        %4525 = vmatprep.subr.mxu0 0.0
        %4526 = vmatpush1.msra.mxu0 0.0
        %4527 = vmatprep.subr.mxu0 0.0
        %4528 = vmatpush1.msra.mxu0 0.0
        %4529 = vmatprep.subr.mxu0 0.0
        %4530 = vmatpush1.msra.mxu0 0.0
        %4531 = vmatprep.mubr.f32.mxu0 0.0
        %4532 = vmatmul.mubr.f32.gmra.mrb[0].mxu0 %v4465
        %v4533 = vpop.f32.mrb[0].mxu0
        %v4534 = vadd.f32 0.0, %v4533
        %v4535 = vpop.f32.mrb[0].mxu0
        %4536 = vdwg.mxu0
        %v4537 = vadd.f32 %v4458, %v4534
        %s4538 = scalar_lea.vmem %s7, 128
        %v4539 = vld [vmem:[%s4538] sm:$0xff]
        %v4540 = vld [vmem:[%s4538 + $0x8] sm:$0xff]
        %v4541 = vld [vmem:[%s4538 + $0x10] sm:$0xff]
        %v4542 = vld [vmem:[%s4538 + $0x18] sm:$0xff]
        %v4543 = vrot.slane %v4222, 1
        %v4544 = vsel %vm494, %v4543, 0
        %4546 = vmatprep.subr.mxu0 0.0
        %4547 = vmatpush1.msra.mxu0 %v4539
        %4548 = vmatprep.subr.mxu0 0.0
        %4549 = vmatpush1.msra.mxu0 %v4540
        %4550 = vmatprep.subr.mxu0 0.0
        %4551 = vmatpush1.msra.mxu0 %v4541
        %4552 = vmatprep.subr.mxu0 0.0
        %4553 = vmatpush1.msra.mxu0 %v4542
        %4554 = vmatprep.subr.mxu0 0.0
        %4555 = vmatpush1.msra.mxu0 0.0
        %4556 = vmatprep.subr.mxu0 0.0
        %4557 = vmatpush1.msra.mxu0 0.0
        %4558 = vmatprep.subr.mxu0 0.0
        %4559 = vmatpush1.msra.mxu0 0.0
        %4560 = vmatprep.subr.mxu0 0.0
        %4561 = vmatpush1.msra.mxu0 0.0
        %4562 = vmatprep.subr.mxu0 0.0
        %4563 = vmatpush1.msra.mxu0 0.0
        %4564 = vmatprep.subr.mxu0 0.0
        %4565 = vmatpush1.msra.mxu0 0.0
        %4566 = vmatprep.subr.mxu0 0.0
        %4567 = vmatpush1.msra.mxu0 0.0
        %4568 = vmatprep.subr.mxu0 0.0
        %4569 = vmatpush1.msra.mxu0 0.0
        %4570 = vmatprep.subr.mxu0 0.0
        %4571 = vmatpush1.msra.mxu0 0.0
        %4572 = vmatprep.subr.mxu0 0.0
        %4573 = vmatpush1.msra.mxu0 0.0
        %4574 = vmatprep.subr.mxu0 0.0
        %4575 = vmatpush1.msra.mxu0 0.0
        %4576 = vmatprep.subr.mxu0 0.0
        %4577 = vmatpush1.msra.mxu0 0.0
        %4578 = vmatprep.subr.mxu0 0.0
        %4579 = vmatpush1.msra.mxu0 0.0
        %4580 = vmatprep.subr.mxu0 0.0
        %4581 = vmatpush1.msra.mxu0 0.0
        %4582 = vmatprep.subr.mxu0 0.0
        %4583 = vmatpush1.msra.mxu0 0.0
        %4584 = vmatprep.subr.mxu0 0.0
        %4585 = vmatpush1.msra.mxu0 0.0
        %4586 = vmatprep.subr.mxu0 0.0
        %4587 = vmatpush1.msra.mxu0 0.0
        %4588 = vmatprep.subr.mxu0 0.0
        %4589 = vmatpush1.msra.mxu0 0.0
        %4590 = vmatprep.subr.mxu0 0.0
        %4591 = vmatpush1.msra.mxu0 0.0
        %4592 = vmatprep.subr.mxu0 0.0
        %4593 = vmatpush1.msra.mxu0 0.0
        %4594 = vmatprep.subr.mxu0 0.0
        %4595 = vmatpush1.msra.mxu0 0.0
        %4596 = vmatprep.subr.mxu0 0.0
        %4597 = vmatpush1.msra.mxu0 0.0
        %4598 = vmatprep.subr.mxu0 0.0
        %4599 = vmatpush1.msra.mxu0 0.0
        %4600 = vmatprep.subr.mxu0 0.0
        %4601 = vmatpush1.msra.mxu0 0.0
        %4602 = vmatprep.subr.mxu0 0.0
        %4603 = vmatpush1.msra.mxu0 0.0
        %4604 = vmatprep.subr.mxu0 0.0
        %4605 = vmatpush1.msra.mxu0 0.0
        %4606 = vmatprep.subr.mxu0 0.0
        %4607 = vmatpush1.msra.mxu0 0.0
        %4608 = vmatprep.subr.mxu0 0.0
        %4609 = vmatpush1.msra.mxu0 0.0
        %4610 = vmatprep.mubr.f32.mxu0 0.0
        %4611 = vmatmul.mubr.f32.gmra.mrb[0].mxu0 %v4544
        %v4612 = vpop.f32.mrb[0].mxu0
        %v4613 = vadd.f32 0.0, %v4612
        %v4614 = vpop.f32.mrb[0].mxu0
        %4615 = vdwg.mxu0
        %v4616 = vadd.f32 %v4537, %v4613
        %s4617 = scalar_lea.vmem %s7, 160
        %v4618 = vld [vmem:[%s4617] sm:$0xff]
        %v4619 = vld [vmem:[%s4617 + $0x8] sm:$0xff]
        %v4620 = vld [vmem:[%s4617 + $0x10] sm:$0xff]
        %v4621 = vld [vmem:[%s4617 + $0x18] sm:$0xff]
        %v4622 = vrot.slane %v4222, 2
        %v4623 = vsel %vm494, %v4622, 0
        %4625 = vmatprep.subr.mxu0 0.0
        %4626 = vmatpush1.msra.mxu0 %v4618
        %4627 = vmatprep.subr.mxu0 0.0
        %4628 = vmatpush1.msra.mxu0 %v4619
        %4629 = vmatprep.subr.mxu0 0.0
        %4630 = vmatpush1.msra.mxu0 %v4620
        %4631 = vmatprep.subr.mxu0 0.0
        %4632 = vmatpush1.msra.mxu0 %v4621
        %4633 = vmatprep.subr.mxu0 0.0
        %4634 = vmatpush1.msra.mxu0 0.0
        %4635 = vmatprep.subr.mxu0 0.0
        %4636 = vmatpush1.msra.mxu0 0.0
        %4637 = vmatprep.subr.mxu0 0.0
        %4638 = vmatpush1.msra.mxu0 0.0
        %4639 = vmatprep.subr.mxu0 0.0
        %4640 = vmatpush1.msra.mxu0 0.0
        %4641 = vmatprep.subr.mxu0 0.0
        %4642 = vmatpush1.msra.mxu0 0.0
        %4643 = vmatprep.subr.mxu0 0.0
        %4644 = vmatpush1.msra.mxu0 0.0
        %4645 = vmatprep.subr.mxu0 0.0
        %4646 = vmatpush1.msra.mxu0 0.0
        %4647 = vmatprep.subr.mxu0 0.0
        %4648 = vmatpush1.msra.mxu0 0.0
        %4649 = vmatprep.subr.mxu0 0.0
        %4650 = vmatpush1.msra.mxu0 0.0
        %4651 = vmatprep.subr.mxu0 0.0
        %4652 = vmatpush1.msra.mxu0 0.0
        %4653 = vmatprep.subr.mxu0 0.0
        %4654 = vmatpush1.msra.mxu0 0.0
        %4655 = vmatprep.subr.mxu0 0.0
        %4656 = vmatpush1.msra.mxu0 0.0
        %4657 = vmatprep.subr.mxu0 0.0
        %4658 = vmatpush1.msra.mxu0 0.0
        %4659 = vmatprep.subr.mxu0 0.0
        %4660 = vmatpush1.msra.mxu0 0.0
        %4661 = vmatprep.subr.mxu0 0.0
        %4662 = vmatpush1.msra.mxu0 0.0
        %4663 = vmatprep.subr.mxu0 0.0
        %4664 = vmatpush1.msra.mxu0 0.0
        %4665 = vmatprep.subr.mxu0 0.0
        %4666 = vmatpush1.msra.mxu0 0.0
        %4667 = vmatprep.subr.mxu0 0.0
        %4668 = vmatpush1.msra.mxu0 0.0
        %4669 = vmatprep.subr.mxu0 0.0
        %4670 = vmatpush1.msra.mxu0 0.0
        %4671 = vmatprep.subr.mxu0 0.0
        %4672 = vmatpush1.msra.mxu0 0.0
        %4673 = vmatprep.subr.mxu0 0.0
        %4674 = vmatpush1.msra.mxu0 0.0
        %4675 = vmatprep.subr.mxu0 0.0
        %4676 = vmatpush1.msra.mxu0 0.0
        %4677 = vmatprep.subr.mxu0 0.0
        %4678 = vmatpush1.msra.mxu0 0.0
        %4679 = vmatprep.subr.mxu0 0.0
        %4680 = vmatpush1.msra.mxu0 0.0
        %4681 = vmatprep.subr.mxu0 0.0
        %4682 = vmatpush1.msra.mxu0 0.0
        %4683 = vmatprep.subr.mxu0 0.0
        %4684 = vmatpush1.msra.mxu0 0.0
        %4685 = vmatprep.subr.mxu0 0.0
        %4686 = vmatpush1.msra.mxu0 0.0
        %4687 = vmatprep.subr.mxu0 0.0
        %4688 = vmatpush1.msra.mxu0 0.0
        %4689 = vmatprep.mubr.f32.mxu0 0.0
        %4690 = vmatmul.mubr.f32.gmra.mrb[0].mxu0 %v4623
        %v4691 = vpop.f32.mrb[0].mxu0
        %v4692 = vadd.f32 0.0, %v4691
        %v4693 = vpop.f32.mrb[0].mxu0
        %4694 = vdwg.mxu0
        %v4695 = vadd.f32 %v4616, %v4692
        %s4696 = scalar_lea.vmem %s7, 192
        %v4697 = vld [vmem:[%s4696] sm:$0xff]
        %v4698 = vld [vmem:[%s4696 + $0x8] sm:$0xff]
        %v4699 = vld [vmem:[%s4696 + $0x10] sm:$0xff]
        %v4700 = vld [vmem:[%s4696 + $0x18] sm:$0xff]
        %v4702 = vsel %vm494, %v4224, 0
        %4704 = vmatprep.subr.mxu0 0.0
        %4705 = vmatpush1.msra.mxu0 %v4697
        %4706 = vmatprep.subr.mxu0 0.0
        %4707 = vmatpush1.msra.mxu0 %v4698
        %4708 = vmatprep.subr.mxu0 0.0
        %4709 = vmatpush1.msra.mxu0 %v4699
        %4710 = vmatprep.subr.mxu0 0.0
        %4711 = vmatpush1.msra.mxu0 %v4700
        %4712 = vmatprep.subr.mxu0 0.0
        %4713 = vmatpush1.msra.mxu0 0.0
        %4714 = vmatprep.subr.mxu0 0.0
        %4715 = vmatpush1.msra.mxu0 0.0
        %4716 = vmatprep.subr.mxu0 0.0
        %4717 = vmatpush1.msra.mxu0 0.0
        %4718 = vmatprep.subr.mxu0 0.0
        %4719 = vmatpush1.msra.mxu0 0.0
        %4720 = vmatprep.subr.mxu0 0.0
        %4721 = vmatpush1.msra.mxu0 0.0
        %4722 = vmatprep.subr.mxu0 0.0
        %4723 = vmatpush1.msra.mxu0 0.0
        %4724 = vmatprep.subr.mxu0 0.0
        %4725 = vmatpush1.msra.mxu0 0.0
        %4726 = vmatprep.subr.mxu0 0.0
        %4727 = vmatpush1.msra.mxu0 0.0
        %4728 = vmatprep.subr.mxu0 0.0
        %4729 = vmatpush1.msra.mxu0 0.0
        %4730 = vmatprep.subr.mxu0 0.0
        %4731 = vmatpush1.msra.mxu0 0.0
        %4732 = vmatprep.subr.mxu0 0.0
        %4733 = vmatpush1.msra.mxu0 0.0
        %4734 = vmatprep.subr.mxu0 0.0
        %4735 = vmatpush1.msra.mxu0 0.0
        %4736 = vmatprep.subr.mxu0 0.0
        %4737 = vmatpush1.msra.mxu0 0.0
        %4738 = vmatprep.subr.mxu0 0.0
        %4739 = vmatpush1.msra.mxu0 0.0
        %4740 = vmatprep.subr.mxu0 0.0
        %4741 = vmatpush1.msra.mxu0 0.0
        %4742 = vmatprep.subr.mxu0 0.0
        %4743 = vmatpush1.msra.mxu0 0.0
        %4744 = vmatprep.subr.mxu0 0.0
        %4745 = vmatpush1.msra.mxu0 0.0
        %4746 = vmatprep.subr.mxu0 0.0
        %4747 = vmatpush1.msra.mxu0 0.0
        %4748 = vmatprep.subr.mxu0 0.0
        %4749 = vmatpush1.msra.mxu0 0.0
        %4750 = vmatprep.subr.mxu0 0.0
        %4751 = vmatpush1.msra.mxu0 0.0
        %4752 = vmatprep.subr.mxu0 0.0
        %4753 = vmatpush1.msra.mxu0 0.0
        %4754 = vmatprep.subr.mxu0 0.0
        %4755 = vmatpush1.msra.mxu0 0.0
        %4756 = vmatprep.subr.mxu0 0.0
        %4757 = vmatpush1.msra.mxu0 0.0
        %4758 = vmatprep.subr.mxu0 0.0
        %4759 = vmatpush1.msra.mxu0 0.0
        %4760 = vmatprep.subr.mxu0 0.0
        %4761 = vmatpush1.msra.mxu0 0.0
        %4762 = vmatprep.subr.mxu0 0.0
        %4763 = vmatpush1.msra.mxu0 0.0
        %4764 = vmatprep.subr.mxu0 0.0
        %4765 = vmatpush1.msra.mxu0 0.0
        %4766 = vmatprep.subr.mxu0 0.0
        %4767 = vmatpush1.msra.mxu0 0.0
        %4768 = vmatprep.mubr.f32.mxu0 0.0
        %4769 = vmatmul.mubr.f32.gmra.mrb[0].mxu0 %v4702
        %v4770 = vpop.f32.mrb[0].mxu0
        %v4771 = vadd.f32 0.0, %v4770
        %v4772 = vpop.f32.mrb[0].mxu0
        %4773 = vdwg.mxu0
        %v4774 = vadd.f32 %v4695, %v4771
        %s4775 = scalar_lea.vmem %s7, 224
        %v4776 = vld [vmem:[%s4775] sm:$0xff]
        %v4777 = vld [vmem:[%s4775 + $0x8] sm:$0xff]
        %v4778 = vld [vmem:[%s4775 + $0x10] sm:$0xff]
        %v4779 = vld [vmem:[%s4775 + $0x18] sm:$0xff]
        %v4780 = vrot.slane %v4224, 1
        %v4781 = vsel %vm494, %v4780, 0
        %4783 = vmatprep.subr.mxu0 0.0
        %4784 = vmatpush1.msra.mxu0 %v4776
        %4785 = vmatprep.subr.mxu0 0.0
        %4786 = vmatpush1.msra.mxu0 %v4777
        %4787 = vmatprep.subr.mxu0 0.0
        %4788 = vmatpush1.msra.mxu0 %v4778
        %4789 = vmatprep.subr.mxu0 0.0
        %4790 = vmatpush1.msra.mxu0 %v4779
        %4791 = vmatprep.subr.mxu0 0.0
        %4792 = vmatpush1.msra.mxu0 0.0
        %4793 = vmatprep.subr.mxu0 0.0
        %4794 = vmatpush1.msra.mxu0 0.0
        %4795 = vmatprep.subr.mxu0 0.0
        %4796 = vmatpush1.msra.mxu0 0.0
        %4797 = vmatprep.subr.mxu0 0.0
        %4798 = vmatpush1.msra.mxu0 0.0
        %4799 = vmatprep.subr.mxu0 0.0
        %4800 = vmatpush1.msra.mxu0 0.0
        %4801 = vmatprep.subr.mxu0 0.0
        %4802 = vmatpush1.msra.mxu0 0.0
        %4803 = vmatprep.subr.mxu0 0.0
        %4804 = vmatpush1.msra.mxu0 0.0
        %4805 = vmatprep.subr.mxu0 0.0
        %4806 = vmatpush1.msra.mxu0 0.0
        %4807 = vmatprep.subr.mxu0 0.0
        %4808 = vmatpush1.msra.mxu0 0.0
        %4809 = vmatprep.subr.mxu0 0.0
        %4810 = vmatpush1.msra.mxu0 0.0
        %4811 = vmatprep.subr.mxu0 0.0
        %4812 = vmatpush1.msra.mxu0 0.0
        %4813 = vmatprep.subr.mxu0 0.0
        %4814 = vmatpush1.msra.mxu0 0.0
        %4815 = vmatprep.subr.mxu0 0.0
        %4816 = vmatpush1.msra.mxu0 0.0
        %4817 = vmatprep.subr.mxu0 0.0
        %4818 = vmatpush1.msra.mxu0 0.0
        %4819 = vmatprep.subr.mxu0 0.0
        %4820 = vmatpush1.msra.mxu0 0.0
        %4821 = vmatprep.subr.mxu0 0.0
        %4822 = vmatpush1.msra.mxu0 0.0
        %4823 = vmatprep.subr.mxu0 0.0
        %4824 = vmatpush1.msra.mxu0 0.0
        %4825 = vmatprep.subr.mxu0 0.0
        %4826 = vmatpush1.msra.mxu0 0.0
        %4827 = vmatprep.subr.mxu0 0.0
        %4828 = vmatpush1.msra.mxu0 0.0
        %4829 = vmatprep.subr.mxu0 0.0
        %4830 = vmatpush1.msra.mxu0 0.0
        %4831 = vmatprep.subr.mxu0 0.0
        %4832 = vmatpush1.msra.mxu0 0.0
        %4833 = vmatprep.subr.mxu0 0.0
        %4834 = vmatpush1.msra.mxu0 0.0
        %4835 = vmatprep.subr.mxu0 0.0
        %4836 = vmatpush1.msra.mxu0 0.0
        %4837 = vmatprep.subr.mxu0 0.0
        %4838 = vmatpush1.msra.mxu0 0.0
        %4839 = vmatprep.subr.mxu0 0.0
        %4840 = vmatpush1.msra.mxu0 0.0
        %4841 = vmatprep.subr.mxu0 0.0
        %4842 = vmatpush1.msra.mxu0 0.0
        %4843 = vmatprep.subr.mxu0 0.0
        %4844 = vmatpush1.msra.mxu0 0.0
        %4845 = vmatprep.subr.mxu0 0.0
        %4846 = vmatpush1.msra.mxu0 0.0
        %4847 = vmatprep.mubr.f32.mxu0 0.0
        %4848 = vmatmul.mubr.f32.gmra.mrb[0].mxu0 %v4781
        %v4849 = vpop.f32.mrb[0].mxu0
        %v4850 = vadd.f32 0.0, %v4849
        %v4851 = vpop.f32.mrb[0].mxu0
        %4852 = vdwg.mxu0
        %v4853 = vadd.f32 %v4774, %v4850
        %s4854 = scalar_lea.vmem %s7, 256
        %v4855 = vld [vmem:[%s4854] sm:$0xff]
        %v4856 = vld [vmem:[%s4854 + $0x8] sm:$0xff]
        %v4857 = vld [vmem:[%s4854 + $0x10] sm:$0xff]
        %v4858 = vld [vmem:[%s4854 + $0x18] sm:$0xff]
        %v4859 = vrot.slane %v4224, 2
        %v4860 = vsel %vm494, %v4859, 0
        %4862 = vmatprep.subr.mxu0 0.0
        %4863 = vmatpush1.msra.mxu0 %v4855
        %4864 = vmatprep.subr.mxu0 0.0
        %4865 = vmatpush1.msra.mxu0 %v4856
        %4866 = vmatprep.subr.mxu0 0.0
        %4867 = vmatpush1.msra.mxu0 %v4857
        %4868 = vmatprep.subr.mxu0 0.0
        %4869 = vmatpush1.msra.mxu0 %v4858
        %4870 = vmatprep.subr.mxu0 0.0
        %4871 = vmatpush1.msra.mxu0 0.0
        %4872 = vmatprep.subr.mxu0 0.0
        %4873 = vmatpush1.msra.mxu0 0.0
        %4874 = vmatprep.subr.mxu0 0.0
        %4875 = vmatpush1.msra.mxu0 0.0
        %4876 = vmatprep.subr.mxu0 0.0
        %4877 = vmatpush1.msra.mxu0 0.0
        %4878 = vmatprep.subr.mxu0 0.0
        %4879 = vmatpush1.msra.mxu0 0.0
        %4880 = vmatprep.subr.mxu0 0.0
        %4881 = vmatpush1.msra.mxu0 0.0
        %4882 = vmatprep.subr.mxu0 0.0
        %4883 = vmatpush1.msra.mxu0 0.0
        %4884 = vmatprep.subr.mxu0 0.0
        %4885 = vmatpush1.msra.mxu0 0.0
        %4886 = vmatprep.subr.mxu0 0.0
        %4887 = vmatpush1.msra.mxu0 0.0
        %4888 = vmatprep.subr.mxu0 0.0
        %4889 = vmatpush1.msra.mxu0 0.0
        %4890 = vmatprep.subr.mxu0 0.0
        %4891 = vmatpush1.msra.mxu0 0.0
        %4892 = vmatprep.subr.mxu0 0.0
        %4893 = vmatpush1.msra.mxu0 0.0
        %4894 = vmatprep.subr.mxu0 0.0
        %4895 = vmatpush1.msra.mxu0 0.0
        %4896 = vmatprep.subr.mxu0 0.0
        %4897 = vmatpush1.msra.mxu0 0.0
        %4898 = vmatprep.subr.mxu0 0.0
        %4899 = vmatpush1.msra.mxu0 0.0
        %4900 = vmatprep.subr.mxu0 0.0
        %4901 = vmatpush1.msra.mxu0 0.0
        %4902 = vmatprep.subr.mxu0 0.0
        %4903 = vmatpush1.msra.mxu0 0.0
        %4904 = vmatprep.subr.mxu0 0.0
        %4905 = vmatpush1.msra.mxu0 0.0
        %4906 = vmatprep.subr.mxu0 0.0
        %4907 = vmatpush1.msra.mxu0 0.0
        %4908 = vmatprep.subr.mxu0 0.0
        %4909 = vmatpush1.msra.mxu0 0.0
        %4910 = vmatprep.subr.mxu0 0.0
        %4911 = vmatpush1.msra.mxu0 0.0
        %4912 = vmatprep.subr.mxu0 0.0
        %4913 = vmatpush1.msra.mxu0 0.0
        %4914 = vmatprep.subr.mxu0 0.0
        %4915 = vmatpush1.msra.mxu0 0.0
        %4916 = vmatprep.subr.mxu0 0.0
        %4917 = vmatpush1.msra.mxu0 0.0
        %4918 = vmatprep.subr.mxu0 0.0
        %4919 = vmatpush1.msra.mxu0 0.0
        %4920 = vmatprep.subr.mxu0 0.0
        %4921 = vmatpush1.msra.mxu0 0.0
        %4922 = vmatprep.subr.mxu0 0.0
        %4923 = vmatpush1.msra.mxu0 0.0
        %4924 = vmatprep.subr.mxu0 0.0
        %4925 = vmatpush1.msra.mxu0 0.0
        %4926 = vmatprep.mubr.f32.mxu0 0.0
        %4927 = vmatmul.mubr.f32.gmra.mrb[0].mxu0 %v4860
        %v4928 = vpop.f32.mrb[0].mxu0
        %v4929 = vadd.f32 0.0, %v4928
        %v4930 = vpop.f32.mrb[0].mxu0
        %4931 = vdwg.mxu0
        %v4932 = vadd.f32 %v4853, %v4929
        %s4933 = scalar_lea.vmem [#allocation4], 24
        %v4934 = vld [vmem:[%s4933] sm:$0x3f]
        %4935 = vmatprep.subr.mxu0 0.0
        %4936 = vmatpush1.msra.mxu0 %v4230
        %4937 = vmatprep.subr.mxu0 0.0
        %4938 = vmatpush1.msra.mxu0 %v4231
        %4939 = vmatprep.subr.mxu0 0.0
        %4940 = vmatpush1.msra.mxu0 %v4232
        %4941 = vmatprep.subr.mxu0 0.0
        %4942 = vmatpush1.msra.mxu0 %v4233
        %4943 = vmatprep.subr.mxu0 0.0
        %4944 = vmatpush1.msra.mxu0 0.0
        %4945 = vmatprep.subr.mxu0 0.0
        %4946 = vmatpush1.msra.mxu0 0.0
        %4947 = vmatprep.subr.mxu0 0.0
        %4948 = vmatpush1.msra.mxu0 0.0
        %4949 = vmatprep.subr.mxu0 0.0
        %4950 = vmatpush1.msra.mxu0 0.0
        %4951 = vmatprep.subr.mxu0 0.0
        %4952 = vmatpush1.msra.mxu0 0.0
        %4953 = vmatprep.subr.mxu0 0.0
        %4954 = vmatpush1.msra.mxu0 0.0
        %4955 = vmatprep.subr.mxu0 0.0
        %4956 = vmatpush1.msra.mxu0 0.0
        %4957 = vmatprep.subr.mxu0 0.0
        %4958 = vmatpush1.msra.mxu0 0.0
        %4959 = vmatprep.subr.mxu0 0.0
        %4960 = vmatpush1.msra.mxu0 0.0
        %4961 = vmatprep.subr.mxu0 0.0
        %4962 = vmatpush1.msra.mxu0 0.0
        %4963 = vmatprep.subr.mxu0 0.0
        %4964 = vmatpush1.msra.mxu0 0.0
        %4965 = vmatprep.subr.mxu0 0.0
        %4966 = vmatpush1.msra.mxu0 0.0
        %4967 = vmatprep.subr.mxu0 0.0
        %4968 = vmatpush1.msra.mxu0 0.0
        %4969 = vmatprep.subr.mxu0 0.0
        %4970 = vmatpush1.msra.mxu0 0.0
        %4971 = vmatprep.subr.mxu0 0.0
        %4972 = vmatpush1.msra.mxu0 0.0
        %4973 = vmatprep.subr.mxu0 0.0
        %4974 = vmatpush1.msra.mxu0 0.0
        %4975 = vmatprep.subr.mxu0 0.0
        %4976 = vmatpush1.msra.mxu0 0.0
        %4977 = vmatprep.subr.mxu0 0.0
        %4978 = vmatpush1.msra.mxu0 0.0
        %4979 = vmatprep.subr.mxu0 0.0
        %4980 = vmatpush1.msra.mxu0 0.0
        %4981 = vmatprep.subr.mxu0 0.0
        %4982 = vmatpush1.msra.mxu0 0.0
        %4983 = vmatprep.subr.mxu0 0.0
        %4984 = vmatpush1.msra.mxu0 0.0
        %4985 = vmatprep.subr.mxu0 0.0
        %4986 = vmatpush1.msra.mxu0 0.0
        %4987 = vmatprep.subr.mxu0 0.0
        %4988 = vmatpush1.msra.mxu0 0.0
        %4989 = vmatprep.subr.mxu0 0.0
        %4990 = vmatpush1.msra.mxu0 0.0
        %4991 = vmatprep.subr.mxu0 0.0
        %4992 = vmatpush1.msra.mxu0 0.0
        %4993 = vmatprep.subr.mxu0 0.0
        %4994 = vmatpush1.msra.mxu0 0.0
        %4995 = vmatprep.subr.mxu0 0.0
        %4996 = vmatpush1.msra.mxu0 0.0
        %4997 = vmatprep.subr.mxu0 0.0
        %4998 = vmatpush1.msra.mxu0 0.0
        %4999 = vmatprep.mubr.f32.mxu0 0.0
        %5000 = vmatmul.mubr.f32.gmra.mrb[0].mxu0 %v4544
        %v5001 = vpop.f32.mrb[0].mxu0
        %v5002 = vadd.f32 0.0, %v5001
        %v5003 = vpop.f32.mrb[0].mxu0
        %5004 = vdwg.mxu0
        %5005 = vmatprep.subr.mxu0 0.0
        %5006 = vmatpush1.msra.mxu0 %v4225
        %5007 = vmatprep.subr.mxu0 0.0
        %5008 = vmatpush1.msra.mxu0 %v4226
        %5009 = vmatprep.subr.mxu0 0.0
        %5010 = vmatpush1.msra.mxu0 %v4227
        %5011 = vmatprep.subr.mxu0 0.0
        %5012 = vmatpush1.msra.mxu0 %v4228
        %5013 = vmatprep.subr.mxu0 0.0
        %5014 = vmatpush1.msra.mxu0 0.0
        %5015 = vmatprep.subr.mxu0 0.0
        %5016 = vmatpush1.msra.mxu0 0.0
        %5017 = vmatprep.subr.mxu0 0.0
        %5018 = vmatpush1.msra.mxu0 0.0
        %5019 = vmatprep.subr.mxu0 0.0
        %5020 = vmatpush1.msra.mxu0 0.0
        %5021 = vmatprep.subr.mxu0 0.0
        %5022 = vmatpush1.msra.mxu0 0.0
        %5023 = vmatprep.subr.mxu0 0.0
        %5024 = vmatpush1.msra.mxu0 0.0
        %5025 = vmatprep.subr.mxu0 0.0
        %5026 = vmatpush1.msra.mxu0 0.0
        %5027 = vmatprep.subr.mxu0 0.0
        %5028 = vmatpush1.msra.mxu0 0.0
        %5029 = vmatprep.subr.mxu0 0.0
        %5030 = vmatpush1.msra.mxu0 0.0
        %5031 = vmatprep.subr.mxu0 0.0
        %5032 = vmatpush1.msra.mxu0 0.0
        %5033 = vmatprep.subr.mxu0 0.0
        %5034 = vmatpush1.msra.mxu0 0.0
        %5035 = vmatprep.subr.mxu0 0.0
        %5036 = vmatpush1.msra.mxu0 0.0
        %5037 = vmatprep.subr.mxu0 0.0
        %5038 = vmatpush1.msra.mxu0 0.0
        %5039 = vmatprep.subr.mxu0 0.0
        %5040 = vmatpush1.msra.mxu0 0.0
        %5041 = vmatprep.subr.mxu0 0.0
        %5042 = vmatpush1.msra.mxu0 0.0
        %5043 = vmatprep.subr.mxu0 0.0
        %5044 = vmatpush1.msra.mxu0 0.0
        %5045 = vmatprep.subr.mxu0 0.0
        %5046 = vmatpush1.msra.mxu0 0.0
        %5047 = vmatprep.subr.mxu0 0.0
        %5048 = vmatpush1.msra.mxu0 0.0
        %5049 = vmatprep.subr.mxu0 0.0
        %5050 = vmatpush1.msra.mxu0 0.0
        %5051 = vmatprep.subr.mxu0 0.0
        %5052 = vmatpush1.msra.mxu0 0.0
        %5053 = vmatprep.subr.mxu0 0.0
        %5054 = vmatpush1.msra.mxu0 0.0
        %5055 = vmatprep.subr.mxu0 0.0
        %5056 = vmatpush1.msra.mxu0 0.0
        %5057 = vmatprep.subr.mxu0 0.0
        %5058 = vmatpush1.msra.mxu0 0.0
        %5059 = vmatprep.subr.mxu0 0.0
        %5060 = vmatpush1.msra.mxu0 0.0
        %5061 = vmatprep.subr.mxu0 0.0
        %5062 = vmatpush1.msra.mxu0 0.0
        %5063 = vmatprep.subr.mxu0 0.0
        %5064 = vmatpush1.msra.mxu0 0.0
        %5065 = vmatprep.subr.mxu0 0.0
        %5066 = vmatpush1.msra.mxu0 0.0
        %5067 = vmatprep.subr.mxu0 0.0
        %5068 = vmatpush1.msra.mxu0 0.0
        %5069 = vmatprep.mubr.f32.mxu0 0.0
        %5070 = vmatmul.mubr.f32.gmra.mrb[0].mxu0 %v4465
        %v5071 = vpop.f32.mrb[0].mxu0
        %v5072 = vadd.f32 %v5002, %v5071
        %v5073 = vpop.f32.mrb[0].mxu0
        %5074 = vdwg.mxu0
        %5075 = vmatprep.subr.mxu0 0.0
        %5076 = vmatpush1.msra.mxu0 %v4381
        %5077 = vmatprep.subr.mxu0 0.0
        %5078 = vmatpush1.msra.mxu0 %v4382
        %5079 = vmatprep.subr.mxu0 0.0
        %5080 = vmatpush1.msra.mxu0 %v4383
        %5081 = vmatprep.subr.mxu0 0.0
        %5082 = vmatpush1.msra.mxu0 %v4384
        %5083 = vmatprep.subr.mxu0 0.0
        %5084 = vmatpush1.msra.mxu0 0.0
        %5085 = vmatprep.subr.mxu0 0.0
        %5086 = vmatpush1.msra.mxu0 0.0
        %5087 = vmatprep.subr.mxu0 0.0
        %5088 = vmatpush1.msra.mxu0 0.0
        %5089 = vmatprep.subr.mxu0 0.0
        %5090 = vmatpush1.msra.mxu0 0.0
        %5091 = vmatprep.subr.mxu0 0.0
        %5092 = vmatpush1.msra.mxu0 0.0
        %5093 = vmatprep.subr.mxu0 0.0
        %5094 = vmatpush1.msra.mxu0 0.0
        %5095 = vmatprep.subr.mxu0 0.0
        %5096 = vmatpush1.msra.mxu0 0.0
        %5097 = vmatprep.subr.mxu0 0.0
        %5098 = vmatpush1.msra.mxu0 0.0
        %5099 = vmatprep.subr.mxu0 0.0
        %5100 = vmatpush1.msra.mxu0 0.0
        %5101 = vmatprep.subr.mxu0 0.0
        %5102 = vmatpush1.msra.mxu0 0.0
        %5103 = vmatprep.subr.mxu0 0.0
        %5104 = vmatpush1.msra.mxu0 0.0
        %5105 = vmatprep.subr.mxu0 0.0
        %5106 = vmatpush1.msra.mxu0 0.0
        %5107 = vmatprep.subr.mxu0 0.0
        %5108 = vmatpush1.msra.mxu0 0.0
        %5109 = vmatprep.subr.mxu0 0.0
        %5110 = vmatpush1.msra.mxu0 0.0
        %5111 = vmatprep.subr.mxu0 0.0
        %5112 = vmatpush1.msra.mxu0 0.0
        %5113 = vmatprep.subr.mxu0 0.0
        %5114 = vmatpush1.msra.mxu0 0.0
        %5115 = vmatprep.subr.mxu0 0.0
        %5116 = vmatpush1.msra.mxu0 0.0
        %5117 = vmatprep.subr.mxu0 0.0
        %5118 = vmatpush1.msra.mxu0 0.0
        %5119 = vmatprep.subr.mxu0 0.0
        %5120 = vmatpush1.msra.mxu0 0.0
        %5121 = vmatprep.subr.mxu0 0.0
        %5122 = vmatpush1.msra.mxu0 0.0
        %5123 = vmatprep.subr.mxu0 0.0
        %5124 = vmatpush1.msra.mxu0 0.0
        %5125 = vmatprep.subr.mxu0 0.0
        %5126 = vmatpush1.msra.mxu0 0.0
        %5127 = vmatprep.subr.mxu0 0.0
        %5128 = vmatpush1.msra.mxu0 0.0
        %5129 = vmatprep.subr.mxu0 0.0
        %5130 = vmatpush1.msra.mxu0 0.0
        %5131 = vmatprep.subr.mxu0 0.0
        %5132 = vmatpush1.msra.mxu0 0.0
        %5133 = vmatprep.subr.mxu0 0.0
        %5134 = vmatpush1.msra.mxu0 0.0
        %5135 = vmatprep.subr.mxu0 0.0
        %5136 = vmatpush1.msra.mxu0 0.0
        %5137 = vmatprep.subr.mxu0 0.0
        %5138 = vmatpush1.msra.mxu0 0.0
        %5139 = vmatprep.mubr.f32.mxu0 0.0
        %5140 = vmatmul.mubr.f32.gmra.mrb[0].mxu0 %v4623
        %v5141 = vpop.f32.mrb[0].mxu0
        %v5142 = vadd.f32 0.0, %v5141
        %v5143 = vpop.f32.mrb[0].mxu0
        %5144 = vdwg.mxu0
        %v5145 = vadd.f32 %v5072, %v5142
        %5146 = vmatprep.subr.mxu0 0.0
        %5147 = vmatpush1.msra.mxu0 %v4460
        %5148 = vmatprep.subr.mxu0 0.0
        %5149 = vmatpush1.msra.mxu0 %v4461
        %5150 = vmatprep.subr.mxu0 0.0
        %5151 = vmatpush1.msra.mxu0 %v4462
        %5152 = vmatprep.subr.mxu0 0.0
        %5153 = vmatpush1.msra.mxu0 %v4463
        %5154 = vmatprep.subr.mxu0 0.0
        %5155 = vmatpush1.msra.mxu0 0.0
        %5156 = vmatprep.subr.mxu0 0.0
        %5157 = vmatpush1.msra.mxu0 0.0
        %5158 = vmatprep.subr.mxu0 0.0
        %5159 = vmatpush1.msra.mxu0 0.0
        %5160 = vmatprep.subr.mxu0 0.0
        %5161 = vmatpush1.msra.mxu0 0.0
        %5162 = vmatprep.subr.mxu0 0.0
        %5163 = vmatpush1.msra.mxu0 0.0
        %5164 = vmatprep.subr.mxu0 0.0
        %5165 = vmatpush1.msra.mxu0 0.0
        %5166 = vmatprep.subr.mxu0 0.0
        %5167 = vmatpush1.msra.mxu0 0.0
        %5168 = vmatprep.subr.mxu0 0.0
        %5169 = vmatpush1.msra.mxu0 0.0
        %5170 = vmatprep.subr.mxu0 0.0
        %5171 = vmatpush1.msra.mxu0 0.0
        %5172 = vmatprep.subr.mxu0 0.0
        %5173 = vmatpush1.msra.mxu0 0.0
        %5174 = vmatprep.subr.mxu0 0.0
        %5175 = vmatpush1.msra.mxu0 0.0
        %5176 = vmatprep.subr.mxu0 0.0
        %5177 = vmatpush1.msra.mxu0 0.0
        %5178 = vmatprep.subr.mxu0 0.0
        %5179 = vmatpush1.msra.mxu0 0.0
        %5180 = vmatprep.subr.mxu0 0.0
        %5181 = vmatpush1.msra.mxu0 0.0
        %5182 = vmatprep.subr.mxu0 0.0
        %5183 = vmatpush1.msra.mxu0 0.0
        %5184 = vmatprep.subr.mxu0 0.0
        %5185 = vmatpush1.msra.mxu0 0.0
        %5186 = vmatprep.subr.mxu0 0.0
        %5187 = vmatpush1.msra.mxu0 0.0
        %5188 = vmatprep.subr.mxu0 0.0
        %5189 = vmatpush1.msra.mxu0 0.0
        %5190 = vmatprep.subr.mxu0 0.0
        %5191 = vmatpush1.msra.mxu0 0.0
        %5192 = vmatprep.subr.mxu0 0.0
        %5193 = vmatpush1.msra.mxu0 0.0
        %5194 = vmatprep.subr.mxu0 0.0
        %5195 = vmatpush1.msra.mxu0 0.0
        %5196 = vmatprep.subr.mxu0 0.0
        %5197 = vmatpush1.msra.mxu0 0.0
        %5198 = vmatprep.subr.mxu0 0.0
        %5199 = vmatpush1.msra.mxu0 0.0
        %5200 = vmatprep.subr.mxu0 0.0
        %5201 = vmatpush1.msra.mxu0 0.0
        %5202 = vmatprep.subr.mxu0 0.0
        %5203 = vmatpush1.msra.mxu0 0.0
        %5204 = vmatprep.subr.mxu0 0.0
        %5205 = vmatpush1.msra.mxu0 0.0
        %5206 = vmatprep.subr.mxu0 0.0
        %5207 = vmatpush1.msra.mxu0 0.0
        %5208 = vmatprep.subr.mxu0 0.0
        %5209 = vmatpush1.msra.mxu0 0.0
        %5210 = vmatprep.mubr.f32.mxu0 0.0
        %5211 = vmatmul.mubr.f32.gmra.mrb[0].mxu0 %v4702
        %v5212 = vpop.f32.mrb[0].mxu0
        %v5213 = vadd.f32 0.0, %v5212
        %v5214 = vpop.f32.mrb[0].mxu0
        %5215 = vdwg.mxu0
        %v5216 = vadd.f32 %v5145, %v5213
        %5217 = vmatprep.subr.mxu0 0.0
        %5218 = vmatpush1.msra.mxu0 %v4539
        %5219 = vmatprep.subr.mxu0 0.0
        %5220 = vmatpush1.msra.mxu0 %v4540
        %5221 = vmatprep.subr.mxu0 0.0
        %5222 = vmatpush1.msra.mxu0 %v4541
        %5223 = vmatprep.subr.mxu0 0.0
        %5224 = vmatpush1.msra.mxu0 %v4542
        %5225 = vmatprep.subr.mxu0 0.0
        %5226 = vmatpush1.msra.mxu0 0.0
        %5227 = vmatprep.subr.mxu0 0.0
        %5228 = vmatpush1.msra.mxu0 0.0
        %5229 = vmatprep.subr.mxu0 0.0
        %5230 = vmatpush1.msra.mxu0 0.0
        %5231 = vmatprep.subr.mxu0 0.0
        %5232 = vmatpush1.msra.mxu0 0.0
        %5233 = vmatprep.subr.mxu0 0.0
        %5234 = vmatpush1.msra.mxu0 0.0
        %5235 = vmatprep.subr.mxu0 0.0
        %5236 = vmatpush1.msra.mxu0 0.0
        %5237 = vmatprep.subr.mxu0 0.0
        %5238 = vmatpush1.msra.mxu0 0.0
        %5239 = vmatprep.subr.mxu0 0.0
        %5240 = vmatpush1.msra.mxu0 0.0
        %5241 = vmatprep.subr.mxu0 0.0
        %5242 = vmatpush1.msra.mxu0 0.0
        %5243 = vmatprep.subr.mxu0 0.0
        %5244 = vmatpush1.msra.mxu0 0.0
        %5245 = vmatprep.subr.mxu0 0.0
        %5246 = vmatpush1.msra.mxu0 0.0
        %5247 = vmatprep.subr.mxu0 0.0
        %5248 = vmatpush1.msra.mxu0 0.0
        %5249 = vmatprep.subr.mxu0 0.0
        %5250 = vmatpush1.msra.mxu0 0.0
        %5251 = vmatprep.subr.mxu0 0.0
        %5252 = vmatpush1.msra.mxu0 0.0
        %5253 = vmatprep.subr.mxu0 0.0
        %5254 = vmatpush1.msra.mxu0 0.0
        %5255 = vmatprep.subr.mxu0 0.0
        %5256 = vmatpush1.msra.mxu0 0.0
        %5257 = vmatprep.subr.mxu0 0.0
        %5258 = vmatpush1.msra.mxu0 0.0
        %5259 = vmatprep.subr.mxu0 0.0
        %5260 = vmatpush1.msra.mxu0 0.0
        %5261 = vmatprep.subr.mxu0 0.0
        %5262 = vmatpush1.msra.mxu0 0.0
        %5263 = vmatprep.subr.mxu0 0.0
        %5264 = vmatpush1.msra.mxu0 0.0
        %5265 = vmatprep.subr.mxu0 0.0
        %5266 = vmatpush1.msra.mxu0 0.0
        %5267 = vmatprep.subr.mxu0 0.0
        %5268 = vmatpush1.msra.mxu0 0.0
        %5269 = vmatprep.subr.mxu0 0.0
        %5270 = vmatpush1.msra.mxu0 0.0
        %5271 = vmatprep.subr.mxu0 0.0
        %5272 = vmatpush1.msra.mxu0 0.0
        %5273 = vmatprep.subr.mxu0 0.0
        %5274 = vmatpush1.msra.mxu0 0.0
        %5275 = vmatprep.subr.mxu0 0.0
        %5276 = vmatpush1.msra.mxu0 0.0
        %5277 = vmatprep.subr.mxu0 0.0
        %5278 = vmatpush1.msra.mxu0 0.0
        %5279 = vmatprep.subr.mxu0 0.0
        %5280 = vmatpush1.msra.mxu0 0.0
        %5281 = vmatprep.mubr.f32.mxu0 0.0
        %5282 = vmatmul.mubr.f32.gmra.mrb[0].mxu0 %v4781
        %v5283 = vpop.f32.mrb[0].mxu0
        %v5284 = vadd.f32 0.0, %v5283
        %v5285 = vpop.f32.mrb[0].mxu0
        %5286 = vdwg.mxu0
        %v5287 = vadd.f32 %v5216, %v5284
        %5288 = vmatprep.subr.mxu0 0.0
        %5289 = vmatpush1.msra.mxu0 %v4618
        %5290 = vmatprep.subr.mxu0 0.0
        %5291 = vmatpush1.msra.mxu0 %v4619
        %5292 = vmatprep.subr.mxu0 0.0
        %5293 = vmatpush1.msra.mxu0 %v4620
        %5294 = vmatprep.subr.mxu0 0.0
        %5295 = vmatpush1.msra.mxu0 %v4621
        %5296 = vmatprep.subr.mxu0 0.0
        %5297 = vmatpush1.msra.mxu0 0.0
        %5298 = vmatprep.subr.mxu0 0.0
        %5299 = vmatpush1.msra.mxu0 0.0
        %5300 = vmatprep.subr.mxu0 0.0
        %5301 = vmatpush1.msra.mxu0 0.0
        %5302 = vmatprep.subr.mxu0 0.0
        %5303 = vmatpush1.msra.mxu0 0.0
        %5304 = vmatprep.subr.mxu0 0.0
        %5305 = vmatpush1.msra.mxu0 0.0
        %5306 = vmatprep.subr.mxu0 0.0
        %5307 = vmatpush1.msra.mxu0 0.0
        %5308 = vmatprep.subr.mxu0 0.0
        %5309 = vmatpush1.msra.mxu0 0.0
        %5310 = vmatprep.subr.mxu0 0.0
        %5311 = vmatpush1.msra.mxu0 0.0
        %5312 = vmatprep.subr.mxu0 0.0
        %5313 = vmatpush1.msra.mxu0 0.0
        %5314 = vmatprep.subr.mxu0 0.0
        %5315 = vmatpush1.msra.mxu0 0.0
        %5316 = vmatprep.subr.mxu0 0.0
        %5317 = vmatpush1.msra.mxu0 0.0
        %5318 = vmatprep.subr.mxu0 0.0
        %5319 = vmatpush1.msra.mxu0 0.0
        %5320 = vmatprep.subr.mxu0 0.0
        %5321 = vmatpush1.msra.mxu0 0.0
        %5322 = vmatprep.subr.mxu0 0.0
        %5323 = vmatpush1.msra.mxu0 0.0
        %5324 = vmatprep.subr.mxu0 0.0
        %5325 = vmatpush1.msra.mxu0 0.0
        %5326 = vmatprep.subr.mxu0 0.0
        %5327 = vmatpush1.msra.mxu0 0.0
        %5328 = vmatprep.subr.mxu0 0.0
        %5329 = vmatpush1.msra.mxu0 0.0
        %5330 = vmatprep.subr.mxu0 0.0
        %5331 = vmatpush1.msra.mxu0 0.0
        %5332 = vmatprep.subr.mxu0 0.0
        %5333 = vmatpush1.msra.mxu0 0.0
        %5334 = vmatprep.subr.mxu0 0.0
        %5335 = vmatpush1.msra.mxu0 0.0
        %5336 = vmatprep.subr.mxu0 0.0
        %5337 = vmatpush1.msra.mxu0 0.0
        %5338 = vmatprep.subr.mxu0 0.0
        %5339 = vmatpush1.msra.mxu0 0.0
        %5340 = vmatprep.subr.mxu0 0.0
        %5341 = vmatpush1.msra.mxu0 0.0
        %5342 = vmatprep.subr.mxu0 0.0
        %5343 = vmatpush1.msra.mxu0 0.0
        %5344 = vmatprep.subr.mxu0 0.0
        %5345 = vmatpush1.msra.mxu0 0.0
        %5346 = vmatprep.subr.mxu0 0.0
        %5347 = vmatpush1.msra.mxu0 0.0
        %5348 = vmatprep.subr.mxu0 0.0
        %5349 = vmatpush1.msra.mxu0 0.0
        %5350 = vmatprep.subr.mxu0 0.0
        %5351 = vmatpush1.msra.mxu0 0.0
        %5352 = vmatprep.mubr.f32.mxu0 0.0
        %5353 = vmatmul.mubr.f32.gmra.mrb[0].mxu0 %v4860
        %v5354 = vpop.f32.mrb[0].mxu0
        %v5355 = vadd.f32 0.0, %v5354
        %v5356 = vpop.f32.mrb[0].mxu0
        %5357 = vdwg.mxu0
        %v5358 = vadd.f32 %v5287, %v5355
        %v5360 = vsel %vm494, %v4934, 0
        %5362 = vmatprep.subr.mxu0 0.0
        %5363 = vmatpush1.msra.mxu0 %v4697
        %5364 = vmatprep.subr.mxu0 0.0
        %5365 = vmatpush1.msra.mxu0 %v4698
        %5366 = vmatprep.subr.mxu0 0.0
        %5367 = vmatpush1.msra.mxu0 %v4699
        %5368 = vmatprep.subr.mxu0 0.0
        %5369 = vmatpush1.msra.mxu0 %v4700
        %5370 = vmatprep.subr.mxu0 0.0
        %5371 = vmatpush1.msra.mxu0 0.0
        %5372 = vmatprep.subr.mxu0 0.0
        %5373 = vmatpush1.msra.mxu0 0.0
        %5374 = vmatprep.subr.mxu0 0.0
        %5375 = vmatpush1.msra.mxu0 0.0
        %5376 = vmatprep.subr.mxu0 0.0
        %5377 = vmatpush1.msra.mxu0 0.0
        %5378 = vmatprep.subr.mxu0 0.0
        %5379 = vmatpush1.msra.mxu0 0.0
        %5380 = vmatprep.subr.mxu0 0.0
        %5381 = vmatpush1.msra.mxu0 0.0
        %5382 = vmatprep.subr.mxu0 0.0
        %5383 = vmatpush1.msra.mxu0 0.0
        %5384 = vmatprep.subr.mxu0 0.0
        %5385 = vmatpush1.msra.mxu0 0.0
        %5386 = vmatprep.subr.mxu0 0.0
        %5387 = vmatpush1.msra.mxu0 0.0
        %5388 = vmatprep.subr.mxu0 0.0
        %5389 = vmatpush1.msra.mxu0 0.0
        %5390 = vmatprep.subr.mxu0 0.0
        %5391 = vmatpush1.msra.mxu0 0.0
        %5392 = vmatprep.subr.mxu0 0.0
        %5393 = vmatpush1.msra.mxu0 0.0
        %5394 = vmatprep.subr.mxu0 0.0
        %5395 = vmatpush1.msra.mxu0 0.0
        %5396 = vmatprep.subr.mxu0 0.0
        %5397 = vmatpush1.msra.mxu0 0.0
        %5398 = vmatprep.subr.mxu0 0.0
        %5399 = vmatpush1.msra.mxu0 0.0
        %5400 = vmatprep.subr.mxu0 0.0
        %5401 = vmatpush1.msra.mxu0 0.0
        %5402 = vmatprep.subr.mxu0 0.0
        %5403 = vmatpush1.msra.mxu0 0.0
        %5404 = vmatprep.subr.mxu0 0.0
        %5405 = vmatpush1.msra.mxu0 0.0
        %5406 = vmatprep.subr.mxu0 0.0
        %5407 = vmatpush1.msra.mxu0 0.0
        %5408 = vmatprep.subr.mxu0 0.0
        %5409 = vmatpush1.msra.mxu0 0.0
        %5410 = vmatprep.subr.mxu0 0.0
        %5411 = vmatpush1.msra.mxu0 0.0
        %5412 = vmatprep.subr.mxu0 0.0
        %5413 = vmatpush1.msra.mxu0 0.0
        %5414 = vmatprep.subr.mxu0 0.0
        %5415 = vmatpush1.msra.mxu0 0.0
        %5416 = vmatprep.subr.mxu0 0.0
        %5417 = vmatpush1.msra.mxu0 0.0
        %5418 = vmatprep.subr.mxu0 0.0
        %5419 = vmatpush1.msra.mxu0 0.0
        %5420 = vmatprep.subr.mxu0 0.0
        %5421 = vmatpush1.msra.mxu0 0.0
        %5422 = vmatprep.subr.mxu0 0.0
        %5423 = vmatpush1.msra.mxu0 0.0
        %5424 = vmatprep.subr.mxu0 0.0
        %5425 = vmatpush1.msra.mxu0 0.0
        %5426 = vmatprep.mubr.f32.mxu0 0.0
        %5427 = vmatmul.mubr.f32.gmra.mrb[0].mxu0 %v5360
        %v5428 = vpop.f32.mrb[0].mxu0
        %v5429 = vadd.f32 0.0, %v5428
        %v5430 = vpop.f32.mrb[0].mxu0
        %5431 = vdwg.mxu0
        %v5432 = vadd.f32 %v5358, %v5429
        %v5433 = vrot.slane %v4934, 1
        %v5434 = vsel %vm494, %v5433, 0
        %5436 = vmatprep.subr.mxu0 0.0
        %5437 = vmatpush1.msra.mxu0 %v4776
        %5438 = vmatprep.subr.mxu0 0.0
        %5439 = vmatpush1.msra.mxu0 %v4777
        %5440 = vmatprep.subr.mxu0 0.0
        %5441 = vmatpush1.msra.mxu0 %v4778
        %5442 = vmatprep.subr.mxu0 0.0
        %5443 = vmatpush1.msra.mxu0 %v4779
        %5444 = vmatprep.subr.mxu0 0.0
        %5445 = vmatpush1.msra.mxu0 0.0
        %5446 = vmatprep.subr.mxu0 0.0
        %5447 = vmatpush1.msra.mxu0 0.0
        %5448 = vmatprep.subr.mxu0 0.0
        %5449 = vmatpush1.msra.mxu0 0.0
        %5450 = vmatprep.subr.mxu0 0.0
        %5451 = vmatpush1.msra.mxu0 0.0
        %5452 = vmatprep.subr.mxu0 0.0
        %5453 = vmatpush1.msra.mxu0 0.0
        %5454 = vmatprep.subr.mxu0 0.0
        %5455 = vmatpush1.msra.mxu0 0.0
        %5456 = vmatprep.subr.mxu0 0.0
        %5457 = vmatpush1.msra.mxu0 0.0
        %5458 = vmatprep.subr.mxu0 0.0
        %5459 = vmatpush1.msra.mxu0 0.0
        %5460 = vmatprep.subr.mxu0 0.0
        %5461 = vmatpush1.msra.mxu0 0.0
        %5462 = vmatprep.subr.mxu0 0.0
        %5463 = vmatpush1.msra.mxu0 0.0
        %5464 = vmatprep.subr.mxu0 0.0
        %5465 = vmatpush1.msra.mxu0 0.0
        %5466 = vmatprep.subr.mxu0 0.0
        %5467 = vmatpush1.msra.mxu0 0.0
        %5468 = vmatprep.subr.mxu0 0.0
        %5469 = vmatpush1.msra.mxu0 0.0
        %5470 = vmatprep.subr.mxu0 0.0
        %5471 = vmatpush1.msra.mxu0 0.0
        %5472 = vmatprep.subr.mxu0 0.0
        %5473 = vmatpush1.msra.mxu0 0.0
        %5474 = vmatprep.subr.mxu0 0.0
        %5475 = vmatpush1.msra.mxu0 0.0
        %5476 = vmatprep.subr.mxu0 0.0
        %5477 = vmatpush1.msra.mxu0 0.0
        %5478 = vmatprep.subr.mxu0 0.0
        %5479 = vmatpush1.msra.mxu0 0.0
        %5480 = vmatprep.subr.mxu0 0.0
        %5481 = vmatpush1.msra.mxu0 0.0
        %5482 = vmatprep.subr.mxu0 0.0
        %5483 = vmatpush1.msra.mxu0 0.0
        %5484 = vmatprep.subr.mxu0 0.0
        %5485 = vmatpush1.msra.mxu0 0.0
        %5486 = vmatprep.subr.mxu0 0.0
        %5487 = vmatpush1.msra.mxu0 0.0
        %5488 = vmatprep.subr.mxu0 0.0
        %5489 = vmatpush1.msra.mxu0 0.0
        %5490 = vmatprep.subr.mxu0 0.0
        %5491 = vmatpush1.msra.mxu0 0.0
        %5492 = vmatprep.subr.mxu0 0.0
        %5493 = vmatpush1.msra.mxu0 0.0
        %5494 = vmatprep.subr.mxu0 0.0
        %5495 = vmatpush1.msra.mxu0 0.0
        %5496 = vmatprep.subr.mxu0 0.0
        %5497 = vmatpush1.msra.mxu0 0.0
        %5498 = vmatprep.subr.mxu0 0.0
        %5499 = vmatpush1.msra.mxu0 0.0
        %5500 = vmatprep.mubr.f32.mxu0 0.0
        %5501 = vmatmul.mubr.f32.gmra.mrb[0].mxu0 %v5434
        %v5502 = vpop.f32.mrb[0].mxu0
        %v5503 = vadd.f32 0.0, %v5502
        %v5504 = vpop.f32.mrb[0].mxu0
        %5505 = vdwg.mxu0
        %v5506 = vadd.f32 %v5432, %v5503
        %v5507 = vrot.slane %v4934, 2
        %v5508 = vsel %vm494, %v5507, 0
        %5510 = vmatprep.subr.mxu0 0.0
        %5511 = vmatpush1.msra.mxu0 %v4855
        %5512 = vmatprep.subr.mxu0 0.0
        %5513 = vmatpush1.msra.mxu0 %v4856
        %5514 = vmatprep.subr.mxu0 0.0
        %5515 = vmatpush1.msra.mxu0 %v4857
        %5516 = vmatprep.subr.mxu0 0.0
        %5517 = vmatpush1.msra.mxu0 %v4858
        %5518 = vmatprep.subr.mxu0 0.0
        %5519 = vmatpush1.msra.mxu0 0.0
        %5520 = vmatprep.subr.mxu0 0.0
        %5521 = vmatpush1.msra.mxu0 0.0
        %5522 = vmatprep.subr.mxu0 0.0
        %5523 = vmatpush1.msra.mxu0 0.0
        %5524 = vmatprep.subr.mxu0 0.0
        %5525 = vmatpush1.msra.mxu0 0.0
        %5526 = vmatprep.subr.mxu0 0.0
        %5527 = vmatpush1.msra.mxu0 0.0
        %5528 = vmatprep.subr.mxu0 0.0
        %5529 = vmatpush1.msra.mxu0 0.0
        %5530 = vmatprep.subr.mxu0 0.0
        %5531 = vmatpush1.msra.mxu0 0.0
        %5532 = vmatprep.subr.mxu0 0.0
        %5533 = vmatpush1.msra.mxu0 0.0
        %5534 = vmatprep.subr.mxu0 0.0
        %5535 = vmatpush1.msra.mxu0 0.0
        %5536 = vmatprep.subr.mxu0 0.0
        %5537 = vmatpush1.msra.mxu0 0.0
        %5538 = vmatprep.subr.mxu0 0.0
        %5539 = vmatpush1.msra.mxu0 0.0
        %5540 = vmatprep.subr.mxu0 0.0
        %5541 = vmatpush1.msra.mxu0 0.0
        %5542 = vmatprep.subr.mxu0 0.0
        %5543 = vmatpush1.msra.mxu0 0.0
        %5544 = vmatprep.subr.mxu0 0.0
        %5545 = vmatpush1.msra.mxu0 0.0
        %5546 = vmatprep.subr.mxu0 0.0
        %5547 = vmatpush1.msra.mxu0 0.0
        %5548 = vmatprep.subr.mxu0 0.0
        %5549 = vmatpush1.msra.mxu0 0.0
        %5550 = vmatprep.subr.mxu0 0.0
        %5551 = vmatpush1.msra.mxu0 0.0
        %5552 = vmatprep.subr.mxu0 0.0
        %5553 = vmatpush1.msra.mxu0 0.0
        %5554 = vmatprep.subr.mxu0 0.0
        %5555 = vmatpush1.msra.mxu0 0.0
        %5556 = vmatprep.subr.mxu0 0.0
        %5557 = vmatpush1.msra.mxu0 0.0
        %5558 = vmatprep.subr.mxu0 0.0
        %5559 = vmatpush1.msra.mxu0 0.0
        %5560 = vmatprep.subr.mxu0 0.0
        %5561 = vmatpush1.msra.mxu0 0.0
        %5562 = vmatprep.subr.mxu0 0.0
        %5563 = vmatpush1.msra.mxu0 0.0
        %5564 = vmatprep.subr.mxu0 0.0
        %5565 = vmatpush1.msra.mxu0 0.0
        %5566 = vmatprep.subr.mxu0 0.0
        %5567 = vmatpush1.msra.mxu0 0.0
        %5568 = vmatprep.subr.mxu0 0.0
        %5569 = vmatpush1.msra.mxu0 0.0
        %5570 = vmatprep.subr.mxu0 0.0
        %5571 = vmatpush1.msra.mxu0 0.0
        %5572 = vmatprep.subr.mxu0 0.0
        %5573 = vmatpush1.msra.mxu0 0.0
        %5574 = vmatprep.mubr.f32.mxu0 0.0
        %5575 = vmatmul.mubr.f32.gmra.mrb[0].mxu0 %v5508
        %v5576 = vpop.f32.mrb[0].mxu0
        %v5577 = vadd.f32 0.0, %v5576
        %v5578 = vpop.f32.mrb[0].mxu0
        %5579 = vdwg.mxu0
        %v5580 = vadd.f32 %v5506, %v5577
        %v5581 = vmax.f32 %v4932, %v5580
        %s5582 = scalar_lea.vmem [#allocation4], 32
        %v5583 = vld [vmem:[%s5582] sm:$0x3f]
        %5584 = vmatprep.subr.mxu0 0.0
        %5585 = vmatpush1.msra.mxu0 %v4230
        %5586 = vmatprep.subr.mxu0 0.0
        %5587 = vmatpush1.msra.mxu0 %v4231
        %5588 = vmatprep.subr.mxu0 0.0
        %5589 = vmatpush1.msra.mxu0 %v4232
        %5590 = vmatprep.subr.mxu0 0.0
        %5591 = vmatpush1.msra.mxu0 %v4233
        %5592 = vmatprep.subr.mxu0 0.0
        %5593 = vmatpush1.msra.mxu0 0.0
        %5594 = vmatprep.subr.mxu0 0.0
        %5595 = vmatpush1.msra.mxu0 0.0
        %5596 = vmatprep.subr.mxu0 0.0
        %5597 = vmatpush1.msra.mxu0 0.0
        %5598 = vmatprep.subr.mxu0 0.0
        %5599 = vmatpush1.msra.mxu0 0.0
        %5600 = vmatprep.subr.mxu0 0.0
        %5601 = vmatpush1.msra.mxu0 0.0
        %5602 = vmatprep.subr.mxu0 0.0
        %5603 = vmatpush1.msra.mxu0 0.0
        %5604 = vmatprep.subr.mxu0 0.0
        %5605 = vmatpush1.msra.mxu0 0.0
        %5606 = vmatprep.subr.mxu0 0.0
        %5607 = vmatpush1.msra.mxu0 0.0
        %5608 = vmatprep.subr.mxu0 0.0
        %5609 = vmatpush1.msra.mxu0 0.0
        %5610 = vmatprep.subr.mxu0 0.0
        %5611 = vmatpush1.msra.mxu0 0.0
        %5612 = vmatprep.subr.mxu0 0.0
        %5613 = vmatpush1.msra.mxu0 0.0
        %5614 = vmatprep.subr.mxu0 0.0
        %5615 = vmatpush1.msra.mxu0 0.0
        %5616 = vmatprep.subr.mxu0 0.0
        %5617 = vmatpush1.msra.mxu0 0.0
        %5618 = vmatprep.subr.mxu0 0.0
        %5619 = vmatpush1.msra.mxu0 0.0
        %5620 = vmatprep.subr.mxu0 0.0
        %5621 = vmatpush1.msra.mxu0 0.0
        %5622 = vmatprep.subr.mxu0 0.0
        %5623 = vmatpush1.msra.mxu0 0.0
        %5624 = vmatprep.subr.mxu0 0.0
        %5625 = vmatpush1.msra.mxu0 0.0
        %5626 = vmatprep.subr.mxu0 0.0
        %5627 = vmatpush1.msra.mxu0 0.0
        %5628 = vmatprep.subr.mxu0 0.0
        %5629 = vmatpush1.msra.mxu0 0.0
        %5630 = vmatprep.subr.mxu0 0.0
        %5631 = vmatpush1.msra.mxu0 0.0
        %5632 = vmatprep.subr.mxu0 0.0
        %5633 = vmatpush1.msra.mxu0 0.0
        %5634 = vmatprep.subr.mxu0 0.0
        %5635 = vmatpush1.msra.mxu0 0.0
        %5636 = vmatprep.subr.mxu0 0.0
        %5637 = vmatpush1.msra.mxu0 0.0
        %5638 = vmatprep.subr.mxu0 0.0
        %5639 = vmatpush1.msra.mxu0 0.0
        %5640 = vmatprep.subr.mxu0 0.0
        %5641 = vmatpush1.msra.mxu0 0.0
        %5642 = vmatprep.subr.mxu0 0.0
        %5643 = vmatpush1.msra.mxu0 0.0
        %5644 = vmatprep.subr.mxu0 0.0
        %5645 = vmatpush1.msra.mxu0 0.0
        %5646 = vmatprep.subr.mxu0 0.0
        %5647 = vmatpush1.msra.mxu0 0.0
        %5648 = vmatprep.mubr.f32.mxu0 0.0
        %5649 = vmatmul.mubr.f32.gmra.mrb[0].mxu0 %v4781
        %v5650 = vpop.f32.mrb[0].mxu0
        %v5651 = vadd.f32 0.0, %v5650
        %v5652 = vpop.f32.mrb[0].mxu0
        %5653 = vdwg.mxu0
        %5654 = vmatprep.subr.mxu0 0.0
        %5655 = vmatpush1.msra.mxu0 %v4225
        %5656 = vmatprep.subr.mxu0 0.0
        %5657 = vmatpush1.msra.mxu0 %v4226
        %5658 = vmatprep.subr.mxu0 0.0
        %5659 = vmatpush1.msra.mxu0 %v4227
        %5660 = vmatprep.subr.mxu0 0.0
        %5661 = vmatpush1.msra.mxu0 %v4228
        %5662 = vmatprep.subr.mxu0 0.0
        %5663 = vmatpush1.msra.mxu0 0.0
        %5664 = vmatprep.subr.mxu0 0.0
        %5665 = vmatpush1.msra.mxu0 0.0
        %5666 = vmatprep.subr.mxu0 0.0
        %5667 = vmatpush1.msra.mxu0 0.0
        %5668 = vmatprep.subr.mxu0 0.0
        %5669 = vmatpush1.msra.mxu0 0.0
        %5670 = vmatprep.subr.mxu0 0.0
        %5671 = vmatpush1.msra.mxu0 0.0
        %5672 = vmatprep.subr.mxu0 0.0
        %5673 = vmatpush1.msra.mxu0 0.0
        %5674 = vmatprep.subr.mxu0 0.0
        %5675 = vmatpush1.msra.mxu0 0.0
        %5676 = vmatprep.subr.mxu0 0.0
        %5677 = vmatpush1.msra.mxu0 0.0
        %5678 = vmatprep.subr.mxu0 0.0
        %5679 = vmatpush1.msra.mxu0 0.0
        %5680 = vmatprep.subr.mxu0 0.0
        %5681 = vmatpush1.msra.mxu0 0.0
        %5682 = vmatprep.subr.mxu0 0.0
        %5683 = vmatpush1.msra.mxu0 0.0
        %5684 = vmatprep.subr.mxu0 0.0
        %5685 = vmatpush1.msra.mxu0 0.0
        %5686 = vmatprep.subr.mxu0 0.0
        %5687 = vmatpush1.msra.mxu0 0.0
        %5688 = vmatprep.subr.mxu0 0.0
        %5689 = vmatpush1.msra.mxu0 0.0
        %5690 = vmatprep.subr.mxu0 0.0
        %5691 = vmatpush1.msra.mxu0 0.0
        %5692 = vmatprep.subr.mxu0 0.0
        %5693 = vmatpush1.msra.mxu0 0.0
        %5694 = vmatprep.subr.mxu0 0.0
        %5695 = vmatpush1.msra.mxu0 0.0
        %5696 = vmatprep.subr.mxu0 0.0
        %5697 = vmatpush1.msra.mxu0 0.0
        %5698 = vmatprep.subr.mxu0 0.0
        %5699 = vmatpush1.msra.mxu0 0.0
        %5700 = vmatprep.subr.mxu0 0.0
        %5701 = vmatpush1.msra.mxu0 0.0
        %5702 = vmatprep.subr.mxu0 0.0
        %5703 = vmatpush1.msra.mxu0 0.0
        %5704 = vmatprep.subr.mxu0 0.0
        %5705 = vmatpush1.msra.mxu0 0.0
        %5706 = vmatprep.subr.mxu0 0.0
        %5707 = vmatpush1.msra.mxu0 0.0
        %5708 = vmatprep.subr.mxu0 0.0
        %5709 = vmatpush1.msra.mxu0 0.0
        %5710 = vmatprep.subr.mxu0 0.0
        %5711 = vmatpush1.msra.mxu0 0.0
        %5712 = vmatprep.subr.mxu0 0.0
        %5713 = vmatpush1.msra.mxu0 0.0
        %5714 = vmatprep.subr.mxu0 0.0
        %5715 = vmatpush1.msra.mxu0 0.0
        %5716 = vmatprep.subr.mxu0 0.0
        %5717 = vmatpush1.msra.mxu0 0.0
        %5718 = vmatprep.mubr.f32.mxu0 0.0
        %5719 = vmatmul.mubr.f32.gmra.mrb[0].mxu0 %v4702
        %v5720 = vpop.f32.mrb[0].mxu0
        %v5721 = vadd.f32 %v5651, %v5720
        %v5722 = vpop.f32.mrb[0].mxu0
        %5723 = vdwg.mxu0
        %5724 = vmatprep.subr.mxu0 0.0
        %5725 = vmatpush1.msra.mxu0 %v4381
        %5726 = vmatprep.subr.mxu0 0.0
        %5727 = vmatpush1.msra.mxu0 %v4382
        %5728 = vmatprep.subr.mxu0 0.0
        %5729 = vmatpush1.msra.mxu0 %v4383
        %5730 = vmatprep.subr.mxu0 0.0
        %5731 = vmatpush1.msra.mxu0 %v4384
        %5732 = vmatprep.subr.mxu0 0.0
        %5733 = vmatpush1.msra.mxu0 0.0
        %5734 = vmatprep.subr.mxu0 0.0
        %5735 = vmatpush1.msra.mxu0 0.0
        %5736 = vmatprep.subr.mxu0 0.0
        %5737 = vmatpush1.msra.mxu0 0.0
        %5738 = vmatprep.subr.mxu0 0.0
        %5739 = vmatpush1.msra.mxu0 0.0
        %5740 = vmatprep.subr.mxu0 0.0
        %5741 = vmatpush1.msra.mxu0 0.0
        %5742 = vmatprep.subr.mxu0 0.0
        %5743 = vmatpush1.msra.mxu0 0.0
        %5744 = vmatprep.subr.mxu0 0.0
        %5745 = vmatpush1.msra.mxu0 0.0
        %5746 = vmatprep.subr.mxu0 0.0
        %5747 = vmatpush1.msra.mxu0 0.0
        %5748 = vmatprep.subr.mxu0 0.0
        %5749 = vmatpush1.msra.mxu0 0.0
        %5750 = vmatprep.subr.mxu0 0.0
        %5751 = vmatpush1.msra.mxu0 0.0
        %5752 = vmatprep.subr.mxu0 0.0
        %5753 = vmatpush1.msra.mxu0 0.0
        %5754 = vmatprep.subr.mxu0 0.0
        %5755 = vmatpush1.msra.mxu0 0.0
        %5756 = vmatprep.subr.mxu0 0.0
        %5757 = vmatpush1.msra.mxu0 0.0
        %5758 = vmatprep.subr.mxu0 0.0
        %5759 = vmatpush1.msra.mxu0 0.0
        %5760 = vmatprep.subr.mxu0 0.0
        %5761 = vmatpush1.msra.mxu0 0.0
        %5762 = vmatprep.subr.mxu0 0.0
        %5763 = vmatpush1.msra.mxu0 0.0
        %5764 = vmatprep.subr.mxu0 0.0
        %5765 = vmatpush1.msra.mxu0 0.0
        %5766 = vmatprep.subr.mxu0 0.0
        %5767 = vmatpush1.msra.mxu0 0.0
        %5768 = vmatprep.subr.mxu0 0.0
        %5769 = vmatpush1.msra.mxu0 0.0
        %5770 = vmatprep.subr.mxu0 0.0
        %5771 = vmatpush1.msra.mxu0 0.0
        %5772 = vmatprep.subr.mxu0 0.0
        %5773 = vmatpush1.msra.mxu0 0.0
        %5774 = vmatprep.subr.mxu0 0.0
        %5775 = vmatpush1.msra.mxu0 0.0
        %5776 = vmatprep.subr.mxu0 0.0
        %5777 = vmatpush1.msra.mxu0 0.0
        %5778 = vmatprep.subr.mxu0 0.0
        %5779 = vmatpush1.msra.mxu0 0.0
        %5780 = vmatprep.subr.mxu0 0.0
        %5781 = vmatpush1.msra.mxu0 0.0
        %5782 = vmatprep.subr.mxu0 0.0
        %5783 = vmatpush1.msra.mxu0 0.0
        %5784 = vmatprep.subr.mxu0 0.0
        %5785 = vmatpush1.msra.mxu0 0.0
        %5786 = vmatprep.subr.mxu0 0.0
        %5787 = vmatpush1.msra.mxu0 0.0
        %5788 = vmatprep.mubr.f32.mxu0 0.0
        %5789 = vmatmul.mubr.f32.gmra.mrb[0].mxu0 %v4860
        %v5790 = vpop.f32.mrb[0].mxu0
        %v5791 = vadd.f32 0.0, %v5790
        %v5792 = vpop.f32.mrb[0].mxu0
        %5793 = vdwg.mxu0
        %v5794 = vadd.f32 %v5721, %v5791
        %5795 = vmatprep.subr.mxu0 0.0
        %5796 = vmatpush1.msra.mxu0 %v4460
        %5797 = vmatprep.subr.mxu0 0.0
        %5798 = vmatpush1.msra.mxu0 %v4461
        %5799 = vmatprep.subr.mxu0 0.0
        %5800 = vmatpush1.msra.mxu0 %v4462
        %5801 = vmatprep.subr.mxu0 0.0
        %5802 = vmatpush1.msra.mxu0 %v4463
        %5803 = vmatprep.subr.mxu0 0.0
        %5804 = vmatpush1.msra.mxu0 0.0
        %5805 = vmatprep.subr.mxu0 0.0
        %5806 = vmatpush1.msra.mxu0 0.0
        %5807 = vmatprep.subr.mxu0 0.0
        %5808 = vmatpush1.msra.mxu0 0.0
        %5809 = vmatprep.subr.mxu0 0.0
        %5810 = vmatpush1.msra.mxu0 0.0
        %5811 = vmatprep.subr.mxu0 0.0
        %5812 = vmatpush1.msra.mxu0 0.0
        %5813 = vmatprep.subr.mxu0 0.0
        %5814 = vmatpush1.msra.mxu0 0.0
        %5815 = vmatprep.subr.mxu0 0.0
        %5816 = vmatpush1.msra.mxu0 0.0
        %5817 = vmatprep.subr.mxu0 0.0
        %5818 = vmatpush1.msra.mxu0 0.0
        %5819 = vmatprep.subr.mxu0 0.0
        %5820 = vmatpush1.msra.mxu0 0.0
        %5821 = vmatprep.subr.mxu0 0.0
        %5822 = vmatpush1.msra.mxu0 0.0
        %5823 = vmatprep.subr.mxu0 0.0
        %5824 = vmatpush1.msra.mxu0 0.0
        %5825 = vmatprep.subr.mxu0 0.0
        %5826 = vmatpush1.msra.mxu0 0.0
        %5827 = vmatprep.subr.mxu0 0.0
        %5828 = vmatpush1.msra.mxu0 0.0
        %5829 = vmatprep.subr.mxu0 0.0
        %5830 = vmatpush1.msra.mxu0 0.0
        %5831 = vmatprep.subr.mxu0 0.0
        %5832 = vmatpush1.msra.mxu0 0.0
        %5833 = vmatprep.subr.mxu0 0.0
        %5834 = vmatpush1.msra.mxu0 0.0
        %5835 = vmatprep.subr.mxu0 0.0
        %5836 = vmatpush1.msra.mxu0 0.0
        %5837 = vmatprep.subr.mxu0 0.0
        %5838 = vmatpush1.msra.mxu0 0.0
        %5839 = vmatprep.subr.mxu0 0.0
        %5840 = vmatpush1.msra.mxu0 0.0
        %5841 = vmatprep.subr.mxu0 0.0
        %5842 = vmatpush1.msra.mxu0 0.0
        %5843 = vmatprep.subr.mxu0 0.0
        %5844 = vmatpush1.msra.mxu0 0.0
        %5845 = vmatprep.subr.mxu0 0.0
        %5846 = vmatpush1.msra.mxu0 0.0
        %5847 = vmatprep.subr.mxu0 0.0
        %5848 = vmatpush1.msra.mxu0 0.0
        %5849 = vmatprep.subr.mxu0 0.0
        %5850 = vmatpush1.msra.mxu0 0.0
        %5851 = vmatprep.subr.mxu0 0.0
        %5852 = vmatpush1.msra.mxu0 0.0
        %5853 = vmatprep.subr.mxu0 0.0
        %5854 = vmatpush1.msra.mxu0 0.0
        %5855 = vmatprep.subr.mxu0 0.0
        %5856 = vmatpush1.msra.mxu0 0.0
        %5857 = vmatprep.subr.mxu0 0.0
        %5858 = vmatpush1.msra.mxu0 0.0
        %5859 = vmatprep.mubr.f32.mxu0 0.0
        %5860 = vmatmul.mubr.f32.gmra.mrb[0].mxu0 %v5360
        %v5861 = vpop.f32.mrb[0].mxu0
        %v5862 = vadd.f32 0.0, %v5861
        %v5863 = vpop.f32.mrb[0].mxu0
        %5864 = vdwg.mxu0
        %v5865 = vadd.f32 %v5794, %v5862
        %5866 = vmatprep.subr.mxu0 0.0
        %5867 = vmatpush1.msra.mxu0 %v4539
        %5868 = vmatprep.subr.mxu0 0.0
        %5869 = vmatpush1.msra.mxu0 %v4540
        %5870 = vmatprep.subr.mxu0 0.0
        %5871 = vmatpush1.msra.mxu0 %v4541
        %5872 = vmatprep.subr.mxu0 0.0
        %5873 = vmatpush1.msra.mxu0 %v4542
        %5874 = vmatprep.subr.mxu0 0.0
        %5875 = vmatpush1.msra.mxu0 0.0
        %5876 = vmatprep.subr.mxu0 0.0
        %5877 = vmatpush1.msra.mxu0 0.0
        %5878 = vmatprep.subr.mxu0 0.0
        %5879 = vmatpush1.msra.mxu0 0.0
        %5880 = vmatprep.subr.mxu0 0.0
        %5881 = vmatpush1.msra.mxu0 0.0
        %5882 = vmatprep.subr.mxu0 0.0
        %5883 = vmatpush1.msra.mxu0 0.0
        %5884 = vmatprep.subr.mxu0 0.0
        %5885 = vmatpush1.msra.mxu0 0.0
        %5886 = vmatprep.subr.mxu0 0.0
        %5887 = vmatpush1.msra.mxu0 0.0
        %5888 = vmatprep.subr.mxu0 0.0
        %5889 = vmatpush1.msra.mxu0 0.0
        %5890 = vmatprep.subr.mxu0 0.0
        %5891 = vmatpush1.msra.mxu0 0.0
        %5892 = vmatprep.subr.mxu0 0.0
        %5893 = vmatpush1.msra.mxu0 0.0
        %5894 = vmatprep.subr.mxu0 0.0
        %5895 = vmatpush1.msra.mxu0 0.0
        %5896 = vmatprep.subr.mxu0 0.0
        %5897 = vmatpush1.msra.mxu0 0.0
        %5898 = vmatprep.subr.mxu0 0.0
        %5899 = vmatpush1.msra.mxu0 0.0
        %5900 = vmatprep.subr.mxu0 0.0
        %5901 = vmatpush1.msra.mxu0 0.0
        %5902 = vmatprep.subr.mxu0 0.0
        %5903 = vmatpush1.msra.mxu0 0.0
        %5904 = vmatprep.subr.mxu0 0.0
        %5905 = vmatpush1.msra.mxu0 0.0
        %5906 = vmatprep.subr.mxu0 0.0
        %5907 = vmatpush1.msra.mxu0 0.0
        %5908 = vmatprep.subr.mxu0 0.0
        %5909 = vmatpush1.msra.mxu0 0.0
        %5910 = vmatprep.subr.mxu0 0.0
        %5911 = vmatpush1.msra.mxu0 0.0
        %5912 = vmatprep.subr.mxu0 0.0
        %5913 = vmatpush1.msra.mxu0 0.0
        %5914 = vmatprep.subr.mxu0 0.0
        %5915 = vmatpush1.msra.mxu0 0.0
        %5916 = vmatprep.subr.mxu0 0.0
        %5917 = vmatpush1.msra.mxu0 0.0
        %5918 = vmatprep.subr.mxu0 0.0
        %5919 = vmatpush1.msra.mxu0 0.0
        %5920 = vmatprep.subr.mxu0 0.0
        %5921 = vmatpush1.msra.mxu0 0.0
        %5922 = vmatprep.subr.mxu0 0.0
        %5923 = vmatpush1.msra.mxu0 0.0
        %5924 = vmatprep.subr.mxu0 0.0
        %5925 = vmatpush1.msra.mxu0 0.0
        %5926 = vmatprep.subr.mxu0 0.0
        %5927 = vmatpush1.msra.mxu0 0.0
        %5928 = vmatprep.subr.mxu0 0.0
        %5929 = vmatpush1.msra.mxu0 0.0
        %5930 = vmatprep.mubr.f32.mxu0 0.0
        %5931 = vmatmul.mubr.f32.gmra.mrb[0].mxu0 %v5434
        %v5932 = vpop.f32.mrb[0].mxu0
        %v5933 = vadd.f32 0.0, %v5932
        %v5934 = vpop.f32.mrb[0].mxu0
        %5935 = vdwg.mxu0
        %v5936 = vadd.f32 %v5865, %v5933
        %5937 = vmatprep.subr.mxu0 0.0
        %5938 = vmatpush1.msra.mxu0 %v4618
        %5939 = vmatprep.subr.mxu0 0.0
        %5940 = vmatpush1.msra.mxu0 %v4619
        %5941 = vmatprep.subr.mxu0 0.0
        %5942 = vmatpush1.msra.mxu0 %v4620
        %5943 = vmatprep.subr.mxu0 0.0
        %5944 = vmatpush1.msra.mxu0 %v4621
        %5945 = vmatprep.subr.mxu0 0.0
        %5946 = vmatpush1.msra.mxu0 0.0
        %5947 = vmatprep.subr.mxu0 0.0
        %5948 = vmatpush1.msra.mxu0 0.0
        %5949 = vmatprep.subr.mxu0 0.0
        %5950 = vmatpush1.msra.mxu0 0.0
        %5951 = vmatprep.subr.mxu0 0.0
        %5952 = vmatpush1.msra.mxu0 0.0
        %5953 = vmatprep.subr.mxu0 0.0
        %5954 = vmatpush1.msra.mxu0 0.0
        %5955 = vmatprep.subr.mxu0 0.0
        %5956 = vmatpush1.msra.mxu0 0.0
        %5957 = vmatprep.subr.mxu0 0.0
        %5958 = vmatpush1.msra.mxu0 0.0
        %5959 = vmatprep.subr.mxu0 0.0
        %5960 = vmatpush1.msra.mxu0 0.0
        %5961 = vmatprep.subr.mxu0 0.0
        %5962 = vmatpush1.msra.mxu0 0.0
        %5963 = vmatprep.subr.mxu0 0.0
        %5964 = vmatpush1.msra.mxu0 0.0
        %5965 = vmatprep.subr.mxu0 0.0
        %5966 = vmatpush1.msra.mxu0 0.0
        %5967 = vmatprep.subr.mxu0 0.0
        %5968 = vmatpush1.msra.mxu0 0.0
        %5969 = vmatprep.subr.mxu0 0.0
        %5970 = vmatpush1.msra.mxu0 0.0
        %5971 = vmatprep.subr.mxu0 0.0
        %5972 = vmatpush1.msra.mxu0 0.0
        %5973 = vmatprep.subr.mxu0 0.0
        %5974 = vmatpush1.msra.mxu0 0.0
        %5975 = vmatprep.subr.mxu0 0.0
        %5976 = vmatpush1.msra.mxu0 0.0
        %5977 = vmatprep.subr.mxu0 0.0
        %5978 = vmatpush1.msra.mxu0 0.0
        %5979 = vmatprep.subr.mxu0 0.0
        %5980 = vmatpush1.msra.mxu0 0.0
        %5981 = vmatprep.subr.mxu0 0.0
        %5982 = vmatpush1.msra.mxu0 0.0
        %5983 = vmatprep.subr.mxu0 0.0
        %5984 = vmatpush1.msra.mxu0 0.0
        %5985 = vmatprep.subr.mxu0 0.0
        %5986 = vmatpush1.msra.mxu0 0.0
        %5987 = vmatprep.subr.mxu0 0.0
        %5988 = vmatpush1.msra.mxu0 0.0
        %5989 = vmatprep.subr.mxu0 0.0
        %5990 = vmatpush1.msra.mxu0 0.0
        %5991 = vmatprep.subr.mxu0 0.0
        %5992 = vmatpush1.msra.mxu0 0.0
        %5993 = vmatprep.subr.mxu0 0.0
        %5994 = vmatpush1.msra.mxu0 0.0
        %5995 = vmatprep.subr.mxu0 0.0
        %5996 = vmatpush1.msra.mxu0 0.0
        %5997 = vmatprep.subr.mxu0 0.0
        %5998 = vmatpush1.msra.mxu0 0.0
        %5999 = vmatprep.subr.mxu0 0.0
        %6000 = vmatpush1.msra.mxu0 0.0
        %6001 = vmatprep.mubr.f32.mxu0 0.0
        %6002 = vmatmul.mubr.f32.gmra.mrb[0].mxu0 %v5508
        %v6003 = vpop.f32.mrb[0].mxu0
        %v6004 = vadd.f32 0.0, %v6003
        %v6005 = vpop.f32.mrb[0].mxu0
        %6006 = vdwg.mxu0
        %v6007 = vadd.f32 %v5936, %v6004
        %v6009 = vsel %vm494, %v5583, 0
        %6011 = vmatprep.subr.mxu0 0.0
        %6012 = vmatpush1.msra.mxu0 %v4697
        %6013 = vmatprep.subr.mxu0 0.0
        %6014 = vmatpush1.msra.mxu0 %v4698
        %6015 = vmatprep.subr.mxu0 0.0
        %6016 = vmatpush1.msra.mxu0 %v4699
        %6017 = vmatprep.subr.mxu0 0.0
        %6018 = vmatpush1.msra.mxu0 %v4700
        %6019 = vmatprep.subr.mxu0 0.0
        %6020 = vmatpush1.msra.mxu0 0.0
        %6021 = vmatprep.subr.mxu0 0.0
        %6022 = vmatpush1.msra.mxu0 0.0
        %6023 = vmatprep.subr.mxu0 0.0
        %6024 = vmatpush1.msra.mxu0 0.0
        %6025 = vmatprep.subr.mxu0 0.0
        %6026 = vmatpush1.msra.mxu0 0.0
        %6027 = vmatprep.subr.mxu0 0.0
        %6028 = vmatpush1.msra.mxu0 0.0
        %6029 = vmatprep.subr.mxu0 0.0
        %6030 = vmatpush1.msra.mxu0 0.0
        %6031 = vmatprep.subr.mxu0 0.0
        %6032 = vmatpush1.msra.mxu0 0.0
        %6033 = vmatprep.subr.mxu0 0.0
        %6034 = vmatpush1.msra.mxu0 0.0
        %6035 = vmatprep.subr.mxu0 0.0
        %6036 = vmatpush1.msra.mxu0 0.0
        %6037 = vmatprep.subr.mxu0 0.0
        %6038 = vmatpush1.msra.mxu0 0.0
        %6039 = vmatprep.subr.mxu0 0.0
        %6040 = vmatpush1.msra.mxu0 0.0
        %6041 = vmatprep.subr.mxu0 0.0
        %6042 = vmatpush1.msra.mxu0 0.0
        %6043 = vmatprep.subr.mxu0 0.0
        %6044 = vmatpush1.msra.mxu0 0.0
        %6045 = vmatprep.subr.mxu0 0.0
        %6046 = vmatpush1.msra.mxu0 0.0
        %6047 = vmatprep.subr.mxu0 0.0
        %6048 = vmatpush1.msra.mxu0 0.0
        %6049 = vmatprep.subr.mxu0 0.0
        %6050 = vmatpush1.msra.mxu0 0.0
        %6051 = vmatprep.subr.mxu0 0.0
        %6052 = vmatpush1.msra.mxu0 0.0
        %6053 = vmatprep.subr.mxu0 0.0
        %6054 = vmatpush1.msra.mxu0 0.0
        %6055 = vmatprep.subr.mxu0 0.0
        %6056 = vmatpush1.msra.mxu0 0.0
        %6057 = vmatprep.subr.mxu0 0.0
        %6058 = vmatpush1.msra.mxu0 0.0
        %6059 = vmatprep.subr.mxu0 0.0
        %6060 = vmatpush1.msra.mxu0 0.0
        %6061 = vmatprep.subr.mxu0 0.0
        %6062 = vmatpush1.msra.mxu0 0.0
        %6063 = vmatprep.subr.mxu0 0.0
        %6064 = vmatpush1.msra.mxu0 0.0
        %6065 = vmatprep.subr.mxu0 0.0
        %6066 = vmatpush1.msra.mxu0 0.0
        %6067 = vmatprep.subr.mxu0 0.0
        %6068 = vmatpush1.msra.mxu0 0.0
        %6069 = vmatprep.subr.mxu0 0.0
        %6070 = vmatpush1.msra.mxu0 0.0
        %6071 = vmatprep.subr.mxu0 0.0
        %6072 = vmatpush1.msra.mxu0 0.0
        %6073 = vmatprep.subr.mxu0 0.0
        %6074 = vmatpush1.msra.mxu0 0.0
        %6075 = vmatprep.mubr.f32.mxu0 0.0
        %6076 = vmatmul.mubr.f32.gmra.mrb[0].mxu0 %v6009
        %v6077 = vpop.f32.mrb[0].mxu0
        %v6078 = vadd.f32 0.0, %v6077
        %v6079 = vpop.f32.mrb[0].mxu0
        %6080 = vdwg.mxu0
        %v6081 = vadd.f32 %v6007, %v6078
        %v6082 = vrot.slane %v5583, 1
        %v6083 = vsel %vm494, %v6082, 0
        %6085 = vmatprep.subr.mxu0 0.0
        %6086 = vmatpush1.msra.mxu0 %v4776
        %6087 = vmatprep.subr.mxu0 0.0
        %6088 = vmatpush1.msra.mxu0 %v4777
        %6089 = vmatprep.subr.mxu0 0.0
        %6090 = vmatpush1.msra.mxu0 %v4778
        %6091 = vmatprep.subr.mxu0 0.0
        %6092 = vmatpush1.msra.mxu0 %v4779
        %6093 = vmatprep.subr.mxu0 0.0
        %6094 = vmatpush1.msra.mxu0 0.0
        %6095 = vmatprep.subr.mxu0 0.0
        %6096 = vmatpush1.msra.mxu0 0.0
        %6097 = vmatprep.subr.mxu0 0.0
        %6098 = vmatpush1.msra.mxu0 0.0
        %6099 = vmatprep.subr.mxu0 0.0
        %6100 = vmatpush1.msra.mxu0 0.0
        %6101 = vmatprep.subr.mxu0 0.0
        %6102 = vmatpush1.msra.mxu0 0.0
        %6103 = vmatprep.subr.mxu0 0.0
        %6104 = vmatpush1.msra.mxu0 0.0
        %6105 = vmatprep.subr.mxu0 0.0
        %6106 = vmatpush1.msra.mxu0 0.0
        %6107 = vmatprep.subr.mxu0 0.0
        %6108 = vmatpush1.msra.mxu0 0.0
        %6109 = vmatprep.subr.mxu0 0.0
        %6110 = vmatpush1.msra.mxu0 0.0
        %6111 = vmatprep.subr.mxu0 0.0
        %6112 = vmatpush1.msra.mxu0 0.0
        %6113 = vmatprep.subr.mxu0 0.0
        %6114 = vmatpush1.msra.mxu0 0.0
        %6115 = vmatprep.subr.mxu0 0.0
        %6116 = vmatpush1.msra.mxu0 0.0
        %6117 = vmatprep.subr.mxu0 0.0
        %6118 = vmatpush1.msra.mxu0 0.0
        %6119 = vmatprep.subr.mxu0 0.0
        %6120 = vmatpush1.msra.mxu0 0.0
        %6121 = vmatprep.subr.mxu0 0.0
        %6122 = vmatpush1.msra.mxu0 0.0
        %6123 = vmatprep.subr.mxu0 0.0
        %6124 = vmatpush1.msra.mxu0 0.0
        %6125 = vmatprep.subr.mxu0 0.0
        %6126 = vmatpush1.msra.mxu0 0.0
        %6127 = vmatprep.subr.mxu0 0.0
        %6128 = vmatpush1.msra.mxu0 0.0
        %6129 = vmatprep.subr.mxu0 0.0
        %6130 = vmatpush1.msra.mxu0 0.0
        %6131 = vmatprep.subr.mxu0 0.0
        %6132 = vmatpush1.msra.mxu0 0.0
        %6133 = vmatprep.subr.mxu0 0.0
        %6134 = vmatpush1.msra.mxu0 0.0
        %6135 = vmatprep.subr.mxu0 0.0
        %6136 = vmatpush1.msra.mxu0 0.0
        %6137 = vmatprep.subr.mxu0 0.0
        %6138 = vmatpush1.msra.mxu0 0.0
        %6139 = vmatprep.subr.mxu0 0.0
        %6140 = vmatpush1.msra.mxu0 0.0
        %6141 = vmatprep.subr.mxu0 0.0
        %6142 = vmatpush1.msra.mxu0 0.0
        %6143 = vmatprep.subr.mxu0 0.0
        %6144 = vmatpush1.msra.mxu0 0.0
        %6145 = vmatprep.subr.mxu0 0.0
        %6146 = vmatpush1.msra.mxu0 0.0
        %6147 = vmatprep.subr.mxu0 0.0
        %6148 = vmatpush1.msra.mxu0 0.0
        %6149 = vmatprep.mubr.f32.mxu0 0.0
        %6150 = vmatmul.mubr.f32.gmra.mrb[0].mxu0 %v6083
        %v6151 = vpop.f32.mrb[0].mxu0
        %v6152 = vadd.f32 0.0, %v6151
        %v6153 = vpop.f32.mrb[0].mxu0
        %6154 = vdwg.mxu0
        %v6155 = vadd.f32 %v6081, %v6152
        %v6156 = vrot.slane %v5583, 2
        %v6157 = vsel %vm494, %v6156, 0
        %6159 = vmatprep.subr.mxu0 0.0
        %6160 = vmatpush1.msra.mxu0 %v4855
        %6161 = vmatprep.subr.mxu0 0.0
        %6162 = vmatpush1.msra.mxu0 %v4856
        %6163 = vmatprep.subr.mxu0 0.0
        %6164 = vmatpush1.msra.mxu0 %v4857
        %6165 = vmatprep.subr.mxu0 0.0
        %6166 = vmatpush1.msra.mxu0 %v4858
        %6167 = vmatprep.subr.mxu0 0.0
        %6168 = vmatpush1.msra.mxu0 0.0
        %6169 = vmatprep.subr.mxu0 0.0
        %6170 = vmatpush1.msra.mxu0 0.0
        %6171 = vmatprep.subr.mxu0 0.0
        %6172 = vmatpush1.msra.mxu0 0.0
        %6173 = vmatprep.subr.mxu0 0.0
        %6174 = vmatpush1.msra.mxu0 0.0
        %6175 = vmatprep.subr.mxu0 0.0
        %6176 = vmatpush1.msra.mxu0 0.0
        %6177 = vmatprep.subr.mxu0 0.0
        %6178 = vmatpush1.msra.mxu0 0.0
        %6179 = vmatprep.subr.mxu0 0.0
        %6180 = vmatpush1.msra.mxu0 0.0
        %6181 = vmatprep.subr.mxu0 0.0
        %6182 = vmatpush1.msra.mxu0 0.0
        %6183 = vmatprep.subr.mxu0 0.0
        %6184 = vmatpush1.msra.mxu0 0.0
        %6185 = vmatprep.subr.mxu0 0.0
        %6186 = vmatpush1.msra.mxu0 0.0
        %6187 = vmatprep.subr.mxu0 0.0
        %6188 = vmatpush1.msra.mxu0 0.0
        %6189 = vmatprep.subr.mxu0 0.0
        %6190 = vmatpush1.msra.mxu0 0.0
        %6191 = vmatprep.subr.mxu0 0.0
        %6192 = vmatpush1.msra.mxu0 0.0
        %6193 = vmatprep.subr.mxu0 0.0
        %6194 = vmatpush1.msra.mxu0 0.0
        %6195 = vmatprep.subr.mxu0 0.0
        %6196 = vmatpush1.msra.mxu0 0.0
        %6197 = vmatprep.subr.mxu0 0.0
        %6198 = vmatpush1.msra.mxu0 0.0
        %6199 = vmatprep.subr.mxu0 0.0
        %6200 = vmatpush1.msra.mxu0 0.0
        %6201 = vmatprep.subr.mxu0 0.0
        %6202 = vmatpush1.msra.mxu0 0.0
        %6203 = vmatprep.subr.mxu0 0.0
        %6204 = vmatpush1.msra.mxu0 0.0
        %6205 = vmatprep.subr.mxu0 0.0
        %6206 = vmatpush1.msra.mxu0 0.0
        %6207 = vmatprep.subr.mxu0 0.0
        %6208 = vmatpush1.msra.mxu0 0.0
        %6209 = vmatprep.subr.mxu0 0.0
        %6210 = vmatpush1.msra.mxu0 0.0
        %6211 = vmatprep.subr.mxu0 0.0
        %6212 = vmatpush1.msra.mxu0 0.0
        %6213 = vmatprep.subr.mxu0 0.0
        %6214 = vmatpush1.msra.mxu0 0.0
        %6215 = vmatprep.subr.mxu0 0.0
        %6216 = vmatpush1.msra.mxu0 0.0
        %6217 = vmatprep.subr.mxu0 0.0
        %6218 = vmatpush1.msra.mxu0 0.0
        %6219 = vmatprep.subr.mxu0 0.0
        %6220 = vmatpush1.msra.mxu0 0.0
        %6221 = vmatprep.subr.mxu0 0.0
        %6222 = vmatpush1.msra.mxu0 0.0
        %6223 = vmatprep.mubr.f32.mxu0 0.0
        %6224 = vmatmul.mubr.f32.gmra.mrb[0].mxu0 %v6157
        %v6225 = vpop.f32.mrb[0].mxu0
        %v6226 = vadd.f32 0.0, %v6225
        %v6227 = vpop.f32.mrb[0].mxu0
        %6228 = vdwg.mxu0
        %v6229 = vadd.f32 %v6155, %v6226
        %v6230 = vmax.f32 %v5581, %v6229
        %s6231 = scalar_lea.vmem [#allocation4], 40
        %v6232 = vld [vmem:[%s6231] sm:$0x3f]
        %6233 = vmatprep.subr.mxu0 0.0
        %6234 = vmatpush1.msra.mxu0 %v4230
        %6235 = vmatprep.subr.mxu0 0.0
        %6236 = vmatpush1.msra.mxu0 %v4231
        %6237 = vmatprep.subr.mxu0 0.0
        %6238 = vmatpush1.msra.mxu0 %v4232
        %6239 = vmatprep.subr.mxu0 0.0
        %6240 = vmatpush1.msra.mxu0 %v4233
        %6241 = vmatprep.subr.mxu0 0.0
        %6242 = vmatpush1.msra.mxu0 0.0
        %6243 = vmatprep.subr.mxu0 0.0
        %6244 = vmatpush1.msra.mxu0 0.0
        %6245 = vmatprep.subr.mxu0 0.0
        %6246 = vmatpush1.msra.mxu0 0.0
        %6247 = vmatprep.subr.mxu0 0.0
        %6248 = vmatpush1.msra.mxu0 0.0
        %6249 = vmatprep.subr.mxu0 0.0
        %6250 = vmatpush1.msra.mxu0 0.0
        %6251 = vmatprep.subr.mxu0 0.0
        %6252 = vmatpush1.msra.mxu0 0.0
        %6253 = vmatprep.subr.mxu0 0.0
        %6254 = vmatpush1.msra.mxu0 0.0
        %6255 = vmatprep.subr.mxu0 0.0
        %6256 = vmatpush1.msra.mxu0 0.0
        %6257 = vmatprep.subr.mxu0 0.0
        %6258 = vmatpush1.msra.mxu0 0.0
        %6259 = vmatprep.subr.mxu0 0.0
        %6260 = vmatpush1.msra.mxu0 0.0
        %6261 = vmatprep.subr.mxu0 0.0
        %6262 = vmatpush1.msra.mxu0 0.0
        %6263 = vmatprep.subr.mxu0 0.0
        %6264 = vmatpush1.msra.mxu0 0.0
        %6265 = vmatprep.subr.mxu0 0.0
        %6266 = vmatpush1.msra.mxu0 0.0
        %6267 = vmatprep.subr.mxu0 0.0
        %6268 = vmatpush1.msra.mxu0 0.0
        %6269 = vmatprep.subr.mxu0 0.0
        %6270 = vmatpush1.msra.mxu0 0.0
        %6271 = vmatprep.subr.mxu0 0.0
        %6272 = vmatpush1.msra.mxu0 0.0
        %6273 = vmatprep.subr.mxu0 0.0
        %6274 = vmatpush1.msra.mxu0 0.0
        %6275 = vmatprep.subr.mxu0 0.0
        %6276 = vmatpush1.msra.mxu0 0.0
        %6277 = vmatprep.subr.mxu0 0.0
        %6278 = vmatpush1.msra.mxu0 0.0
        %6279 = vmatprep.subr.mxu0 0.0
        %6280 = vmatpush1.msra.mxu0 0.0
        %6281 = vmatprep.subr.mxu0 0.0
        %6282 = vmatpush1.msra.mxu0 0.0
        %6283 = vmatprep.subr.mxu0 0.0
        %6284 = vmatpush1.msra.mxu0 0.0
        %6285 = vmatprep.subr.mxu0 0.0
        %6286 = vmatpush1.msra.mxu0 0.0
        %6287 = vmatprep.subr.mxu0 0.0
        %6288 = vmatpush1.msra.mxu0 0.0
        %6289 = vmatprep.subr.mxu0 0.0
        %6290 = vmatpush1.msra.mxu0 0.0
        %6291 = vmatprep.subr.mxu0 0.0
        %6292 = vmatpush1.msra.mxu0 0.0
        %6293 = vmatprep.subr.mxu0 0.0
        %6294 = vmatpush1.msra.mxu0 0.0
        %6295 = vmatprep.subr.mxu0 0.0
        %6296 = vmatpush1.msra.mxu0 0.0
        %6297 = vmatprep.mubr.f32.mxu0 0.0
        %6298 = vmatmul.mubr.f32.gmra.mrb[0].mxu0 %v5434
        %v6299 = vpop.f32.mrb[0].mxu0
        %v6300 = vadd.f32 0.0, %v6299
        %v6301 = vpop.f32.mrb[0].mxu0
        %6302 = vdwg.mxu0
        %6303 = vmatprep.subr.mxu0 0.0
        %6304 = vmatpush1.msra.mxu0 %v4225
        %6305 = vmatprep.subr.mxu0 0.0
        %6306 = vmatpush1.msra.mxu0 %v4226
        %6307 = vmatprep.subr.mxu0 0.0
        %6308 = vmatpush1.msra.mxu0 %v4227
        %6309 = vmatprep.subr.mxu0 0.0
        %6310 = vmatpush1.msra.mxu0 %v4228
        %6311 = vmatprep.subr.mxu0 0.0
        %6312 = vmatpush1.msra.mxu0 0.0
        %6313 = vmatprep.subr.mxu0 0.0
        %6314 = vmatpush1.msra.mxu0 0.0
        %6315 = vmatprep.subr.mxu0 0.0
        %6316 = vmatpush1.msra.mxu0 0.0
        %6317 = vmatprep.subr.mxu0 0.0
        %6318 = vmatpush1.msra.mxu0 0.0
        %6319 = vmatprep.subr.mxu0 0.0
        %6320 = vmatpush1.msra.mxu0 0.0
        %6321 = vmatprep.subr.mxu0 0.0
        %6322 = vmatpush1.msra.mxu0 0.0
        %6323 = vmatprep.subr.mxu0 0.0
        %6324 = vmatpush1.msra.mxu0 0.0
        %6325 = vmatprep.subr.mxu0 0.0
        %6326 = vmatpush1.msra.mxu0 0.0
        %6327 = vmatprep.subr.mxu0 0.0
        %6328 = vmatpush1.msra.mxu0 0.0
        %6329 = vmatprep.subr.mxu0 0.0
        %6330 = vmatpush1.msra.mxu0 0.0
        %6331 = vmatprep.subr.mxu0 0.0
        %6332 = vmatpush1.msra.mxu0 0.0
        %6333 = vmatprep.subr.mxu0 0.0
        %6334 = vmatpush1.msra.mxu0 0.0
        %6335 = vmatprep.subr.mxu0 0.0
        %6336 = vmatpush1.msra.mxu0 0.0
        %6337 = vmatprep.subr.mxu0 0.0
        %6338 = vmatpush1.msra.mxu0 0.0
        %6339 = vmatprep.subr.mxu0 0.0
        %6340 = vmatpush1.msra.mxu0 0.0
        %6341 = vmatprep.subr.mxu0 0.0
        %6342 = vmatpush1.msra.mxu0 0.0
        %6343 = vmatprep.subr.mxu0 0.0
        %6344 = vmatpush1.msra.mxu0 0.0
        %6345 = vmatprep.subr.mxu0 0.0
        %6346 = vmatpush1.msra.mxu0 0.0
        %6347 = vmatprep.subr.mxu0 0.0
        %6348 = vmatpush1.msra.mxu0 0.0
        %6349 = vmatprep.subr.mxu0 0.0
        %6350 = vmatpush1.msra.mxu0 0.0
        %6351 = vmatprep.subr.mxu0 0.0
        %6352 = vmatpush1.msra.mxu0 0.0
        %6353 = vmatprep.subr.mxu0 0.0
        %6354 = vmatpush1.msra.mxu0 0.0
        %6355 = vmatprep.subr.mxu0 0.0
        %6356 = vmatpush1.msra.mxu0 0.0
        %6357 = vmatprep.subr.mxu0 0.0
        %6358 = vmatpush1.msra.mxu0 0.0
        %6359 = vmatprep.subr.mxu0 0.0
        %6360 = vmatpush1.msra.mxu0 0.0
        %6361 = vmatprep.subr.mxu0 0.0
        %6362 = vmatpush1.msra.mxu0 0.0
        %6363 = vmatprep.subr.mxu0 0.0
        %6364 = vmatpush1.msra.mxu0 0.0
        %6365 = vmatprep.subr.mxu0 0.0
        %6366 = vmatpush1.msra.mxu0 0.0
        %6367 = vmatprep.mubr.f32.mxu0 0.0
        %6368 = vmatmul.mubr.f32.gmra.mrb[0].mxu0 %v5360
        %v6369 = vpop.f32.mrb[0].mxu0
        %v6370 = vadd.f32 %v6300, %v6369
        %v6371 = vpop.f32.mrb[0].mxu0
        %6372 = vdwg.mxu0
        %6373 = vmatprep.subr.mxu0 0.0
        %6374 = vmatpush1.msra.mxu0 %v4381
        %6375 = vmatprep.subr.mxu0 0.0
        %6376 = vmatpush1.msra.mxu0 %v4382
        %6377 = vmatprep.subr.mxu0 0.0
        %6378 = vmatpush1.msra.mxu0 %v4383
        %6379 = vmatprep.subr.mxu0 0.0
        %6380 = vmatpush1.msra.mxu0 %v4384
        %6381 = vmatprep.subr.mxu0 0.0
        %6382 = vmatpush1.msra.mxu0 0.0
        %6383 = vmatprep.subr.mxu0 0.0
        %6384 = vmatpush1.msra.mxu0 0.0
        %6385 = vmatprep.subr.mxu0 0.0
        %6386 = vmatpush1.msra.mxu0 0.0
        %6387 = vmatprep.subr.mxu0 0.0
        %6388 = vmatpush1.msra.mxu0 0.0
        %6389 = vmatprep.subr.mxu0 0.0
        %6390 = vmatpush1.msra.mxu0 0.0
        %6391 = vmatprep.subr.mxu0 0.0
        %6392 = vmatpush1.msra.mxu0 0.0
        %6393 = vmatprep.subr.mxu0 0.0
        %6394 = vmatpush1.msra.mxu0 0.0
        %6395 = vmatprep.subr.mxu0 0.0
        %6396 = vmatpush1.msra.mxu0 0.0
        %6397 = vmatprep.subr.mxu0 0.0
        %6398 = vmatpush1.msra.mxu0 0.0
        %6399 = vmatprep.subr.mxu0 0.0
        %6400 = vmatpush1.msra.mxu0 0.0
        %6401 = vmatprep.subr.mxu0 0.0
        %6402 = vmatpush1.msra.mxu0 0.0
        %6403 = vmatprep.subr.mxu0 0.0
        %6404 = vmatpush1.msra.mxu0 0.0
        %6405 = vmatprep.subr.mxu0 0.0
        %6406 = vmatpush1.msra.mxu0 0.0
        %6407 = vmatprep.subr.mxu0 0.0
        %6408 = vmatpush1.msra.mxu0 0.0
        %6409 = vmatprep.subr.mxu0 0.0
        %6410 = vmatpush1.msra.mxu0 0.0
        %6411 = vmatprep.subr.mxu0 0.0
        %6412 = vmatpush1.msra.mxu0 0.0
        %6413 = vmatprep.subr.mxu0 0.0
        %6414 = vmatpush1.msra.mxu0 0.0
        %6415 = vmatprep.subr.mxu0 0.0
        %6416 = vmatpush1.msra.mxu0 0.0
        %6417 = vmatprep.subr.mxu0 0.0
        %6418 = vmatpush1.msra.mxu0 0.0
        %6419 = vmatprep.subr.mxu0 0.0
        %6420 = vmatpush1.msra.mxu0 0.0
        %6421 = vmatprep.subr.mxu0 0.0
        %6422 = vmatpush1.msra.mxu0 0.0
        %6423 = vmatprep.subr.mxu0 0.0
        %6424 = vmatpush1.msra.mxu0 0.0
        %6425 = vmatprep.subr.mxu0 0.0
        %6426 = vmatpush1.msra.mxu0 0.0
        %6427 = vmatprep.subr.mxu0 0.0
        %6428 = vmatpush1.msra.mxu0 0.0
        %6429 = vmatprep.subr.mxu0 0.0
        %6430 = vmatpush1.msra.mxu0 0.0
        %6431 = vmatprep.subr.mxu0 0.0
        %6432 = vmatpush1.msra.mxu0 0.0
        %6433 = vmatprep.subr.mxu0 0.0
        %6434 = vmatpush1.msra.mxu0 0.0
        %6435 = vmatprep.subr.mxu0 0.0
        %6436 = vmatpush1.msra.mxu0 0.0
        %6437 = vmatprep.mubr.f32.mxu0 0.0
        %6438 = vmatmul.mubr.f32.gmra.mrb[0].mxu0 %v5508
        %v6439 = vpop.f32.mrb[0].mxu0
        %v6440 = vadd.f32 0.0, %v6439
        %v6441 = vpop.f32.mrb[0].mxu0
        %6442 = vdwg.mxu0
        %v6443 = vadd.f32 %v6370, %v6440
        %6444 = vmatprep.subr.mxu0 0.0
        %6445 = vmatpush1.msra.mxu0 %v4460
        %6446 = vmatprep.subr.mxu0 0.0
        %6447 = vmatpush1.msra.mxu0 %v4461
        %6448 = vmatprep.subr.mxu0 0.0
        %6449 = vmatpush1.msra.mxu0 %v4462
        %6450 = vmatprep.subr.mxu0 0.0
        %6451 = vmatpush1.msra.mxu0 %v4463
        %6452 = vmatprep.subr.mxu0 0.0
        %6453 = vmatpush1.msra.mxu0 0.0
        %6454 = vmatprep.subr.mxu0 0.0
        %6455 = vmatpush1.msra.mxu0 0.0
        %6456 = vmatprep.subr.mxu0 0.0
        %6457 = vmatpush1.msra.mxu0 0.0
        %6458 = vmatprep.subr.mxu0 0.0
        %6459 = vmatpush1.msra.mxu0 0.0
        %6460 = vmatprep.subr.mxu0 0.0
        %6461 = vmatpush1.msra.mxu0 0.0
        %6462 = vmatprep.subr.mxu0 0.0
        %6463 = vmatpush1.msra.mxu0 0.0
        %6464 = vmatprep.subr.mxu0 0.0
        %6465 = vmatpush1.msra.mxu0 0.0
        %6466 = vmatprep.subr.mxu0 0.0
        %6467 = vmatpush1.msra.mxu0 0.0
        %6468 = vmatprep.subr.mxu0 0.0
        %6469 = vmatpush1.msra.mxu0 0.0
        %6470 = vmatprep.subr.mxu0 0.0
        %6471 = vmatpush1.msra.mxu0 0.0
        %6472 = vmatprep.subr.mxu0 0.0
        %6473 = vmatpush1.msra.mxu0 0.0
        %6474 = vmatprep.subr.mxu0 0.0
        %6475 = vmatpush1.msra.mxu0 0.0
        %6476 = vmatprep.subr.mxu0 0.0
        %6477 = vmatpush1.msra.mxu0 0.0
        %6478 = vmatprep.subr.mxu0 0.0
        %6479 = vmatpush1.msra.mxu0 0.0
        %6480 = vmatprep.subr.mxu0 0.0
        %6481 = vmatpush1.msra.mxu0 0.0
        %6482 = vmatprep.subr.mxu0 0.0
        %6483 = vmatpush1.msra.mxu0 0.0
        %6484 = vmatprep.subr.mxu0 0.0
        %6485 = vmatpush1.msra.mxu0 0.0
        %6486 = vmatprep.subr.mxu0 0.0
        %6487 = vmatpush1.msra.mxu0 0.0
        %6488 = vmatprep.subr.mxu0 0.0
        %6489 = vmatpush1.msra.mxu0 0.0
        %6490 = vmatprep.subr.mxu0 0.0
        %6491 = vmatpush1.msra.mxu0 0.0
        %6492 = vmatprep.subr.mxu0 0.0
        %6493 = vmatpush1.msra.mxu0 0.0
        %6494 = vmatprep.subr.mxu0 0.0
        %6495 = vmatpush1.msra.mxu0 0.0
        %6496 = vmatprep.subr.mxu0 0.0
        %6497 = vmatpush1.msra.mxu0 0.0
        %6498 = vmatprep.subr.mxu0 0.0
        %6499 = vmatpush1.msra.mxu0 0.0
        %6500 = vmatprep.subr.mxu0 0.0
        %6501 = vmatpush1.msra.mxu0 0.0
        %6502 = vmatprep.subr.mxu0 0.0
        %6503 = vmatpush1.msra.mxu0 0.0
        %6504 = vmatprep.subr.mxu0 0.0
        %6505 = vmatpush1.msra.mxu0 0.0
        %6506 = vmatprep.subr.mxu0 0.0
        %6507 = vmatpush1.msra.mxu0 0.0
        %6508 = vmatprep.mubr.f32.mxu0 0.0
        %6509 = vmatmul.mubr.f32.gmra.mrb[0].mxu0 %v6009
        %v6510 = vpop.f32.mrb[0].mxu0
        %v6511 = vadd.f32 0.0, %v6510
        %v6512 = vpop.f32.mrb[0].mxu0
        %6513 = vdwg.mxu0
        %v6514 = vadd.f32 %v6443, %v6511
        %6515 = vmatprep.subr.mxu0 0.0
        %6516 = vmatpush1.msra.mxu0 %v4539
        %6517 = vmatprep.subr.mxu0 0.0
        %6518 = vmatpush1.msra.mxu0 %v4540
        %6519 = vmatprep.subr.mxu0 0.0
        %6520 = vmatpush1.msra.mxu0 %v4541
        %6521 = vmatprep.subr.mxu0 0.0
        %6522 = vmatpush1.msra.mxu0 %v4542
        %6523 = vmatprep.subr.mxu0 0.0
        %6524 = vmatpush1.msra.mxu0 0.0
        %6525 = vmatprep.subr.mxu0 0.0
        %6526 = vmatpush1.msra.mxu0 0.0
        %6527 = vmatprep.subr.mxu0 0.0
        %6528 = vmatpush1.msra.mxu0 0.0
        %6529 = vmatprep.subr.mxu0 0.0
        %6530 = vmatpush1.msra.mxu0 0.0
        %6531 = vmatprep.subr.mxu0 0.0
        %6532 = vmatpush1.msra.mxu0 0.0
        %6533 = vmatprep.subr.mxu0 0.0
        %6534 = vmatpush1.msra.mxu0 0.0
        %6535 = vmatprep.subr.mxu0 0.0
        %6536 = vmatpush1.msra.mxu0 0.0
        %6537 = vmatprep.subr.mxu0 0.0
        %6538 = vmatpush1.msra.mxu0 0.0
        %6539 = vmatprep.subr.mxu0 0.0
        %6540 = vmatpush1.msra.mxu0 0.0
        %6541 = vmatprep.subr.mxu0 0.0
        %6542 = vmatpush1.msra.mxu0 0.0
        %6543 = vmatprep.subr.mxu0 0.0
        %6544 = vmatpush1.msra.mxu0 0.0
        %6545 = vmatprep.subr.mxu0 0.0
        %6546 = vmatpush1.msra.mxu0 0.0
        %6547 = vmatprep.subr.mxu0 0.0
        %6548 = vmatpush1.msra.mxu0 0.0
        %6549 = vmatprep.subr.mxu0 0.0
        %6550 = vmatpush1.msra.mxu0 0.0
        %6551 = vmatprep.subr.mxu0 0.0
        %6552 = vmatpush1.msra.mxu0 0.0
        %6553 = vmatprep.subr.mxu0 0.0
        %6554 = vmatpush1.msra.mxu0 0.0
        %6555 = vmatprep.subr.mxu0 0.0
        %6556 = vmatpush1.msra.mxu0 0.0
        %6557 = vmatprep.subr.mxu0 0.0
        %6558 = vmatpush1.msra.mxu0 0.0
        %6559 = vmatprep.subr.mxu0 0.0
        %6560 = vmatpush1.msra.mxu0 0.0
        %6561 = vmatprep.subr.mxu0 0.0
        %6562 = vmatpush1.msra.mxu0 0.0
        %6563 = vmatprep.subr.mxu0 0.0
        %6564 = vmatpush1.msra.mxu0 0.0
        %6565 = vmatprep.subr.mxu0 0.0
        %6566 = vmatpush1.msra.mxu0 0.0
        %6567 = vmatprep.subr.mxu0 0.0
        %6568 = vmatpush1.msra.mxu0 0.0
        %6569 = vmatprep.subr.mxu0 0.0
        %6570 = vmatpush1.msra.mxu0 0.0
        %6571 = vmatprep.subr.mxu0 0.0
        %6572 = vmatpush1.msra.mxu0 0.0
        %6573 = vmatprep.subr.mxu0 0.0
        %6574 = vmatpush1.msra.mxu0 0.0
        %6575 = vmatprep.subr.mxu0 0.0
        %6576 = vmatpush1.msra.mxu0 0.0
        %6577 = vmatprep.subr.mxu0 0.0
        %6578 = vmatpush1.msra.mxu0 0.0
        %6579 = vmatprep.mubr.f32.mxu0 0.0
        %6580 = vmatmul.mubr.f32.gmra.mrb[0].mxu0 %v6083
        %v6581 = vpop.f32.mrb[0].mxu0
        %v6582 = vadd.f32 0.0, %v6581
        %v6583 = vpop.f32.mrb[0].mxu0
        %6584 = vdwg.mxu0
        %v6585 = vadd.f32 %v6514, %v6582
        %6586 = vmatprep.subr.mxu0 0.0
        %6587 = vmatpush1.msra.mxu0 %v4618
        %6588 = vmatprep.subr.mxu0 0.0
        %6589 = vmatpush1.msra.mxu0 %v4619
        %6590 = vmatprep.subr.mxu0 0.0
        %6591 = vmatpush1.msra.mxu0 %v4620
        %6592 = vmatprep.subr.mxu0 0.0
        %6593 = vmatpush1.msra.mxu0 %v4621
        %6594 = vmatprep.subr.mxu0 0.0
        %6595 = vmatpush1.msra.mxu0 0.0
        %6596 = vmatprep.subr.mxu0 0.0
        %6597 = vmatpush1.msra.mxu0 0.0
        %6598 = vmatprep.subr.mxu0 0.0
        %6599 = vmatpush1.msra.mxu0 0.0
        %6600 = vmatprep.subr.mxu0 0.0
        %6601 = vmatpush1.msra.mxu0 0.0
        %6602 = vmatprep.subr.mxu0 0.0
        %6603 = vmatpush1.msra.mxu0 0.0
        %6604 = vmatprep.subr.mxu0 0.0
        %6605 = vmatpush1.msra.mxu0 0.0
        %6606 = vmatprep.subr.mxu0 0.0
        %6607 = vmatpush1.msra.mxu0 0.0
        %6608 = vmatprep.subr.mxu0 0.0
        %6609 = vmatpush1.msra.mxu0 0.0
        %6610 = vmatprep.subr.mxu0 0.0
        %6611 = vmatpush1.msra.mxu0 0.0
        %6612 = vmatprep.subr.mxu0 0.0
        %6613 = vmatpush1.msra.mxu0 0.0
        %6614 = vmatprep.subr.mxu0 0.0
        %6615 = vmatpush1.msra.mxu0 0.0
        %6616 = vmatprep.subr.mxu0 0.0
        %6617 = vmatpush1.msra.mxu0 0.0
        %6618 = vmatprep.subr.mxu0 0.0
        %6619 = vmatpush1.msra.mxu0 0.0
        %6620 = vmatprep.subr.mxu0 0.0
        %6621 = vmatpush1.msra.mxu0 0.0
        %6622 = vmatprep.subr.mxu0 0.0
        %6623 = vmatpush1.msra.mxu0 0.0
        %6624 = vmatprep.subr.mxu0 0.0
        %6625 = vmatpush1.msra.mxu0 0.0
        %6626 = vmatprep.subr.mxu0 0.0
        %6627 = vmatpush1.msra.mxu0 0.0
        %6628 = vmatprep.subr.mxu0 0.0
        %6629 = vmatpush1.msra.mxu0 0.0
        %6630 = vmatprep.subr.mxu0 0.0
        %6631 = vmatpush1.msra.mxu0 0.0
        %6632 = vmatprep.subr.mxu0 0.0
        %6633 = vmatpush1.msra.mxu0 0.0
        %6634 = vmatprep.subr.mxu0 0.0
        %6635 = vmatpush1.msra.mxu0 0.0
        %6636 = vmatprep.subr.mxu0 0.0
        %6637 = vmatpush1.msra.mxu0 0.0
        %6638 = vmatprep.subr.mxu0 0.0
        %6639 = vmatpush1.msra.mxu0 0.0
        %6640 = vmatprep.subr.mxu0 0.0
        %6641 = vmatpush1.msra.mxu0 0.0
        %6642 = vmatprep.subr.mxu0 0.0
        %6643 = vmatpush1.msra.mxu0 0.0
        %6644 = vmatprep.subr.mxu0 0.0
        %6645 = vmatpush1.msra.mxu0 0.0
        %6646 = vmatprep.subr.mxu0 0.0
        %6647 = vmatpush1.msra.mxu0 0.0
        %6648 = vmatprep.subr.mxu0 0.0
        %6649 = vmatpush1.msra.mxu0 0.0
        %6650 = vmatprep.mubr.f32.mxu0 0.0
        %6651 = vmatmul.mubr.f32.gmra.mrb[0].mxu0 %v6157
        %v6652 = vpop.f32.mrb[0].mxu0
        %v6653 = vadd.f32 0.0, %v6652
        %v6654 = vpop.f32.mrb[0].mxu0
        %6655 = vdwg.mxu0
        %v6656 = vadd.f32 %v6585, %v6653
        %v6658 = vsel %vm494, %v6232, 0
        %6660 = vmatprep.subr.mxu0 0.0
        %6661 = vmatpush1.msra.mxu0 %v4697
        %6662 = vmatprep.subr.mxu0 0.0
        %6663 = vmatpush1.msra.mxu0 %v4698
        %6664 = vmatprep.subr.mxu0 0.0
        %6665 = vmatpush1.msra.mxu0 %v4699
        %6666 = vmatprep.subr.mxu0 0.0
        %6667 = vmatpush1.msra.mxu0 %v4700
        %6668 = vmatprep.subr.mxu0 0.0
        %6669 = vmatpush1.msra.mxu0 0.0
        %6670 = vmatprep.subr.mxu0 0.0
        %6671 = vmatpush1.msra.mxu0 0.0
        %6672 = vmatprep.subr.mxu0 0.0
        %6673 = vmatpush1.msra.mxu0 0.0
        %6674 = vmatprep.subr.mxu0 0.0
        %6675 = vmatpush1.msra.mxu0 0.0
        %6676 = vmatprep.subr.mxu0 0.0
        %6677 = vmatpush1.msra.mxu0 0.0
        %6678 = vmatprep.subr.mxu0 0.0
        %6679 = vmatpush1.msra.mxu0 0.0
        %6680 = vmatprep.subr.mxu0 0.0
        %6681 = vmatpush1.msra.mxu0 0.0
        %6682 = vmatprep.subr.mxu0 0.0
        %6683 = vmatpush1.msra.mxu0 0.0
        %6684 = vmatprep.subr.mxu0 0.0
        %6685 = vmatpush1.msra.mxu0 0.0
        %6686 = vmatprep.subr.mxu0 0.0
        %6687 = vmatpush1.msra.mxu0 0.0
        %6688 = vmatprep.subr.mxu0 0.0
        %6689 = vmatpush1.msra.mxu0 0.0
        %6690 = vmatprep.subr.mxu0 0.0
        %6691 = vmatpush1.msra.mxu0 0.0
        %6692 = vmatprep.subr.mxu0 0.0
        %6693 = vmatpush1.msra.mxu0 0.0
        %6694 = vmatprep.subr.mxu0 0.0
        %6695 = vmatpush1.msra.mxu0 0.0
        %6696 = vmatprep.subr.mxu0 0.0
        %6697 = vmatpush1.msra.mxu0 0.0
        %6698 = vmatprep.subr.mxu0 0.0
        %6699 = vmatpush1.msra.mxu0 0.0
        %6700 = vmatprep.subr.mxu0 0.0
        %6701 = vmatpush1.msra.mxu0 0.0
        %6702 = vmatprep.subr.mxu0 0.0
        %6703 = vmatpush1.msra.mxu0 0.0
        %6704 = vmatprep.subr.mxu0 0.0
        %6705 = vmatpush1.msra.mxu0 0.0
        %6706 = vmatprep.subr.mxu0 0.0
        %6707 = vmatpush1.msra.mxu0 0.0
        %6708 = vmatprep.subr.mxu0 0.0
        %6709 = vmatpush1.msra.mxu0 0.0
        %6710 = vmatprep.subr.mxu0 0.0
        %6711 = vmatpush1.msra.mxu0 0.0
        %6712 = vmatprep.subr.mxu0 0.0
        %6713 = vmatpush1.msra.mxu0 0.0
        %6714 = vmatprep.subr.mxu0 0.0
        %6715 = vmatpush1.msra.mxu0 0.0
        %6716 = vmatprep.subr.mxu0 0.0
        %6717 = vmatpush1.msra.mxu0 0.0
        %6718 = vmatprep.subr.mxu0 0.0
        %6719 = vmatpush1.msra.mxu0 0.0
        %6720 = vmatprep.subr.mxu0 0.0
        %6721 = vmatpush1.msra.mxu0 0.0
        %6722 = vmatprep.subr.mxu0 0.0
        %6723 = vmatpush1.msra.mxu0 0.0
        %6724 = vmatprep.mubr.f32.mxu0 0.0
        %6725 = vmatmul.mubr.f32.gmra.mrb[0].mxu0 %v6658
        %v6726 = vpop.f32.mrb[0].mxu0
        %v6727 = vadd.f32 0.0, %v6726
        %v6728 = vpop.f32.mrb[0].mxu0
        %6729 = vdwg.mxu0
        %v6730 = vadd.f32 %v6656, %v6727
        %v6731 = vrot.slane %v6232, 1
        %v6732 = vsel %vm494, %v6731, 0
        %6734 = vmatprep.subr.mxu0 0.0
        %6735 = vmatpush1.msra.mxu0 %v4776
        %6736 = vmatprep.subr.mxu0 0.0
        %6737 = vmatpush1.msra.mxu0 %v4777
        %6738 = vmatprep.subr.mxu0 0.0
        %6739 = vmatpush1.msra.mxu0 %v4778
        %6740 = vmatprep.subr.mxu0 0.0
        %6741 = vmatpush1.msra.mxu0 %v4779
        %6742 = vmatprep.subr.mxu0 0.0
        %6743 = vmatpush1.msra.mxu0 0.0
        %6744 = vmatprep.subr.mxu0 0.0
        %6745 = vmatpush1.msra.mxu0 0.0
        %6746 = vmatprep.subr.mxu0 0.0
        %6747 = vmatpush1.msra.mxu0 0.0
        %6748 = vmatprep.subr.mxu0 0.0
        %6749 = vmatpush1.msra.mxu0 0.0
        %6750 = vmatprep.subr.mxu0 0.0
        %6751 = vmatpush1.msra.mxu0 0.0
        %6752 = vmatprep.subr.mxu0 0.0
        %6753 = vmatpush1.msra.mxu0 0.0
        %6754 = vmatprep.subr.mxu0 0.0
        %6755 = vmatpush1.msra.mxu0 0.0
        %6756 = vmatprep.subr.mxu0 0.0
        %6757 = vmatpush1.msra.mxu0 0.0
        %6758 = vmatprep.subr.mxu0 0.0
        %6759 = vmatpush1.msra.mxu0 0.0
        %6760 = vmatprep.subr.mxu0 0.0
        %6761 = vmatpush1.msra.mxu0 0.0
        %6762 = vmatprep.subr.mxu0 0.0
        %6763 = vmatpush1.msra.mxu0 0.0
        %6764 = vmatprep.subr.mxu0 0.0
        %6765 = vmatpush1.msra.mxu0 0.0
        %6766 = vmatprep.subr.mxu0 0.0
        %6767 = vmatpush1.msra.mxu0 0.0
        %6768 = vmatprep.subr.mxu0 0.0
        %6769 = vmatpush1.msra.mxu0 0.0
        %6770 = vmatprep.subr.mxu0 0.0
        %6771 = vmatpush1.msra.mxu0 0.0
        %6772 = vmatprep.subr.mxu0 0.0
        %6773 = vmatpush1.msra.mxu0 0.0
        %6774 = vmatprep.subr.mxu0 0.0
        %6775 = vmatpush1.msra.mxu0 0.0
        %6776 = vmatprep.subr.mxu0 0.0
        %6777 = vmatpush1.msra.mxu0 0.0
        %6778 = vmatprep.subr.mxu0 0.0
        %6779 = vmatpush1.msra.mxu0 0.0
        %6780 = vmatprep.subr.mxu0 0.0
        %6781 = vmatpush1.msra.mxu0 0.0
        %6782 = vmatprep.subr.mxu0 0.0
        %6783 = vmatpush1.msra.mxu0 0.0
        %6784 = vmatprep.subr.mxu0 0.0
        %6785 = vmatpush1.msra.mxu0 0.0
        %6786 = vmatprep.subr.mxu0 0.0
        %6787 = vmatpush1.msra.mxu0 0.0
        %6788 = vmatprep.subr.mxu0 0.0
        %6789 = vmatpush1.msra.mxu0 0.0
        %6790 = vmatprep.subr.mxu0 0.0
        %6791 = vmatpush1.msra.mxu0 0.0
        %6792 = vmatprep.subr.mxu0 0.0
        %6793 = vmatpush1.msra.mxu0 0.0
        %6794 = vmatprep.subr.mxu0 0.0
        %6795 = vmatpush1.msra.mxu0 0.0
        %6796 = vmatprep.subr.mxu0 0.0
        %6797 = vmatpush1.msra.mxu0 0.0
        %6798 = vmatprep.mubr.f32.mxu0 0.0
        %6799 = vmatmul.mubr.f32.gmra.mrb[0].mxu0 %v6732
        %v6800 = vpop.f32.mrb[0].mxu0
        %v6801 = vadd.f32 0.0, %v6800
        %v6802 = vpop.f32.mrb[0].mxu0
        %6803 = vdwg.mxu0
        %v6804 = vadd.f32 %v6730, %v6801
        %v6805 = vrot.slane %v6232, 2
        %v6806 = vsel %vm494, %v6805, 0
        %6808 = vmatprep.subr.mxu0 0.0
        %6809 = vmatpush1.msra.mxu0 %v4855
        %6810 = vmatprep.subr.mxu0 0.0
        %6811 = vmatpush1.msra.mxu0 %v4856
        %6812 = vmatprep.subr.mxu0 0.0
        %6813 = vmatpush1.msra.mxu0 %v4857
        %6814 = vmatprep.subr.mxu0 0.0
        %6815 = vmatpush1.msra.mxu0 %v4858
        %6816 = vmatprep.subr.mxu0 0.0
        %6817 = vmatpush1.msra.mxu0 0.0
        %6818 = vmatprep.subr.mxu0 0.0
        %6819 = vmatpush1.msra.mxu0 0.0
        %6820 = vmatprep.subr.mxu0 0.0
        %6821 = vmatpush1.msra.mxu0 0.0
        %6822 = vmatprep.subr.mxu0 0.0
        %6823 = vmatpush1.msra.mxu0 0.0
        %6824 = vmatprep.subr.mxu0 0.0
        %6825 = vmatpush1.msra.mxu0 0.0
        %6826 = vmatprep.subr.mxu0 0.0
        %6827 = vmatpush1.msra.mxu0 0.0
        %6828 = vmatprep.subr.mxu0 0.0
        %6829 = vmatpush1.msra.mxu0 0.0
        %6830 = vmatprep.subr.mxu0 0.0
        %6831 = vmatpush1.msra.mxu0 0.0
        %6832 = vmatprep.subr.mxu0 0.0
        %6833 = vmatpush1.msra.mxu0 0.0
        %6834 = vmatprep.subr.mxu0 0.0
        %6835 = vmatpush1.msra.mxu0 0.0
        %6836 = vmatprep.subr.mxu0 0.0
        %6837 = vmatpush1.msra.mxu0 0.0
        %6838 = vmatprep.subr.mxu0 0.0
        %6839 = vmatpush1.msra.mxu0 0.0
        %6840 = vmatprep.subr.mxu0 0.0
        %6841 = vmatpush1.msra.mxu0 0.0
        %6842 = vmatprep.subr.mxu0 0.0
        %6843 = vmatpush1.msra.mxu0 0.0
        %6844 = vmatprep.subr.mxu0 0.0
        %6845 = vmatpush1.msra.mxu0 0.0
        %6846 = vmatprep.subr.mxu0 0.0
        %6847 = vmatpush1.msra.mxu0 0.0
        %6848 = vmatprep.subr.mxu0 0.0
        %6849 = vmatpush1.msra.mxu0 0.0
        %6850 = vmatprep.subr.mxu0 0.0
        %6851 = vmatpush1.msra.mxu0 0.0
        %6852 = vmatprep.subr.mxu0 0.0
        %6853 = vmatpush1.msra.mxu0 0.0
        %6854 = vmatprep.subr.mxu0 0.0
        %6855 = vmatpush1.msra.mxu0 0.0
        %6856 = vmatprep.subr.mxu0 0.0
        %6857 = vmatpush1.msra.mxu0 0.0
        %6858 = vmatprep.subr.mxu0 0.0
        %6859 = vmatpush1.msra.mxu0 0.0
        %6860 = vmatprep.subr.mxu0 0.0
        %6861 = vmatpush1.msra.mxu0 0.0
        %6862 = vmatprep.subr.mxu0 0.0
        %6863 = vmatpush1.msra.mxu0 0.0
        %6864 = vmatprep.subr.mxu0 0.0
        %6865 = vmatpush1.msra.mxu0 0.0
        %6866 = vmatprep.subr.mxu0 0.0
        %6867 = vmatpush1.msra.mxu0 0.0
        %6868 = vmatprep.subr.mxu0 0.0
        %6869 = vmatpush1.msra.mxu0 0.0
        %6870 = vmatprep.subr.mxu0 0.0
        %6871 = vmatpush1.msra.mxu0 0.0
        %6872 = vmatprep.mubr.f32.mxu0 0.0
        %6873 = vmatmul.mubr.f32.gmra.mrb[0].mxu0 %v6806
        %v6874 = vpop.f32.mrb[0].mxu0
        %v6875 = vadd.f32 0.0, %v6874
        %v6876 = vpop.f32.mrb[0].mxu0
        %6877 = vdwg.mxu0
        %v6878 = vadd.f32 %v6804, %v6875
        %v6879 = vmax.f32 %v6230, %v6878
        %vm6880 = vcmask 519168
        %v6881 = vsel %vm6880, %v6879, -inf
        %v6882 = vrot.slane %v6881, 4
        %v6883 = vmax.f32 %v6881, %v6882
        %v6884 = vrot.slane %v6883, 2
        %v6885 = vmax.f32 %v6883, %v6884
        %v6886 = vrot.slane %v6885, 1
        %v6887 = vmax.f32 %v6885, %v6886
        %v6888 = vld [vmem:[%s8] sm:$0x1]
        %v6889 = vadd.f32 %v6887, %v6888
        %v6890 = vmax.f32 %v6889, 0.0
        %v6891 = vld [vmem:[%s9] sm:$0xff]
        %v6892 = vld [vmem:[%s9 + $0x8] sm:$0xff]
        %v6893 = vld [vmem:[%s9 + $0x10] sm:$0xff]
        %v6894 = vld [vmem:[%s9 + $0x18] sm:$0xff]
        %v6895 = vld [vmem:[%s9 + $0x20] sm:$0xff]
        %v6896 = vld [vmem:[%s9 + $0x28] sm:$0xff]
        %v6897 = vld [vmem:[%s9 + $0x30] sm:$0xff]
        %v6898 = vld [vmem:[%s9 + $0x38] sm:$0xff]
        %v6899 = vld [vmem:[%s10] sm:$0x1]
        %vm6900 = vcmask 523264
        %v6902 = vsel %vm6900, %v6890, 0
        %6904 = vmatprep.subr.mxu0 0.0
        %6905 = vmatpush1.msra.mxu0 %v6891
        %6906 = vmatprep.subr.mxu0 0.0
        %6907 = vmatpush1.msra.mxu0 %v6892
        %6908 = vmatprep.subr.mxu0 0.0
        %6909 = vmatpush1.msra.mxu0 %v6893
        %6910 = vmatprep.subr.mxu0 0.0
        %6911 = vmatpush1.msra.mxu0 %v6894
        %6912 = vmatprep.subr.mxu0 0.0
        %6913 = vmatpush1.msra.mxu0 %v6895
        %6914 = vmatprep.subr.mxu0 0.0
        %6915 = vmatpush1.msra.mxu0 %v6896
        %6916 = vmatprep.subr.mxu0 0.0
        %6917 = vmatpush1.msra.mxu0 %v6897
        %6918 = vmatprep.subr.mxu0 0.0
        %6919 = vmatpush1.msra.mxu0 %v6898
        %6920 = vmatprep.subr.mxu0 0.0
        %6921 = vmatpush1.msra.mxu0 0.0
        %6922 = vmatprep.subr.mxu0 0.0
        %6923 = vmatpush1.msra.mxu0 0.0
        %6924 = vmatprep.subr.mxu0 0.0
        %6925 = vmatpush1.msra.mxu0 0.0
        %6926 = vmatprep.subr.mxu0 0.0
        %6927 = vmatpush1.msra.mxu0 0.0
        %6928 = vmatprep.subr.mxu0 0.0
        %6929 = vmatpush1.msra.mxu0 0.0
        %6930 = vmatprep.subr.mxu0 0.0
        %6931 = vmatpush1.msra.mxu0 0.0
        %6932 = vmatprep.subr.mxu0 0.0
        %6933 = vmatpush1.msra.mxu0 0.0
        %6934 = vmatprep.subr.mxu0 0.0
        %6935 = vmatpush1.msra.mxu0 0.0
        %6936 = vmatprep.subr.mxu0 0.0
        %6937 = vmatpush1.msra.mxu0 0.0
        %6938 = vmatprep.subr.mxu0 0.0
        %6939 = vmatpush1.msra.mxu0 0.0
        %6940 = vmatprep.subr.mxu0 0.0
        %6941 = vmatpush1.msra.mxu0 0.0
        %6942 = vmatprep.subr.mxu0 0.0
        %6943 = vmatpush1.msra.mxu0 0.0
        %6944 = vmatprep.subr.mxu0 0.0
        %6945 = vmatpush1.msra.mxu0 0.0
        %6946 = vmatprep.subr.mxu0 0.0
        %6947 = vmatpush1.msra.mxu0 0.0
        %6948 = vmatprep.subr.mxu0 0.0
        %6949 = vmatpush1.msra.mxu0 0.0
        %6950 = vmatprep.subr.mxu0 0.0
        %6951 = vmatpush1.msra.mxu0 0.0
        %6952 = vmatprep.subr.mxu0 0.0
        %6953 = vmatpush1.msra.mxu0 0.0
        %6954 = vmatprep.subr.mxu0 0.0
        %6955 = vmatpush1.msra.mxu0 0.0
        %6956 = vmatprep.subr.mxu0 0.0
        %6957 = vmatpush1.msra.mxu0 0.0
        %6958 = vmatprep.subr.mxu0 0.0
        %6959 = vmatpush1.msra.mxu0 0.0
        %6960 = vmatprep.subr.mxu0 0.0
        %6961 = vmatpush1.msra.mxu0 0.0
        %6962 = vmatprep.subr.mxu0 0.0
        %6963 = vmatpush1.msra.mxu0 0.0
        %6964 = vmatprep.subr.mxu0 0.0
        %6965 = vmatpush1.msra.mxu0 0.0
        %6966 = vmatprep.subr.mxu0 0.0
        %6967 = vmatpush1.msra.mxu0 0.0
        %6968 = vmatprep.mubr.f32.mxu0 0.0
        %6969 = vmatmul.mubr.f32.gmra.mrb[0].mxu0 %v6902
        %v6970 = vpop.f32.mrb[0].mxu0
        %v6971 = vadd.f32 %v6899, %v6970
        %v6972 = vpop.f32.mrb[0].mxu0
        %6973 = vdwg.mxu0
        %v6974 = vmax.f32 %v6971, 0.0
        %v6975 = vld [vmem:[%s11] sm:$0xff]
        %v6976 = vld [vmem:[%s12] sm:$0x1]
        %vm6977 = vcmask 64512
        %v6979 = vsel %vm6977, %v6974, 0
        %6981 = vmatprep.subr.mxu0 0.0
        %6982 = vmatpush1.msra.mxu0 %v6975
        %6983 = vmatprep.subr.mxu0 0.0
        %6984 = vmatpush1.msra.mxu0 0.0
        %6985 = vmatprep.subr.mxu0 0.0
        %6986 = vmatpush1.msra.mxu0 0.0
        %6987 = vmatprep.subr.mxu0 0.0
        %6988 = vmatpush1.msra.mxu0 0.0
        %6989 = vmatprep.subr.mxu0 0.0
        %6990 = vmatpush1.msra.mxu0 0.0
        %6991 = vmatprep.subr.mxu0 0.0
        %6992 = vmatpush1.msra.mxu0 0.0
        %6993 = vmatprep.subr.mxu0 0.0
        %6994 = vmatpush1.msra.mxu0 0.0
        %6995 = vmatprep.subr.mxu0 0.0
        %6996 = vmatpush1.msra.mxu0 0.0
        %6997 = vmatprep.subr.mxu0 0.0
        %6998 = vmatpush1.msra.mxu0 0.0
        %6999 = vmatprep.subr.mxu0 0.0
        %7000 = vmatpush1.msra.mxu0 0.0
        %7001 = vmatprep.subr.mxu0 0.0
        %7002 = vmatpush1.msra.mxu0 0.0
        %7003 = vmatprep.subr.mxu0 0.0
        %7004 = vmatpush1.msra.mxu0 0.0
        %7005 = vmatprep.subr.mxu0 0.0
        %7006 = vmatpush1.msra.mxu0 0.0
        %7007 = vmatprep.subr.mxu0 0.0
        %7008 = vmatpush1.msra.mxu0 0.0
        %7009 = vmatprep.subr.mxu0 0.0
        %7010 = vmatpush1.msra.mxu0 0.0
        %7011 = vmatprep.subr.mxu0 0.0
        %7012 = vmatpush1.msra.mxu0 0.0
        %7013 = vmatprep.subr.mxu0 0.0
        %7014 = vmatpush1.msra.mxu0 0.0
        %7015 = vmatprep.subr.mxu0 0.0
        %7016 = vmatpush1.msra.mxu0 0.0
        %7017 = vmatprep.subr.mxu0 0.0
        %7018 = vmatpush1.msra.mxu0 0.0
        %7019 = vmatprep.subr.mxu0 0.0
        %7020 = vmatpush1.msra.mxu0 0.0
        %7021 = vmatprep.subr.mxu0 0.0
        %7022 = vmatpush1.msra.mxu0 0.0
        %7023 = vmatprep.subr.mxu0 0.0
        %7024 = vmatpush1.msra.mxu0 0.0
        %7025 = vmatprep.subr.mxu0 0.0
        %7026 = vmatpush1.msra.mxu0 0.0
        %7027 = vmatprep.subr.mxu0 0.0
        %7028 = vmatpush1.msra.mxu0 0.0
        %7029 = vmatprep.subr.mxu0 0.0
        %7030 = vmatpush1.msra.mxu0 0.0
        %7031 = vmatprep.subr.mxu0 0.0
        %7032 = vmatpush1.msra.mxu0 0.0
        %7033 = vmatprep.subr.mxu0 0.0
        %7034 = vmatpush1.msra.mxu0 0.0
        %7035 = vmatprep.subr.mxu0 0.0
        %7036 = vmatpush1.msra.mxu0 0.0
        %7037 = vmatprep.subr.mxu0 0.0
        %7038 = vmatpush1.msra.mxu0 0.0
        %7039 = vmatprep.subr.mxu0 0.0
        %7040 = vmatpush1.msra.mxu0 0.0
        %7041 = vmatprep.subr.mxu0 0.0
        %7042 = vmatpush1.msra.mxu0 0.0
        %7043 = vmatprep.subr.mxu0 0.0
        %7044 = vmatpush1.msra.mxu0 0.0
        %7045 = vmatprep.mubr.f32.mxu0 0.0
        %7046 = vmatmul.mubr.f32.gmra.mrb[0].mxu0 %v6979
        %v7047 = vpop.f32.mrb[0].mxu0
        %v7048 = vadd.f32 %v6976, %v7047
        %v7049 = vpop.f32.mrb[0].mxu0
        %7050 = vdwg.mxu0
        %vm7051 = vcmask 8192
        %7052 = vst.msk [vmem:[%s432] sm:$0x1] %vm7051, %v7048
        %s7053 = sand.u32 %s313, 1
        %s7054 = scalar_lea.sflag [#allocation6], %s7053
        %s7055 = sand.u32 %s313, 1
        %s7056 = scalar_lea.vmem [#allocation5], %s7055
        // Predicated region
        $region94: #{detection_network_pallas.1} parent=71 // pred_check
          %p7057 = pneg %p323
        $region95: #{detection_network_pallas.1} parent=71 // pred_check_branch
          %7059 = sbr.rel (%p7057) target = $region97
        $region96: #{detection_network_pallas.1} parent=71 // pred_region
          %s7061 = ssub.s32 16, 16
          %7062 = vsyncadd %s7054, %s7061
          %s7063 = smul.addr %s27, 16
          %s7064 = scalar_lea.hbm %s13, %s7063
          %s7066 = sshll.u32 %s7056, 4
          %s7067 = int_to_ptr.vmem [resolvable:$true] %s7066
          %7069 = dma.vmem_to_hbm [thread:$0]  %s7067, 16, %s7064, %s7054
        $region97: #{detection_network_pallas.1} parent=71 // pred_fallthru
          _
      $region72: #{detection_network_pallas.1} parent=5 // pred_fallthru
        _
      %p7070 = scmp.le.s32.totalorder 2, %s22
      // Predicated region
      $region98: #{detection_network_pallas.1} parent=5 // pred_check
        %p7071 = pneg %p7070
      $region99: #{detection_network_pallas.1} parent=5 // pred_check_branch
        %7073 = sbr.rel (%p7071) target = $region101
      $region100: #{detection_network_pallas.1} parent=5 // pred_region
        %s7074 = ssub.s32 %s22, 2
        // Predicated region
        $region102: #{detection_network_pallas.1} parent=100 // pred_check
          %p7075 = pneg %p329
        $region103: #{detection_network_pallas.1} parent=100 // pred_check_branch
          %7077 = sbr.rel (%p7075) target = $region105
        $region104: #{detection_network_pallas.1} parent=100 // pred_region
          %s7078 = sand.u32 %s314, 1
          %s7079 = scalar_lea.sflag [#allocation6], %s7078
          %s7080 = sand.u32 %s314, 1
          %s7081 = scalar_lea.vmem [#allocation5], %s7080
          %7082 = dma.done %s7079, 16
        $region105: #{detection_network_pallas.1} parent=100 // pred_fallthru
          _
      $region101: #{detection_network_pallas.1} parent=5 // pred_fallthru
        _
    $region6: #{detection_network_pallas.1} parent=1 // loop_footer
      %s26 = sadd.s32 1, %s22
    $region7: #{detection_network_pallas.1} parent=1 // loop_footer_branch
      %21 = sbr.rel target = $region3
    $region8: #{detection_network_pallas.1} parent=1 // loop_exit
      _
    %7083 = vsyncpa [#allocation6], 1
    %s7084 = scalar_lea.sflag [#allocation6], 1
    %7085 = vsyncpa %s7084, 1

</llo_original>
